<compile_context>
chip_gen: v7x
topology: tpu7x:2x2x1
jax: 0.10.0
libtpu: 0.0.40
codegen_flags: <defaults>
</compile_context>

<pallas_src>
import functools
import math

import numpy as np
import jax
import jax.numpy as jnp
from jax.experimental import pallas as pl
from jax.experimental.pallas import tpu as pltpu

NEG_INF = -1e9  # matches masked_fill_(mask, -1e9) in the reference


# --------------------------------------------------------------------------------------
# erf-in-Mosaic probe (exact GELU); resolved once before jitting the model
# --------------------------------------------------------------------------------------
_ERF_IN_KERNEL = None


def _erf_in_kernel():
    global _ERF_IN_KERNEL
    if _ERF_IN_KERNEL is None:
        def k(x_ref, o_ref):
            o_ref[...] = jax.lax.erf(x_ref[...])
        try:
            fn = pl.pallas_call(k, out_shape=jax.ShapeDtypeStruct((8, 128), jnp.float32))
            jax.block_until_ready(jax.jit(fn)(jnp.zeros((8, 128), jnp.float32)))
            _ERF_IN_KERNEL = True
        except Exception:
            _ERF_IN_KERNEL = False
    return _ERF_IN_KERNEL


# --------------------------------------------------------------------------------------
# In-kernel building blocks (traced inline inside the fused kernels)
# --------------------------------------------------------------------------------------
def _ln(y, g, b, eps):
    mu = jnp.mean(y, axis=-1, keepdims=True)
    yc = y - mu
    var = jnp.mean(yc * yc, axis=-1, keepdims=True)
    return yc * jax.lax.rsqrt(var + eps) * g + b


def _gelu(x, use_erf):
    if use_erf:
        return 0.5 * x * (1.0 + jax.lax.erf(x * 0.7071067811865476))     # exact F.gelu
    c = 0.7978845608028654                                                # sqrt(2/pi)
    return 0.5 * x * (1.0 + jnp.tanh(c * (x + 0.044715 * x * x * x)))    # tanh approx (EUP)


def _mha(x_q, x_kv, bias, wq, wkv, fcw, fcb, n_heads, d_k, d_v):
    """MultiHeadAttention sub-layer (pre-LayerNorm output): residual + fc(attn)."""
    q = jnp.dot(x_q, wq, preferred_element_type=jnp.float32)     # (Tq, H*dk), 1/sqrt(dk) folded in
    kv = jnp.dot(x_kv, wkv, preferred_element_type=jnp.float32)  # (Tk, H*dk + H*dv)
    y = x_q + fcb
    for h in range(n_heads):
        qh = q[:, h * d_k:(h + 1) * d_k]
        kh = kv[:, h * d_k:(h + 1) * d_k]
        vh = kv[:, n_heads * d_k + h * d_v: n_heads * d_k + (h + 1) * d_v]
        s = jax.lax.dot_general(qh, kh, (((1,), (1,)), ((), ())),
                                preferred_element_type=jnp.float32)
        if bias is not None:
            s = s + bias
        s = s - jnp.max(s, axis=-1, keepdims=True)
        e = jnp.exp(s)
        p = e / jnp.sum(e, axis=-1, keepdims=True)                # exact softmax division
        oh = jnp.dot(p, vh, preferred_element_type=jnp.float32)
        y = y + jnp.dot(oh, fcw[h * d_v:(h + 1) * d_v, :],
                        preferred_element_type=jnp.float32)
    return y


# --------------------------------------------------------------------------------------
# Kernel 1: DataEmbedding + Bottleneck_Construct (one call, grid over batch)
# --------------------------------------------------------------------------------------
def _embed_bottleneck_kernel(L, dk, window_sizes, eps, *refs):
    n_st = len(window_sizes)
    xin_ref, embW_ref, embb_ref, pe_ref, dW_ref, db_ref = refs[:6]
    st_refs = refs[6:6 + 3 * n_st]
    upW_ref, upb_ref, g_ref, bt_ref, o_ref = refs[6 + 3 * n_st:]

    g = g_ref[...]
    bt = bt_ref[...]
    # [im2col(token conv) | time features] @ W + b + positional encoding, one matmul.
    x = (jnp.dot(xin_ref[0], embW_ref[...], preferred_element_type=jnp.float32)
         + embb_ref[...] + pe_ref[...])                                   # (L, D)
    o_ref[0, 0:L, :] = _ln(x, g, bt, eps)

    cur = jnp.dot(x, dW_ref[...], preferred_element_type=jnp.float32) + db_ref[...]   # (L, dk)
    off = L
    for i, w in enumerate(window_sizes):
        sel_ref, cW_ref, cb_ref = st_refs[3 * i: 3 * i + 3]
        y = cb_ref[...]
        for j in range(w):
            t = jnp.dot(sel_ref[j], cur, preferred_element_type=jnp.float32)   # strided pick
            y = y + jnp.dot(t, cW_ref[j * dk:(j + 1) * dk, :],
                            preferred_element_type=jnp.float32)
        cur = jnp.where(y > 0.0, y, jnp.exp(y) - 1.0)                     # ELU (BatchNorm folded)
        up = jnp.dot(cur, upW_ref[...], preferred_element_type=jnp.float32) + upb_ref[...]
        ln_i = up.shape[0]
        o_ref[0, off:off + ln_i, :] = _ln(up, g, bt, eps)
        off += ln_i


def _make_sel(Lc, w):
    """Selection matrices P_j (Ln, Lc): P_j[n, n*w + j] = 1 (row picks for a stride-w conv)."""
    Ln = Lc // w
    s = np.zeros((w, Ln, Lc), dtype=np.float32)
    for j in range(w):
        s[j, np.arange(Ln), np.arange(Ln) * w + j] = 1.0
    return jnp.asarray(s)


def embed_bottleneck(xin, p, cfg, pe):
    B, L, K = xin.shape
    D = cfg["d_model"]
    dk = cfg["factor"]
    ws = cfg["window_size"]
    sizes = [L]
    for w in ws:
        sizes.append(sizes[-1] // w)
    T = sum(sizes)

    args = [xin, p["enc_emb_W"], p["enc_emb_b"].reshape(1, D), pe,
            p["bc_down_W"], p["bc_down_b"].reshape(1, dk)]
    in_specs = [
        pl.BlockSpec((1, L, K), lambda b: (b, 0, 0)),
        pl.BlockSpec((K, D), lambda b: (0, 0)),
        pl.BlockSpec((1, D), lambda b: (0, 0)),
        pl.BlockSpec((L, D), lambda b: (0, 0)),
        pl.BlockSpec((D, dk), lambda b: (0, 0)),
        pl.BlockSpec((1, dk), lambda b: (0, 0)),
    ]
    for i, w in enumerate(ws):
        args += [_make_sel(sizes[i], w), p[f"bc_conv{i}_W"], p[f"bc_conv{i}_b"].reshape(1, dk)]
        in_specs += [
            pl.BlockSpec((w, sizes[i + 1], sizes[i]), lambda b: (0, 0, 0)),
            pl.BlockSpec((w * dk, dk), lambda b: (0, 0)),
            pl.BlockSpec((1, dk), lambda b: (0, 0)),
        ]
    args += [p["bc_up_W"], p["bc_up_b"].reshape(1, D),
             p["bc_ln_g"].reshape(1, D), p["bc_ln_b"].reshape(1, D)]
    in_specs += [pl.BlockSpec((dk, D), lambda b: (0, 0)),
                 pl.BlockSpec((1, D), lambda b: (0, 0)),
                 pl.BlockSpec((1, D), lambda b: (0, 0)),
                 pl.BlockSpec((1, D), lambda b: (0, 0))]

    return pl.pallas_call(
        functools.partial(_embed_bottleneck_kernel, L, dk, tuple(ws), 1e-5),
        out_shape=jax.ShapeDtypeStruct((B, T, D), jnp.float32),
        grid=(B,),
        in_specs=in_specs,
        out_specs=pl.BlockSpec((1, T, D), lambda b: (b, 0, 0)),
        compiler_params=pltpu.CompilerParams(dimension_semantics=("parallel",)),
    )(*args)


# --------------------------------------------------------------------------------------
# Kernel 2: the WHOLE encoder layer stack (grid = (B, e_layers), activation VMEM-resident)
# --------------------------------------------------------------------------------------
def _enc_stack_kernel(n_heads, d_k, d_v, eps, use_erf,
                      x_ref, bias_ref,
                      wq_ref, wkv_ref, fcw_ref, fcb_ref, ln1g_ref, ln1b_ref,
                      w1_ref, b1_ref, w2_ref, b2_ref, ln2g_ref, ln2b_ref,
                      o_ref):
    @pl.when(pl.program_id(1) == 0)
    def _():
        o_ref[...] = x_ref[...]          # seed the resident activation at layer 0

    x = o_ref[0]                                                          # (T, D)
    y = _mha(x, x, bias_ref[0], wq_ref[0], wkv_ref[0], fcw_ref[0], fcb_ref[0],
             n_heads, d_k, d_v)
    y = _ln(y, ln1g_ref[0], ln1b_ref[0], eps)
    h = jnp.dot(y, w1_ref[0], preferred_element_type=jnp.float32) + b1_ref[0]
    h = _gelu(h, use_erf)
    z = jnp.dot(h, w2_ref[0], preferred_element_type=jnp.float32) + b2_ref[0] + y
    o_ref[0] = _ln(z, ln2g_ref[0], ln2b_ref[0], eps)


_ENC_NAMES = ["wq", "wkv", "fc_W", "fc_b", "ln1_g", "ln1_b",
              "w1", "b1", "w2", "b2", "ln2_g", "ln2_b"]


def encoder_stack(x, bias, p, cfg):
    B, T, D = x.shape
    H, dk = cfg["n_heads"], cfg["factor"]
    dv = dk
    d_ff = cfg["d_ff"]
    Lyr = cfg["e_layers"]
    use_erf = _erf_in_kernel()

    def w_spec(shape):
        nd = len(shape)
        return pl.BlockSpec((1,) + tuple(shape[1:]), lambda b, l: (l,) + (0,) * (nd - 1))

    in_specs = [
        pl.BlockSpec((1, T, D), lambda b, l: (b, 0, 0)),
        pl.BlockSpec((1, T, T), lambda b, l: (0, 0, 0)),
        w_spec((Lyr, D, H * dk)),
        w_spec((Lyr, D, H * (dk + dv))),
        w_spec((Lyr, H * dv, D)),
        w_spec((Lyr, 1, D)),
        w_spec((Lyr, 1, D)),
        w_spec((Lyr, 1, D)),
        w_spec((Lyr, D, d_ff)),
        w_spec((Lyr, 1, d_ff)),
        w_spec((Lyr, d_ff, D)),
        w_spec((Lyr, 1, D)),
        w_spec((Lyr, 1, D)),
        w_spec((Lyr, 1, D)),
    ]
    args = [x, bias] + [p["enc_" + n] for n in _ENC_NAMES]
    return pl.pallas_call(
        functools.partial(_enc_stack_kernel, H, dk, dv, 1e-6, use_erf),
        out_shape=jax.ShapeDtypeStruct((B, T, D), jnp.float32),
        grid=(B, Lyr),
        in_specs=in_specs,
        out_specs=pl.BlockSpec((1, T, D), lambda b, l: (b, 0, 0)),
        compiler_params=pltpu.CompilerParams(
            dimension_semantics=("parallel", "arbitrary")),
    )(*args)


# --------------------------------------------------------------------------------------
# Kernel 3: full decoder (embedding + 2 attention/FFN layers + predictor), grid over batch
# --------------------------------------------------------------------------------------
def _decoder_kernel(n_heads, d_k, d_v, T, P, eps, use_erf,
                    xin_ref, embW_ref, embb_ref, pe_ref, refer_ref, bias_ref,
                    wq0, wkv0, fcw0, fcb0, g10, b10, w10, bb10, w20, bb20, g20, b20,
                    wq1, wkv1, fcw1, fcb1, g11, b11, w11, bb11, w21, bb21, g21, b21,
                    predW_ref, o_ref, kvbuf):
    x = (jnp.dot(xin_ref[0], embW_ref[...], preferred_element_type=jnp.float32)
         + embb_ref[...] + pe_ref[...])                                   # (P, D)
    refer = refer_ref[0]                                                  # (T, D)

    # layer 0: cross attention to encoder output (no mask) + FFN
    y = _mha(x, refer, None, wq0[...], wkv0[...], fcw0[...], fcb0[...], n_heads, d_k, d_v)
    y = _ln(y, g10[...], b10[...], eps)
    h = jnp.dot(y, w10[...], preferred_element_type=jnp.float32) + bb10[...]
    h = _gelu(h, use_erf)
    z = jnp.dot(h, w20[...], preferred_element_type=jnp.float32) + bb20[...] + y
    x = _ln(z, g20[...], b20[...], eps)

    # refer_enc = concat([refer, dec]) built in a VMEM scratch
    kvbuf[0:T, :] = refer
    kvbuf[T:, :] = x
    kv_all = kvbuf[...]                                                   # (T+P, D)

    # layer 1: attention over [enc | dec] with the subsequent-mask bias + FFN
    y = _mha(x, kv_all, bias_ref[0], wq1[...], wkv1[...], fcw1[...], fcb1[...],
             n_heads, d_k, d_v)
    y = _ln(y, g11[...], b11[...], eps)
    h = jnp.dot(y, w11[...], preferred_element_type=jnp.float32) + bb11[...]
    h = _gelu(h, use_erf)
    z = jnp.dot(h, w21[...], preferred_element_type=jnp.float32) + bb21[...] + y
    x = _ln(z, g21[...], b21[...], eps)

    # predictor (bias-free linear)
    o_ref[0] = jnp.dot(x, predW_ref[...], preferred_element_type=jnp.float32)


def decoder_predict(xdin, refer, p, cfg, pe_dec, dec_bias):
    B, P, Kd = xdin.shape
    T = refer.shape[1]
    D = cfg["d_model"]
    H, dk = cfg["n_heads"], cfg["factor"]
    dv = dk
    d_ff = cfg["d_ff"]
    C = p["pred_W"].shape[1]
    use_erf = _erf_in_kernel()

    def full(shape):
        nd = len(shape)
        return pl.BlockSpec(tuple(shape), lambda b: (0,) * nd)

    def layer_args(l):
        return [p[f"dec{l}_" + n] for n in _ENC_NAMES]

    def layer_specs():
        return [full((D, H * dk)), full((D, H * (dk + dv))), full((H * dv, D)), full((1, D)),
                full((1, D)), full((1, D)),
                full((D, d_ff)), full((1, d_ff)), full((d_ff, D)), full((1, D)),
                full((1, D)), full((1, D))]

    args = ([xdin, p["dec_emb_W"], p["dec_emb_b"].reshape(1, D), pe_dec, refer, dec_bias]
            + layer_args(0) + layer_args(1) + [p["pred_W"]])
    in_specs = ([pl.BlockSpec((1, P, Kd), lambda b: (b, 0, 0)),
                 full((Kd, D)), full((1, D)), full((P, D)),
                 pl.BlockSpec((1, T, D), lambda b: (b, 0, 0)),
                 full((1, P, T + P))]
                + layer_specs() + layer_specs() + [full((D, C))])

    return pl.pallas_call(
        functools.partial(_decoder_kernel, H, dk, dv, T, P, 1e-6, use_erf),
        out_shape=jax.ShapeDtypeStruct((B, P, C), jnp.float32),
        grid=(B,),
        in_specs=in_specs,
        out_specs=pl.BlockSpec((1, P, C), lambda b: (b, 0, 0)),
        scratch_shapes=[pltpu.VMEM((T + P, D), jnp.float32)],
        compiler_params=pltpu.CompilerParams(dimension_semantics=("parallel",)),
    )(*args)


# --------------------------------------------------------------------------------------
# JAX glue: positional encoding, circular-conv im2col, masks, forward
# --------------------------------------------------------------------------------------
def positional_encoding(L, d_model):
    pe = np.zeros((L, d_model), dtype=np.float32)
    position = np.arange(L)[:, None].astype(np.float32)
    div_term = np.exp(np.arange(0, d_model, 2).astype(np.float32) * -(math.log(10000.0) / d_model))
    pe[:, 0::2] = np.sin(position * div_term)
    pe[:, 1::2] = np.cos(position * div_term)
    return jnp.asarray(pe)                       # (L, d_model)


def _embed_inputs(x, x_mark):
    """im2col for the circular Conv1d(k=3) token embedding, concatenated with time marks."""
    B, L, C = x.shape
    idx = (jnp.arange(L)[:, None] + jnp.arange(-1, 2)[None, :]) % L       # (L, 3)
    xg = x[:, idx, :].reshape(B, L, 3 * C)                                # (j, c) ordering
    return jnp.concatenate([xg, x_mark], axis=-1).astype(jnp.float32)


def model_forward(params, x_enc, x_mark_enc, x_dec, x_mark_dec, cfg, enc_bias, dec_bias):
    D = cfg["d_model"]
    xin_enc = _embed_inputs(x_enc, x_mark_enc)
    seq = embed_bottleneck(xin_enc, params, cfg, positional_encoding(cfg["seq_len"], D))
    seq = encoder_stack(seq, enc_bias, params, cfg)      # decoder_type='attention', truncate=False
    xin_dec = _embed_inputs(x_dec, x_mark_dec)
    pred = decoder_predict(xin_dec, seq, params, cfg,
                           positional_encoding(cfg["pred_len"], D), dec_bias)
    return pred


# --------------------------------------------------------------------------------------
# Pyramidal masks -> additive biases (1.0 == blocked -> -1e9)
# --------------------------------------------------------------------------------------
def get_mask_bias(input_size, window_size, inner_size):
    all_size = [input_size]
    for w in window_size:
        all_size.append(all_size[-1] // w)
    T = sum(all_size)
    mask = np.zeros((T, T), dtype=np.float32)
    inner_window = inner_size // 2
    for layer_idx in range(len(all_size)):
        start = sum(all_size[:layer_idx])
        for i in range(start, start + all_size[layer_idx]):
            left = max(i - inner_window, start)
            right = min(i + inner_window + 1, start + all_size[layer_idx])
            mask[i, left:right] = 1
    for layer_idx in range(1, len(all_size)):
        start = sum(all_size[:layer_idx])
        for i in range(start, start + all_size[layer_idx]):
            left = (start - all_size[layer_idx - 1]) + (i - start) * window_size[layer_idx - 1]
            if i == start + all_size[layer_idx] - 1:
                right = start
            else:
                right = (start - all_size[layer_idx - 1]) + (i - start + 1) * window_size[layer_idx - 1]
            mask[i, left:right] = 1
            mask[left:right, i] = 1
    bias = (1.0 - mask) * NEG_INF
    return jnp.asarray(bias, jnp.float32)[None], all_size   # (1, T, T)


def get_subsequent_mask_bias(input_size, window_size, predict_step, truncate=False):
    if truncate:
        total = input_size
    else:
        all_size = [input_size]
        for w in window_size:
            all_size.append(all_size[-1] // w)
        total = sum(all_size)
    mask = np.zeros((predict_step, total + predict_step), dtype=np.float32)
    for i in range(predict_step):
        mask[i, : total + i + 1] = 1
    return jnp.asarray((1.0 - mask) * NEG_INF, jnp.float32)[None]   # (1, P, total+P)


# --------------------------------------------------------------------------------------
# Deterministic parameter init (shapes follow the PyTorch module; kernel-ready layouts)
# --------------------------------------------------------------------------------------
def init_params(cfg, key):
    d_model, C, d_ff = cfg["d_model"], cfg["enc_in"], cfg["d_ff"]
    H, dk, nt = cfg["n_heads"], cfg["factor"], cfg["n_time_feats"]
    dv = dk
    ws = cfg["window_size"]
    Lyr = cfg["e_layers"]
    p = {}
    keys = iter(jax.random.split(key, 512))

    def nrm(shape, scale=0.1):
        return (scale * jax.random.normal(next(keys), shape)).astype(jnp.float32)

    for emb in ("enc_emb_", "dec_emb_"):
        tok_W = nrm((d_model, C, 3))                                  # Conv1d(C, d_model, 3, circular)
        tok_W2 = jnp.transpose(tok_W, (2, 1, 0)).reshape(3 * C, d_model)
        time_W = nrm((nt, d_model))                                   # TimeFeatureEmbedding Linear
        p[emb + "W"] = jnp.concatenate([tok_W2, time_W], axis=0)      # fused (3C+nt, d_model)
        p[emb + "b"] = nrm((d_model,), 0.01)

    p["bc_down_W"] = nrm((d_model, dk))
    p["bc_down_b"] = nrm((dk,), 0.01)
    p["bc_up_W"] = nrm((dk, d_model))
    p["bc_up_b"] = nrm((d_model,), 0.01)
    # BatchNorm1d eval with fresh running stats (mean=0, var=1, gamma=1, beta=0) folded in.
    bn_scale = 1.0 / np.sqrt(1.0 + 1e-5)
    for i, w in enumerate(ws):
        Wc = nrm((dk, dk, w))                                         # Conv1d(dk, dk, w, stride=w)
        p[f"bc_conv{i}_W"] = jnp.transpose(Wc, (2, 1, 0)).reshape(w * dk, dk) * bn_scale
        p[f"bc_conv{i}_b"] = nrm((dk,), 0.01) * bn_scale
    p["bc_ln_g"] = jnp.ones((d_model,), jnp.float32)
    p["bc_ln_b"] = jnp.zeros((d_model,), jnp.float32)

    inv_temp = 1.0 / math.sqrt(dk)   # temperature = sqrt(d_k), folded into W_q

    def attn_ffn_params():
        wq = nrm((d_model, H * dk)) * inv_temp
        wk = nrm((d_model, H * dk))
        wv = nrm((d_model, H * dv))
        wkv = jnp.concatenate([wk, wv], axis=1)
        fcw = nrm((H * dv, d_model))
        fcb = nrm((d_model,), 0.01)
        ln1g = jnp.ones((d_model,), jnp.float32)
        ln1b = jnp.zeros((d_model,), jnp.float32)
        w1 = nrm((d_model, d_ff))
        b1 = nrm((d_ff,), 0.01)
        w2 = nrm((d_ff, d_model))
        b2 = nrm((d_model,), 0.01)
        ln2g = jnp.ones((d_model,), jnp.float32)
        ln2b = jnp.zeros((d_model,), jnp.float32)
        return (wq, wkv, fcw, fcb, ln1g, ln1b, w1, b1, w2, b2, ln2g, ln2b)

    # encoder layers: stacked along a leading layer axis for the fused layer-stack kernel
    enc_layers = [attn_ffn_params() for _ in range(Lyr)]
    for i, name in enumerate(_ENC_NAMES):
        stk = jnp.stack([enc_layers[l][i] for l in range(Lyr)], axis=0)
        if stk.ndim == 2:                       # vectors -> (Lyr, 1, dim)
            stk = stk[:, None, :]
        p["enc_" + name] = stk

    # decoder layers kept separate (different kv sources / lengths)
    for l in range(2):
        vals = attn_ffn_params()
        for name, v in zip(_ENC_NAMES, vals):
            if v.ndim == 1:
                v = v.reshape(1, -1)
            p[f"dec{l}_" + name] = v

    p["pred_W"] = nrm((d_model, C))                                   # Predictor, bias=False
    return p


# --------------------------------------------------------------------------------------
# Main
# --------------------------------------------------------------------------------------
if __name__ == "__main__":
    cfg = dict(
        seq_len=16, pred_len=4, enc_in=4, n_time_feats=4,
        d_model=32, d_ff=16, n_heads=2, factor=8, e_layers=2,
        window_size=[2, 2],          # configs.detail_freq = '[2,2]'
    )

    key = jax.random.PRNGKey(0)
    kp, k1, k2, k3, k4 = jax.random.split(key, 5)
    params = init_params(cfg, kp)

    B = 2
    x_enc = jax.random.normal(k1, (B, cfg["seq_len"], cfg["enc_in"]), jnp.float32)
    x_mark_enc = jax.random.normal(k2, (B, cfg["seq_len"], cfg["n_time_feats"]), jnp.float32)
    x_dec = jax.random.normal(k3, (B, cfg["pred_len"], cfg["enc_in"]), jnp.float32)
    x_mark_dec = jax.random.normal(k4, (B, cfg["pred_len"], cfg["n_time_feats"]), jnp.float32)

    # get_mask(seq_len, window_size, d_ff) -- matches the reference Encoder.__init__
    enc_bias, all_size = get_mask_bias(cfg["seq_len"], cfg["window_size"], cfg["d_ff"])
    dec_bias = get_subsequent_mask_bias(cfg["seq_len"], cfg["window_size"], cfg["pred_len"],
                                        truncate=False)

    _erf_in_kernel()  # resolve the GELU path (exact erf vs tanh-approx) before tracing

    fwd = jax.jit(lambda p, a, b, c, d: model_forward(p, a, b, c, d, cfg, enc_bias, dec_bias))
    pred = fwd(params, x_enc, x_mark_enc, x_dec, x_mark_dec)
    jax.block_until_ready(pred)

    assert pred.shape == (B, cfg["pred_len"], cfg["enc_in"]), pred.shape
    assert bool(jnp.all(jnp.isfinite(pred)))
    print("KERNEL_OK")
</pallas_src>

<mosaic_0001>
module attributes {stable_mosaic.version = 11 : i64} {
  func.func @k(%arg0: memref<8x128xf32, #tpu.memory_space<vmem>>, %arg1: memref<8x128xf32, #tpu.memory_space<vmem>>) attributes {dimension_semantics = [], scalar_prefetch = 0 : i64, scratch_operands = 0 : i64, tpu.core_type = #tpu.core_type<tc>} {
    %c0 = arith.constant 0 : index
    %c0_0 = arith.constant 0 : index
    %0 = vector.load %arg0[%c0, %c0_0] : memref<8x128xf32, #tpu.memory_space<vmem>>, vector<8x128xf32>
    %1 = math.erf %0 : vector<8x128xf32>
    %c0_1 = arith.constant 0 : index
    %c0_2 = arith.constant 0 : index
    %2 = vector.load %arg1[%c0_1, %c0_2] : memref<8x128xf32, #tpu.memory_space<vmem>>, vector<8x128xf32>
    tpu.vector_store %arg1[%c0_1, %c0_2], %1 {strides = array<i32>} : memref<8x128xf32, #tpu.memory_space<vmem>>, vector<8x128xf32>,
    return
  }
}

module attributes {stable_mosaic.version = 11 : i64} {
  func.func @_embed_bottleneck_kernel(%arg0: i32, %arg1: memref<1x16x16xf32, #tpu.memory_space<vmem>>, %arg2: memref<16x32xf32, #tpu.memory_space<vmem>>, %arg3: memref<1x32xf32, #tpu.memory_space<vmem>>, %arg4: memref<16x32xf32, #tpu.memory_space<vmem>>, %arg5: memref<32x8xf32, #tpu.memory_space<vmem>>, %arg6: memref<1x8xf32, #tpu.memory_space<vmem>>, %arg7: memref<2x8x16xf32, #tpu.memory_space<vmem>>, %arg8: memref<16x8xf32, #tpu.memory_space<vmem>>, %arg9: memref<1x8xf32, #tpu.memory_space<vmem>>, %arg10: memref<2x4x8xf32, #tpu.memory_space<vmem>>, %arg11: memref<16x8xf32, #tpu.memory_space<vmem>>, %arg12: memref<1x8xf32, #tpu.memory_space<vmem>>, %arg13: memref<8x32xf32, #tpu.memory_space<vmem>>, %arg14: memref<1x32xf32, #tpu.memory_space<vmem>>, %arg15: memref<1x32xf32, #tpu.memory_space<vmem>>, %arg16: memref<1x32xf32, #tpu.memory_space<vmem>>, %arg17: memref<1x28x32xf32, #tpu.memory_space<vmem>>) attributes {dimension_semantics = [#tpu.dimension_semantics<parallel>], iteration_bounds = array<i64: 2>, scalar_prefetch = 0 : i64, scratch_operands = 0 : i64, tpu.core_type = #tpu.core_type<tc>, window_params = [{transform_indices = @transform_0, window_bounds = array<i64: 1, 16, 16>}, {pipeline_mode = #tpu.pipeline_mode<synchronous>, transform_indices = @transform_1, window_bounds = array<i64: 16, 32>}, {pipeline_mode = #tpu.pipeline_mode<synchronous>, transform_indices = @transform_2, window_bounds = array<i64: 1, 32>}, {pipeline_mode = #tpu.pipeline_mode<synchronous>, transform_indices = @transform_3, window_bounds = array<i64: 16, 32>}, {pipeline_mode = #tpu.pipeline_mode<synchronous>, transform_indices = @transform_4, window_bounds = array<i64: 32, 8>}, {pipeline_mode = #tpu.pipeline_mode<synchronous>, transform_indices = @transform_5, window_bounds = array<i64: 1, 8>}, {pipeline_mode = #tpu.pipeline_mode<synchronous>, transform_indices = @transform_6, window_bounds = array<i64: 2, 8, 16>}, {pipeline_mode = #tpu.pipeline_mode<synchronous>, transform_indices = @transform_7, window_bounds = array<i64: 16, 8>}, {pipeline_mode = #tpu.pipeline_mode<synchronous>, transform_indices = @transform_8, window_bounds = array<i64: 1, 8>}, {pipeline_mode = #tpu.pipeline_mode<synchronous>, transform_indices = @transform_9, window_bounds = array<i64: 2, 4, 8>}, {pipeline_mode = #tpu.pipeline_mode<synchronous>, transform_indices = @transform_10, window_bounds = array<i64: 16, 8>}, {pipeline_mode = #tpu.pipeline_mode<synchronous>, transform_indices = @transform_11, window_bounds = array<i64: 1, 8>}, {pipeline_mode = #tpu.pipeline_mode<synchronous>, transform_indices = @transform_12, window_bounds = array<i64: 8, 32>}, {pipeline_mode = #tpu.pipeline_mode<synchronous>, transform_indices = @transform_13, window_bounds = array<i64: 1, 32>}, {pipeline_mode = #tpu.pipeline_mode<synchronous>, transform_indices = @transform_14, window_bounds = array<i64: 1, 32>}, {pipeline_mode = #tpu.pipeline_mode<synchronous>, transform_indices = @transform_15, window_bounds = array<i64: 1, 32>}, {transform_indices = @transform_16, window_bounds = array<i64: 1, 28, 32>}]} {
    %c0 = arith.constant 0 : index
    %c0_0 = arith.constant 0 : index
    %0 = vector.load %arg15[%c0, %c0_0] : memref<1x32xf32, #tpu.memory_space<vmem>>, vector<1x32xf32>
    %c0_1 = arith.constant 0 : index
    %c0_2 = arith.constant 0 : index
    %1 = vector.load %arg16[%c0_1, %c0_2] : memref<1x32xf32, #tpu.memory_space<vmem>>, vector<1x32xf32>
    %c0_3 = arith.constant 0 : index
    %c0_4 = arith.constant 0 : index
    %c0_5 = arith.constant 0 : index
    %2 = vector.load %arg1[%c0_3, %c0_4, %c0_5] : memref<1x16x16xf32, #tpu.memory_space<vmem>>, vector<1x16x16xf32>
    %3 = vector.shape_cast %2 : vector<1x16x16xf32> to vector<16x16xf32>
    %c0_6 = arith.constant 0 : index
    %c0_7 = arith.constant 0 : index
    %4 = vector.load %arg2[%c0_6, %c0_7] : memref<16x32xf32, #tpu.memory_space<vmem>>, vector<16x32xf32>
    %cst = arith.constant dense<0.000000e+00> : vector<16x32xf32>
    %5 = tpu.matmul %3, %4, %cst {dimension_numbers = #tpu.dot_dimension_numbers<[1], [0], [0], [1], [0, 0, 1, 1], [], []>} : vector<16x16xf32>, vector<16x32xf32>, vector<16x32xf32> -> vector<16x32xf32>
    %c0_8 = arith.constant 0 : index
    %c0_9 = arith.constant 0 : index
    %6 = vector.load %arg3[%c0_8, %c0_9] : memref<1x32xf32, #tpu.memory_space<vmem>>, vector<1x32xf32>
    %7 = vector.broadcast %6 : vector<1x32xf32> to vector<16x32xf32>
    %8 = arith.addf %5, %7 : vector<16x32xf32>
    %c0_10 = arith.constant 0 : index
    %c0_11 = arith.constant 0 : index
    %9 = vector.load %arg4[%c0_10, %c0_11] : memref<16x32xf32, #tpu.memory_space<vmem>>, vector<16x32xf32>
    %10 = arith.addf %8, %9 : vector<16x32xf32>
    %cst_12 = arith.constant dense<0.000000e+00> : vector<16xf32>
    %11 = vector.multi_reduction <add>, %10, %cst_12 [1] : vector<16x32xf32> to vector<16xf32>
    %12 = vector.shape_cast %11 : vector<16xf32> to vector<16x1xf32>
    %cst_13 = arith.constant 3.200000e+01 : f32
    %13 = vector.broadcast %cst_13 : f32 to vector<16x1xf32>
    %14 = arith.divf %12, %13 : vector<16x1xf32>
    %15 = vector.broadcast %14 : vector<16x1xf32> to vector<16x32xf32>
    %16 = arith.subf %10, %15 : vector<16x32xf32>
    %17 = arith.mulf %16, %16 : vector<16x32xf32>
    %cst_14 = arith.constant dense<0.000000e+00> : vector<16xf32>
    %18 = vector.multi_reduction <add>, %17, %cst_14 [1] : vector<16x32xf32> to vector<16xf32>
    %19 = vector.shape_cast %18 : vector<16xf32> to vector<16x1xf32>
    %cst_15 = arith.constant 3.200000e+01 : f32
    %20 = vector.broadcast %cst_15 : f32 to vector<16x1xf32>
    %21 = arith.divf %19, %20 : vector<16x1xf32>
    %cst_16 = arith.constant 9.99999974E-6 : f32
    %22 = vector.broadcast %cst_16 : f32 to vector<16x1xf32>
    %23 = arith.addf %21, %22 : vector<16x1xf32>
    %24 = math.rsqrt %23 : vector<16x1xf32>
    %25 = vector.broadcast %24 : vector<16x1xf32> to vector<16x32xf32>
    %26 = arith.mulf %16, %25 : vector<16x32xf32>
    %27 = vector.broadcast %0 : vector<1x32xf32> to vector<16x32xf32>
    %28 = arith.mulf %26, %27 : vector<16x32xf32>
    %29 = vector.broadcast %1 : vector<1x32xf32> to vector<16x32xf32>
    %30 = arith.addf %28, %29 : vector<16x32xf32>
    %c0_17 = arith.constant 0 : index
    %c0_18 = arith.constant 0 : index
    %c0_19 = arith.constant 0 : index
    %31 = vector.load %arg17[%c0_17, %c0_18, %c0_19] : memref<1x28x32xf32, #tpu.memory_space<vmem>>, vector<1x16x32xf32>
    %32 = vector.shape_cast %31 : vector<1x16x32xf32> to vector<16x32xf32>
    %33 = vector.shape_cast %30 : vector<16x32xf32> to vector<1x16x32xf32>
    tpu.vector_store %arg17[%c0_17, %c0_18, %c0_19], %33 {strides = array<i32>} : memref<1x28x32xf32, #tpu.memory_space<vmem>>, vector<1x16x32xf32>,
    %c0_20 = arith.constant 0 : index
    %c0_21 = arith.constant 0 : index
    %34 = vector.load %arg5[%c0_20, %c0_21] : memref<32x8xf32, #tpu.memory_space<vmem>>, vector<32x8xf32>
    %cst_22 = arith.constant dense<0.000000e+00> : vector<16x8xf32>
    %35 = tpu.matmul %10, %34, %cst_22 {dimension_numbers = #tpu.dot_dimension_numbers<[1], [0], [0], [1], [0, 0, 1, 1], [], []>} : vector<16x32xf32>, vector<32x8xf32>, vector<16x8xf32> -> vector<16x8xf32>
    %c0_23 = arith.constant 0 : index
    %c0_24 = arith.constant 0 : index
    %36 = vector.load %arg6[%c0_23, %c0_24] : memref<1x8xf32, #tpu.memory_space<vmem>>, vector<1x8xf32>
    %37 = vector.broadcast %36 : vector<1x8xf32> to vector<16x8xf32>
    %38 = arith.addf %35, %37 : vector<16x8xf32>
    %c0_25 = arith.constant 0 : index
    %c0_26 = arith.constant 0 : index
    %39 = vector.load %arg9[%c0_25, %c0_26] : memref<1x8xf32, #tpu.memory_space<vmem>>, vector<1x8xf32>
    %c0_27 = arith.constant 0 : index
    %c0_28 = arith.constant 0 : index
    %c0_29 = arith.constant 0 : index
    %40 = vector.load %arg7[%c0_27, %c0_28, %c0_29] : memref<2x8x16xf32, #tpu.memory_space<vmem>>, vector<1x8x16xf32>
    %41 = vector.shape_cast %40 : vector<1x8x16xf32> to vector<8x16xf32>
    %cst_30 = arith.constant dense<0.000000e+00> : vector<8x8xf32>
    %42 = tpu.matmul %41, %38, %cst_30 {dimension_numbers = #tpu.dot_dimension_numbers<[1], [0], [0], [1], [0, 0, 1, 1], [], []>} : vector<8x16xf32>, vector<16x8xf32>, vector<8x8xf32> -> vector<8x8xf32>
    %c0_31 = arith.constant 0 : index
    %c0_32 = arith.constant 0 : index
    %43 = vector.load %arg8[%c0_31, %c0_32] : memref<16x8xf32, #tpu.memory_space<vmem>>, vector<8x8xf32>
    %cst_33 = arith.constant dense<0.000000e+00> : vector<8x8xf32>
    %44 = tpu.matmul %42, %43, %cst_33 {dimension_numbers = #tpu.dot_dimension_numbers<[1], [0], [0], [1], [0, 0, 1, 1], [], []>} : vector<8x8xf32>, vector<8x8xf32>, vector<8x8xf32> -> vector<8x8xf32>
    %45 = vector.broadcast %39 : vector<1x8xf32> to vector<8x8xf32>
    %46 = arith.addf %45, %44 : vector<8x8xf32>
    %c1 = arith.constant 1 : index
    %c0_34 = arith.constant 0 : index
    %c0_35 = arith.constant 0 : index
    %47 = vector.load %arg7[%c1, %c0_34, %c0_35] : memref<2x8x16xf32, #tpu.memory_space<vmem>>, vector<1x8x16xf32>
    %48 = vector.shape_cast %47 : vector<1x8x16xf32> to vector<8x16xf32>
    %cst_36 = arith.constant dense<0.000000e+00> : vector<8x8xf32>
    %49 = tpu.matmul %48, %38, %cst_36 {dimension_numbers = #tpu.dot_dimension_numbers<[1], [0], [0], [1], [0, 0, 1, 1], [], []>} : vector<8x16xf32>, vector<16x8xf32>, vector<8x8xf32> -> vector<8x8xf32>
    %c8 = arith.constant 8 : index
    %c0_37 = arith.constant 0 : index
    %50 = vector.load %arg8[%c8, %c0_37] : memref<16x8xf32, #tpu.memory_space<vmem>>, vector<8x8xf32>
    %cst_38 = arith.constant dense<0.000000e+00> : vector<8x8xf32>
    %51 = tpu.matmul %49, %50, %cst_38 {dimension_numbers = #tpu.dot_dimension_numbers<[1], [0], [0], [1], [0, 0, 1, 1], [], []>} : vector<8x8xf32>, vector<8x8xf32>, vector<8x8xf32> -> vector<8x8xf32>
    %52 = arith.addf %46, %51 : vector<8x8xf32>
    %cst_39 = arith.constant 0.000000e+00 : f32
    %53 = vector.broadcast %cst_39 : f32 to vector<8x8xf32>
    %54 = arith.cmpf ogt, %52, %53 : vector<8x8xf32>
    %55 = math.exp %52 : vector<8x8xf32>
    %cst_40 = arith.constant 1.000000e+00 : f32
    %56 = vector.broadcast %cst_40 : f32 to vector<8x8xf32>
    %57 = arith.subf %55, %56 : vector<8x8xf32>
    %58 = arith.select %54, %52, %57 : vector<8x8xi1>, vector<8x8xf32>
    %c0_41 = arith.constant 0 : index
    %c0_42 = arith.constant 0 : index
    %59 = vector.load %arg13[%c0_41, %c0_42] : memref<8x32xf32, #tpu.memory_space<vmem>>, vector<8x32xf32>
    %cst_43 = arith.constant dense<0.000000e+00> : vector<8x32xf32>
    %60 = tpu.matmul %58, %59, %cst_43 {dimension_numbers = #tpu.dot_dimension_numbers<[1], [0], [0], [1], [0, 0, 1, 1], [], []>} : vector<8x8xf32>, vector<8x32xf32>, vector<8x32xf32> -> vector<8x32xf32>
    %c0_44 = arith.constant 0 : index
    %c0_45 = arith.constant 0 : index
    %61 = vector.load %arg14[%c0_44, %c0_45] : memref<1x32xf32, #tpu.memory_space<vmem>>, vector<1x32xf32>
    %62 = vector.broadcast %61 : vector<1x32xf32> to vector<8x32xf32>
    %63 = arith.addf %60, %62 : vector<8x32xf32>
    %cst_46 = arith.constant dense<0.000000e+00> : vector<8xf32>
    %64 = vector.multi_reduction <add>, %63, %cst_46 [1] : vector<8x32xf32> to vector<8xf32>
    %65 = vector.shape_cast %64 : vector<8xf32> to vector<8x1xf32>
    %cst_47 = arith.constant 3.200000e+01 : f32
    %66 = vector.broadcast %cst_47 : f32 to vector<8x1xf32>
    %67 = arith.divf %65, %66 : vector<8x1xf32>
    %68 = vector.broadcast %67 : vector<8x1xf32> to vector<8x32xf32>
    %69 = arith.subf %63, %68 : vector<8x32xf32>
    %70 = arith.mulf %69, %69 : vector<8x32xf32>
    %cst_48 = arith.constant dense<0.000000e+00> : vector<8xf32>
    %71 = vector.multi_reduction <add>, %70, %cst_48 [1] : vector<8x32xf32> to vector<8xf32>
    %72 = vector.shape_cast %71 : vector<8xf32> to vector<8x1xf32>
    %cst_49 = arith.constant 3.200000e+01 : f32
    %73 = vector.broadcast %cst_49 : f32 to vector<8x1xf32>
    %74 = arith.divf %72, %73 : vector<8x1xf32>
    %cst_50 = arith.constant 9.99999974E-6 : f32
    %75 = vector.broadcast %cst_50 : f32 to vector<8x1xf32>
    %76 = arith.addf %74, %75 : vector<8x1xf32>
    %77 = math.rsqrt %76 : vector<8x1xf32>
    %78 = vector.broadcast %77 : vector<8x1xf32> to vector<8x32xf32>
    %79 = arith.mulf %69, %78 : vector<8x32xf32>
    %80 = vector.broadcast %0 : vector<1x32xf32> to vector<8x32xf32>
    %81 = arith.mulf %79, %80 : vector<8x32xf32>
    %82 = vector.broadcast %1 : vector<1x32xf32> to vector<8x32xf32>
    %83 = arith.addf %81, %82 : vector<8x32xf32>
    %c0_51 = arith.constant 0 : index
    %c16 = arith.constant 16 : index
    %c0_52 = arith.constant 0 : index
    %84 = vector.load %arg17[%c0_51, %c16, %c0_52] : memref<1x28x32xf32, #tpu.memory_space<vmem>>, vector<1x8x32xf32>
    %85 = vector.shape_cast %84 : vector<1x8x32xf32> to vector<8x32xf32>
    %86 = vector.shape_cast %83 : vector<8x32xf32> to vector<1x8x32xf32>
    tpu.vector_store %arg17[%c0_51, %c16, %c0_52], %86 {strides = array<i32>} : memref<1x28x32xf32, #tpu.memory_space<vmem>>, vector<1x8x32xf32>,
    %c0_53 = arith.constant 0 : index
    %c0_54 = arith.constant 0 : index
    %87 = vector.load %arg12[%c0_53, %c0_54] : memref<1x8xf32, #tpu.memory_space<vmem>>, vector<1x8xf32>
    %c0_55 = arith.constant 0 : index
    %c0_56 = arith.constant 0 : index
    %c0_57 = arith.constant 0 : index
    %88 = vector.load %arg10[%c0_55, %c0_56, %c0_57] : memref<2x4x8xf32, #tpu.memory_space<vmem>>, vector<1x4x8xf32>
    %89 = vector.shape_cast %88 : vector<1x4x8xf32> to vector<4x8xf32>
    %cst_58 = arith.constant dense<0.000000e+00> : vector<4x8xf32>
    %90 = tpu.matmul %89, %58, %cst_58 {dimension_numbers = #tpu.dot_dimension_numbers<[1], [0], [0], [1], [0, 0, 1, 1], [], []>} : vector<4x8xf32>, vector<8x8xf32>, vector<4x8xf32> -> vector<4x8xf32>
    %c0_59 = arith.constant 0 : index
    %c0_60 = arith.constant 0 : index
    %91 = vector.load %arg11[%c0_59, %c0_60] : memref<16x8xf32, #tpu.memory_space<vmem>>, vector<8x8xf32>
    %cst_61 = arith.constant dense<0.000000e+00> : vector<4x8xf32>
    %92 = tpu.matmul %90, %91, %cst_61 {dimension_numbers = #tpu.dot_dimension_numbers<[1], [0], [0], [1], [0, 0, 1, 1], [], []>} : vector<4x8xf32>, vector<8x8xf32>, vector<4x8xf32> -> vector<4x8xf32>
    %93 = vector.broadcast %87 : vector<1x8xf32> to vector<4x8xf32>
    %94 = arith.addf %93, %92 : vector<4x8xf32>
    %c1_62 = arith.constant 1 : index
    %c0_63 = arith.constant 0 : index
    %c0_64 = arith.constant 0 : index
    %95 = vector.load %arg10[%c1_62, %c0_63, %c0_64] : memref<2x4x8xf32, #tpu.memory_space<vmem>>, vector<1x4x8xf32>
    %96 = vector.shape_cast %95 : vector<1x4x8xf32> to vector<4x8xf32>
    %cst_65 = arith.constant dense<0.000000e+00> : vector<4x8xf32>
    %97 = tpu.matmul %96, %58, %cst_65 {dimension_numbers = #tpu.dot_dimension_numbers<[1], [0], [0], [1], [0, 0, 1, 1], [], []>} : vector<4x8xf32>, vector<8x8xf32>, vector<4x8xf32> -> vector<4x8xf32>
    %c8_66 = arith.constant 8 : index
    %c0_67 = arith.constant 0 : index
    %98 = vector.load %arg11[%c8_66, %c0_67] : memref<16x8xf32, #tpu.memory_space<vmem>>, vector<8x8xf32>
    %cst_68 = arith.constant dense<0.000000e+00> : vector<4x8xf32>
    %99 = tpu.matmul %97, %98, %cst_68 {dimension_numbers = #tpu.dot_dimension_numbers<[1], [0], [0], [1], [0, 0, 1, 1], [], []>} : vector<4x8xf32>, vector<8x8xf32>, vector<4x8xf32> -> vector<4x8xf32>
    %100 = arith.addf %94, %99 : vector<4x8xf32>
    %cst_69 = arith.constant 0.000000e+00 : f32
    %101 = vector.broadcast %cst_69 : f32 to vector<4x8xf32>
    %102 = arith.cmpf ogt, %100, %101 : vector<4x8xf32>
    %103 = math.exp %100 : vector<4x8xf32>
    %cst_70 = arith.constant 1.000000e+00 : f32
    %104 = vector.broadcast %cst_70 : f32 to vector<4x8xf32>
    %105 = arith.subf %103, %104 : vector<4x8xf32>
    %106 = arith.select %102, %100, %105 : vector<4x8xi1>, vector<4x8xf32>
    %c0_71 = arith.constant 0 : index
    %c0_72 = arith.constant 0 : index
    %107 = vector.load %arg13[%c0_71, %c0_72] : memref<8x32xf32, #tpu.memory_space<vmem>>, vector<8x32xf32>
    %cst_73 = arith.constant dense<0.000000e+00> : vector<4x32xf32>
    %108 = tpu.matmul %106, %107, %cst_73 {dimension_numbers = #tpu.dot_dimension_numbers<[1], [0], [0], [1], [0, 0, 1, 1], [], []>} : vector<4x8xf32>, vector<8x32xf32>, vector<4x32xf32> -> vector<4x32xf32>
    %c0_74 = arith.constant 0 : index
    %c0_75 = arith.constant 0 : index
    %109 = vector.load %arg14[%c0_74, %c0_75] : memref<1x32xf32, #tpu.memory_space<vmem>>, vector<1x32xf32>
    %110 = vector.broadcast %109 : vector<1x32xf32> to vector<4x32xf32>
    %111 = arith.addf %108, %110 : vector<4x32xf32>
    %cst_76 = arith.constant dense<0.000000e+00> : vector<4xf32>
    %112 = vector.multi_reduction <add>, %111, %cst_76 [1] : vector<4x32xf32> to vector<4xf32>
    %113 = vector.shape_cast %112 : vector<4xf32> to vector<4x1xf32>
    %cst_77 = arith.constant 3.200000e+01 : f32
    %114 = vector.broadcast %cst_77 : f32 to vector<4x1xf32>
    %115 = arith.divf %113, %114 : vector<4x1xf32>
    %116 = vector.broadcast %115 : vector<4x1xf32> to vector<4x32xf32>
    %117 = arith.subf %111, %116 : vector<4x32xf32>
    %118 = arith.mulf %117, %117 : vector<4x32xf32>
    %cst_78 = arith.constant dense<0.000000e+00> : vector<4xf32>
    %119 = vector.multi_reduction <add>, %118, %cst_78 [1] : vector<4x32xf32> to vector<4xf32>
    %120 = vector.shape_cast %119 : vector<4xf32> to vector<4x1xf32>
    %cst_79 = arith.constant 3.200000e+01 : f32
    %121 = vector.broadcast %cst_79 : f32 to vector<4x1xf32>
    %122 = arith.divf %120, %121 : vector<4x1xf32>
    %cst_80 = arith.constant 9.99999974E-6 : f32
    %123 = vector.broadcast %cst_80 : f32 to vector<4x1xf32>
    %124 = arith.addf %122, %123 : vector<4x1xf32>
    %125 = math.rsqrt %124 : vector<4x1xf32>
    %126 = vector.broadcast %125 : vector<4x1xf32> to vector<4x32xf32>
    %127 = arith.mulf %117, %126 : vector<4x32xf32>
    %128 = vector.broadcast %0 : vector<1x32xf32> to vector<4x32xf32>
    %129 = arith.mulf %127, %128 : vector<4x32xf32>
    %130 = vector.broadcast %1 : vector<1x32xf32> to vector<4x32xf32>
    %131 = arith.addf %129, %130 : vector<4x32xf32>
    %c0_81 = arith.constant 0 : index
    %c24 = arith.constant 24 : index
    %c0_82 = arith.constant 0 : index
    %132 = vector.load %arg17[%c0_81, %c24, %c0_82] : memref<1x28x32xf32, #tpu.memory_space<vmem>>, vector<1x4x32xf32>
    %133 = vector.shape_cast %132 : vector<1x4x32xf32> to vector<4x32xf32>
    %134 = vector.shape_cast %131 : vector<4x32xf32> to vector<1x4x32xf32>
    tpu.vector_store %arg17[%c0_81, %c24, %c0_82], %134 {strides = array<i32>} : memref<1x28x32xf32, #tpu.memory_space<vmem>>, vector<1x4x32xf32>,
    return
  }
  func.func @transform_0(%arg0: i32) -> (i32, i32, i32) {
    %c0_i32 = arith.constant 0 : i32
    %c0_i32_0 = arith.constant 0 : i32
    %c0_i32_1 = arith.constant 0 : i32
    return %arg0, %c0_i32, %c0_i32_0 : i32, i32, i32
  }
  func.func @transform_1(%arg0: i32) -> (i32, i32) {
    %c0_i32 = arith.constant 0 : i32
    %c0_i32_0 = arith.constant 0 : i32
    %c0_i32_1 = arith.constant 0 : i32
    return %c0_i32, %c0_i32_0 : i32, i32
  }
  func.func @transform_2(%arg0: i32) -> (i32, i32) {
    %c0_i32 = arith.constant 0 : i32
    %c0_i32_0 = arith.constant 0 : i32
    %c0_i32_1 = arith.constant 0 : i32
    return %c0_i32, %c0_i32_0 : i32, i32
  }
  func.func @transform_3(%arg0: i32) -> (i32, i32) {
    %c0_i32 = arith.constant 0 : i32
    %c0_i32_0 = arith.constant 0 : i32
    %c0_i32_1 = arith.constant 0 : i32
    return %c0_i32, %c0_i32_0 : i32, i32
  }
  func.func @transform_4(%arg0: i32) -> (i32, i32) {
    %c0_i32 = arith.constant 0 : i32
    %c0_i32_0 = arith.constant 0 : i32
    %c0_i32_1 = arith.constant 0 : i32
    return %c0_i32, %c0_i32_0 : i32, i32
  }
  func.func @transform_5(%arg0: i32) -> (i32, i32) {
    %c0_i32 = arith.constant 0 : i32
    %c0_i32_0 = arith.constant 0 : i32
    %c0_i32_1 = arith.constant 0 : i32
    return %c0_i32, %c0_i32_0 : i32, i32
  }
  func.func @transform_6(%arg0: i32) -> (i32, i32, i32) {
    %c0_i32 = arith.constant 0 : i32
    %c0_i32_0 = arith.constant 0 : i32
    %c0_i32_1 = arith.constant 0 : i32
    %c0_i32_2 = arith.constant 0 : i32
    return %c0_i32, %c0_i32_0, %c0_i32_1 : i32, i32, i32
  }
  func.func @transform_7(%arg0: i32) -> (i32, i32) {
    %c0_i32 = arith.constant 0 : i32
    %c0_i32_0 = arith.constant 0 : i32
    %c0_i32_1 = arith.constant 0 : i32
    return %c0_i32, %c0_i32_0 : i32, i32
  }
  func.func @transform_8(%arg0: i32) -> (i32, i32) {
    %c0_i32 = arith.constant 0 : i32
    %c0_i32_0 = arith.constant 0 : i32
    %c0_i32_1 = arith.constant 0 : i32
    return %c0_i32, %c0_i32_0 : i32, i32
  }
  func.func @transform_9(%arg0: i32) -> (i32, i32, i32) {
    %c0_i32 = arith.constant 0 : i32
    %c0_i32_0 = arith.constant 0 : i32
    %c0_i32_1 = arith.constant 0 : i32
    %c0_i32_2 = arith.constant 0 : i32
    return %c0_i32, %c0_i32_0, %c0_i32_1 : i32, i32, i32
  }
  func.func @transform_10(%arg0: i32) -> (i32, i32) {
    %c0_i32 = arith.constant 0 : i32
    %c0_i32_0 = arith.constant 0 : i32
    %c0_i32_1 = arith.constant 0 : i32
    return %c0_i32, %c0_i32_0 : i32, i32
  }
  func.func @transform_11(%arg0: i32) -> (i32, i32) {
    %c0_i32 = arith.constant 0 : i32
    %c0_i32_0 = arith.constant 0 : i32
    %c0_i32_1 = arith.constant 0 : i32
    return %c0_i32, %c0_i32_0 : i32, i32
  }
  func.func @transform_12(%arg0: i32) -> (i32, i32) {
    %c0_i32 = arith.constant 0 : i32
    %c0_i32_0 = arith.constant 0 : i32
    %c0_i32_1 = arith.constant 0 : i32
    return %c0_i32, %c0_i32_0 : i32, i32
  }
  func.func @transform_13(%arg0: i32) -> (i32, i32) {
    %c0_i32 = arith.constant 0 : i32
    %c0_i32_0 = arith.constant 0 : i32
    %c0_i32_1 = arith.constant 0 : i32
    return %c0_i32, %c0_i32_0 : i32, i32
  }
  func.func @transform_14(%arg0: i32) -> (i32, i32) {
    %c0_i32 = arith.constant 0 : i32
    %c0_i32_0 = arith.constant 0 : i32
    %c0_i32_1 = arith.constant 0 : i32
    return %c0_i32, %c0_i32_0 : i32, i32
  }
  func.func @transform_15(%arg0: i32) -> (i32, i32) {
    %c0_i32 = arith.constant 0 : i32
    %c0_i32_0 = arith.constant 0 : i32
    %c0_i32_1 = arith.constant 0 : i32
    return %c0_i32, %c0_i32_0 : i32, i32
  }
  func.func @transform_16(%arg0: i32) -> (i32, i32, i32) {
    %c0_i32 = arith.constant 0 : i32
    %c0_i32_0 = arith.constant 0 : i32
    %c0_i32_1 = arith.constant 0 : i32
    return %arg0, %c0_i32, %c0_i32_0 : i32, i32, i32
  }
}

module attributes {stable_mosaic.version = 11 : i64} {
  func.func @_enc_stack_kernel(%arg0: i32, %arg1: i32, %arg2: memref<1x28x32xf32, #tpu.memory_space<vmem>>, %arg3: memref<1x28x28xf32, #tpu.memory_space<vmem>>, %arg4: memref<1x32x16xf32, #tpu.memory_space<vmem>>, %arg5: memref<1x32x32xf32, #tpu.memory_space<vmem>>, %arg6: memref<1x16x32xf32, #tpu.memory_space<vmem>>, %arg7: memref<1x1x32xf32, #tpu.memory_space<vmem>>, %arg8: memref<1x1x32xf32, #tpu.memory_space<vmem>>, %arg9: memref<1x1x32xf32, #tpu.memory_space<vmem>>, %arg10: memref<1x32x16xf32, #tpu.memory_space<vmem>>, %arg11: memref<1x1x16xf32, #tpu.memory_space<vmem>>, %arg12: memref<1x16x32xf32, #tpu.memory_space<vmem>>, %arg13: memref<1x1x32xf32, #tpu.memory_space<vmem>>, %arg14: memref<1x1x32xf32, #tpu.memory_space<vmem>>, %arg15: memref<1x1x32xf32, #tpu.memory_space<vmem>>, %arg16: memref<1x28x32xf32, #tpu.memory_space<vmem>>) attributes {dimension_semantics = [#tpu.dimension_semantics<parallel>, #tpu.dimension_semantics<arbitrary>], iteration_bounds = array<i64: 2, 2>, scalar_prefetch = 0 : i64, scratch_operands = 0 : i64, tpu.core_type = #tpu.core_type<tc>, window_params = [{transform_indices = @transform_0, window_bounds = array<i64: 1, 28, 32>}, {pipeline_mode = #tpu.pipeline_mode<synchronous>, transform_indices = @transform_1, window_bounds = array<i64: 1, 28, 28>}, {transform_indices = @transform_2, window_bounds = array<i64: 1, 32, 16>}, {transform_indices = @transform_3, window_bounds = array<i64: 1, 32, 32>}, {transform_indices = @transform_4, window_bounds = array<i64: 1, 16, 32>}, {transform_indices = @transform_5, window_bounds = array<i64: 1, 1, 32>}, {transform_indices = @transform_6, window_bounds = array<i64: 1, 1, 32>}, {transform_indices = @transform_7, window_bounds = array<i64: 1, 1, 32>}, {transform_indices = @transform_8, window_bounds = array<i64: 1, 32, 16>}, {transform_indices = @transform_9, window_bounds = array<i64: 1, 1, 16>}, {transform_indices = @transform_10, window_bounds = array<i64: 1, 16, 32>}, {transform_indices = @transform_11, window_bounds = array<i64: 1, 1, 32>}, {transform_indices = @transform_12, window_bounds = array<i64: 1, 1, 32>}, {transform_indices = @transform_13, window_bounds = array<i64: 1, 1, 32>}, {transform_indices = @transform_14, window_bounds = array<i64: 1, 28, 32>}]} {
    %c0_i32 = arith.constant 0 : i32
    %0 = arith.cmpi eq, %arg1, %c0_i32 : i32
    %1 = arith.extui %0 : i1 to i32
    %c0_i32_0 = arith.constant 0 : i32
    %2 = arith.cmpi ne, %1, %c0_i32_0 : i32
    scf.if %2 {
      %c0_72 = arith.constant 0 : index
      %c0_73 = arith.constant 0 : index
      %c0_74 = arith.constant 0 : index
      %134 = vector.load %arg2[%c0_72, %c0_73, %c0_74] : memref<1x28x32xf32, #tpu.memory_space<vmem>>, vector<1x28x32xf32>
      %c0_75 = arith.constant 0 : index
      %c0_76 = arith.constant 0 : index
      %c0_77 = arith.constant 0 : index
      %135 = vector.load %arg16[%c0_75, %c0_76, %c0_77] : memref<1x28x32xf32, #tpu.memory_space<vmem>>, vector<1x28x32xf32>
      tpu.vector_store %arg16[%c0_75, %c0_76, %c0_77], %134 {strides = array<i32>} : memref<1x28x32xf32, #tpu.memory_space<vmem>>, vector<1x28x32xf32>,
    } else {
    }
    %c0 = arith.constant 0 : index
    %c0_1 = arith.constant 0 : index
    %c0_2 = arith.constant 0 : index
    %3 = vector.load %arg16[%c0, %c0_1, %c0_2] : memref<1x28x32xf32, #tpu.memory_space<vmem>>, vector<1x28x32xf32>
    %4 = vector.shape_cast %3 : vector<1x28x32xf32> to vector<28x32xf32>
    %c0_3 = arith.constant 0 : index
    %c0_4 = arith.constant 0 : index
    %c0_5 = arith.constant 0 : index
    %5 = vector.load %arg3[%c0_3, %c0_4, %c0_5] : memref<1x28x28xf32, #tpu.memory_space<vmem>>, vector<1x28x28xf32>
    %6 = vector.shape_cast %5 : vector<1x28x28xf32> to vector<28x28xf32>
    %c0_6 = arith.constant 0 : index
    %c0_7 = arith.constant 0 : index
    %c0_8 = arith.constant 0 : index
    %7 = vector.load %arg4[%c0_6, %c0_7, %c0_8] : memref<1x32x16xf32, #tpu.memory_space<vmem>>, vector<1x32x16xf32>
    %8 = vector.shape_cast %7 : vector<1x32x16xf32> to vector<32x16xf32>
    %c0_9 = arith.constant 0 : index
    %c0_10 = arith.constant 0 : index
    %c0_11 = arith.constant 0 : index
    %9 = vector.load %arg5[%c0_9, %c0_10, %c0_11] : memref<1x32x32xf32, #tpu.memory_space<vmem>>, vector<1x32x32xf32>
    %10 = vector.shape_cast %9 : vector<1x32x32xf32> to vector<32x32xf32>
    %c0_12 = arith.constant 0 : index
    %c0_13 = arith.constant 0 : index
    %c0_14 = arith.constant 0 : index
    %11 = vector.load %arg6[%c0_12, %c0_13, %c0_14] : memref<1x16x32xf32, #tpu.memory_space<vmem>>, vector<1x16x32xf32>
    %12 = vector.shape_cast %11 : vector<1x16x32xf32> to vector<16x32xf32>
    %c0_15 = arith.constant 0 : index
    %c0_16 = arith.constant 0 : index
    %c0_17 = arith.constant 0 : index
    %13 = vector.load %arg7[%c0_15, %c0_16, %c0_17] : memref<1x1x32xf32, #tpu.memory_space<vmem>>, vector<1x1x32xf32>
    %14 = vector.shape_cast %13 : vector<1x1x32xf32> to vector<1x32xf32>
    %cst = arith.constant dense<0.000000e+00> : vector<28x16xf32>
    %15 = tpu.matmul %4, %8, %cst {dimension_numbers = #tpu.dot_dimension_numbers<[1], [0], [0], [1], [0, 0, 1, 1], [], []>} : vector<28x32xf32>, vector<32x16xf32>, vector<28x16xf32> -> vector<28x16xf32>
    %cst_18 = arith.constant dense<0.000000e+00> : vector<28x32xf32>
    %16 = tpu.matmul %4, %10, %cst_18 {dimension_numbers = #tpu.dot_dimension_numbers<[1], [0], [0], [1], [0, 0, 1, 1], [], []>} : vector<28x32xf32>, vector<32x32xf32>, vector<28x32xf32> -> vector<28x32xf32>
    %17 = vector.broadcast %14 : vector<1x32xf32> to vector<28x32xf32>
    %18 = arith.addf %4, %17 : vector<28x32xf32>
    %19 = vector.extract_strided_slice %15 {offsets = [0, 0], sizes = [28, 8], strides = [1, 1]} : vector<28x16xf32> to vector<28x8xf32>
    %20 = vector.extract_strided_slice %16 {offsets = [0, 0], sizes = [28, 8], strides = [1, 1]} : vector<28x32xf32> to vector<28x8xf32>
    %21 = vector.extract_strided_slice %16 {offsets = [0, 16], sizes = [28, 8], strides = [1, 1]} : vector<28x32xf32> to vector<28x8xf32>
    %cst_19 = arith.constant dense<0.000000e+00> : vector<28x28xf32>
    %22 = tpu.matmul %19, %20, %cst_19 {dimension_numbers = #tpu.dot_dimension_numbers<[1], [1], [0], [0], [0, 0, 1, 0], [], []>} : vector<28x8xf32>, vector<28x8xf32>, vector<28x28xf32> -> vector<28x28xf32>
    %23 = arith.addf %22, %6 : vector<28x28xf32>
    %cst_20 = arith.constant dense<0xFF800000> : vector<28xf32>
    %24 = vector.multi_reduction <maximumf>, %23, %cst_20 [1] : vector<28x28xf32> to vector<28xf32>
    %25 = vector.shape_cast %24 : vector<28xf32> to vector<28x1xf32>
    %26 = vector.broadcast %25 : vector<28x1xf32> to vector<28x28xf32>
    %27 = arith.subf %23, %26 : vector<28x28xf32>
    %28 = math.exp %27 : vector<28x28xf32>
    %cst_21 = arith.constant dense<0.000000e+00> : vector<28xf32>
    %29 = vector.multi_reduction <add>, %28, %cst_21 [1] : vector<28x28xf32> to vector<28xf32>
    %30 = vector.shape_cast %29 : vector<28xf32> to vector<28x1xf32>
    %31 = vector.broadcast %30 : vector<28x1xf32> to vector<28x28xf32>
    %32 = arith.divf %28, %31 : vector<28x28xf32>
    %cst_22 = arith.constant dense<0.000000e+00> : vector<28x8xf32>
    %33 = tpu.matmul %32, %21, %cst_22 {dimension_numbers = #tpu.dot_dimension_numbers<[1], [0], [0], [1], [0, 0, 1, 1], [], []>} : vector<28x28xf32>, vector<28x8xf32>, vector<28x8xf32> -> vector<28x8xf32>
    %34 = vector.extract_strided_slice %12 {offsets = [0, 0], sizes = [8, 32], strides = [1, 1]} : vector<16x32xf32> to vector<8x32xf32>
    %cst_23 = arith.constant dense<0.000000e+00> : vector<28x32xf32>
    %35 = tpu.matmul %33, %34, %cst_23 {dimension_numbers = #tpu.dot_dimension_numbers<[1], [0], [0], [1], [0, 0, 1, 1], [], []>} : vector<28x8xf32>, vector<8x32xf32>, vector<28x32xf32> -> vector<28x32xf32>
    %36 = arith.addf %18, %35 : vector<28x32xf32>
    %37 = vector.extract_strided_slice %15 {offsets = [0, 8], sizes = [28, 8], strides = [1, 1]} : vector<28x16xf32> to vector<28x8xf32>
    %38 = vector.extract_strided_slice %16 {offsets = [0, 8], sizes = [28, 8], strides = [1, 1]} : vector<28x32xf32> to vector<28x8xf32>
    %39 = vector.extract_strided_slice %16 {offsets = [0, 24], sizes = [28, 8], strides = [1, 1]} : vector<28x32xf32> to vector<28x8xf32>
    %cst_24 = arith.constant dense<0.000000e+00> : vector<28x28xf32>
    %40 = tpu.matmul %37, %38, %cst_24 {dimension_numbers = #tpu.dot_dimension_numbers<[1], [1], [0], [0], [0, 0, 1, 0], [], []>} : vector<28x8xf32>, vector<28x8xf32>, vector<28x28xf32> -> vector<28x28xf32>
    %41 = arith.addf %40, %6 : vector<28x28xf32>
    %cst_25 = arith.constant dense<0xFF800000> : vector<28xf32>
    %42 = vector.multi_reduction <maximumf>, %41, %cst_25 [1] : vector<28x28xf32> to vector<28xf32>
    %43 = vector.shape_cast %42 : vector<28xf32> to vector<28x1xf32>
    %44 = vector.broadcast %43 : vector<28x1xf32> to vector<28x28xf32>
    %45 = arith.subf %41, %44 : vector<28x28xf32>
    %46 = math.exp %45 : vector<28x28xf32>
    %cst_26 = arith.constant dense<0.000000e+00> : vector<28xf32>
    %47 = vector.multi_reduction <add>, %46, %cst_26 [1] : vector<28x28xf32> to vector<28xf32>
    %48 = vector.shape_cast %47 : vector<28xf32> to vector<28x1xf32>
    %49 = vector.broadcast %48 : vector<28x1xf32> to vector<28x28xf32>
    %50 = arith.divf %46, %49 : vector<28x28xf32>
    %cst_27 = arith.constant dense<0.000000e+00> : vector<28x8xf32>
    %51 = tpu.matmul %50, %39, %cst_27 {dimension_numbers = #tpu.dot_dimension_numbers<[1], [0], [0], [1], [0, 0, 1, 1], [], []>} : vector<28x28xf32>, vector<28x8xf32>, vector<28x8xf32> -> vector<28x8xf32>
    %52 = vector.extract_strided_slice %12 {offsets = [8, 0], sizes = [8, 32], strides = [1, 1]} : vector<16x32xf32> to vector<8x32xf32>
    %cst_28 = arith.constant dense<0.000000e+00> : vector<28x32xf32>
    %53 = tpu.matmul %51, %52, %cst_28 {dimension_numbers = #tpu.dot_dimension_numbers<[1], [0], [0], [1], [0, 0, 1, 1], [], []>} : vector<28x8xf32>, vector<8x32xf32>, vector<28x32xf32> -> vector<28x32xf32>
    %54 = arith.addf %36, %53 : vector<28x32xf32>
    %c0_29 = arith.constant 0 : index
    %c0_30 = arith.constant 0 : index
    %c0_31 = arith.constant 0 : index
    %55 = vector.load %arg8[%c0_29, %c0_30, %c0_31] : memref<1x1x32xf32, #tpu.memory_space<vmem>>, vector<1x1x32xf32>
    %56 = vector.shape_cast %55 : vector<1x1x32xf32> to vector<1x32xf32>
    %c0_32 = arith.constant 0 : index
    %c0_33 = arith.constant 0 : index
    %c0_34 = arith.constant 0 : index
    %57 = vector.load %arg9[%c0_32, %c0_33, %c0_34] : memref<1x1x32xf32, #tpu.memory_space<vmem>>, vector<1x1x32xf32>
    %58 = vector.shape_cast %57 : vector<1x1x32xf32> to vector<1x32xf32>
    %cst_35 = arith.constant dense<0.000000e+00> : vector<28xf32>
    %59 = vector.multi_reduction <add>, %54, %cst_35 [1] : vector<28x32xf32> to vector<28xf32>
    %60 = vector.shape_cast %59 : vector<28xf32> to vector<28x1xf32>
    %cst_36 = arith.constant 3.200000e+01 : f32
    %61 = vector.broadcast %cst_36 : f32 to vector<28x1xf32>
    %62 = arith.divf %60, %61 : vector<28x1xf32>
    %63 = vector.broadcast %62 : vector<28x1xf32> to vector<28x32xf32>
    %64 = arith.subf %54, %63 : vector<28x32xf32>
    %65 = arith.mulf %64, %64 : vector<28x32xf32>
    %cst_37 = arith.constant dense<0.000000e+00> : vector<28xf32>
    %66 = vector.multi_reduction <add>, %65, %cst_37 [1] : vector<28x32xf32> to vector<28xf32>
    %67 = vector.shape_cast %66 : vector<28xf32> to vector<28x1xf32>
    %cst_38 = arith.constant 3.200000e+01 : f32
    %68 = vector.broadcast %cst_38 : f32 to vector<28x1xf32>
    %69 = arith.divf %67, %68 : vector<28x1xf32>
    %cst_39 = arith.constant 9.99999997E-7 : f32
    %70 = vector.broadcast %cst_39 : f32 to vector<28x1xf32>
    %71 = arith.addf %69, %70 : vector<28x1xf32>
    %72 = math.rsqrt %71 : vector<28x1xf32>
    %73 = vector.broadcast %72 : vector<28x1xf32> to vector<28x32xf32>
    %74 = arith.mulf %64, %73 : vector<28x32xf32>
    %75 = vector.broadcast %56 : vector<1x32xf32> to vector<28x32xf32>
    %76 = arith.mulf %74, %75 : vector<28x32xf32>
    %77 = vector.broadcast %58 : vector<1x32xf32> to vector<28x32xf32>
    %78 = arith.addf %76, %77 : vector<28x32xf32>
    %c0_40 = arith.constant 0 : index
    %c0_41 = arith.constant 0 : index
    %c0_42 = arith.constant 0 : index
    %79 = vector.load %arg10[%c0_40, %c0_41, %c0_42] : memref<1x32x16xf32, #tpu.memory_space<vmem>>, vector<1x32x16xf32>
    %80 = vector.shape_cast %79 : vector<1x32x16xf32> to vector<32x16xf32>
    %cst_43 = arith.constant dense<0.000000e+00> : vector<28x16xf32>
    %81 = tpu.matmul %78, %80, %cst_43 {dimension_numbers = #tpu.dot_dimension_numbers<[1], [0], [0], [1], [0, 0, 1, 1], [], []>} : vector<28x32xf32>, vector<32x16xf32>, vector<28x16xf32> -> vector<28x16xf32>
    %c0_44 = arith.constant 0 : index
    %c0_45 = arith.constant 0 : index
    %c0_46 = arith.constant 0 : index
    %82 = vector.load %arg11[%c0_44, %c0_45, %c0_46] : memref<1x1x16xf32, #tpu.memory_space<vmem>>, vector<1x1x16xf32>
    %83 = vector.shape_cast %82 : vector<1x1x16xf32> to vector<1x16xf32>
    %84 = vector.broadcast %83 : vector<1x16xf32> to vector<28x16xf32>
    %85 = arith.addf %81, %84 : vector<28x16xf32>
    %cst_47 = arith.constant 5.000000e-01 : f32
    %86 = vector.broadcast %cst_47 : f32 to vector<28x16xf32>
    %87 = arith.mulf %86, %85 : vector<28x16xf32>
    %cst_48 = arith.constant 4.471500e-02 : f32
    %88 = vector.broadcast %cst_48 : f32 to vector<28x16xf32>
    %89 = arith.mulf %88, %85 : vector<28x16xf32>
    %90 = arith.mulf %89, %85 : vector<28x16xf32>
    %91 = arith.mulf %90, %85 : vector<28x16xf32>
    %92 = arith.addf %85, %91 : vector<28x16xf32>
    %cst_49 = arith.constant 0.797884583 : f32
    %93 = vector.broadcast %cst_49 : f32 to vector<28x16xf32>
    %94 = arith.mulf %93, %92 : vector<28x16xf32>
    %95 = math.tanh %94 : vector<28x16xf32>
    %cst_50 = arith.constant 1.000000e+00 : f32
    %96 = vector.broadcast %cst_50 : f32 to vector<28x16xf32>
    %97 = arith.addf %96, %95 : vector<28x16xf32>
    %98 = arith.mulf %87, %97 : vector<28x16xf32>
    %c0_51 = arith.constant 0 : index
    %c0_52 = arith.constant 0 : index
    %c0_53 = arith.constant 0 : index
    %99 = vector.load %arg12[%c0_51, %c0_52, %c0_53] : memref<1x16x32xf32, #tpu.memory_space<vmem>>, vector<1x16x32xf32>
    %100 = vector.shape_cast %99 : vector<1x16x32xf32> to vector<16x32xf32>
    %cst_54 = arith.constant dense<0.000000e+00> : vector<28x32xf32>
    %101 = tpu.matmul %98, %100, %cst_54 {dimension_numbers = #tpu.dot_dimension_numbers<[1], [0], [0], [1], [0, 0, 1, 1], [], []>} : vector<28x16xf32>, vector<16x32xf32>, vector<28x32xf32> -> vector<28x32xf32>
    %c0_55 = arith.constant 0 : index
    %c0_56 = arith.constant 0 : index
    %c0_57 = arith.constant 0 : index
    %102 = vector.load %arg13[%c0_55, %c0_56, %c0_57] : memref<1x1x32xf32, #tpu.memory_space<vmem>>, vector<1x1x32xf32>
    %103 = vector.shape_cast %102 : vector<1x1x32xf32> to vector<1x32xf32>
    %104 = vector.broadcast %103 : vector<1x32xf32> to vector<28x32xf32>
    %105 = arith.addf %101, %104 : vector<28x32xf32>
    %106 = arith.addf %105, %78 : vector<28x32xf32>
    %c0_58 = arith.constant 0 : index
    %c0_59 = arith.constant 0 : index
    %c0_60 = arith.constant 0 : index
    %107 = vector.load %arg14[%c0_58, %c0_59, %c0_60] : memref<1x1x32xf32, #tpu.memory_space<vmem>>, vector<1x1x32xf32>
    %108 = vector.shape_cast %107 : vector<1x1x32xf32> to vector<1x32xf32>
    %c0_61 = arith.constant 0 : index
    %c0_62 = arith.constant 0 : index
    %c0_63 = arith.constant 0 : index
    %109 = vector.load %arg15[%c0_61, %c0_62, %c0_63] : memref<1x1x32xf32, #tpu.memory_space<vmem>>, vector<1x1x32xf32>
    %110 = vector.shape_cast %109 : vector<1x1x32xf32> to vector<1x32xf32>
    %cst_64 = arith.constant dense<0.000000e+00> : vector<28xf32>
    %111 = vector.multi_reduction <add>, %106, %cst_64 [1] : vector<28x32xf32> to vector<28xf32>
    %112 = vector.shape_cast %111 : vector<28xf32> to vector<28x1xf32>
    %cst_65 = arith.constant 3.200000e+01 : f32
    %113 = vector.broadcast %cst_65 : f32 to vector<28x1xf32>
    %114 = arith.divf %112, %113 : vector<28x1xf32>
    %115 = vector.broadcast %114 : vector<28x1xf32> to vector<28x32xf32>
    %116 = arith.subf %106, %115 : vector<28x32xf32>
    %117 = arith.mulf %116, %116 : vector<28x32xf32>
    %cst_66 = arith.constant dense<0.000000e+00> : vector<28xf32>
    %118 = vector.multi_reduction <add>, %117, %cst_66 [1] : vector<28x32xf32> to vector<28xf32>
    %119 = vector.shape_cast %118 : vector<28xf32> to vector<28x1xf32>
    %cst_67 = arith.constant 3.200000e+01 : f32
    %120 = vector.broadcast %cst_67 : f32 to vector<28x1xf32>
    %121 = arith.divf %119, %120 : vector<28x1xf32>
    %cst_68 = arith.constant 9.99999997E-7 : f32
    %122 = vector.broadcast %cst_68 : f32 to vector<28x1xf32>
    %123 = arith.addf %121, %122 : vector<28x1xf32>
    %124 = math.rsqrt %123 : vector<28x1xf32>
    %125 = vector.broadcast %124 : vector<28x1xf32> to vector<28x32xf32>
    %126 = arith.mulf %116, %125 : vector<28x32xf32>
    %127 = vector.broadcast %108 : vector<1x32xf32> to vector<28x32xf32>
    %128 = arith.mulf %126, %127 : vector<28x32xf32>
    %129 = vector.broadcast %110 : vector<1x32xf32> to vector<28x32xf32>
    %130 = arith.addf %128, %129 : vector<28x32xf32>
    %c0_69 = arith.constant 0 : index
    %c0_70 = arith.constant 0 : index
    %c0_71 = arith.constant 0 : index
    %131 = vector.load %arg16[%c0_69, %c0_70, %c0_71] : memref<1x28x32xf32, #tpu.memory_space<vmem>>, vector<1x28x32xf32>
    %132 = vector.shape_cast %131 : vector<1x28x32xf32> to vector<28x32xf32>
    %133 = vector.shape_cast %130 : vector<28x32xf32> to vector<1x28x32xf32>
    tpu.vector_store %arg16[%c0_69, %c0_70, %c0_71], %133 {strides = array<i32>} : memref<1x28x32xf32, #tpu.memory_space<vmem>>, vector<1x28x32xf32>,
    return
  }
  func.func @transform_0(%arg0: i32, %arg1: i32) -> (i32, i32, i32) {
    %c0_i32 = arith.constant 0 : i32
    %c0_i32_0 = arith.constant 0 : i32
    %c0_i32_1 = arith.constant 0 : i32
    return %arg0, %c0_i32, %c0_i32_0 : i32, i32, i32
  }
  func.func @transform_1(%arg0: i32, %arg1: i32) -> (i32, i32, i32) {
    %c0_i32 = arith.constant 0 : i32
    %c0_i32_0 = arith.constant 0 : i32
    %c0_i32_1 = arith.constant 0 : i32
    %c0_i32_2 = arith.constant 0 : i32
    return %c0_i32, %c0_i32_0, %c0_i32_1 : i32, i32, i32
  }
  func.func @transform_2(%arg0: i32, %arg1: i32) -> (i32, i32, i32) {
    %c0_i32 = arith.constant 0 : i32
    %c0_i32_0 = arith.constant 0 : i32
    %c0_i32_1 = arith.constant 0 : i32
    return %arg1, %c0_i32, %c0_i32_0 : i32, i32, i32
  }
  func.func @transform_3(%arg0: i32, %arg1: i32) -> (i32, i32, i32) {
    %c0_i32 = arith.constant 0 : i32
    %c0_i32_0 = arith.constant 0 : i32
    %c0_i32_1 = arith.constant 0 : i32
    return %arg1, %c0_i32, %c0_i32_0 : i32, i32, i32
  }
  func.func @transform_4(%arg0: i32, %arg1: i32) -> (i32, i32, i32) {
    %c0_i32 = arith.constant 0 : i32
    %c0_i32_0 = arith.constant 0 : i32
    %c0_i32_1 = arith.constant 0 : i32
    return %arg1, %c0_i32, %c0_i32_0 : i32, i32, i32
  }
  func.func @transform_5(%arg0: i32, %arg1: i32) -> (i32, i32, i32) {
    %c0_i32 = arith.constant 0 : i32
    %c0_i32_0 = arith.constant 0 : i32
    %c0_i32_1 = arith.constant 0 : i32
    return %arg1, %c0_i32, %c0_i32_0 : i32, i32, i32
  }
  func.func @transform_6(%arg0: i32, %arg1: i32) -> (i32, i32, i32) {
    %c0_i32 = arith.constant 0 : i32
    %c0_i32_0 = arith.constant 0 : i32
    %c0_i32_1 = arith.constant 0 : i32
    return %arg1, %c0_i32, %c0_i32_0 : i32, i32, i32
  }
  func.func @transform_7(%arg0: i32, %arg1: i32) -> (i32, i32, i32) {
    %c0_i32 = arith.constant 0 : i32
    %c0_i32_0 = arith.constant 0 : i32
    %c0_i32_1 = arith.constant 0 : i32
    return %arg1, %c0_i32, %c0_i32_0 : i32, i32, i32
  }
  func.func @transform_8(%arg0: i32, %arg1: i32) -> (i32, i32, i32) {
    %c0_i32 = arith.constant 0 : i32
    %c0_i32_0 = arith.constant 0 : i32
    %c0_i32_1 = arith.constant 0 : i32
    return %arg1, %c0_i32, %c0_i32_0 : i32, i32, i32
  }
  func.func @transform_9(%arg0: i32, %arg1: i32) -> (i32, i32, i32) {
    %c0_i32 = arith.constant 0 : i32
    %c0_i32_0 = arith.constant 0 : i32
    %c0_i32_1 = arith.constant 0 : i32
    return %arg1, %c0_i32, %c0_i32_0 : i32, i32, i32
  }
  func.func @transform_10(%arg0: i32, %arg1: i32) -> (i32, i32, i32) {
    %c0_i32 = arith.constant 0 : i32
    %c0_i32_0 = arith.constant 0 : i32
    %c0_i32_1 = arith.constant 0 : i32
    return %arg1, %c0_i32, %c0_i32_0 : i32, i32, i32
  }
  func.func @transform_11(%arg0: i32, %arg1: i32) -> (i32, i32, i32) {
    %c0_i32 = arith.constant 0 : i32
    %c0_i32_0 = arith.constant 0 : i32
    %c0_i32_1 = arith.constant 0 : i32
    return %arg1, %c0_i32, %c0_i32_0 : i32, i32, i32
  }
  func.func @transform_12(%arg0: i32, %arg1: i32) -> (i32, i32, i32) {
    %c0_i32 = arith.constant 0 : i32
    %c0_i32_0 = arith.constant 0 : i32
    %c0_i32_1 = arith.constant 0 : i32
    return %arg1, %c0_i32, %c0_i32_0 : i32, i32, i32
  }
  func.func @transform_13(%arg0: i32, %arg1: i32) -> (i32, i32, i32) {
    %c0_i32 = arith.constant 0 : i32
    %c0_i32_0 = arith.constant 0 : i32
    %c0_i32_1 = arith.constant 0 : i32
    return %arg1, %c0_i32, %c0_i32_0 : i32, i32, i32
  }
  func.func @transform_14(%arg0: i32, %arg1: i32) -> (i32, i32, i32) {
    %c0_i32 = arith.constant 0 : i32
    %c0_i32_0 = arith.constant 0 : i32
    %c0_i32_1 = arith.constant 0 : i32
    return %arg0, %c0_i32, %c0_i32_0 : i32, i32, i32
  }
}

module attributes {stable_mosaic.version = 11 : i64} {
  func.func @_decoder_kernel(%arg0: i32, %arg1: memref<1x4x16xf32, #tpu.memory_space<vmem>>, %arg2: memref<16x32xf32, #tpu.memory_space<vmem>>, %arg3: memref<1x32xf32, #tpu.memory_space<vmem>>, %arg4: memref<4x32xf32, #tpu.memory_space<vmem>>, %arg5: memref<1x28x32xf32, #tpu.memory_space<vmem>>, %arg6: memref<1x4x32xf32, #tpu.memory_space<vmem>>, %arg7: memref<32x16xf32, #tpu.memory_space<vmem>>, %arg8: memref<32x32xf32, #tpu.memory_space<vmem>>, %arg9: memref<16x32xf32, #tpu.memory_space<vmem>>, %arg10: memref<1x32xf32, #tpu.memory_space<vmem>>, %arg11: memref<1x32xf32, #tpu.memory_space<vmem>>, %arg12: memref<1x32xf32, #tpu.memory_space<vmem>>, %arg13: memref<32x16xf32, #tpu.memory_space<vmem>>, %arg14: memref<1x16xf32, #tpu.memory_space<vmem>>, %arg15: memref<16x32xf32, #tpu.memory_space<vmem>>, %arg16: memref<1x32xf32, #tpu.memory_space<vmem>>, %arg17: memref<1x32xf32, #tpu.memory_space<vmem>>, %arg18: memref<1x32xf32, #tpu.memory_space<vmem>>, %arg19: memref<32x16xf32, #tpu.memory_space<vmem>>, %arg20: memref<32x32xf32, #tpu.memory_space<vmem>>, %arg21: memref<16x32xf32, #tpu.memory_space<vmem>>, %arg22: memref<1x32xf32, #tpu.memory_space<vmem>>, %arg23: memref<1x32xf32, #tpu.memory_space<vmem>>, %arg24: memref<1x32xf32, #tpu.memory_space<vmem>>, %arg25: memref<32x16xf32, #tpu.memory_space<vmem>>, %arg26: memref<1x16xf32, #tpu.memory_space<vmem>>, %arg27: memref<16x32xf32, #tpu.memory_space<vmem>>, %arg28: memref<1x32xf32, #tpu.memory_space<vmem>>, %arg29: memref<1x32xf32, #tpu.memory_space<vmem>>, %arg30: memref<1x32xf32, #tpu.memory_space<vmem>>, %arg31: memref<32x4xf32, #tpu.memory_space<vmem>>, %arg32: memref<1x4x4xf32, #tpu.memory_space<vmem>>, %arg33: memref<32x32xf32, #tpu.memory_space<vmem>>) attributes {dimension_semantics = [#tpu.dimension_semantics<parallel>], iteration_bounds = array<i64: 2>, scalar_prefetch = 0 : i64, scratch_operands = 1 : i64, tpu.core_type = #tpu.core_type<tc>, window_params = [{transform_indices = @transform_0, window_bounds = array<i64: 1, 4, 16>}, {pipeline_mode = #tpu.pipeline_mode<synchronous>, transform_indices = @transform_1, window_bounds = array<i64: 16, 32>}, {pipeline_mode = #tpu.pipeline_mode<synchronous>, transform_indices = @transform_2, window_bounds = array<i64: 1, 32>}, {pipeline_mode = #tpu.pipeline_mode<synchronous>, transform_indices = @transform_3, window_bounds = array<i64: 4, 32>}, {transform_indices = @transform_4, window_bounds = array<i64: 1, 28, 32>}, {pipeline_mode = #tpu.pipeline_mode<synchronous>, transform_indices = @transform_5, window_bounds = array<i64: 1, 4, 32>}, {pipeline_mode = #tpu.pipeline_mode<synchronous>, transform_indices = @transform_6, window_bounds = array<i64: 32, 16>}, {pipeline_mode = #tpu.pipeline_mode<synchronous>, transform_indices = @transform_7, window_bounds = array<i64: 32, 32>}, {pipeline_mode = #tpu.pipeline_mode<synchronous>, transform_indices = @transform_8, window_bounds = array<i64: 16, 32>}, {pipeline_mode = #tpu.pipeline_mode<synchronous>, transform_indices = @transform_9, window_bounds = array<i64: 1, 32>}, {pipeline_mode = #tpu.pipeline_mode<synchronous>, transform_indices = @transform_10, window_bounds = array<i64: 1, 32>}, {pipeline_mode = #tpu.pipeline_mode<synchronous>, transform_indices = @transform_11, window_bounds = array<i64: 1, 32>}, {pipeline_mode = #tpu.pipeline_mode<synchronous>, transform_indices = @transform_12, window_bounds = array<i64: 32, 16>}, {pipeline_mode = #tpu.pipeline_mode<synchronous>, transform_indices = @transform_13, window_bounds = array<i64: 1, 16>}, {pipeline_mode = #tpu.pipeline_mode<synchronous>, transform_indices = @transform_14, window_bounds = array<i64: 16, 32>}, {pipeline_mode = #tpu.pipeline_mode<synchronous>, transform_indices = @transform_15, window_bounds = array<i64: 1, 32>}, {pipeline_mode = #tpu.pipeline_mode<synchronous>, transform_indices = @transform_16, window_bounds = array<i64: 1, 32>}, {pipeline_mode = #tpu.pipeline_mode<synchronous>, transform_indices = @transform_17, window_bounds = array<i64: 1, 32>}, {pipeline_mode = #tpu.pipeline_mode<synchronous>, transform_indices = @transform_18, window_bounds = array<i64: 32, 16>}, {pipeline_mode = #tpu.pipeline_mode<synchronous>, transform_indices = @transform_19, window_bounds = array<i64: 32, 32>}, {pipeline_mode = #tpu.pipeline_mode<synchronous>, transform_indices = @transform_20, window_bounds = array<i64: 16, 32>}, {pipeline_mode = #tpu.pipeline_mode<synchronous>, transform_indices = @transform_21, window_bounds = array<i64: 1, 32>}, {pipeline_mode = #tpu.pipeline_mode<synchronous>, transform_indices = @transform_22, window_bounds = array<i64: 1, 32>}, {pipeline_mode = #tpu.pipeline_mode<synchronous>, transform_indices = @transform_23, window_bounds = array<i64: 1, 32>}, {pipeline_mode = #tpu.pipeline_mode<synchronous>, transform_indices = @transform_24, window_bounds = array<i64: 32, 16>}, {pipeline_mode = #tpu.pipeline_mode<synchronous>, transform_indices = @transform_25, window_bounds = array<i64: 1, 16>}, {pipeline_mode = #tpu.pipeline_mode<synchronous>, transform_indices = @transform_26, window_bounds = array<i64: 16, 32>}, {pipeline_mode = #tpu.pipeline_mode<synchronous>, transform_indices = @transform_27, window_bounds = array<i64: 1, 32>}, {pipeline_mode = #tpu.pipeline_mode<synchronous>, transform_indices = @transform_28, window_bounds = array<i64: 1, 32>}, {pipeline_mode = #tpu.pipeline_mode<synchronous>, transform_indices = @transform_29, window_bounds = array<i64: 1, 32>}, {pipeline_mode = #tpu.pipeline_mode<synchronous>, transform_indices = @transform_30, window_bounds = array<i64: 32, 4>}, {transform_indices = @transform_31, window_bounds = array<i64: 1, 4, 4>}]} {
    %c0 = arith.constant 0 : index
    %c0_0 = arith.constant 0 : index
    %c0_1 = arith.constant 0 : index
    %0 = vector.load %arg1[%c0, %c0_0, %c0_1] : memref<1x4x16xf32, #tpu.memory_space<vmem>>, vector<1x4x16xf32>
    %1 = vector.shape_cast %0 : vector<1x4x16xf32> to vector<4x16xf32>
    %c0_2 = arith.constant 0 : index
    %c0_3 = arith.constant 0 : index
    %2 = vector.load %arg2[%c0_2, %c0_3] : memref<16x32xf32, #tpu.memory_space<vmem>>, vector<16x32xf32>
    %cst = arith.constant dense<0.000000e+00> : vector<4x32xf32>
    %3 = tpu.matmul %1, %2, %cst {dimension_numbers = #tpu.dot_dimension_numbers<[1], [0], [0], [1], [0, 0, 1, 1], [], []>} : vector<4x16xf32>, vector<16x32xf32>, vector<4x32xf32> -> vector<4x32xf32>
    %c0_4 = arith.constant 0 : index
    %c0_5 = arith.constant 0 : index
    %4 = vector.load %arg3[%c0_4, %c0_5] : memref<1x32xf32, #tpu.memory_space<vmem>>, vector<1x32xf32>
    %5 = vector.broadcast %4 : vector<1x32xf32> to vector<4x32xf32>
    %6 = arith.addf %3, %5 : vector<4x32xf32>
    %c0_6 = arith.constant 0 : index
    %c0_7 = arith.constant 0 : index
    %7 = vector.load %arg4[%c0_6, %c0_7] : memref<4x32xf32, #tpu.memory_space<vmem>>, vector<4x32xf32>
    %8 = arith.addf %6, %7 : vector<4x32xf32>
    %c0_8 = arith.constant 0 : index
    %c0_9 = arith.constant 0 : index
    %c0_10 = arith.constant 0 : index
    %9 = vector.load %arg5[%c0_8, %c0_9, %c0_10] : memref<1x28x32xf32, #tpu.memory_space<vmem>>, vector<1x28x32xf32>
    %10 = vector.shape_cast %9 : vector<1x28x32xf32> to vector<28x32xf32>
    %c0_11 = arith.constant 0 : index
    %c0_12 = arith.constant 0 : index
    %11 = vector.load %arg7[%c0_11, %c0_12] : memref<32x16xf32, #tpu.memory_space<vmem>>, vector<32x16xf32>
    %c0_13 = arith.constant 0 : index
    %c0_14 = arith.constant 0 : index
    %12 = vector.load %arg8[%c0_13, %c0_14] : memref<32x32xf32, #tpu.memory_space<vmem>>, vector<32x32xf32>
    %c0_15 = arith.constant 0 : index
    %c0_16 = arith.constant 0 : index
    %13 = vector.load %arg9[%c0_15, %c0_16] : memref<16x32xf32, #tpu.memory_space<vmem>>, vector<16x32xf32>
    %c0_17 = arith.constant 0 : index
    %c0_18 = arith.constant 0 : index
    %14 = vector.load %arg10[%c0_17, %c0_18] : memref<1x32xf32, #tpu.memory_space<vmem>>, vector<1x32xf32>
    %cst_19 = arith.constant dense<0.000000e+00> : vector<4x16xf32>
    %15 = tpu.matmul %8, %11, %cst_19 {dimension_numbers = #tpu.dot_dimension_numbers<[1], [0], [0], [1], [0, 0, 1, 1], [], []>} : vector<4x32xf32>, vector<32x16xf32>, vector<4x16xf32> -> vector<4x16xf32>
    %cst_20 = arith.constant dense<0.000000e+00> : vector<28x32xf32>
    %16 = tpu.matmul %10, %12, %cst_20 {dimension_numbers = #tpu.dot_dimension_numbers<[1], [0], [0], [1], [0, 0, 1, 1], [], []>} : vector<28x32xf32>, vector<32x32xf32>, vector<28x32xf32> -> vector<28x32xf32>
    %17 = vector.broadcast %14 : vector<1x32xf32> to vector<4x32xf32>
    %18 = arith.addf %8, %17 : vector<4x32xf32>
    %19 = vector.extract_strided_slice %15 {offsets = [0, 0], sizes = [4, 8], strides = [1, 1]} : vector<4x16xf32> to vector<4x8xf32>
    %20 = vector.extract_strided_slice %16 {offsets = [0, 0], sizes = [28, 8], strides = [1, 1]} : vector<28x32xf32> to vector<28x8xf32>
    %21 = vector.extract_strided_slice %16 {offsets = [0, 16], sizes = [28, 8], strides = [1, 1]} : vector<28x32xf32> to vector<28x8xf32>
    %cst_21 = arith.constant dense<0.000000e+00> : vector<4x28xf32>
    %22 = tpu.matmul %19, %20, %cst_21 {dimension_numbers = #tpu.dot_dimension_numbers<[1], [1], [0], [0], [0, 0, 1, 0], [], []>} : vector<4x8xf32>, vector<28x8xf32>, vector<4x28xf32> -> vector<4x28xf32>
    %cst_22 = arith.constant dense<0xFF800000> : vector<4xf32>
    %23 = vector.multi_reduction <maximumf>, %22, %cst_22 [1] : vector<4x28xf32> to vector<4xf32>
    %24 = vector.shape_cast %23 : vector<4xf32> to vector<4x1xf32>
    %25 = vector.broadcast %24 : vector<4x1xf32> to vector<4x28xf32>
    %26 = arith.subf %22, %25 : vector<4x28xf32>
    %27 = math.exp %26 : vector<4x28xf32>
    %cst_23 = arith.constant dense<0.000000e+00> : vector<4xf32>
    %28 = vector.multi_reduction <add>, %27, %cst_23 [1] : vector<4x28xf32> to vector<4xf32>
    %29 = vector.shape_cast %28 : vector<4xf32> to vector<4x1xf32>
    %30 = vector.broadcast %29 : vector<4x1xf32> to vector<4x28xf32>
    %31 = arith.divf %27, %30 : vector<4x28xf32>
    %cst_24 = arith.constant dense<0.000000e+00> : vector<4x8xf32>
    %32 = tpu.matmul %31, %21, %cst_24 {dimension_numbers = #tpu.dot_dimension_numbers<[1], [0], [0], [1], [0, 0, 1, 1], [], []>} : vector<4x28xf32>, vector<28x8xf32>, vector<4x8xf32> -> vector<4x8xf32>
    %33 = vector.extract_strided_slice %13 {offsets = [0, 0], sizes = [8, 32], strides = [1, 1]} : vector<16x32xf32> to vector<8x32xf32>
    %cst_25 = arith.constant dense<0.000000e+00> : vector<4x32xf32>
    %34 = tpu.matmul %32, %33, %cst_25 {dimension_numbers = #tpu.dot_dimension_numbers<[1], [0], [0], [1], [0, 0, 1, 1], [], []>} : vector<4x8xf32>, vector<8x32xf32>, vector<4x32xf32> -> vector<4x32xf32>
    %35 = arith.addf %18, %34 : vector<4x32xf32>
    %36 = vector.extract_strided_slice %15 {offsets = [0, 8], sizes = [4, 8], strides = [1, 1]} : vector<4x16xf32> to vector<4x8xf32>
    %37 = vector.extract_strided_slice %16 {offsets = [0, 8], sizes = [28, 8], strides = [1, 1]} : vector<28x32xf32> to vector<28x8xf32>
    %38 = vector.extract_strided_slice %16 {offsets = [0, 24], sizes = [28, 8], strides = [1, 1]} : vector<28x32xf32> to vector<28x8xf32>
    %cst_26 = arith.constant dense<0.000000e+00> : vector<4x28xf32>
    %39 = tpu.matmul %36, %37, %cst_26 {dimension_numbers = #tpu.dot_dimension_numbers<[1], [1], [0], [0], [0, 0, 1, 0], [], []>} : vector<4x8xf32>, vector<28x8xf32>, vector<4x28xf32> -> vector<4x28xf32>
    %cst_27 = arith.constant dense<0xFF800000> : vector<4xf32>
    %40 = vector.multi_reduction <maximumf>, %39, %cst_27 [1] : vector<4x28xf32> to vector<4xf32>
    %41 = vector.shape_cast %40 : vector<4xf32> to vector<4x1xf32>
    %42 = vector.broadcast %41 : vector<4x1xf32> to vector<4x28xf32>
    %43 = arith.subf %39, %42 : vector<4x28xf32>
    %44 = math.exp %43 : vector<4x28xf32>
    %cst_28 = arith.constant dense<0.000000e+00> : vector<4xf32>
    %45 = vector.multi_reduction <add>, %44, %cst_28 [1] : vector<4x28xf32> to vector<4xf32>
    %46 = vector.shape_cast %45 : vector<4xf32> to vector<4x1xf32>
    %47 = vector.broadcast %46 : vector<4x1xf32> to vector<4x28xf32>
    %48 = arith.divf %44, %47 : vector<4x28xf32>
    %cst_29 = arith.constant dense<0.000000e+00> : vector<4x8xf32>
    %49 = tpu.matmul %48, %38, %cst_29 {dimension_numbers = #tpu.dot_dimension_numbers<[1], [0], [0], [1], [0, 0, 1, 1], [], []>} : vector<4x28xf32>, vector<28x8xf32>, vector<4x8xf32> -> vector<4x8xf32>
    %50 = vector.extract_strided_slice %13 {offsets = [8, 0], sizes = [8, 32], strides = [1, 1]} : vector<16x32xf32> to vector<8x32xf32>
    %cst_30 = arith.constant dense<0.000000e+00> : vector<4x32xf32>
    %51 = tpu.matmul %49, %50, %cst_30 {dimension_numbers = #tpu.dot_dimension_numbers<[1], [0], [0], [1], [0, 0, 1, 1], [], []>} : vector<4x8xf32>, vector<8x32xf32>, vector<4x32xf32> -> vector<4x32xf32>
    %52 = arith.addf %35, %51 : vector<4x32xf32>
    %c0_31 = arith.constant 0 : index
    %c0_32 = arith.constant 0 : index
    %53 = vector.load %arg11[%c0_31, %c0_32] : memref<1x32xf32, #tpu.memory_space<vmem>>, vector<1x32xf32>
    %c0_33 = arith.constant 0 : index
    %c0_34 = arith.constant 0 : index
    %54 = vector.load %arg12[%c0_33, %c0_34] : memref<1x32xf32, #tpu.memory_space<vmem>>, vector<1x32xf32>
    %cst_35 = arith.constant dense<0.000000e+00> : vector<4xf32>
    %55 = vector.multi_reduction <add>, %52, %cst_35 [1] : vector<4x32xf32> to vector<4xf32>
    %56 = vector.shape_cast %55 : vector<4xf32> to vector<4x1xf32>
    %cst_36 = arith.constant 3.200000e+01 : f32
    %57 = vector.broadcast %cst_36 : f32 to vector<4x1xf32>
    %58 = arith.divf %56, %57 : vector<4x1xf32>
    %59 = vector.broadcast %58 : vector<4x1xf32> to vector<4x32xf32>
    %60 = arith.subf %52, %59 : vector<4x32xf32>
    %61 = arith.mulf %60, %60 : vector<4x32xf32>
    %cst_37 = arith.constant dense<0.000000e+00> : vector<4xf32>
    %62 = vector.multi_reduction <add>, %61, %cst_37 [1] : vector<4x32xf32> to vector<4xf32>
    %63 = vector.shape_cast %62 : vector<4xf32> to vector<4x1xf32>
    %cst_38 = arith.constant 3.200000e+01 : f32
    %64 = vector.broadcast %cst_38 : f32 to vector<4x1xf32>
    %65 = arith.divf %63, %64 : vector<4x1xf32>
    %cst_39 = arith.constant 9.99999997E-7 : f32
    %66 = vector.broadcast %cst_39 : f32 to vector<4x1xf32>
    %67 = arith.addf %65, %66 : vector<4x1xf32>
    %68 = math.rsqrt %67 : vector<4x1xf32>
    %69 = vector.broadcast %68 : vector<4x1xf32> to vector<4x32xf32>
    %70 = arith.mulf %60, %69 : vector<4x32xf32>
    %71 = vector.broadcast %53 : vector<1x32xf32> to vector<4x32xf32>
    %72 = arith.mulf %70, %71 : vector<4x32xf32>
    %73 = vector.broadcast %54 : vector<1x32xf32> to vector<4x32xf32>
    %74 = arith.addf %72, %73 : vector<4x32xf32>
    %c0_40 = arith.constant 0 : index
    %c0_41 = arith.constant 0 : index
    %75 = vector.load %arg13[%c0_40, %c0_41] : memref<32x16xf32, #tpu.memory_space<vmem>>, vector<32x16xf32>
    %cst_42 = arith.constant dense<0.000000e+00> : vector<4x16xf32>
    %76 = tpu.matmul %74, %75, %cst_42 {dimension_numbers = #tpu.dot_dimension_numbers<[1], [0], [0], [1], [0, 0, 1, 1], [], []>} : vector<4x32xf32>, vector<32x16xf32>, vector<4x16xf32> -> vector<4x16xf32>
    %c0_43 = arith.constant 0 : index
    %c0_44 = arith.constant 0 : index
    %77 = vector.load %arg14[%c0_43, %c0_44] : memref<1x16xf32, #tpu.memory_space<vmem>>, vector<1x16xf32>
    %78 = vector.broadcast %77 : vector<1x16xf32> to vector<4x16xf32>
    %79 = arith.addf %76, %78 : vector<4x16xf32>
    %cst_45 = arith.constant 5.000000e-01 : f32
    %80 = vector.broadcast %cst_45 : f32 to vector<4x16xf32>
    %81 = arith.mulf %80, %79 : vector<4x16xf32>
    %cst_46 = arith.constant 4.471500e-02 : f32
    %82 = vector.broadcast %cst_46 : f32 to vector<4x16xf32>
    %83 = arith.mulf %82, %79 : vector<4x16xf32>
    %84 = arith.mulf %83, %79 : vector<4x16xf32>
    %85 = arith.mulf %84, %79 : vector<4x16xf32>
    %86 = arith.addf %79, %85 : vector<4x16xf32>
    %cst_47 = arith.constant 0.797884583 : f32
    %87 = vector.broadcast %cst_47 : f32 to vector<4x16xf32>
    %88 = arith.mulf %87, %86 : vector<4x16xf32>
    %89 = math.tanh %88 : vector<4x16xf32>
    %cst_48 = arith.constant 1.000000e+00 : f32
    %90 = vector.broadcast %cst_48 : f32 to vector<4x16xf32>
    %91 = arith.addf %90, %89 : vector<4x16xf32>
    %92 = arith.mulf %81, %91 : vector<4x16xf32>
    %c0_49 = arith.constant 0 : index
    %c0_50 = arith.constant 0 : index
    %93 = vector.load %arg15[%c0_49, %c0_50] : memref<16x32xf32, #tpu.memory_space<vmem>>, vector<16x32xf32>
    %cst_51 = arith.constant dense<0.000000e+00> : vector<4x32xf32>
    %94 = tpu.matmul %92, %93, %cst_51 {dimension_numbers = #tpu.dot_dimension_numbers<[1], [0], [0], [1], [0, 0, 1, 1], [], []>} : vector<4x16xf32>, vector<16x32xf32>, vector<4x32xf32> -> vector<4x32xf32>
    %c0_52 = arith.constant 0 : index
    %c0_53 = arith.constant 0 : index
    %95 = vector.load %arg16[%c0_52, %c0_53] : memref<1x32xf32, #tpu.memory_space<vmem>>, vector<1x32xf32>
    %96 = vector.broadcast %95 : vector<1x32xf32> to vector<4x32xf32>
    %97 = arith.addf %94, %96 : vector<4x32xf32>
    %98 = arith.addf %97, %74 : vector<4x32xf32>
    %c0_54 = arith.constant 0 : index
    %c0_55 = arith.constant 0 : index
    %99 = vector.load %arg17[%c0_54, %c0_55] : memref<1x32xf32, #tpu.memory_space<vmem>>, vector<1x32xf32>
    %c0_56 = arith.constant 0 : index
    %c0_57 = arith.constant 0 : index
    %100 = vector.load %arg18[%c0_56, %c0_57] : memref<1x32xf32, #tpu.memory_space<vmem>>, vector<1x32xf32>
    %cst_58 = arith.constant dense<0.000000e+00> : vector<4xf32>
    %101 = vector.multi_reduction <add>, %98, %cst_58 [1] : vector<4x32xf32> to vector<4xf32>
    %102 = vector.shape_cast %101 : vector<4xf32> to vector<4x1xf32>
    %cst_59 = arith.constant 3.200000e+01 : f32
    %103 = vector.broadcast %cst_59 : f32 to vector<4x1xf32>
    %104 = arith.divf %102, %103 : vector<4x1xf32>
    %105 = vector.broadcast %104 : vector<4x1xf32> to vector<4x32xf32>
    %106 = arith.subf %98, %105 : vector<4x32xf32>
    %107 = arith.mulf %106, %106 : vector<4x32xf32>
    %cst_60 = arith.constant dense<0.000000e+00> : vector<4xf32>
    %108 = vector.multi_reduction <add>, %107, %cst_60 [1] : vector<4x32xf32> to vector<4xf32>
    %109 = vector.shape_cast %108 : vector<4xf32> to vector<4x1xf32>
    %cst_61 = arith.constant 3.200000e+01 : f32
    %110 = vector.broadcast %cst_61 : f32 to vector<4x1xf32>
    %111 = arith.divf %109, %110 : vector<4x1xf32>
    %cst_62 = arith.constant 9.99999997E-7 : f32
    %112 = vector.broadcast %cst_62 : f32 to vector<4x1xf32>
    %113 = arith.addf %111, %112 : vector<4x1xf32>
    %114 = math.rsqrt %113 : vector<4x1xf32>
    %115 = vector.broadcast %114 : vector<4x1xf32> to vector<4x32xf32>
    %116 = arith.mulf %106, %115 : vector<4x32xf32>
    %117 = vector.broadcast %99 : vector<1x32xf32> to vector<4x32xf32>
    %118 = arith.mulf %116, %117 : vector<4x32xf32>
    %119 = vector.broadcast %100 : vector<1x32xf32> to vector<4x32xf32>
    %120 = arith.addf %118, %119 : vector<4x32xf32>
    %c0_63 = arith.constant 0 : index
    %c0_64 = arith.constant 0 : index
    %121 = vector.load %arg33[%c0_63, %c0_64] : memref<32x32xf32, #tpu.memory_space<vmem>>, vector<28x32xf32>
    tpu.vector_store %arg33[%c0_63, %c0_64], %10 {strides = array<i32>} : memref<32x32xf32, #tpu.memory_space<vmem>>, vector<28x32xf32>,
    %c28 = arith.constant 28 : index
    %c0_65 = arith.constant 0 : index
    %122 = vector.load %arg33[%c28, %c0_65] : memref<32x32xf32, #tpu.memory_space<vmem>>, vector<4x32xf32>
    tpu.vector_store %arg33[%c28, %c0_65], %120 {strides = array<i32>} : memref<32x32xf32, #tpu.memory_space<vmem>>, vector<4x32xf32>,
    %c0_66 = arith.constant 0 : index
    %c0_67 = arith.constant 0 : index
    %123 = vector.load %arg33[%c0_66, %c0_67] : memref<32x32xf32, #tpu.memory_space<vmem>>, vector<32x32xf32>
    %c0_68 = arith.constant 0 : index
    %c0_69 = arith.constant 0 : index
    %c0_70 = arith.constant 0 : index
    %124 = vector.load %arg6[%c0_68, %c0_69, %c0_70] : memref<1x4x32xf32, #tpu.memory_space<vmem>>, vector<1x4x32xf32>
    %125 = vector.shape_cast %124 : vector<1x4x32xf32> to vector<4x32xf32>
    %c0_71 = arith.constant 0 : index
    %c0_72 = arith.constant 0 : index
    %126 = vector.load %arg19[%c0_71, %c0_72] : memref<32x16xf32, #tpu.memory_space<vmem>>, vector<32x16xf32>
    %c0_73 = arith.constant 0 : index
    %c0_74 = arith.constant 0 : index
    %127 = vector.load %arg20[%c0_73, %c0_74] : memref<32x32xf32, #tpu.memory_space<vmem>>, vector<32x32xf32>
    %c0_75 = arith.constant 0 : index
    %c0_76 = arith.constant 0 : index
    %128 = vector.load %arg21[%c0_75, %c0_76] : memref<16x32xf32, #tpu.memory_space<vmem>>, vector<16x32xf32>
    %c0_77 = arith.constant 0 : index
    %c0_78 = arith.constant 0 : index
    %129 = vector.load %arg22[%c0_77, %c0_78] : memref<1x32xf32, #tpu.memory_space<vmem>>, vector<1x32xf32>
    %cst_79 = arith.constant dense<0.000000e+00> : vector<4x16xf32>
    %130 = tpu.matmul %120, %126, %cst_79 {dimension_numbers = #tpu.dot_dimension_numbers<[1], [0], [0], [1], [0, 0, 1, 1], [], []>} : vector<4x32xf32>, vector<32x16xf32>, vector<4x16xf32> -> vector<4x16xf32>
    %cst_80 = arith.constant dense<0.000000e+00> : vector<32x32xf32>
    %131 = tpu.matmul %123, %127, %cst_80 {dimension_numbers = #tpu.dot_dimension_numbers<[1], [0], [0], [1], [0, 0, 1, 1], [], []>} : vector<32x32xf32>, vector<32x32xf32>, vector<32x32xf32> -> vector<32x32xf32>
    %132 = vector.broadcast %129 : vector<1x32xf32> to vector<4x32xf32>
    %133 = arith.addf %120, %132 : vector<4x32xf32>
    %134 = vector.extract_strided_slice %130 {offsets = [0, 0], sizes = [4, 8], strides = [1, 1]} : vector<4x16xf32> to vector<4x8xf32>
    %135 = vector.extract_strided_slice %131 {offsets = [0, 0], sizes = [32, 8], strides = [1, 1]} : vector<32x32xf32> to vector<32x8xf32>
    %136 = vector.extract_strided_slice %131 {offsets = [0, 16], sizes = [32, 8], strides = [1, 1]} : vector<32x32xf32> to vector<32x8xf32>
    %cst_81 = arith.constant dense<0.000000e+00> : vector<4x32xf32>
    %137 = tpu.matmul %134, %135, %cst_81 {dimension_numbers = #tpu.dot_dimension_numbers<[1], [1], [0], [0], [0, 0, 1, 0], [], []>} : vector<4x8xf32>, vector<32x8xf32>, vector<4x32xf32> -> vector<4x32xf32>
    %138 = arith.addf %137, %125 : vector<4x32xf32>
    %cst_82 = arith.constant dense<0xFF800000> : vector<4xf32>
    %139 = vector.multi_reduction <maximumf>, %138, %cst_82 [1] : vector<4x32xf32> to vector<4xf32>
    %140 = vector.shape_cast %139 : vector<4xf32> to vector<4x1xf32>
    %141 = vector.broadcast %140 : vector<4x1xf32> to vector<4x32xf32>
    %142 = arith.subf %138, %141 : vector<4x32xf32>
    %143 = math.exp %142 : vector<4x32xf32>
    %cst_83 = arith.constant dense<0.000000e+00> : vector<4xf32>
    %144 = vector.multi_reduction <add>, %143, %cst_83 [1] : vector<4x32xf32> to vector<4xf32>
    %145 = vector.shape_cast %144 : vector<4xf32> to vector<4x1xf32>
    %146 = vector.broadcast %145 : vector<4x1xf32> to vector<4x32xf32>
    %147 = arith.divf %143, %146 : vector<4x32xf32>
    %cst_84 = arith.constant dense<0.000000e+00> : vector<4x8xf32>
    %148 = tpu.matmul %147, %136, %cst_84 {dimension_numbers = #tpu.dot_dimension_numbers<[1], [0], [0], [1], [0, 0, 1, 1], [], []>} : vector<4x32xf32>, vector<32x8xf32>, vector<4x8xf32> -> vector<4x8xf32>
    %149 = vector.extract_strided_slice %128 {offsets = [0, 0], sizes = [8, 32], strides = [1, 1]} : vector<16x32xf32> to vector<8x32xf32>
    %cst_85 = arith.constant dense<0.000000e+00> : vector<4x32xf32>
    %150 = tpu.matmul %148, %149, %cst_85 {dimension_numbers = #tpu.dot_dimension_numbers<[1], [0], [0], [1], [0, 0, 1, 1], [], []>} : vector<4x8xf32>, vector<8x32xf32>, vector<4x32xf32> -> vector<4x32xf32>
    %151 = arith.addf %133, %150 : vector<4x32xf32>
    %152 = vector.extract_strided_slice %130 {offsets = [0, 8], sizes = [4, 8], strides = [1, 1]} : vector<4x16xf32> to vector<4x8xf32>
    %153 = vector.extract_strided_slice %131 {offsets = [0, 8], sizes = [32, 8], strides = [1, 1]} : vector<32x32xf32> to vector<32x8xf32>
    %154 = vector.extract_strided_slice %131 {offsets = [0, 24], sizes = [32, 8], strides = [1, 1]} : vector<32x32xf32> to vector<32x8xf32>
    %cst_86 = arith.constant dense<0.000000e+00> : vector<4x32xf32>
    %155 = tpu.matmul %152, %153, %cst_86 {dimension_numbers = #tpu.dot_dimension_numbers<[1], [1], [0], [0], [0, 0, 1, 0], [], []>} : vector<4x8xf32>, vector<32x8xf32>, vector<4x32xf32> -> vector<4x32xf32>
    %156 = arith.addf %155, %125 : vector<4x32xf32>
    %cst_87 = arith.constant dense<0xFF800000> : vector<4xf32>
    %157 = vector.multi_reduction <maximumf>, %156, %cst_87 [1] : vector<4x32xf32> to vector<4xf32>
    %158 = vector.shape_cast %157 : vector<4xf32> to vector<4x1xf32>
    %159 = vector.broadcast %158 : vector<4x1xf32> to vector<4x32xf32>
    %160 = arith.subf %156, %159 : vector<4x32xf32>
    %161 = math.exp %160 : vector<4x32xf32>
    %cst_88 = arith.constant dense<0.000000e+00> : vector<4xf32>
    %162 = vector.multi_reduction <add>, %161, %cst_88 [1] : vector<4x32xf32> to vector<4xf32>
    %163 = vector.shape_cast %162 : vector<4xf32> to vector<4x1xf32>
    %164 = vector.broadcast %163 : vector<4x1xf32> to vector<4x32xf32>
    %165 = arith.divf %161, %164 : vector<4x32xf32>
    %cst_89 = arith.constant dense<0.000000e+00> : vector<4x8xf32>
    %166 = tpu.matmul %165, %154, %cst_89 {dimension_numbers = #tpu.dot_dimension_numbers<[1], [0], [0], [1], [0, 0, 1, 1], [], []>} : vector<4x32xf32>, vector<32x8xf32>, vector<4x8xf32> -> vector<4x8xf32>
    %167 = vector.extract_strided_slice %128 {offsets = [8, 0], sizes = [8, 32], strides = [1, 1]} : vector<16x32xf32> to vector<8x32xf32>
    %cst_90 = arith.constant dense<0.000000e+00> : vector<4x32xf32>
    %168 = tpu.matmul %166, %167, %cst_90 {dimension_numbers = #tpu.dot_dimension_numbers<[1], [0], [0], [1], [0, 0, 1, 1], [], []>} : vector<4x8xf32>, vector<8x32xf32>, vector<4x32xf32> -> vector<4x32xf32>
    %169 = arith.addf %151, %168 : vector<4x32xf32>
    %c0_91 = arith.constant 0 : index
    %c0_92 = arith.constant 0 : index
    %170 = vector.load %arg23[%c0_91, %c0_92] : memref<1x32xf32, #tpu.memory_space<vmem>>, vector<1x32xf32>
    %c0_93 = arith.constant 0 : index
    %c0_94 = arith.constant 0 : index
    %171 = vector.load %arg24[%c0_93, %c0_94] : memref<1x32xf32, #tpu.memory_space<vmem>>, vector<1x32xf32>
    %cst_95 = arith.constant dense<0.000000e+00> : vector<4xf32>
    %172 = vector.multi_reduction <add>, %169, %cst_95 [1] : vector<4x32xf32> to vector<4xf32>
    %173 = vector.shape_cast %172 : vector<4xf32> to vector<4x1xf32>
    %cst_96 = arith.constant 3.200000e+01 : f32
    %174 = vector.broadcast %cst_96 : f32 to vector<4x1xf32>
    %175 = arith.divf %173, %174 : vector<4x1xf32>
    %176 = vector.broadcast %175 : vector<4x1xf32> to vector<4x32xf32>
    %177 = arith.subf %169, %176 : vector<4x32xf32>
    %178 = arith.mulf %177, %177 : vector<4x32xf32>
    %cst_97 = arith.constant dense<0.000000e+00> : vector<4xf32>
    %179 = vector.multi_reduction <add>, %178, %cst_97 [1] : vector<4x32xf32> to vector<4xf32>
    %180 = vector.shape_cast %179 : vector<4xf32> to vector<4x1xf32>
    %cst_98 = arith.constant 3.200000e+01 : f32
    %181 = vector.broadcast %cst_98 : f32 to vector<4x1xf32>
    %182 = arith.divf %180, %181 : vector<4x1xf32>
    %cst_99 = arith.constant 9.99999997E-7 : f32
    %183 = vector.broadcast %cst_99 : f32 to vector<4x1xf32>
    %184 = arith.addf %182, %183 : vector<4x1xf32>
    %185 = math.rsqrt %184 : vector<4x1xf32>
    %186 = vector.broadcast %185 : vector<4x1xf32> to vector<4x32xf32>
    %187 = arith.mulf %177, %186 : vector<4x32xf32>
    %188 = vector.broadcast %170 : vector<1x32xf32> to vector<4x32xf32>
    %189 = arith.mulf %187, %188 : vector<4x32xf32>
    %190 = vector.broadcast %171 : vector<1x32xf32> to vector<4x32xf32>
    %191 = arith.addf %189, %190 : vector<4x32xf32>
    %c0_100 = arith.constant 0 : index
    %c0_101 = arith.constant 0 : index
    %192 = vector.load %arg25[%c0_100, %c0_101] : memref<32x16xf32, #tpu.memory_space<vmem>>, vector<32x16xf32>
    %cst_102 = arith.constant dense<0.000000e+00> : vector<4x16xf32>
    %193 = tpu.matmul %191, %192, %cst_102 {dimension_numbers = #tpu.dot_dimension_numbers<[1], [0], [0], [1], [0, 0, 1, 1], [], []>} : vector<4x32xf32>, vector<32x16xf32>, vector<4x16xf32> -> vector<4x16xf32>
    %c0_103 = arith.constant 0 : index
    %c0_104 = arith.constant 0 : index
    %194 = vector.load %arg26[%c0_103, %c0_104] : memref<1x16xf32, #tpu.memory_space<vmem>>, vector<1x16xf32>
    %195 = vector.broadcast %194 : vector<1x16xf32> to vector<4x16xf32>
    %196 = arith.addf %193, %195 : vector<4x16xf32>
    %cst_105 = arith.constant 5.000000e-01 : f32
    %197 = vector.broadcast %cst_105 : f32 to vector<4x16xf32>
    %198 = arith.mulf %197, %196 : vector<4x16xf32>
    %cst_106 = arith.constant 4.471500e-02 : f32
    %199 = vector.broadcast %cst_106 : f32 to vector<4x16xf32>
    %200 = arith.mulf %199, %196 : vector<4x16xf32>
    %201 = arith.mulf %200, %196 : vector<4x16xf32>
    %202 = arith.mulf %201, %196 : vector<4x16xf32>
    %203 = arith.addf %196, %202 : vector<4x16xf32>
    %cst_107 = arith.constant 0.797884583 : f32
    %204 = vector.broadcast %cst_107 : f32 to vector<4x16xf32>
    %205 = arith.mulf %204, %203 : vector<4x16xf32>
    %206 = math.tanh %205 : vector<4x16xf32>
    %cst_108 = arith.constant 1.000000e+00 : f32
    %207 = vector.broadcast %cst_108 : f32 to vector<4x16xf32>
    %208 = arith.addf %207, %206 : vector<4x16xf32>
    %209 = arith.mulf %198, %208 : vector<4x16xf32>
    %c0_109 = arith.constant 0 : index
    %c0_110 = arith.constant 0 : index
    %210 = vector.load %arg27[%c0_109, %c0_110] : memref<16x32xf32, #tpu.memory_space<vmem>>, vector<16x32xf32>
    %cst_111 = arith.constant dense<0.000000e+00> : vector<4x32xf32>
    %211 = tpu.matmul %209, %210, %cst_111 {dimension_numbers = #tpu.dot_dimension_numbers<[1], [0], [0], [1], [0, 0, 1, 1], [], []>} : vector<4x16xf32>, vector<16x32xf32>, vector<4x32xf32> -> vector<4x32xf32>
    %c0_112 = arith.constant 0 : index
    %c0_113 = arith.constant 0 : index
    %212 = vector.load %arg28[%c0_112, %c0_113] : memref<1x32xf32, #tpu.memory_space<vmem>>, vector<1x32xf32>
    %213 = vector.broadcast %212 : vector<1x32xf32> to vector<4x32xf32>
    %214 = arith.addf %211, %213 : vector<4x32xf32>
    %215 = arith.addf %214, %191 : vector<4x32xf32>
    %c0_114 = arith.constant 0 : index
    %c0_115 = arith.constant 0 : index
    %216 = vector.load %arg29[%c0_114, %c0_115] : memref<1x32xf32, #tpu.memory_space<vmem>>, vector<1x32xf32>
    %c0_116 = arith.constant 0 : index
    %c0_117 = arith.constant 0 : index
    %217 = vector.load %arg30[%c0_116, %c0_117] : memref<1x32xf32, #tpu.memory_space<vmem>>, vector<1x32xf32>
    %cst_118 = arith.constant dense<0.000000e+00> : vector<4xf32>
    %218 = vector.multi_reduction <add>, %215, %cst_118 [1] : vector<4x32xf32> to vector<4xf32>
    %219 = vector.shape_cast %218 : vector<4xf32> to vector<4x1xf32>
    %cst_119 = arith.constant 3.200000e+01 : f32
    %220 = vector.broadcast %cst_119 : f32 to vector<4x1xf32>
    %221 = arith.divf %219, %220 : vector<4x1xf32>
    %222 = vector.broadcast %221 : vector<4x1xf32> to vector<4x32xf32>
    %223 = arith.subf %215, %222 : vector<4x32xf32>
    %224 = arith.mulf %223, %223 : vector<4x32xf32>
    %cst_120 = arith.constant dense<0.000000e+00> : vector<4xf32>
    %225 = vector.multi_reduction <add>, %224, %cst_120 [1] : vector<4x32xf32> to vector<4xf32>
    %226 = vector.shape_cast %225 : vector<4xf32> to vector<4x1xf32>
    %cst_121 = arith.constant 3.200000e+01 : f32
    %227 = vector.broadcast %cst_121 : f32 to vector<4x1xf32>
    %228 = arith.divf %226, %227 : vector<4x1xf32>
    %cst_122 = arith.constant 9.99999997E-7 : f32
    %229 = vector.broadcast %cst_122 : f32 to vector<4x1xf32>
    %230 = arith.addf %228, %229 : vector<4x1xf32>
    %231 = math.rsqrt %230 : vector<4x1xf32>
    %232 = vector.broadcast %231 : vector<4x1xf32> to vector<4x32xf32>
    %233 = arith.mulf %223, %232 : vector<4x32xf32>
    %234 = vector.broadcast %216 : vector<1x32xf32> to vector<4x32xf32>
    %235 = arith.mulf %233, %234 : vector<4x32xf32>
    %236 = vector.broadcast %217 : vector<1x32xf32> to vector<4x32xf32>
    %237 = arith.addf %235, %236 : vector<4x32xf32>
    %c0_123 = arith.constant 0 : index
    %c0_124 = arith.constant 0 : index
    %238 = vector.load %arg31[%c0_123, %c0_124] : memref<32x4xf32, #tpu.memory_space<vmem>>, vector<32x4xf32>
    %cst_125 = arith.constant dense<0.000000e+00> : vector<4x4xf32>
    %239 = tpu.matmul %237, %238, %cst_125 {dimension_numbers = #tpu.dot_dimension_numbers<[1], [0], [0], [1], [0, 0, 1, 1], [], []>} : vector<4x32xf32>, vector<32x4xf32>, vector<4x4xf32> -> vector<4x4xf32>
    %c0_126 = arith.constant 0 : index
    %c0_127 = arith.constant 0 : index
    %c0_128 = arith.constant 0 : index
    %240 = vector.load %arg32[%c0_126, %c0_127, %c0_128] : memref<1x4x4xf32, #tpu.memory_space<vmem>>, vector<1x4x4xf32>
    %241 = vector.shape_cast %240 : vector<1x4x4xf32> to vector<4x4xf32>
    %242 = vector.shape_cast %239 : vector<4x4xf32> to vector<1x4x4xf32>
    tpu.vector_store %arg32[%c0_126, %c0_127, %c0_128], %242 {strides = array<i32>} : memref<1x4x4xf32, #tpu.memory_space<vmem>>, vector<1x4x4xf32>,
    return
  }
  func.func @transform_0(%arg0: i32) -> (i32, i32, i32) {
    %c0_i32 = arith.constant 0 : i32
    %c0_i32_0 = arith.constant 0 : i32
    %c0_i32_1 = arith.constant 0 : i32
    return %arg0, %c0_i32, %c0_i32_0 : i32, i32, i32
  }
  func.func @transform_1(%arg0: i32) -> (i32, i32) {
    %c0_i32 = arith.constant 0 : i32
    %c0_i32_0 = arith.constant 0 : i32
    %c0_i32_1 = arith.constant 0 : i32
    return %c0_i32, %c0_i32_0 : i32, i32
  }
  func.func @transform_2(%arg0: i32) -> (i32, i32) {
    %c0_i32 = arith.constant 0 : i32
    %c0_i32_0 = arith.constant 0 : i32
    %c0_i32_1 = arith.constant 0 : i32
    return %c0_i32, %c0_i32_0 : i32, i32
  }
  func.func @transform_3(%arg0: i32) -> (i32, i32) {
    %c0_i32 = arith.constant 0 : i32
    %c0_i32_0 = arith.constant 0 : i32
    %c0_i32_1 = arith.constant 0 : i32
    return %c0_i32, %c0_i32_0 : i32, i32
  }
  func.func @transform_4(%arg0: i32) -> (i32, i32, i32) {
    %c0_i32 = arith.constant 0 : i32
    %c0_i32_0 = arith.constant 0 : i32
    %c0_i32_1 = arith.constant 0 : i32
    return %arg0, %c0_i32, %c0_i32_0 : i32, i32, i32
  }
  func.func @transform_5(%arg0: i32) -> (i32, i32, i32) {
    %c0_i32 = arith.constant 0 : i32
    %c0_i32_0 = arith.constant 0 : i32
    %c0_i32_1 = arith.constant 0 : i32
    %c0_i32_2 = arith.constant 0 : i32
    return %c0_i32, %c0_i32_0, %c0_i32_1 : i32, i32, i32
  }
  func.func @transform_6(%arg0: i32) -> (i32, i32) {
    %c0_i32 = arith.constant 0 : i32
    %c0_i32_0 = arith.constant 0 : i32
    %c0_i32_1 = arith.constant 0 : i32
    return %c0_i32, %c0_i32_0 : i32, i32
  }
  func.func @transform_7(%arg0: i32) -> (i32, i32) {
    %c0_i32 = arith.constant 0 : i32
    %c0_i32_0 = arith.constant 0 : i32
    %c0_i32_1 = arith.constant 0 : i32
    return %c0_i32, %c0_i32_0 : i32, i32
  }
  func.func @transform_8(%arg0: i32) -> (i32, i32) {
    %c0_i32 = arith.constant 0 : i32
    %c0_i32_0 = arith.constant 0 : i32
    %c0_i32_1 = arith.constant 0 : i32
    return %c0_i32, %c0_i32_0 : i32, i32
  }
  func.func @transform_9(%arg0: i32) -> (i32, i32) {
    %c0_i32 = arith.constant 0 : i32
    %c0_i32_0 = arith.constant 0 : i32
    %c0_i32_1 = arith.constant 0 : i32
    return %c0_i32, %c0_i32_0 : i32, i32
  }
  func.func @transform_10(%arg0: i32) -> (i32, i32) {
    %c0_i32 = arith.constant 0 : i32
    %c0_i32_0 = arith.constant 0 : i32
    %c0_i32_1 = arith.constant 0 : i32
    return %c0_i32, %c0_i32_0 : i32, i32
  }
  func.func @transform_11(%arg0: i32) -> (i32, i32) {
    %c0_i32 = arith.constant 0 : i32
    %c0_i32_0 = arith.constant 0 : i32
    %c0_i32_1 = arith.constant 0 : i32
    return %c0_i32, %c0_i32_0 : i32, i32
  }
  func.func @transform_12(%arg0: i32) -> (i32, i32) {
    %c0_i32 = arith.constant 0 : i32
    %c0_i32_0 = arith.constant 0 : i32
    %c0_i32_1 = arith.constant 0 : i32
    return %c0_i32, %c0_i32_0 : i32, i32
  }
  func.func @transform_13(%arg0: i32) -> (i32, i32) {
    %c0_i32 = arith.constant 0 : i32
    %c0_i32_0 = arith.constant 0 : i32
    %c0_i32_1 = arith.constant 0 : i32
    return %c0_i32, %c0_i32_0 : i32, i32
  }
  func.func @transform_14(%arg0: i32) -> (i32, i32) {
    %c0_i32 = arith.constant 0 : i32
    %c0_i32_0 = arith.constant 0 : i32
    %c0_i32_1 = arith.constant 0 : i32
    return %c0_i32, %c0_i32_0 : i32, i32
  }
  func.func @transform_15(%arg0: i32) -> (i32, i32) {
    %c0_i32 = arith.constant 0 : i32
    %c0_i32_0 = arith.constant 0 : i32
    %c0_i32_1 = arith.constant 0 : i32
    return %c0_i32, %c0_i32_0 : i32, i32
  }
  func.func @transform_16(%arg0: i32) -> (i32, i32) {
    %c0_i32 = arith.constant 0 : i32
    %c0_i32_0 = arith.constant 0 : i32
    %c0_i32_1 = arith.constant 0 : i32
    return %c0_i32, %c0_i32_0 : i32, i32
  }
  func.func @transform_17(%arg0: i32) -> (i32, i32) {
    %c0_i32 = arith.constant 0 : i32
    %c0_i32_0 = arith.constant 0 : i32
    %c0_i32_1 = arith.constant 0 : i32
    return %c0_i32, %c0_i32_0 : i32, i32
  }
  func.func @transform_18(%arg0: i32) -> (i32, i32) {
    %c0_i32 = arith.constant 0 : i32
    %c0_i32_0 = arith.constant 0 : i32
    %c0_i32_1 = arith.constant 0 : i32
    return %c0_i32, %c0_i32_0 : i32, i32
  }
  func.func @transform_19(%arg0: i32) -> (i32, i32) {
    %c0_i32 = arith.constant 0 : i32
    %c0_i32_0 = arith.constant 0 : i32
    %c0_i32_1 = arith.constant 0 : i32
    return %c0_i32, %c0_i32_0 : i32, i32
  }
  func.func @transform_20(%arg0: i32) -> (i32, i32) {
    %c0_i32 = arith.constant 0 : i32
    %c0_i32_0 = arith.constant 0 : i32
    %c0_i32_1 = arith.constant 0 : i32
    return %c0_i32, %c0_i32_0 : i32, i32
  }
  func.func @transform_21(%arg0: i32) -> (i32, i32) {
    %c0_i32 = arith.constant 0 : i32
    %c0_i32_0 = arith.constant 0 : i32
    %c0_i32_1 = arith.constant 0 : i32
    return %c0_i32, %c0_i32_0 : i32, i32
  }
  func.func @transform_22(%arg0: i32) -> (i32, i32) {
    %c0_i32 = arith.constant 0 : i32
    %c0_i32_0 = arith.constant 0 : i32
    %c0_i32_1 = arith.constant 0 : i32
    return %c0_i32, %c0_i32_0 : i32, i32
  }
  func.func @transform_23(%arg0: i32) -> (i32, i32) {
    %c0_i32 = arith.constant 0 : i32
    %c0_i32_0 = arith.constant 0 : i32
    %c0_i32_1 = arith.constant 0 : i32
    return %c0_i32, %c0_i32_0 : i32, i32
  }
  func.func @transform_24(%arg0: i32) -> (i32, i32) {
    %c0_i32 = arith.constant 0 : i32
    %c0_i32_0 = arith.constant 0 : i32
    %c0_i32_1 = arith.constant 0 : i32
    return %c0_i32, %c0_i32_0 : i32, i32
  }
  func.func @transform_25(%arg0: i32) -> (i32, i32) {
    %c0_i32 = arith.constant 0 : i32
    %c0_i32_0 = arith.constant 0 : i32
    %c0_i32_1 = arith.constant 0 : i32
    return %c0_i32, %c0_i32_0 : i32, i32
  }
  func.func @transform_26(%arg0: i32) -> (i32, i32) {
    %c0_i32 = arith.constant 0 : i32
    %c0_i32_0 = arith.constant 0 : i32
    %c0_i32_1 = arith.constant 0 : i32
    return %c0_i32, %c0_i32_0 : i32, i32
  }
  func.func @transform_27(%arg0: i32) -> (i32, i32) {
    %c0_i32 = arith.constant 0 : i32
    %c0_i32_0 = arith.constant 0 : i32
    %c0_i32_1 = arith.constant 0 : i32
    return %c0_i32, %c0_i32_0 : i32, i32
  }
  func.func @transform_28(%arg0: i32) -> (i32, i32) {
    %c0_i32 = arith.constant 0 : i32
    %c0_i32_0 = arith.constant 0 : i32
    %c0_i32_1 = arith.constant 0 : i32
    return %c0_i32, %c0_i32_0 : i32, i32
  }
  func.func @transform_29(%arg0: i32) -> (i32, i32) {
    %c0_i32 = arith.constant 0 : i32
    %c0_i32_0 = arith.constant 0 : i32
    %c0_i32_1 = arith.constant 0 : i32
    return %c0_i32, %c0_i32_0 : i32, i32
  }
  func.func @transform_30(%arg0: i32) -> (i32, i32) {
    %c0_i32 = arith.constant 0 : i32
    %c0_i32_0 = arith.constant 0 : i32
    %c0_i32_1 = arith.constant 0 : i32
    return %c0_i32, %c0_i32_0 : i32, i32
  }
  func.func @transform_31(%arg0: i32) -> (i32, i32, i32) {
    %c0_i32 = arith.constant 0 : i32
    %c0_i32_0 = arith.constant 0 : i32
    %c0_i32_1 = arith.constant 0 : i32
    return %arg0, %c0_i32, %c0_i32_0 : i32, i32, i32
  }
}

</mosaic_0001>

<llo_original>
// kernel: tpu_custom_call.1
$region0: #{tpu_custom_call.1}
  #allocation0 [shape = 'u32[]', space=smem, size = 0x4, offset = 0x4, fixed_abs, tag = 'smem constant byte address 0x4 - core index']
  #allocation1 [shape = 'u32[144,128]{1,0:T(1,128)}', space=vmem, size = 0x12000, scoped, tag = 'internal scratch']
  %s0 = inlined_call_operand.hbm [shape: f32[8,128], index: 0, kind: input, shape index: {}]
  %s1 = inlined_call_operand.hbm [shape: f32[8,128], index: 1, kind: output, shape index: {}]
  %s2 = sld [smem:[#allocation0]]
  $region18: #{tpu_custom_call.1} parent=0
    _
  %s4 = ssub.s32 1, %s2
  %s5 = scalar_select 0, %s4, %s2
  $region1: #{tpu_custom_call.1} parent=0
    #allocation2 [shape = 'u8[4096]{0}', space=vmem, size = 0x1000, scoped, tag = 'input window, operand 0, single buffered']
    #allocation3 [shape = 's32[1]{0}', space=sflag, size = 0x4, scoped, tag = 'scoped memory for tpu_custom_call.1']
    #allocation4 [shape = 's32[1]{0}', space=sflag, size = 0x4, scoped, tag = 'scoped memory for tpu_custom_call.1']
    #allocation5 [shape = 'u8[4096]{0}', space=vmem, size = 0x1000, scoped, tag = 'output window, operand 0, single buffered']
    %6 = vsyncpa [#allocation3], 0
    %7 = vsyncpa [#allocation4], 0
    // Predicated region
    $region2: #{tpu_custom_call.1} parent=1 // pred_check
      _
    $region3: #{tpu_custom_call.1} parent=1 // pred_check_branch
      %9 = sbr.rel (0) target = $region5
    $region4: #{tpu_custom_call.1} parent=1 // pred_region
      %s11 = ssub.s32 128, 128
      %12 = vsyncadd [#allocation3], %s11
      %s14 = sshll.u32 [#allocation2], 4
      %s15 = int_to_ptr.vmem [resolvable:$true] %s14
      %17 = dma.hbm_to_vmem [thread:$0]  %s0, 128, %s15, [#allocation3]
    $region5: #{tpu_custom_call.1} parent=1 // pred_fallthru
      _
    // Predicated region
    $region6: #{tpu_custom_call.1} parent=1 // pred_check
      _
    $region7: #{tpu_custom_call.1} parent=1 // pred_check_branch
      %19 = sbr.rel (0) target = $region9
    $region8: #{tpu_custom_call.1} parent=1 // pred_region
      %20 = dma.done [#allocation3], 128
    $region9: #{tpu_custom_call.1} parent=1 // pred_fallthru
      _
    %v21 = vld [vmem:[#allocation2] sm:$0xff]
    %v22 = verf.f32.pop %v21
    %23 = vst [vmem:[#allocation5] sm:$0xff] %v22
    // Predicated region
    $region10: #{tpu_custom_call.1} parent=1 // pred_check
      _
    $region11: #{tpu_custom_call.1} parent=1 // pred_check_branch
      %25 = sbr.rel (0) target = $region13
    $region12: #{tpu_custom_call.1} parent=1 // pred_region
      %s27 = ssub.s32 128, 128
      %28 = vsyncadd [#allocation4], %s27
      %s30 = sshll.u32 [#allocation5], 4
      %s31 = int_to_ptr.vmem [resolvable:$true] %s30
      %33 = dma.vmem_to_hbm [thread:$0]  %s31, 128, %s1, [#allocation4]
    $region13: #{tpu_custom_call.1} parent=1 // pred_fallthru
      _
    // Predicated region
    $region14: #{tpu_custom_call.1} parent=1 // pred_check
      _
    $region15: #{tpu_custom_call.1} parent=1 // pred_check_branch
      %35 = sbr.rel (0) target = $region17
    $region16: #{tpu_custom_call.1} parent=1 // pred_region
      %36 = dma.done [#allocation4], 128
    $region17: #{tpu_custom_call.1} parent=1 // pred_fallthru
      _
    %37 = vsyncpa [#allocation3], 1
    %38 = vsyncpa [#allocation4], 1

// kernel: _lambda_.3
$region0: #{_lambda_.3}
  #allocation0 [shape = 'u32[]', space=smem, size = 0x4, offset = 0x4, fixed_abs, tag = 'smem constant byte address 0x4 - core index']
  #allocation1 [shape = 'u32[144,128]{1,0:T(1,128)}', space=vmem, size = 0x12000, scoped, tag = 'internal scratch']
  %s0 = inlined_call_operand.vmem [shape: f32[2,16,16], index: 0, kind: input, shape index: {}]
  %s1 = inlined_call_operand.vmem [shape: f32[16,32], index: 1, kind: input, shape index: {}]
  %s2 = inlined_call_operand.vmem [shape: f32[1,32], index: 2, kind: input, shape index: {}]
  %s3 = inlined_call_operand.vmem [shape: f32[16,32], index: 3, kind: input, shape index: {}]
  %s4 = inlined_call_operand.vmem [shape: f32[32,8], index: 4, kind: input, shape index: {}]
  %s5 = inlined_call_operand.vmem [shape: f32[1,8], index: 5, kind: input, shape index: {}]
  %s6 = inlined_call_operand.vmem [shape: f32[2,8,16], index: 6, kind: input, shape index: {}]
  %s7 = inlined_call_operand.vmem [shape: f32[16,8], index: 7, kind: input, shape index: {}]
  %s8 = inlined_call_operand.vmem [shape: f32[1,8], index: 8, kind: input, shape index: {}]
  %s9 = inlined_call_operand.vmem [shape: f32[2,4,8], index: 9, kind: input, shape index: {}]
  %s10 = inlined_call_operand.vmem [shape: f32[16,8], index: 10, kind: input, shape index: {}]
  %s11 = inlined_call_operand.vmem [shape: f32[1,8], index: 11, kind: input, shape index: {}]
  %s12 = inlined_call_operand.vmem [shape: f32[8,32], index: 12, kind: input, shape index: {}]
  %s13 = inlined_call_operand.vmem [shape: f32[1,32], index: 13, kind: input, shape index: {}]
  %s14 = inlined_call_operand.vmem [shape: f32[1,32], index: 14, kind: input, shape index: {}]
  %s15 = inlined_call_operand.vmem [shape: f32[1,32], index: 15, kind: input, shape index: {}]
  %s16 = inlined_call_operand.vmem [shape: f32[2,28,32], index: 16, kind: output, shape index: {}]
  %s17 = sld [smem:[#allocation0]]
  $region97: #{_lambda_.3} parent=0
    _
  %s19 = ssub.s32 1, %s17
  %s20 = scalar_select 0, %s19, %s17
  loop: start=0, step=1, limit=4
  $region2: #{_lambda_.3} parent=0 // loop_pre_header
    _
  $region3: #{_lambda_.3} parent=0 // loop_header
    %s22 = sphi 0, %s26
    %p23 = scmp.ge.s32.totalorder %s22, 4
    %s32 = sphi 0, %s34
    %s35 = sphi 0, %s32
    %s36 = sphi 0, %s35
    %s52 = sphi 0, %s36
    %s56 = sphi 0, %s56
    %s58 = sphi 0, %s56
    %s59 = sphi 0, %s58
    %s73 = sphi 0, %s59
    %s77 = sphi 0, %s77
    %s79 = sphi 0, %s77
    %s80 = sphi 0, %s79
    %s94 = sphi 0, %s80
    %s98 = sphi 0, %s98
    %s100 = sphi 0, %s98
    %s101 = sphi 0, %s100
    %s115 = sphi 0, %s101
    %s119 = sphi 0, %s119
    %s121 = sphi 0, %s119
    %s122 = sphi 0, %s121
    %s136 = sphi 0, %s122
    %s140 = sphi 0, %s140
    %s142 = sphi 0, %s140
    %s143 = sphi 0, %s142
    %s157 = sphi 0, %s143
    %s161 = sphi 0, %s161
    %s163 = sphi 0, %s161
    %s164 = sphi 0, %s163
    %s178 = sphi 0, %s164
    %s182 = sphi 0, %s182
    %s184 = sphi 0, %s182
    %s185 = sphi 0, %s184
    %s199 = sphi 0, %s185
    %s203 = sphi 0, %s203
    %s205 = sphi 0, %s203
    %s206 = sphi 0, %s205
    %s220 = sphi 0, %s206
    %s224 = sphi 0, %s224
    %s226 = sphi 0, %s224
    %s227 = sphi 0, %s226
    %s241 = sphi 0, %s227
    %s245 = sphi 0, %s245
    %s247 = sphi 0, %s245
    %s248 = sphi 0, %s247
    %s262 = sphi 0, %s248
    %s266 = sphi 0, %s266
    %s268 = sphi 0, %s266
    %s269 = sphi 0, %s268
    %s283 = sphi 0, %s269
    %s287 = sphi 0, %s287
    %s289 = sphi 0, %s287
    %s290 = sphi 0, %s289
    %s304 = sphi 0, %s290
    %s308 = sphi 0, %s308
    %s310 = sphi 0, %s308
    %s311 = sphi 0, %s310
    %s325 = sphi 0, %s311
    %s329 = sphi 0, %s329
    %s331 = sphi 0, %s329
    %s332 = sphi 0, %s331
    %s346 = sphi 0, %s332
    %s350 = sphi 0, %s350
    %s352 = sphi 0, %s350
    %s353 = sphi 0, %s352
    %s367 = sphi 0, %s353
    %s373 = sphi 0, %s375
    %s376 = sphi 0, %s373
    %s377 = sphi 0, %s376
    %s393 = sphi 0, %s377
  $region4: #{_lambda_.3} parent=0 // loop_header_branch
    %25 = sbr.rel (%p23) target = $region8
  $region5: #{_lambda_.3} parent=0 // loop_body
    %s27 = ssub.s32 %s22, 1
    %s28 = ssub.s32 %s22, 2
    %s29 = sadd.s32 %s22, 1
    %s30 = ssub.s32 %s22, %s29
    %p31 = scmp.eq.s32.totalorder %s30, 0
    %s33 = sadd.s32 %s32, 1
    %s34 = scalar_select %p31, %s32, %s33
    %p37 = pneg %p31
    %p38 = scmp.eq.s32.totalorder %s22, 1
    %p39 = por %p37, %p38
    %p40 = scmp.ne.s32.totalorder %s32, %s35
    %p41 = scmp.eq.s32.totalorder %s22, 0
    %p42 = por %p40, %p41
    %p43 = scmp.ne.s32.totalorder %s32, %s35
    %p44 = scmp.eq.s32.totalorder %s27, 1
    %p45 = por %p43, %p44
    %p46 = scmp.ne.s32.totalorder %s35, %s36
    %p47 = scmp.eq.s32.totalorder %s27, 0
    %p48 = por %p46, %p47
    %p49 = scmp.ne.s32.totalorder %s35, %s36
    %p50 = scmp.eq.s32.totalorder %s28, 1
    %p51 = por %p49, %p50
    %p53 = scmp.ne.s32.totalorder %s36, %s52
    %p54 = scmp.eq.s32.totalorder %s28, 0
    %p55 = por %p53, %p54
    %s57 = sadd.s32 %s56, 1
    %p60 = scmp.eq.s32.totalorder %s22, 1
    %p61 = scmp.ne.s32.totalorder %s56, %s58
    %p62 = scmp.eq.s32.totalorder %s22, 0
    %p63 = por %p61, %p62
    %p64 = scmp.ne.s32.totalorder %s56, %s58
    %p65 = scmp.eq.s32.totalorder %s27, 1
    %p66 = por %p64, %p65
    %p67 = scmp.ne.s32.totalorder %s58, %s59
    %p68 = scmp.eq.s32.totalorder %s27, 0
    %p69 = por %p67, %p68
    %p70 = scmp.ne.s32.totalorder %s58, %s59
    %p71 = scmp.eq.s32.totalorder %s28, 1
    %p72 = por %p70, %p71
    %p74 = scmp.ne.s32.totalorder %s59, %s73
    %p75 = scmp.eq.s32.totalorder %s28, 0
    %p76 = por %p74, %p75
    %s78 = sadd.s32 %s77, 1
    %p81 = scmp.eq.s32.totalorder %s22, 1
    %p82 = scmp.ne.s32.totalorder %s77, %s79
    %p83 = scmp.eq.s32.totalorder %s22, 0
    %p84 = por %p82, %p83
    %p85 = scmp.ne.s32.totalorder %s77, %s79
    %p86 = scmp.eq.s32.totalorder %s27, 1
    %p87 = por %p85, %p86
    %p88 = scmp.ne.s32.totalorder %s79, %s80
    %p89 = scmp.eq.s32.totalorder %s27, 0
    %p90 = por %p88, %p89
    %p91 = scmp.ne.s32.totalorder %s79, %s80
    %p92 = scmp.eq.s32.totalorder %s28, 1
    %p93 = por %p91, %p92
    %p95 = scmp.ne.s32.totalorder %s80, %s94
    %p96 = scmp.eq.s32.totalorder %s28, 0
    %p97 = por %p95, %p96
    %s99 = sadd.s32 %s98, 1
    %p102 = scmp.eq.s32.totalorder %s22, 1
    %p103 = scmp.ne.s32.totalorder %s98, %s100
    %p104 = scmp.eq.s32.totalorder %s22, 0
    %p105 = por %p103, %p104
    %p106 = scmp.ne.s32.totalorder %s98, %s100
    %p107 = scmp.eq.s32.totalorder %s27, 1
    %p108 = por %p106, %p107
    %p109 = scmp.ne.s32.totalorder %s100, %s101
    %p110 = scmp.eq.s32.totalorder %s27, 0
    %p111 = por %p109, %p110
    %p112 = scmp.ne.s32.totalorder %s100, %s101
    %p113 = scmp.eq.s32.totalorder %s28, 1
    %p114 = por %p112, %p113
    %p116 = scmp.ne.s32.totalorder %s101, %s115
    %p117 = scmp.eq.s32.totalorder %s28, 0
    %p118 = por %p116, %p117
    %s120 = sadd.s32 %s119, 1
    %p123 = scmp.eq.s32.totalorder %s22, 1
    %p124 = scmp.ne.s32.totalorder %s119, %s121
    %p125 = scmp.eq.s32.totalorder %s22, 0
    %p126 = por %p124, %p125
    %p127 = scmp.ne.s32.totalorder %s119, %s121
    %p128 = scmp.eq.s32.totalorder %s27, 1
    %p129 = por %p127, %p128
    %p130 = scmp.ne.s32.totalorder %s121, %s122
    %p131 = scmp.eq.s32.totalorder %s27, 0
    %p132 = por %p130, %p131
    %p133 = scmp.ne.s32.totalorder %s121, %s122
    %p134 = scmp.eq.s32.totalorder %s28, 1
    %p135 = por %p133, %p134
    %p137 = scmp.ne.s32.totalorder %s122, %s136
    %p138 = scmp.eq.s32.totalorder %s28, 0
    %p139 = por %p137, %p138
    %s141 = sadd.s32 %s140, 1
    %p144 = scmp.eq.s32.totalorder %s22, 1
    %p145 = scmp.ne.s32.totalorder %s140, %s142
    %p146 = scmp.eq.s32.totalorder %s22, 0
    %p147 = por %p145, %p146
    %p148 = scmp.ne.s32.totalorder %s140, %s142
    %p149 = scmp.eq.s32.totalorder %s27, 1
    %p150 = por %p148, %p149
    %p151 = scmp.ne.s32.totalorder %s142, %s143
    %p152 = scmp.eq.s32.totalorder %s27, 0
    %p153 = por %p151, %p152
    %p154 = scmp.ne.s32.totalorder %s142, %s143
    %p155 = scmp.eq.s32.totalorder %s28, 1
    %p156 = por %p154, %p155
    %p158 = scmp.ne.s32.totalorder %s143, %s157
    %p159 = scmp.eq.s32.totalorder %s28, 0
    %p160 = por %p158, %p159
    %s162 = sadd.s32 %s161, 1
    %p165 = scmp.eq.s32.totalorder %s22, 1
    %p166 = scmp.ne.s32.totalorder %s161, %s163
    %p167 = scmp.eq.s32.totalorder %s22, 0
    %p168 = por %p166, %p167
    %p169 = scmp.ne.s32.totalorder %s161, %s163
    %p170 = scmp.eq.s32.totalorder %s27, 1
    %p171 = por %p169, %p170
    %p172 = scmp.ne.s32.totalorder %s163, %s164
    %p173 = scmp.eq.s32.totalorder %s27, 0
    %p174 = por %p172, %p173
    %p175 = scmp.ne.s32.totalorder %s163, %s164
    %p176 = scmp.eq.s32.totalorder %s28, 1
    %p177 = por %p175, %p176
    %p179 = scmp.ne.s32.totalorder %s164, %s178
    %p180 = scmp.eq.s32.totalorder %s28, 0
    %p181 = por %p179, %p180
    %s183 = sadd.s32 %s182, 1
    %p186 = scmp.eq.s32.totalorder %s22, 1
    %p187 = scmp.ne.s32.totalorder %s182, %s184
    %p188 = scmp.eq.s32.totalorder %s22, 0
    %p189 = por %p187, %p188
    %p190 = scmp.ne.s32.totalorder %s182, %s184
    %p191 = scmp.eq.s32.totalorder %s27, 1
    %p192 = por %p190, %p191
    %p193 = scmp.ne.s32.totalorder %s184, %s185
    %p194 = scmp.eq.s32.totalorder %s27, 0
    %p195 = por %p193, %p194
    %p196 = scmp.ne.s32.totalorder %s184, %s185
    %p197 = scmp.eq.s32.totalorder %s28, 1
    %p198 = por %p196, %p197
    %p200 = scmp.ne.s32.totalorder %s185, %s199
    %p201 = scmp.eq.s32.totalorder %s28, 0
    %p202 = por %p200, %p201
    %s204 = sadd.s32 %s203, 1
    %p207 = scmp.eq.s32.totalorder %s22, 1
    %p208 = scmp.ne.s32.totalorder %s203, %s205
    %p209 = scmp.eq.s32.totalorder %s22, 0
    %p210 = por %p208, %p209
    %p211 = scmp.ne.s32.totalorder %s203, %s205
    %p212 = scmp.eq.s32.totalorder %s27, 1
    %p213 = por %p211, %p212
    %p214 = scmp.ne.s32.totalorder %s205, %s206
    %p215 = scmp.eq.s32.totalorder %s27, 0
    %p216 = por %p214, %p215
    %p217 = scmp.ne.s32.totalorder %s205, %s206
    %p218 = scmp.eq.s32.totalorder %s28, 1
    %p219 = por %p217, %p218
    %p221 = scmp.ne.s32.totalorder %s206, %s220
    %p222 = scmp.eq.s32.totalorder %s28, 0
    %p223 = por %p221, %p222
    %s225 = sadd.s32 %s224, 1
    %p228 = scmp.eq.s32.totalorder %s22, 1
    %p229 = scmp.ne.s32.totalorder %s224, %s226
    %p230 = scmp.eq.s32.totalorder %s22, 0
    %p231 = por %p229, %p230
    %p232 = scmp.ne.s32.totalorder %s224, %s226
    %p233 = scmp.eq.s32.totalorder %s27, 1
    %p234 = por %p232, %p233
    %p235 = scmp.ne.s32.totalorder %s226, %s227
    %p236 = scmp.eq.s32.totalorder %s27, 0
    %p237 = por %p235, %p236
    %p238 = scmp.ne.s32.totalorder %s226, %s227
    %p239 = scmp.eq.s32.totalorder %s28, 1
    %p240 = por %p238, %p239
    %p242 = scmp.ne.s32.totalorder %s227, %s241
    %p243 = scmp.eq.s32.totalorder %s28, 0
    %p244 = por %p242, %p243
    %s246 = sadd.s32 %s245, 1
    %p249 = scmp.eq.s32.totalorder %s22, 1
    %p250 = scmp.ne.s32.totalorder %s245, %s247
    %p251 = scmp.eq.s32.totalorder %s22, 0
    %p252 = por %p250, %p251
    %p253 = scmp.ne.s32.totalorder %s245, %s247
    %p254 = scmp.eq.s32.totalorder %s27, 1
    %p255 = por %p253, %p254
    %p256 = scmp.ne.s32.totalorder %s247, %s248
    %p257 = scmp.eq.s32.totalorder %s27, 0
    %p258 = por %p256, %p257
    %p259 = scmp.ne.s32.totalorder %s247, %s248
    %p260 = scmp.eq.s32.totalorder %s28, 1
    %p261 = por %p259, %p260
    %p263 = scmp.ne.s32.totalorder %s248, %s262
    %p264 = scmp.eq.s32.totalorder %s28, 0
    %p265 = por %p263, %p264
    %s267 = sadd.s32 %s266, 1
    %p270 = scmp.eq.s32.totalorder %s22, 1
    %p271 = scmp.ne.s32.totalorder %s266, %s268
    %p272 = scmp.eq.s32.totalorder %s22, 0
    %p273 = por %p271, %p272
    %p274 = scmp.ne.s32.totalorder %s266, %s268
    %p275 = scmp.eq.s32.totalorder %s27, 1
    %p276 = por %p274, %p275
    %p277 = scmp.ne.s32.totalorder %s268, %s269
    %p278 = scmp.eq.s32.totalorder %s27, 0
    %p279 = por %p277, %p278
    %p280 = scmp.ne.s32.totalorder %s268, %s269
    %p281 = scmp.eq.s32.totalorder %s28, 1
    %p282 = por %p280, %p281
    %p284 = scmp.ne.s32.totalorder %s269, %s283
    %p285 = scmp.eq.s32.totalorder %s28, 0
    %p286 = por %p284, %p285
    %s288 = sadd.s32 %s287, 1
    %p291 = scmp.eq.s32.totalorder %s22, 1
    %p292 = scmp.ne.s32.totalorder %s287, %s289
    %p293 = scmp.eq.s32.totalorder %s22, 0
    %p294 = por %p292, %p293
    %p295 = scmp.ne.s32.totalorder %s287, %s289
    %p296 = scmp.eq.s32.totalorder %s27, 1
    %p297 = por %p295, %p296
    %p298 = scmp.ne.s32.totalorder %s289, %s290
    %p299 = scmp.eq.s32.totalorder %s27, 0
    %p300 = por %p298, %p299
    %p301 = scmp.ne.s32.totalorder %s289, %s290
    %p302 = scmp.eq.s32.totalorder %s28, 1
    %p303 = por %p301, %p302
    %p305 = scmp.ne.s32.totalorder %s290, %s304
    %p306 = scmp.eq.s32.totalorder %s28, 0
    %p307 = por %p305, %p306
    %s309 = sadd.s32 %s308, 1
    %p312 = scmp.eq.s32.totalorder %s22, 1
    %p313 = scmp.ne.s32.totalorder %s308, %s310
    %p314 = scmp.eq.s32.totalorder %s22, 0
    %p315 = por %p313, %p314
    %p316 = scmp.ne.s32.totalorder %s308, %s310
    %p317 = scmp.eq.s32.totalorder %s27, 1
    %p318 = por %p316, %p317
    %p319 = scmp.ne.s32.totalorder %s310, %s311
    %p320 = scmp.eq.s32.totalorder %s27, 0
    %p321 = por %p319, %p320
    %p322 = scmp.ne.s32.totalorder %s310, %s311
    %p323 = scmp.eq.s32.totalorder %s28, 1
    %p324 = por %p322, %p323
    %p326 = scmp.ne.s32.totalorder %s311, %s325
    %p327 = scmp.eq.s32.totalorder %s28, 0
    %p328 = por %p326, %p327
    %s330 = sadd.s32 %s329, 1
    %p333 = scmp.eq.s32.totalorder %s22, 1
    %p334 = scmp.ne.s32.totalorder %s329, %s331
    %p335 = scmp.eq.s32.totalorder %s22, 0
    %p336 = por %p334, %p335
    %p337 = scmp.ne.s32.totalorder %s329, %s331
    %p338 = scmp.eq.s32.totalorder %s27, 1
    %p339 = por %p337, %p338
    %p340 = scmp.ne.s32.totalorder %s331, %s332
    %p341 = scmp.eq.s32.totalorder %s27, 0
    %p342 = por %p340, %p341
    %p343 = scmp.ne.s32.totalorder %s331, %s332
    %p344 = scmp.eq.s32.totalorder %s28, 1
    %p345 = por %p343, %p344
    %p347 = scmp.ne.s32.totalorder %s332, %s346
    %p348 = scmp.eq.s32.totalorder %s28, 0
    %p349 = por %p347, %p348
    %s351 = sadd.s32 %s350, 1
    %p354 = scmp.eq.s32.totalorder %s22, 1
    %p355 = scmp.ne.s32.totalorder %s350, %s352
    %p356 = scmp.eq.s32.totalorder %s22, 0
    %p357 = por %p355, %p356
    %p358 = scmp.ne.s32.totalorder %s350, %s352
    %p359 = scmp.eq.s32.totalorder %s27, 1
    %p360 = por %p358, %p359
    %p361 = scmp.ne.s32.totalorder %s352, %s353
    %p362 = scmp.eq.s32.totalorder %s27, 0
    %p363 = por %p361, %p362
    %p364 = scmp.ne.s32.totalorder %s352, %s353
    %p365 = scmp.eq.s32.totalorder %s28, 1
    %p366 = por %p364, %p365
    %p368 = scmp.ne.s32.totalorder %s353, %s367
    %p369 = scmp.eq.s32.totalorder %s28, 0
    %p370 = por %p368, %p369
    %s371 = ssub.s32 %s22, %s29
    %p372 = scmp.eq.s32.totalorder %s371, 0
    %s374 = sadd.s32 %s373, 1
    %s375 = scalar_select %p372, %s373, %s374
    %p378 = pneg %p372
    %p379 = scmp.eq.s32.totalorder %s22, 1
    %p380 = por %p378, %p379
    %p381 = scmp.ne.s32.totalorder %s373, %s376
    %p382 = scmp.eq.s32.totalorder %s22, 0
    %p383 = por %p381, %p382
    %p384 = scmp.ne.s32.totalorder %s373, %s376
    %p385 = scmp.eq.s32.totalorder %s27, 1
    %p386 = por %p384, %p385
    %p387 = scmp.ne.s32.totalorder %s376, %s377
    %p388 = scmp.eq.s32.totalorder %s27, 0
    %p389 = por %p387, %p388
    %p390 = scmp.ne.s32.totalorder %s376, %s377
    %p391 = scmp.eq.s32.totalorder %s28, 1
    %p392 = por %p390, %p391
    %p394 = scmp.ne.s32.totalorder %s377, %s393
    %p395 = scmp.eq.s32.totalorder %s28, 0
    %p396 = por %p394, %p395
    %p397 = scmp.le.s32.totalorder 1, %s22
    %p398 = scmp.lt.s32.totalorder %s22, 3
    %p399 = pnand %p397, %p398
    %p400 = pneg %p399
    // Predicated region
    $region9: #{_lambda_.3} parent=5 // pred_check
      _
    $region10: #{_lambda_.3} parent=5 // pred_check_branch
      %402 = sbr.rel (%p399) target = $region12
    $region11: #{_lambda_.3} parent=5 // pred_region
      %s403 = ssub.s32 %s22, 1
      // Predicated region
      $region13: #{_lambda_.3} parent=11 // pred_check
        %p404 = pneg %p69
      $region14: #{_lambda_.3} parent=11 // pred_check_branch
        %406 = sbr.rel (%p404) target = $region16
      $region15: #{_lambda_.3} parent=11 // pred_region
        _
      $region16: #{_lambda_.3} parent=11 // pred_fallthru
        _
      // Predicated region
      $region17: #{_lambda_.3} parent=11 // pred_check
        %p407 = pneg %p90
      $region18: #{_lambda_.3} parent=11 // pred_check_branch
        %409 = sbr.rel (%p407) target = $region20
      $region19: #{_lambda_.3} parent=11 // pred_region
        _
      $region20: #{_lambda_.3} parent=11 // pred_fallthru
        _
      // Predicated region
      $region21: #{_lambda_.3} parent=11 // pred_check
        %p410 = pneg %p111
      $region22: #{_lambda_.3} parent=11 // pred_check_branch
        %412 = sbr.rel (%p410) target = $region24
      $region23: #{_lambda_.3} parent=11 // pred_region
        _
      $region24: #{_lambda_.3} parent=11 // pred_fallthru
        _
      // Predicated region
      $region25: #{_lambda_.3} parent=11 // pred_check
        %p413 = pneg %p132
      $region26: #{_lambda_.3} parent=11 // pred_check_branch
        %415 = sbr.rel (%p413) target = $region28
      $region27: #{_lambda_.3} parent=11 // pred_region
        _
      $region28: #{_lambda_.3} parent=11 // pred_fallthru
        _
      // Predicated region
      $region29: #{_lambda_.3} parent=11 // pred_check
        %p416 = pneg %p153
      $region30: #{_lambda_.3} parent=11 // pred_check_branch
        %418 = sbr.rel (%p416) target = $region32
      $region31: #{_lambda_.3} parent=11 // pred_region
        _
      $region32: #{_lambda_.3} parent=11 // pred_fallthru
        _
      // Predicated region
      $region33: #{_lambda_.3} parent=11 // pred_check
        %p419 = pneg %p174
      $region34: #{_lambda_.3} parent=11 // pred_check_branch
        %421 = sbr.rel (%p419) target = $region36
      $region35: #{_lambda_.3} parent=11 // pred_region
        _
      $region36: #{_lambda_.3} parent=11 // pred_fallthru
        _
      // Predicated region
      $region37: #{_lambda_.3} parent=11 // pred_check
        %p422 = pneg %p195
      $region38: #{_lambda_.3} parent=11 // pred_check_branch
        %424 = sbr.rel (%p422) target = $region40
      $region39: #{_lambda_.3} parent=11 // pred_region
        _
      $region40: #{_lambda_.3} parent=11 // pred_fallthru
        _
      // Predicated region
      $region41: #{_lambda_.3} parent=11 // pred_check
        %p425 = pneg %p216
      $region42: #{_lambda_.3} parent=11 // pred_check_branch
        %427 = sbr.rel (%p425) target = $region44
      $region43: #{_lambda_.3} parent=11 // pred_region
        _
      $region44: #{_lambda_.3} parent=11 // pred_fallthru
        _
      // Predicated region
      $region45: #{_lambda_.3} parent=11 // pred_check
        %p428 = pneg %p237
      $region46: #{_lambda_.3} parent=11 // pred_check_branch
        %430 = sbr.rel (%p428) target = $region48
      $region47: #{_lambda_.3} parent=11 // pred_region
        _
      $region48: #{_lambda_.3} parent=11 // pred_fallthru
        _
      // Predicated region
      $region49: #{_lambda_.3} parent=11 // pred_check
        %p431 = pneg %p258
      $region50: #{_lambda_.3} parent=11 // pred_check_branch
        %433 = sbr.rel (%p431) target = $region52
      $region51: #{_lambda_.3} parent=11 // pred_region
        _
      $region52: #{_lambda_.3} parent=11 // pred_fallthru
        _
      // Predicated region
      $region53: #{_lambda_.3} parent=11 // pred_check
        %p434 = pneg %p279
      $region54: #{_lambda_.3} parent=11 // pred_check_branch
        %436 = sbr.rel (%p434) target = $region56
      $region55: #{_lambda_.3} parent=11 // pred_region
        _
      $region56: #{_lambda_.3} parent=11 // pred_fallthru
        _
      // Predicated region
      $region57: #{_lambda_.3} parent=11 // pred_check
        %p437 = pneg %p300
      $region58: #{_lambda_.3} parent=11 // pred_check_branch
        %439 = sbr.rel (%p437) target = $region60
      $region59: #{_lambda_.3} parent=11 // pred_region
        _
      $region60: #{_lambda_.3} parent=11 // pred_fallthru
        _
      // Predicated region
      $region61: #{_lambda_.3} parent=11 // pred_check
        %p440 = pneg %p321
      $region62: #{_lambda_.3} parent=11 // pred_check_branch
        %442 = sbr.rel (%p440) target = $region64
      $region63: #{_lambda_.3} parent=11 // pred_region
        _
      $region64: #{_lambda_.3} parent=11 // pred_fallthru
        _
      // Predicated region
      $region65: #{_lambda_.3} parent=11 // pred_check
        %p443 = pneg %p342
      $region66: #{_lambda_.3} parent=11 // pred_check_branch
        %445 = sbr.rel (%p443) target = $region68
      $region67: #{_lambda_.3} parent=11 // pred_region
        _
      $region68: #{_lambda_.3} parent=11 // pred_fallthru
        _
      // Predicated region
      $region69: #{_lambda_.3} parent=11 // pred_check
        %p446 = pneg %p363
      $region70: #{_lambda_.3} parent=11 // pred_check_branch
        %448 = sbr.rel (%p446) target = $region72
      $region71: #{_lambda_.3} parent=11 // pred_region
        _
      $region72: #{_lambda_.3} parent=11 // pred_fallthru
        _
    $region12: #{_lambda_.3} parent=5 // pred_fallthru
      _
    %p449 = scmp.lt.s32.totalorder %s22, 2
    // Predicated region
    $region73: #{_lambda_.3} parent=5 // pred_check
      %p450 = pneg %p449
    $region74: #{_lambda_.3} parent=5 // pred_check_branch
      %452 = sbr.rel (%p450) target = $region76
    $region75: #{_lambda_.3} parent=5 // pred_region
      // Predicated region
      $region77: #{_lambda_.3} parent=75 // pred_check
        %p453 = pneg %p42
      $region78: #{_lambda_.3} parent=75 // pred_check_branch
        %455 = sbr.rel (%p453) target = $region80
      $region79: #{_lambda_.3} parent=75 // pred_region
        %p456 = scmp.lt.s32.totalorder %s22, 1
        %s457 = scalar_select %p456, %s22, 1
        %s458 = smul.addr %s457, 2
        %s459 = smul.addr %s458, 8
        %s460 = scalar_lea.vmem %s0, %s459
      $region80: #{_lambda_.3} parent=75 // pred_fallthru
        _
    $region76: #{_lambda_.3} parent=5 // pred_fallthru
      _
    %p461 = scmp.le.s32.totalorder 1, %s22
    %p462 = scmp.lt.s32.totalorder %s22, 3
    %p463 = pnand %p461, %p462
    %p464 = pneg %p463
    // Predicated region
    $region81: #{_lambda_.3} parent=5 // pred_check
      _
    $region82: #{_lambda_.3} parent=5 // pred_check_branch
      %466 = sbr.rel (%p463) target = $region84
    $region83: #{_lambda_.3} parent=5 // pred_region
      %s467 = ssub.s32 %s22, 1
      %p468 = scmp.lt.s32.totalorder %s27, 1
      %s469 = scalar_select %p468, %s27, 1
      %s470 = smul.addr %s469, 2
      %s471 = smul.addr %s470, 8
      %s472 = scalar_lea.vmem %s0, %s471
      %p473 = pneg %p48
      %p474 = pneg %p45
      %p475 = pneg %p69
      %p476 = pneg %p66
      %p477 = pneg %p90
      %p478 = pneg %p87
      %p479 = pneg %p111
      %p480 = pneg %p108
      %p481 = pneg %p132
      %p482 = pneg %p129
      %p483 = pneg %p153
      %p484 = pneg %p150
      %p485 = pneg %p174
      %p486 = pneg %p171
      %p487 = pneg %p195
      %p488 = pneg %p192
      %p489 = pneg %p216
      %p490 = pneg %p213
      %p491 = pneg %p237
      %p492 = pneg %p234
      %p493 = pneg %p258
      %p494 = pneg %p255
      %p495 = pneg %p279
      %p496 = pneg %p276
      %p497 = pneg %p300
      %p498 = pneg %p297
      %p499 = pneg %p321
      %p500 = pneg %p318
      %p501 = pneg %p342
      %p502 = pneg %p339
      %p503 = pneg %p363
      %p504 = pneg %p360
      %p505 = pneg %p389
      %p506 = pneg %p386
      %p507 = scmp.lt.s32.totalorder %s27, 1
      %s508 = scalar_select %p507, %s27, 1
      %s509 = smul.addr %s508, 4
      %s510 = smul.addr %s509, 8
      %s511 = scalar_lea.vmem %s16, %s510
      %p512 = scmp.lt.s32.totalorder %s27, 1
      %s513 = scalar_select %p512, %s27, 1
      %s514 = smul.addr %s513, 2
      %s515 = smul.addr %s514, 8
      %s516 = scalar_lea.vmem %s0, %s515
      %p517 = scmp.lt.s32.totalorder %s27, 1
      %s518 = scalar_select %p517, %s27, 1
      %s519 = smul.addr %s518, 4
      %s520 = smul.addr %s519, 8
      %s521 = scalar_lea.vmem %s16, %s520
      %v522 = vld [vmem:[%s14] sm:$0x1]
      %v523 = vld [vmem:[%s15] sm:$0x1]
      %v524 = vld [vmem:[%s516] sm:$0xff]
      %v525 = vld [vmem:[%s516 + $0x8] sm:$0xff]
      %v526 = vld [vmem:[%s1] sm:$0xff]
      %v527 = vld [vmem:[%s1 + $0x8] sm:$0xff]
      %v528 = vld [vmem:[%s2] sm:$0x1]
      %v530 = vlaneseq
      %v531 = vshrl.u32 %v530, 7
      %v532 = vsub.s32 0, %v531
      %v533 = vrot.slane %v528, %v532
      %vm535 = vcmask 130048
      %v537 = vsel %vm535, %v524, 0
      %v540 = vsel %vm535, %v525, 0
      %542 = vmatprep.subr.mxu0 0.0
      %543 = vmatpush1.msra.mxu0 %v526
      %544 = vmatprep.subr.mxu0 0.0
      %545 = vmatpush1.msra.mxu0 %v527
      %546 = vmatprep.subr.mxu0 0.0
      %547 = vmatpush1.msra.mxu0 0.0
      %548 = vmatprep.subr.mxu0 0.0
      %549 = vmatpush1.msra.mxu0 0.0
      %550 = vmatprep.subr.mxu0 0.0
      %551 = vmatpush1.msra.mxu0 0.0
      %552 = vmatprep.subr.mxu0 0.0
      %553 = vmatpush1.msra.mxu0 0.0
      %554 = vmatprep.subr.mxu0 0.0
      %555 = vmatpush1.msra.mxu0 0.0
      %556 = vmatprep.subr.mxu0 0.0
      %557 = vmatpush1.msra.mxu0 0.0
      %558 = vmatprep.subr.mxu0 0.0
      %559 = vmatpush1.msra.mxu0 0.0
      %560 = vmatprep.subr.mxu0 0.0
      %561 = vmatpush1.msra.mxu0 0.0
      %562 = vmatprep.subr.mxu0 0.0
      %563 = vmatpush1.msra.mxu0 0.0
      %564 = vmatprep.subr.mxu0 0.0
      %565 = vmatpush1.msra.mxu0 0.0
      %566 = vmatprep.subr.mxu0 0.0
      %567 = vmatpush1.msra.mxu0 0.0
      %568 = vmatprep.subr.mxu0 0.0
      %569 = vmatpush1.msra.mxu0 0.0
      %570 = vmatprep.subr.mxu0 0.0
      %571 = vmatpush1.msra.mxu0 0.0
      %572 = vmatprep.subr.mxu0 0.0
      %573 = vmatpush1.msra.mxu0 0.0
      %574 = vmatprep.subr.mxu0 0.0
      %575 = vmatpush1.msra.mxu0 0.0
      %576 = vmatprep.subr.mxu0 0.0
      %577 = vmatpush1.msra.mxu0 0.0
      %578 = vmatprep.subr.mxu0 0.0
      %579 = vmatpush1.msra.mxu0 0.0
      %580 = vmatprep.subr.mxu0 0.0
      %581 = vmatpush1.msra.mxu0 0.0
      %582 = vmatprep.subr.mxu0 0.0
      %583 = vmatpush1.msra.mxu0 0.0
      %584 = vmatprep.subr.mxu0 0.0
      %585 = vmatpush1.msra.mxu0 0.0
      %586 = vmatprep.subr.mxu0 0.0
      %587 = vmatpush1.msra.mxu0 0.0
      %588 = vmatprep.subr.mxu0 0.0
      %589 = vmatpush1.msra.mxu0 0.0
      %590 = vmatprep.subr.mxu0 0.0
      %591 = vmatpush1.msra.mxu0 0.0
      %592 = vmatprep.subr.mxu0 0.0
      %593 = vmatpush1.msra.mxu0 0.0
      %594 = vmatprep.subr.mxu0 0.0
      %595 = vmatpush1.msra.mxu0 0.0
      %596 = vmatprep.subr.mxu0 0.0
      %597 = vmatpush1.msra.mxu0 0.0
      %598 = vmatprep.subr.mxu0 0.0
      %599 = vmatpush1.msra.mxu0 0.0
      %600 = vmatprep.subr.mxu0 0.0
      %601 = vmatpush1.msra.mxu0 0.0
      %602 = vmatprep.subr.mxu0 0.0
      %603 = vmatpush1.msra.mxu0 0.0
      %604 = vmatprep.subr.mxu0 0.0
      %605 = vmatpush1.msra.mxu0 0.0
      %606 = vmatprep.mubr.f32.mxu0 0.0
      %607 = vmatmul.mubr.f32.gmra.mrb[0].mxu0 %v537
      %v608 = vpop.f32.mrb[0].mxu0
      %v609 = vadd.f32 %v533, %v608
      %v610 = vpop.f32.mrb[0].mxu0
      %611 = vmatprep.mubr.f32.mxu0 0.0
      %612 = vmatmul.mubr.f32.gmra.mrb[0].mxu0 %v540
      %v613 = vpop.f32.mrb[0].mxu0
      %v614 = vadd.f32 %v533, %v613
      %v615 = vpop.f32.mrb[0].mxu0
      %616 = vdwg.mxu0
      %v617 = vld [vmem:[%s3] sm:$0xff]
      %v618 = vld [vmem:[%s3 + $0x8] sm:$0xff]
      %v619 = vadd.f32 %v609, %v617
      %v620 = vadd.f32 %v614, %v618
      %vm621 = vcmask 261120
      %v622 = vsel %vm621, %v619, 0.0
      %623 = vadd.xlane.f32.xlu0 %v622
      %v624 = vpop.xlane.xlu0 %623
      %v625 = vsel %vm621, %v620, 0.0
      %626 = vadd.xlane.f32.xlu0 %v625
      %v627 = vpop.xlane.xlu0 %626
      %v628 = vrcp.pop 32.0
      %v629 = vmul.f32 %v624, %v628
      %v630 = vmul.f32 %v627, %v628
      %v631 = vsub.f32 %v619, %v629
      %v632 = vsub.f32 %v620, %v630
      %v633 = vmul.f32 %v631, %v631
      %v634 = vmul.f32 %v632, %v632
      %v635 = vsel %vm621, %v633, 0.0
      %636 = vadd.xlane.f32.xlu0 %v635
      %v637 = vpop.xlane.xlu0 %636
      %v638 = vsel %vm621, %v634, 0.0
      %639 = vadd.xlane.f32.xlu0 %v638
      %v640 = vpop.xlane.xlu0 %639
      %v641 = vmul.f32 %v637, %v628
      %v642 = vmul.f32 %v640, %v628
      %v643 = vadd.f32 %v641, 1e-05
      %v644 = vadd.f32 %v642, 1e-05
      %v645 = vrsqrt.pop %v643
      %v646 = vrsqrt.pop %v644
      %v647 = vmul.f32 %v631, %v645
      %v648 = vmul.f32 %v632, %v646
      %v650 = vlaneseq
      %v651 = vshrl.u32 %v650, 7
      %v652 = vsub.s32 0, %v651
      %v653 = vrot.slane %v522, %v652
      %v655 = vmul.f32 %v647, %v653
      %v656 = vmul.f32 %v648, %v653
      %v658 = vlaneseq
      %v659 = vshrl.u32 %v658, 7
      %v660 = vsub.s32 0, %v659
      %v661 = vrot.slane %v523, %v660
      %v663 = vadd.f32 %v655, %v661
      %v664 = vadd.f32 %v656, %v661
      %665 = vst.msk [vmem:[%s521] sm:$0xff] %vm621, %v663
      %666 = vst.msk [vmem:[%s521 + $0x8] sm:$0xff] %vm621, %v664
      %v667 = vld [vmem:[%s4] sm:$0xff]
      %v668 = vld [vmem:[%s4 + $0x8] sm:$0xff]
      %v669 = vld [vmem:[%s4 + $0x10] sm:$0xff]
      %v670 = vld [vmem:[%s4 + $0x18] sm:$0xff]
      %v671 = vld [vmem:[%s5] sm:$0x1]
      %v673 = vlaneseq
      %v674 = vshrl.u32 %v673, 7
      %v675 = vsub.s32 0, %v674
      %v676 = vrot.slane %v671, %v675
      %v679 = vsel %vm621, %v619, 0
      %v682 = vsel %vm621, %v620, 0
      %684 = vmatprep.subr.mxu0 0.0
      %685 = vmatpush1.msra.mxu0 %v667
      %686 = vmatprep.subr.mxu0 0.0
      %687 = vmatpush1.msra.mxu0 %v668
      %688 = vmatprep.subr.mxu0 0.0
      %689 = vmatpush1.msra.mxu0 %v669
      %690 = vmatprep.subr.mxu0 0.0
      %691 = vmatpush1.msra.mxu0 %v670
      %692 = vmatprep.subr.mxu0 0.0
      %693 = vmatpush1.msra.mxu0 0.0
      %694 = vmatprep.subr.mxu0 0.0
      %695 = vmatpush1.msra.mxu0 0.0
      %696 = vmatprep.subr.mxu0 0.0
      %697 = vmatpush1.msra.mxu0 0.0
      %698 = vmatprep.subr.mxu0 0.0
      %699 = vmatpush1.msra.mxu0 0.0
      %700 = vmatprep.subr.mxu0 0.0
      %701 = vmatpush1.msra.mxu0 0.0
      %702 = vmatprep.subr.mxu0 0.0
      %703 = vmatpush1.msra.mxu0 0.0
      %704 = vmatprep.subr.mxu0 0.0
      %705 = vmatpush1.msra.mxu0 0.0
      %706 = vmatprep.subr.mxu0 0.0
      %707 = vmatpush1.msra.mxu0 0.0
      %708 = vmatprep.subr.mxu0 0.0
      %709 = vmatpush1.msra.mxu0 0.0
      %710 = vmatprep.subr.mxu0 0.0
      %711 = vmatpush1.msra.mxu0 0.0
      %712 = vmatprep.subr.mxu0 0.0
      %713 = vmatpush1.msra.mxu0 0.0
      %714 = vmatprep.subr.mxu0 0.0
      %715 = vmatpush1.msra.mxu0 0.0
      %716 = vmatprep.subr.mxu0 0.0
      %717 = vmatpush1.msra.mxu0 0.0
      %718 = vmatprep.subr.mxu0 0.0
      %719 = vmatpush1.msra.mxu0 0.0
      %720 = vmatprep.subr.mxu0 0.0
      %721 = vmatpush1.msra.mxu0 0.0
      %722 = vmatprep.subr.mxu0 0.0
      %723 = vmatpush1.msra.mxu0 0.0
      %724 = vmatprep.subr.mxu0 0.0
      %725 = vmatpush1.msra.mxu0 0.0
      %726 = vmatprep.subr.mxu0 0.0
      %727 = vmatpush1.msra.mxu0 0.0
      %728 = vmatprep.subr.mxu0 0.0
      %729 = vmatpush1.msra.mxu0 0.0
      %730 = vmatprep.subr.mxu0 0.0
      %731 = vmatpush1.msra.mxu0 0.0
      %732 = vmatprep.subr.mxu0 0.0
      %733 = vmatpush1.msra.mxu0 0.0
      %734 = vmatprep.subr.mxu0 0.0
      %735 = vmatpush1.msra.mxu0 0.0
      %736 = vmatprep.subr.mxu0 0.0
      %737 = vmatpush1.msra.mxu0 0.0
      %738 = vmatprep.subr.mxu0 0.0
      %739 = vmatpush1.msra.mxu0 0.0
      %740 = vmatprep.subr.mxu0 0.0
      %741 = vmatpush1.msra.mxu0 0.0
      %742 = vmatprep.subr.mxu0 0.0
      %743 = vmatpush1.msra.mxu0 0.0
      %744 = vmatprep.subr.mxu0 0.0
      %745 = vmatpush1.msra.mxu0 0.0
      %746 = vmatprep.subr.mxu0 0.0
      %747 = vmatpush1.msra.mxu0 0.0
      %748 = vmatprep.mubr.f32.mxu0 0.0
      %749 = vmatmul.mubr.f32.gmra.mrb[0].mxu0 %v679
      %v750 = vpop.f32.mrb[0].mxu0
      %v751 = vadd.f32 %v676, %v750
      %v752 = vpop.f32.mrb[0].mxu0
      %753 = vmatprep.mubr.f32.mxu0 0.0
      %754 = vmatmul.mubr.f32.gmra.mrb[0].mxu0 %v682
      %v755 = vpop.f32.mrb[0].mxu0
      %v756 = vadd.f32 %v676, %v755
      %v757 = vpop.f32.mrb[0].mxu0
      %758 = vdwg.mxu0
      %v759 = vld [vmem:[%s8] sm:$0x1]
      %v760 = vld [vmem:[%s6] sm:$0xff]
      %v762 = vsel %vm535, %v760, 0
      %764 = vmatprep.subr.mxu0 0.0
      %765 = vmatpush1.msra.mxu0 %v751
      %766 = vmatprep.subr.mxu0 0.0
      %767 = vmatpush1.msra.mxu0 %v756
      %768 = vmatprep.subr.mxu0 0.0
      %769 = vmatpush1.msra.mxu0 0.0
      %770 = vmatprep.subr.mxu0 0.0
      %771 = vmatpush1.msra.mxu0 0.0
      %772 = vmatprep.subr.mxu0 0.0
      %773 = vmatpush1.msra.mxu0 0.0
      %774 = vmatprep.subr.mxu0 0.0
      %775 = vmatpush1.msra.mxu0 0.0
      %776 = vmatprep.subr.mxu0 0.0
      %777 = vmatpush1.msra.mxu0 0.0
      %778 = vmatprep.subr.mxu0 0.0
      %779 = vmatpush1.msra.mxu0 0.0
      %780 = vmatprep.subr.mxu0 0.0
      %781 = vmatpush1.msra.mxu0 0.0
      %782 = vmatprep.subr.mxu0 0.0
      %783 = vmatpush1.msra.mxu0 0.0
      %784 = vmatprep.subr.mxu0 0.0
      %785 = vmatpush1.msra.mxu0 0.0
      %786 = vmatprep.subr.mxu0 0.0
      %787 = vmatpush1.msra.mxu0 0.0
      %788 = vmatprep.subr.mxu0 0.0
      %789 = vmatpush1.msra.mxu0 0.0
      %790 = vmatprep.subr.mxu0 0.0
      %791 = vmatpush1.msra.mxu0 0.0
      %792 = vmatprep.subr.mxu0 0.0
      %793 = vmatpush1.msra.mxu0 0.0
      %794 = vmatprep.subr.mxu0 0.0
      %795 = vmatpush1.msra.mxu0 0.0
      %796 = vmatprep.subr.mxu0 0.0
      %797 = vmatpush1.msra.mxu0 0.0
      %798 = vmatprep.subr.mxu0 0.0
      %799 = vmatpush1.msra.mxu0 0.0
      %800 = vmatprep.subr.mxu0 0.0
      %801 = vmatpush1.msra.mxu0 0.0
      %802 = vmatprep.subr.mxu0 0.0
      %803 = vmatpush1.msra.mxu0 0.0
      %804 = vmatprep.subr.mxu0 0.0
      %805 = vmatpush1.msra.mxu0 0.0
      %806 = vmatprep.subr.mxu0 0.0
      %807 = vmatpush1.msra.mxu0 0.0
      %808 = vmatprep.subr.mxu0 0.0
      %809 = vmatpush1.msra.mxu0 0.0
      %810 = vmatprep.subr.mxu0 0.0
      %811 = vmatpush1.msra.mxu0 0.0
      %812 = vmatprep.subr.mxu0 0.0
      %813 = vmatpush1.msra.mxu0 0.0
      %814 = vmatprep.subr.mxu0 0.0
      %815 = vmatpush1.msra.mxu0 0.0
      %816 = vmatprep.subr.mxu0 0.0
      %817 = vmatpush1.msra.mxu0 0.0
      %818 = vmatprep.subr.mxu0 0.0
      %819 = vmatpush1.msra.mxu0 0.0
      %820 = vmatprep.subr.mxu0 0.0
      %821 = vmatpush1.msra.mxu0 0.0
      %822 = vmatprep.subr.mxu0 0.0
      %823 = vmatpush1.msra.mxu0 0.0
      %824 = vmatprep.subr.mxu0 0.0
      %825 = vmatpush1.msra.mxu0 0.0
      %826 = vmatprep.subr.mxu0 0.0
      %827 = vmatpush1.msra.mxu0 0.0
      %828 = vmatprep.mubr.f32.mxu0 0.0
      %829 = vmatmul.mubr.f32.gmra.mrb[0].mxu0 %v762
      %v830 = vpop.f32.mrb[0].mxu0
      %v831 = vadd.f32 0.0, %v830
      %v832 = vpop.f32.mrb[0].mxu0
      %833 = vdwg.mxu0
      %v834 = vld [vmem:[%s7] sm:$0xff]
      %vm835 = vcmask 64512
      %v837 = vsel %vm835, %v831, 0
      %839 = vmatprep.subr.mxu0 0.0
      %840 = vmatpush1.msra.mxu0 %v834
      %841 = vmatprep.subr.mxu0 0.0
      %842 = vmatpush1.msra.mxu0 0.0
      %843 = vmatprep.subr.mxu0 0.0
      %844 = vmatpush1.msra.mxu0 0.0
      %845 = vmatprep.subr.mxu0 0.0
      %846 = vmatpush1.msra.mxu0 0.0
      %847 = vmatprep.subr.mxu0 0.0
      %848 = vmatpush1.msra.mxu0 0.0
      %849 = vmatprep.subr.mxu0 0.0
      %850 = vmatpush1.msra.mxu0 0.0
      %851 = vmatprep.subr.mxu0 0.0
      %852 = vmatpush1.msra.mxu0 0.0
      %853 = vmatprep.subr.mxu0 0.0
      %854 = vmatpush1.msra.mxu0 0.0
      %855 = vmatprep.subr.mxu0 0.0
      %856 = vmatpush1.msra.mxu0 0.0
      %857 = vmatprep.subr.mxu0 0.0
      %858 = vmatpush1.msra.mxu0 0.0
      %859 = vmatprep.subr.mxu0 0.0
      %860 = vmatpush1.msra.mxu0 0.0
      %861 = vmatprep.subr.mxu0 0.0
      %862 = vmatpush1.msra.mxu0 0.0
      %863 = vmatprep.subr.mxu0 0.0
      %864 = vmatpush1.msra.mxu0 0.0
      %865 = vmatprep.subr.mxu0 0.0
      %866 = vmatpush1.msra.mxu0 0.0
      %867 = vmatprep.subr.mxu0 0.0
      %868 = vmatpush1.msra.mxu0 0.0
      %869 = vmatprep.subr.mxu0 0.0
      %870 = vmatpush1.msra.mxu0 0.0
      %871 = vmatprep.subr.mxu0 0.0
      %872 = vmatpush1.msra.mxu0 0.0
      %873 = vmatprep.subr.mxu0 0.0
      %874 = vmatpush1.msra.mxu0 0.0
      %875 = vmatprep.subr.mxu0 0.0
      %876 = vmatpush1.msra.mxu0 0.0
      %877 = vmatprep.subr.mxu0 0.0
      %878 = vmatpush1.msra.mxu0 0.0
      %879 = vmatprep.subr.mxu0 0.0
      %880 = vmatpush1.msra.mxu0 0.0
      %881 = vmatprep.subr.mxu0 0.0
      %882 = vmatpush1.msra.mxu0 0.0
      %883 = vmatprep.subr.mxu0 0.0
      %884 = vmatpush1.msra.mxu0 0.0
      %885 = vmatprep.subr.mxu0 0.0
      %886 = vmatpush1.msra.mxu0 0.0
      %887 = vmatprep.subr.mxu0 0.0
      %888 = vmatpush1.msra.mxu0 0.0
      %889 = vmatprep.subr.mxu0 0.0
      %890 = vmatpush1.msra.mxu0 0.0
      %891 = vmatprep.subr.mxu0 0.0
      %892 = vmatpush1.msra.mxu0 0.0
      %893 = vmatprep.subr.mxu0 0.0
      %894 = vmatpush1.msra.mxu0 0.0
      %895 = vmatprep.subr.mxu0 0.0
      %896 = vmatpush1.msra.mxu0 0.0
      %897 = vmatprep.subr.mxu0 0.0
      %898 = vmatpush1.msra.mxu0 0.0
      %899 = vmatprep.subr.mxu0 0.0
      %900 = vmatpush1.msra.mxu0 0.0
      %901 = vmatprep.subr.mxu0 0.0
      %902 = vmatpush1.msra.mxu0 0.0
      %903 = vmatprep.mubr.f32.mxu0 0.0
      %904 = vmatmul.mubr.f32.gmra.mrb[0].mxu0 %v837
      %v905 = vpop.f32.mrb[0].mxu0
      %v906 = vadd.f32 0.0, %v905
      %v907 = vpop.f32.mrb[0].mxu0
      %908 = vdwg.mxu0
      %v910 = vlaneseq
      %v911 = vshrl.u32 %v910, 7
      %v912 = vsub.s32 0, %v911
      %v913 = vrot.slane %v759, %v912
      %v915 = vadd.f32 %v913, %v906
      %s916 = scalar_lea.vmem %s6, 8
      %v917 = vld [vmem:[%s916] sm:$0xff]
      %v919 = vsel %vm535, %v917, 0
      %921 = vmatprep.subr.mxu0 0.0
      %922 = vmatpush1.msra.mxu0 %v751
      %923 = vmatprep.subr.mxu0 0.0
      %924 = vmatpush1.msra.mxu0 %v756
      %925 = vmatprep.subr.mxu0 0.0
      %926 = vmatpush1.msra.mxu0 0.0
      %927 = vmatprep.subr.mxu0 0.0
      %928 = vmatpush1.msra.mxu0 0.0
      %929 = vmatprep.subr.mxu0 0.0
      %930 = vmatpush1.msra.mxu0 0.0
      %931 = vmatprep.subr.mxu0 0.0
      %932 = vmatpush1.msra.mxu0 0.0
      %933 = vmatprep.subr.mxu0 0.0
      %934 = vmatpush1.msra.mxu0 0.0
      %935 = vmatprep.subr.mxu0 0.0
      %936 = vmatpush1.msra.mxu0 0.0
      %937 = vmatprep.subr.mxu0 0.0
      %938 = vmatpush1.msra.mxu0 0.0
      %939 = vmatprep.subr.mxu0 0.0
      %940 = vmatpush1.msra.mxu0 0.0
      %941 = vmatprep.subr.mxu0 0.0
      %942 = vmatpush1.msra.mxu0 0.0
      %943 = vmatprep.subr.mxu0 0.0
      %944 = vmatpush1.msra.mxu0 0.0
      %945 = vmatprep.subr.mxu0 0.0
      %946 = vmatpush1.msra.mxu0 0.0
      %947 = vmatprep.subr.mxu0 0.0
      %948 = vmatpush1.msra.mxu0 0.0
      %949 = vmatprep.subr.mxu0 0.0
      %950 = vmatpush1.msra.mxu0 0.0
      %951 = vmatprep.subr.mxu0 0.0
      %952 = vmatpush1.msra.mxu0 0.0
      %953 = vmatprep.subr.mxu0 0.0
      %954 = vmatpush1.msra.mxu0 0.0
      %955 = vmatprep.subr.mxu0 0.0
      %956 = vmatpush1.msra.mxu0 0.0
      %957 = vmatprep.subr.mxu0 0.0
      %958 = vmatpush1.msra.mxu0 0.0
      %959 = vmatprep.subr.mxu0 0.0
      %960 = vmatpush1.msra.mxu0 0.0
      %961 = vmatprep.subr.mxu0 0.0
      %962 = vmatpush1.msra.mxu0 0.0
      %963 = vmatprep.subr.mxu0 0.0
      %964 = vmatpush1.msra.mxu0 0.0
      %965 = vmatprep.subr.mxu0 0.0
      %966 = vmatpush1.msra.mxu0 0.0
      %967 = vmatprep.subr.mxu0 0.0
      %968 = vmatpush1.msra.mxu0 0.0
      %969 = vmatprep.subr.mxu0 0.0
      %970 = vmatpush1.msra.mxu0 0.0
      %971 = vmatprep.subr.mxu0 0.0
      %972 = vmatpush1.msra.mxu0 0.0
      %973 = vmatprep.subr.mxu0 0.0
      %974 = vmatpush1.msra.mxu0 0.0
      %975 = vmatprep.subr.mxu0 0.0
      %976 = vmatpush1.msra.mxu0 0.0
      %977 = vmatprep.subr.mxu0 0.0
      %978 = vmatpush1.msra.mxu0 0.0
      %979 = vmatprep.subr.mxu0 0.0
      %980 = vmatpush1.msra.mxu0 0.0
      %981 = vmatprep.subr.mxu0 0.0
      %982 = vmatpush1.msra.mxu0 0.0
      %983 = vmatprep.subr.mxu0 0.0
      %984 = vmatpush1.msra.mxu0 0.0
      %985 = vmatprep.mubr.f32.mxu0 0.0
      %986 = vmatmul.mubr.f32.gmra.mrb[0].mxu0 %v919
      %v987 = vpop.f32.mrb[0].mxu0
      %v988 = vadd.f32 0.0, %v987
      %v989 = vpop.f32.mrb[0].mxu0
      %990 = vdwg.mxu0
      %v991 = vld [vmem:[%s7 + $0x8] sm:$0xff]
      %v993 = vsel %vm835, %v988, 0
      %995 = vmatprep.subr.mxu0 0.0
      %996 = vmatpush1.msra.mxu0 %v991
      %997 = vmatprep.subr.mxu0 0.0
      %998 = vmatpush1.msra.mxu0 0.0
      %999 = vmatprep.subr.mxu0 0.0
      %1000 = vmatpush1.msra.mxu0 0.0
      %1001 = vmatprep.subr.mxu0 0.0
      %1002 = vmatpush1.msra.mxu0 0.0
      %1003 = vmatprep.subr.mxu0 0.0
      %1004 = vmatpush1.msra.mxu0 0.0
      %1005 = vmatprep.subr.mxu0 0.0
      %1006 = vmatpush1.msra.mxu0 0.0
      %1007 = vmatprep.subr.mxu0 0.0
      %1008 = vmatpush1.msra.mxu0 0.0
      %1009 = vmatprep.subr.mxu0 0.0
      %1010 = vmatpush1.msra.mxu0 0.0
      %1011 = vmatprep.subr.mxu0 0.0
      %1012 = vmatpush1.msra.mxu0 0.0
      %1013 = vmatprep.subr.mxu0 0.0
      %1014 = vmatpush1.msra.mxu0 0.0
      %1015 = vmatprep.subr.mxu0 0.0
      %1016 = vmatpush1.msra.mxu0 0.0
      %1017 = vmatprep.subr.mxu0 0.0
      %1018 = vmatpush1.msra.mxu0 0.0
      %1019 = vmatprep.subr.mxu0 0.0
      %1020 = vmatpush1.msra.mxu0 0.0
      %1021 = vmatprep.subr.mxu0 0.0
      %1022 = vmatpush1.msra.mxu0 0.0
      %1023 = vmatprep.subr.mxu0 0.0
      %1024 = vmatpush1.msra.mxu0 0.0
      %1025 = vmatprep.subr.mxu0 0.0
      %1026 = vmatpush1.msra.mxu0 0.0
      %1027 = vmatprep.subr.mxu0 0.0
      %1028 = vmatpush1.msra.mxu0 0.0
      %1029 = vmatprep.subr.mxu0 0.0
      %1030 = vmatpush1.msra.mxu0 0.0
      %1031 = vmatprep.subr.mxu0 0.0
      %1032 = vmatpush1.msra.mxu0 0.0
      %1033 = vmatprep.subr.mxu0 0.0
      %1034 = vmatpush1.msra.mxu0 0.0
      %1035 = vmatprep.subr.mxu0 0.0
      %1036 = vmatpush1.msra.mxu0 0.0
      %1037 = vmatprep.subr.mxu0 0.0
      %1038 = vmatpush1.msra.mxu0 0.0
      %1039 = vmatprep.subr.mxu0 0.0
      %1040 = vmatpush1.msra.mxu0 0.0
      %1041 = vmatprep.subr.mxu0 0.0
      %1042 = vmatpush1.msra.mxu0 0.0
      %1043 = vmatprep.subr.mxu0 0.0
      %1044 = vmatpush1.msra.mxu0 0.0
      %1045 = vmatprep.subr.mxu0 0.0
      %1046 = vmatpush1.msra.mxu0 0.0
      %1047 = vmatprep.subr.mxu0 0.0
      %1048 = vmatpush1.msra.mxu0 0.0
      %1049 = vmatprep.subr.mxu0 0.0
      %1050 = vmatpush1.msra.mxu0 0.0
      %1051 = vmatprep.subr.mxu0 0.0
      %1052 = vmatpush1.msra.mxu0 0.0
      %1053 = vmatprep.subr.mxu0 0.0
      %1054 = vmatpush1.msra.mxu0 0.0
      %1055 = vmatprep.subr.mxu0 0.0
      %1056 = vmatpush1.msra.mxu0 0.0
      %1057 = vmatprep.subr.mxu0 0.0
      %1058 = vmatpush1.msra.mxu0 0.0
      %1059 = vmatprep.mubr.f32.mxu0 0.0
      %1060 = vmatmul.mubr.f32.gmra.mrb[0].mxu0 %v993
      %v1061 = vpop.f32.mrb[0].mxu0
      %v1062 = vadd.f32 0.0, %v1061
      %v1063 = vpop.f32.mrb[0].mxu0
      %1064 = vdwg.mxu0
      %v1065 = vadd.f32 %v915, %v1062
      %vm1066 = vcmp.gt.f32.partialorder %v1065, 0.0
      %v1067 = vmul.f32 %v1065, 1.442695
      %v1068 = vpow.pop %v1067
      %v1069 = vsub.f32 %v1068, 1.0
      %v1070 = vsel %vm1066, %v1065, %v1069
      %v1071 = vld [vmem:[%s12] sm:$0xff]
      %v1072 = vld [vmem:[%s13] sm:$0x1]
      %v1074 = vlaneseq
      %v1075 = vshrl.u32 %v1074, 7
      %v1076 = vsub.s32 0, %v1075
      %v1077 = vrot.slane %v1072, %v1076
      %v1080 = vsel %vm835, %v1070, 0
      %1082 = vmatprep.subr.mxu0 0.0
      %1083 = vmatpush1.msra.mxu0 %v1071
      %1084 = vmatprep.subr.mxu0 0.0
      %1085 = vmatpush1.msra.mxu0 0.0
      %1086 = vmatprep.subr.mxu0 0.0
      %1087 = vmatpush1.msra.mxu0 0.0
      %1088 = vmatprep.subr.mxu0 0.0
      %1089 = vmatpush1.msra.mxu0 0.0
      %1090 = vmatprep.subr.mxu0 0.0
      %1091 = vmatpush1.msra.mxu0 0.0
      %1092 = vmatprep.subr.mxu0 0.0
      %1093 = vmatpush1.msra.mxu0 0.0
      %1094 = vmatprep.subr.mxu0 0.0
      %1095 = vmatpush1.msra.mxu0 0.0
      %1096 = vmatprep.subr.mxu0 0.0
      %1097 = vmatpush1.msra.mxu0 0.0
      %1098 = vmatprep.subr.mxu0 0.0
      %1099 = vmatpush1.msra.mxu0 0.0
      %1100 = vmatprep.subr.mxu0 0.0
      %1101 = vmatpush1.msra.mxu0 0.0
      %1102 = vmatprep.subr.mxu0 0.0
      %1103 = vmatpush1.msra.mxu0 0.0
      %1104 = vmatprep.subr.mxu0 0.0
      %1105 = vmatpush1.msra.mxu0 0.0
      %1106 = vmatprep.subr.mxu0 0.0
      %1107 = vmatpush1.msra.mxu0 0.0
      %1108 = vmatprep.subr.mxu0 0.0
      %1109 = vmatpush1.msra.mxu0 0.0
      %1110 = vmatprep.subr.mxu0 0.0
      %1111 = vmatpush1.msra.mxu0 0.0
      %1112 = vmatprep.subr.mxu0 0.0
      %1113 = vmatpush1.msra.mxu0 0.0
      %1114 = vmatprep.subr.mxu0 0.0
      %1115 = vmatpush1.msra.mxu0 0.0
      %1116 = vmatprep.subr.mxu0 0.0
      %1117 = vmatpush1.msra.mxu0 0.0
      %1118 = vmatprep.subr.mxu0 0.0
      %1119 = vmatpush1.msra.mxu0 0.0
      %1120 = vmatprep.subr.mxu0 0.0
      %1121 = vmatpush1.msra.mxu0 0.0
      %1122 = vmatprep.subr.mxu0 0.0
      %1123 = vmatpush1.msra.mxu0 0.0
      %1124 = vmatprep.subr.mxu0 0.0
      %1125 = vmatpush1.msra.mxu0 0.0
      %1126 = vmatprep.subr.mxu0 0.0
      %1127 = vmatpush1.msra.mxu0 0.0
      %1128 = vmatprep.subr.mxu0 0.0
      %1129 = vmatpush1.msra.mxu0 0.0
      %1130 = vmatprep.subr.mxu0 0.0
      %1131 = vmatpush1.msra.mxu0 0.0
      %1132 = vmatprep.subr.mxu0 0.0
      %1133 = vmatpush1.msra.mxu0 0.0
      %1134 = vmatprep.subr.mxu0 0.0
      %1135 = vmatpush1.msra.mxu0 0.0
      %1136 = vmatprep.subr.mxu0 0.0
      %1137 = vmatpush1.msra.mxu0 0.0
      %1138 = vmatprep.subr.mxu0 0.0
      %1139 = vmatpush1.msra.mxu0 0.0
      %1140 = vmatprep.subr.mxu0 0.0
      %1141 = vmatpush1.msra.mxu0 0.0
      %1142 = vmatprep.subr.mxu0 0.0
      %1143 = vmatpush1.msra.mxu0 0.0
      %1144 = vmatprep.subr.mxu0 0.0
      %1145 = vmatpush1.msra.mxu0 0.0
      %1146 = vmatprep.mubr.f32.mxu0 0.0
      %1147 = vmatmul.mubr.f32.gmra.mrb[0].mxu0 %v1080
      %v1148 = vpop.f32.mrb[0].mxu0
      %v1149 = vadd.f32 %v1077, %v1148
      %v1150 = vpop.f32.mrb[0].mxu0
      %1151 = vdwg.mxu0
      %v1152 = vsel %vm621, %v1149, 0.0
      %1153 = vadd.xlane.f32.xlu0 %v1152
      %v1154 = vpop.xlane.xlu0 %1153
      %v1155 = vmul.f32 %v1154, %v628
      %v1156 = vsub.f32 %v1149, %v1155
      %v1157 = vmul.f32 %v1156, %v1156
      %v1158 = vsel %vm621, %v1157, 0.0
      %1159 = vadd.xlane.f32.xlu0 %v1158
      %v1160 = vpop.xlane.xlu0 %1159
      %v1161 = vmul.f32 %v1160, %v628
      %v1162 = vadd.f32 %v1161, 1e-05
      %v1163 = vrsqrt.pop %v1162
      %v1164 = vmul.f32 %v1156, %v1163
      %v1165 = vmul.f32 %v1164, %v653
      %v1166 = vadd.f32 %v1165, %v661
      %1167 = vst.msk [vmem:[%s521 + $0x10] sm:$0xff] %vm621, %v1166
      %v1168 = vld [vmem:[%s11] sm:$0x1]
      %v1169 = vld [vmem:[%s9] sm:$0xf]
      %v1171 = vsel %vm835, %v1169, 0
      %1173 = vmatprep.subr.mxu0 0.0
      %1174 = vmatpush1.msra.mxu0 %v1070
      %1175 = vmatprep.subr.mxu0 0.0
      %1176 = vmatpush1.msra.mxu0 0.0
      %1177 = vmatprep.subr.mxu0 0.0
      %1178 = vmatpush1.msra.mxu0 0.0
      %1179 = vmatprep.subr.mxu0 0.0
      %1180 = vmatpush1.msra.mxu0 0.0
      %1181 = vmatprep.subr.mxu0 0.0
      %1182 = vmatpush1.msra.mxu0 0.0
      %1183 = vmatprep.subr.mxu0 0.0
      %1184 = vmatpush1.msra.mxu0 0.0
      %1185 = vmatprep.subr.mxu0 0.0
      %1186 = vmatpush1.msra.mxu0 0.0
      %1187 = vmatprep.subr.mxu0 0.0
      %1188 = vmatpush1.msra.mxu0 0.0
      %1189 = vmatprep.subr.mxu0 0.0
      %1190 = vmatpush1.msra.mxu0 0.0
      %1191 = vmatprep.subr.mxu0 0.0
      %1192 = vmatpush1.msra.mxu0 0.0
      %1193 = vmatprep.subr.mxu0 0.0
      %1194 = vmatpush1.msra.mxu0 0.0
      %1195 = vmatprep.subr.mxu0 0.0
      %1196 = vmatpush1.msra.mxu0 0.0
      %1197 = vmatprep.subr.mxu0 0.0
      %1198 = vmatpush1.msra.mxu0 0.0
      %1199 = vmatprep.subr.mxu0 0.0
      %1200 = vmatpush1.msra.mxu0 0.0
      %1201 = vmatprep.subr.mxu0 0.0
      %1202 = vmatpush1.msra.mxu0 0.0
      %1203 = vmatprep.subr.mxu0 0.0
      %1204 = vmatpush1.msra.mxu0 0.0
      %1205 = vmatprep.subr.mxu0 0.0
      %1206 = vmatpush1.msra.mxu0 0.0
      %1207 = vmatprep.subr.mxu0 0.0
      %1208 = vmatpush1.msra.mxu0 0.0
      %1209 = vmatprep.subr.mxu0 0.0
      %1210 = vmatpush1.msra.mxu0 0.0
      %1211 = vmatprep.subr.mxu0 0.0
      %1212 = vmatpush1.msra.mxu0 0.0
      %1213 = vmatprep.subr.mxu0 0.0
      %1214 = vmatpush1.msra.mxu0 0.0
      %1215 = vmatprep.subr.mxu0 0.0
      %1216 = vmatpush1.msra.mxu0 0.0
      %1217 = vmatprep.subr.mxu0 0.0
      %1218 = vmatpush1.msra.mxu0 0.0
      %1219 = vmatprep.subr.mxu0 0.0
      %1220 = vmatpush1.msra.mxu0 0.0
      %1221 = vmatprep.subr.mxu0 0.0
      %1222 = vmatpush1.msra.mxu0 0.0
      %1223 = vmatprep.subr.mxu0 0.0
      %1224 = vmatpush1.msra.mxu0 0.0
      %1225 = vmatprep.subr.mxu0 0.0
      %1226 = vmatpush1.msra.mxu0 0.0
      %1227 = vmatprep.subr.mxu0 0.0
      %1228 = vmatpush1.msra.mxu0 0.0
      %1229 = vmatprep.subr.mxu0 0.0
      %1230 = vmatpush1.msra.mxu0 0.0
      %1231 = vmatprep.subr.mxu0 0.0
      %1232 = vmatpush1.msra.mxu0 0.0
      %1233 = vmatprep.subr.mxu0 0.0
      %1234 = vmatpush1.msra.mxu0 0.0
      %1235 = vmatprep.subr.mxu0 0.0
      %1236 = vmatpush1.msra.mxu0 0.0
      %1237 = vmatprep.mubr.f32.mxu0 0.0
      %1238 = vmatmul.mubr.f32.gmra.mrb[0].mxu0 %v1171
      %v1239 = vpop.f32.mrb[0].mxu0
      %v1240 = vadd.f32 0.0, %v1239
      %v1241 = vpop.f32.mrb[0].mxu0
      %1242 = vdwg.mxu0
      %v1243 = vld [vmem:[%s10] sm:$0xff]
      %v1245 = vsel %vm835, %v1240, 0
      %1247 = vmatprep.subr.mxu0 0.0
      %1248 = vmatpush1.msra.mxu0 %v1243
      %1249 = vmatprep.subr.mxu0 0.0
      %1250 = vmatpush1.msra.mxu0 0.0
      %1251 = vmatprep.subr.mxu0 0.0
      %1252 = vmatpush1.msra.mxu0 0.0
      %1253 = vmatprep.subr.mxu0 0.0
      %1254 = vmatpush1.msra.mxu0 0.0
      %1255 = vmatprep.subr.mxu0 0.0
      %1256 = vmatpush1.msra.mxu0 0.0
      %1257 = vmatprep.subr.mxu0 0.0
      %1258 = vmatpush1.msra.mxu0 0.0
      %1259 = vmatprep.subr.mxu0 0.0
      %1260 = vmatpush1.msra.mxu0 0.0
      %1261 = vmatprep.subr.mxu0 0.0
      %1262 = vmatpush1.msra.mxu0 0.0
      %1263 = vmatprep.subr.mxu0 0.0
      %1264 = vmatpush1.msra.mxu0 0.0
      %1265 = vmatprep.subr.mxu0 0.0
      %1266 = vmatpush1.msra.mxu0 0.0
      %1267 = vmatprep.subr.mxu0 0.0
      %1268 = vmatpush1.msra.mxu0 0.0
      %1269 = vmatprep.subr.mxu0 0.0
      %1270 = vmatpush1.msra.mxu0 0.0
      %1271 = vmatprep.subr.mxu0 0.0
      %1272 = vmatpush1.msra.mxu0 0.0
      %1273 = vmatprep.subr.mxu0 0.0
      %1274 = vmatpush1.msra.mxu0 0.0
      %1275 = vmatprep.subr.mxu0 0.0
      %1276 = vmatpush1.msra.mxu0 0.0
      %1277 = vmatprep.subr.mxu0 0.0
      %1278 = vmatpush1.msra.mxu0 0.0
      %1279 = vmatprep.subr.mxu0 0.0
      %1280 = vmatpush1.msra.mxu0 0.0
      %1281 = vmatprep.subr.mxu0 0.0
      %1282 = vmatpush1.msra.mxu0 0.0
      %1283 = vmatprep.subr.mxu0 0.0
      %1284 = vmatpush1.msra.mxu0 0.0
      %1285 = vmatprep.subr.mxu0 0.0
      %1286 = vmatpush1.msra.mxu0 0.0
      %1287 = vmatprep.subr.mxu0 0.0
      %1288 = vmatpush1.msra.mxu0 0.0
      %1289 = vmatprep.subr.mxu0 0.0
      %1290 = vmatpush1.msra.mxu0 0.0
      %1291 = vmatprep.subr.mxu0 0.0
      %1292 = vmatpush1.msra.mxu0 0.0
      %1293 = vmatprep.subr.mxu0 0.0
      %1294 = vmatpush1.msra.mxu0 0.0
      %1295 = vmatprep.subr.mxu0 0.0
      %1296 = vmatpush1.msra.mxu0 0.0
      %1297 = vmatprep.subr.mxu0 0.0
      %1298 = vmatpush1.msra.mxu0 0.0
      %1299 = vmatprep.subr.mxu0 0.0
      %1300 = vmatpush1.msra.mxu0 0.0
      %1301 = vmatprep.subr.mxu0 0.0
      %1302 = vmatpush1.msra.mxu0 0.0
      %1303 = vmatprep.subr.mxu0 0.0
      %1304 = vmatpush1.msra.mxu0 0.0
      %1305 = vmatprep.subr.mxu0 0.0
      %1306 = vmatpush1.msra.mxu0 0.0
      %1307 = vmatprep.subr.mxu0 0.0
      %1308 = vmatpush1.msra.mxu0 0.0
      %1309 = vmatprep.subr.mxu0 0.0
      %1310 = vmatpush1.msra.mxu0 0.0
      %1311 = vmatprep.mubr.f32.mxu0 0.0
      %1312 = vmatmul.mubr.f32.gmra.mrb[0].mxu0 %v1245
      %v1313 = vpop.f32.mrb[0].mxu0
      %v1314 = vadd.f32 0.0, %v1313
      %v1315 = vpop.f32.mrb[0].mxu0
      %1316 = vdwg.mxu0
      %v1318 = vlaneseq
      %v1319 = vshrl.u32 %v1318, 7
      %v1320 = vsub.s32 0, %v1319
      %v1321 = vrot.slane %v1168, %v1320
      %v1323 = vadd.f32 %v1321, %v1314
      %s1324 = scalar_lea.vmem %s9, 4
      %v1325 = vld [vmem:[%s1324] sm:$0xf]
      %v1327 = vsel %vm835, %v1325, 0
      %1329 = vmatprep.subr.mxu0 0.0
      %1330 = vmatpush1.msra.mxu0 %v1070
      %1331 = vmatprep.subr.mxu0 0.0
      %1332 = vmatpush1.msra.mxu0 0.0
      %1333 = vmatprep.subr.mxu0 0.0
      %1334 = vmatpush1.msra.mxu0 0.0
      %1335 = vmatprep.subr.mxu0 0.0
      %1336 = vmatpush1.msra.mxu0 0.0
      %1337 = vmatprep.subr.mxu0 0.0
      %1338 = vmatpush1.msra.mxu0 0.0
      %1339 = vmatprep.subr.mxu0 0.0
      %1340 = vmatpush1.msra.mxu0 0.0
      %1341 = vmatprep.subr.mxu0 0.0
      %1342 = vmatpush1.msra.mxu0 0.0
      %1343 = vmatprep.subr.mxu0 0.0
      %1344 = vmatpush1.msra.mxu0 0.0
      %1345 = vmatprep.subr.mxu0 0.0
      %1346 = vmatpush1.msra.mxu0 0.0
      %1347 = vmatprep.subr.mxu0 0.0
      %1348 = vmatpush1.msra.mxu0 0.0
      %1349 = vmatprep.subr.mxu0 0.0
      %1350 = vmatpush1.msra.mxu0 0.0
      %1351 = vmatprep.subr.mxu0 0.0
      %1352 = vmatpush1.msra.mxu0 0.0
      %1353 = vmatprep.subr.mxu0 0.0
      %1354 = vmatpush1.msra.mxu0 0.0
      %1355 = vmatprep.subr.mxu0 0.0
      %1356 = vmatpush1.msra.mxu0 0.0
      %1357 = vmatprep.subr.mxu0 0.0
      %1358 = vmatpush1.msra.mxu0 0.0
      %1359 = vmatprep.subr.mxu0 0.0
      %1360 = vmatpush1.msra.mxu0 0.0
      %1361 = vmatprep.subr.mxu0 0.0
      %1362 = vmatpush1.msra.mxu0 0.0
      %1363 = vmatprep.subr.mxu0 0.0
      %1364 = vmatpush1.msra.mxu0 0.0
      %1365 = vmatprep.subr.mxu0 0.0
      %1366 = vmatpush1.msra.mxu0 0.0
      %1367 = vmatprep.subr.mxu0 0.0
      %1368 = vmatpush1.msra.mxu0 0.0
      %1369 = vmatprep.subr.mxu0 0.0
      %1370 = vmatpush1.msra.mxu0 0.0
      %1371 = vmatprep.subr.mxu0 0.0
      %1372 = vmatpush1.msra.mxu0 0.0
      %1373 = vmatprep.subr.mxu0 0.0
      %1374 = vmatpush1.msra.mxu0 0.0
      %1375 = vmatprep.subr.mxu0 0.0
      %1376 = vmatpush1.msra.mxu0 0.0
      %1377 = vmatprep.subr.mxu0 0.0
      %1378 = vmatpush1.msra.mxu0 0.0
      %1379 = vmatprep.subr.mxu0 0.0
      %1380 = vmatpush1.msra.mxu0 0.0
      %1381 = vmatprep.subr.mxu0 0.0
      %1382 = vmatpush1.msra.mxu0 0.0
      %1383 = vmatprep.subr.mxu0 0.0
      %1384 = vmatpush1.msra.mxu0 0.0
      %1385 = vmatprep.subr.mxu0 0.0
      %1386 = vmatpush1.msra.mxu0 0.0
      %1387 = vmatprep.subr.mxu0 0.0
      %1388 = vmatpush1.msra.mxu0 0.0
      %1389 = vmatprep.subr.mxu0 0.0
      %1390 = vmatpush1.msra.mxu0 0.0
      %1391 = vmatprep.subr.mxu0 0.0
      %1392 = vmatpush1.msra.mxu0 0.0
      %1393 = vmatprep.mubr.f32.mxu0 0.0
      %1394 = vmatmul.mubr.f32.gmra.mrb[0].mxu0 %v1327
      %v1395 = vpop.f32.mrb[0].mxu0
      %v1396 = vadd.f32 0.0, %v1395
      %v1397 = vpop.f32.mrb[0].mxu0
      %1398 = vdwg.mxu0
      %v1399 = vld [vmem:[%s10 + $0x8] sm:$0xff]
      %v1401 = vsel %vm835, %v1396, 0
      %1403 = vmatprep.subr.mxu0 0.0
      %1404 = vmatpush1.msra.mxu0 %v1399
      %1405 = vmatprep.subr.mxu0 0.0
      %1406 = vmatpush1.msra.mxu0 0.0
      %1407 = vmatprep.subr.mxu0 0.0
      %1408 = vmatpush1.msra.mxu0 0.0
      %1409 = vmatprep.subr.mxu0 0.0
      %1410 = vmatpush1.msra.mxu0 0.0
      %1411 = vmatprep.subr.mxu0 0.0
      %1412 = vmatpush1.msra.mxu0 0.0
      %1413 = vmatprep.subr.mxu0 0.0
      %1414 = vmatpush1.msra.mxu0 0.0
      %1415 = vmatprep.subr.mxu0 0.0
      %1416 = vmatpush1.msra.mxu0 0.0
      %1417 = vmatprep.subr.mxu0 0.0
      %1418 = vmatpush1.msra.mxu0 0.0
      %1419 = vmatprep.subr.mxu0 0.0
      %1420 = vmatpush1.msra.mxu0 0.0
      %1421 = vmatprep.subr.mxu0 0.0
      %1422 = vmatpush1.msra.mxu0 0.0
      %1423 = vmatprep.subr.mxu0 0.0
      %1424 = vmatpush1.msra.mxu0 0.0
      %1425 = vmatprep.subr.mxu0 0.0
      %1426 = vmatpush1.msra.mxu0 0.0
      %1427 = vmatprep.subr.mxu0 0.0
      %1428 = vmatpush1.msra.mxu0 0.0
      %1429 = vmatprep.subr.mxu0 0.0
      %1430 = vmatpush1.msra.mxu0 0.0
      %1431 = vmatprep.subr.mxu0 0.0
      %1432 = vmatpush1.msra.mxu0 0.0
      %1433 = vmatprep.subr.mxu0 0.0
      %1434 = vmatpush1.msra.mxu0 0.0
      %1435 = vmatprep.subr.mxu0 0.0
      %1436 = vmatpush1.msra.mxu0 0.0
      %1437 = vmatprep.subr.mxu0 0.0
      %1438 = vmatpush1.msra.mxu0 0.0
      %1439 = vmatprep.subr.mxu0 0.0
      %1440 = vmatpush1.msra.mxu0 0.0
      %1441 = vmatprep.subr.mxu0 0.0
      %1442 = vmatpush1.msra.mxu0 0.0
      %1443 = vmatprep.subr.mxu0 0.0
      %1444 = vmatpush1.msra.mxu0 0.0
      %1445 = vmatprep.subr.mxu0 0.0
      %1446 = vmatpush1.msra.mxu0 0.0
      %1447 = vmatprep.subr.mxu0 0.0
      %1448 = vmatpush1.msra.mxu0 0.0
      %1449 = vmatprep.subr.mxu0 0.0
      %1450 = vmatpush1.msra.mxu0 0.0
      %1451 = vmatprep.subr.mxu0 0.0
      %1452 = vmatpush1.msra.mxu0 0.0
      %1453 = vmatprep.subr.mxu0 0.0
      %1454 = vmatpush1.msra.mxu0 0.0
      %1455 = vmatprep.subr.mxu0 0.0
      %1456 = vmatpush1.msra.mxu0 0.0
      %1457 = vmatprep.subr.mxu0 0.0
      %1458 = vmatpush1.msra.mxu0 0.0
      %1459 = vmatprep.subr.mxu0 0.0
      %1460 = vmatpush1.msra.mxu0 0.0
      %1461 = vmatprep.subr.mxu0 0.0
      %1462 = vmatpush1.msra.mxu0 0.0
      %1463 = vmatprep.subr.mxu0 0.0
      %1464 = vmatpush1.msra.mxu0 0.0
      %1465 = vmatprep.subr.mxu0 0.0
      %1466 = vmatpush1.msra.mxu0 0.0
      %1467 = vmatprep.mubr.f32.mxu0 0.0
      %1468 = vmatmul.mubr.f32.gmra.mrb[0].mxu0 %v1401
      %v1469 = vpop.f32.mrb[0].mxu0
      %v1470 = vadd.f32 0.0, %v1469
      %v1471 = vpop.f32.mrb[0].mxu0
      %1472 = vdwg.mxu0
      %v1473 = vadd.f32 %v1323, %v1470
      %vm1474 = vcmp.gt.f32.partialorder %v1473, 0.0
      %v1475 = vmul.f32 %v1473, 1.442695
      %v1476 = vpow.pop %v1475
      %v1477 = vsub.f32 %v1476, 1.0
      %v1478 = vsel %vm1474, %v1473, %v1477
      %v1479 = vld [vmem:[%s12] sm:$0xff]
      %v1480 = vld [vmem:[%s13] sm:$0x1]
      %v1482 = vlaneseq
      %v1483 = vshrl.u32 %v1482, 7
      %v1484 = vsub.s32 0, %v1483
      %v1485 = vrot.slane %v1480, %v1484
      %v1488 = vsel %vm835, %v1478, 0
      %1490 = vmatprep.subr.mxu0 0.0
      %1491 = vmatpush1.msra.mxu0 %v1479
      %1492 = vmatprep.subr.mxu0 0.0
      %1493 = vmatpush1.msra.mxu0 0.0
      %1494 = vmatprep.subr.mxu0 0.0
      %1495 = vmatpush1.msra.mxu0 0.0
      %1496 = vmatprep.subr.mxu0 0.0
      %1497 = vmatpush1.msra.mxu0 0.0
      %1498 = vmatprep.subr.mxu0 0.0
      %1499 = vmatpush1.msra.mxu0 0.0
      %1500 = vmatprep.subr.mxu0 0.0
      %1501 = vmatpush1.msra.mxu0 0.0
      %1502 = vmatprep.subr.mxu0 0.0
      %1503 = vmatpush1.msra.mxu0 0.0
      %1504 = vmatprep.subr.mxu0 0.0
      %1505 = vmatpush1.msra.mxu0 0.0
      %1506 = vmatprep.subr.mxu0 0.0
      %1507 = vmatpush1.msra.mxu0 0.0
      %1508 = vmatprep.subr.mxu0 0.0
      %1509 = vmatpush1.msra.mxu0 0.0
      %1510 = vmatprep.subr.mxu0 0.0
      %1511 = vmatpush1.msra.mxu0 0.0
      %1512 = vmatprep.subr.mxu0 0.0
      %1513 = vmatpush1.msra.mxu0 0.0
      %1514 = vmatprep.subr.mxu0 0.0
      %1515 = vmatpush1.msra.mxu0 0.0
      %1516 = vmatprep.subr.mxu0 0.0
      %1517 = vmatpush1.msra.mxu0 0.0
      %1518 = vmatprep.subr.mxu0 0.0
      %1519 = vmatpush1.msra.mxu0 0.0
      %1520 = vmatprep.subr.mxu0 0.0
      %1521 = vmatpush1.msra.mxu0 0.0
      %1522 = vmatprep.subr.mxu0 0.0
      %1523 = vmatpush1.msra.mxu0 0.0
      %1524 = vmatprep.subr.mxu0 0.0
      %1525 = vmatpush1.msra.mxu0 0.0
      %1526 = vmatprep.subr.mxu0 0.0
      %1527 = vmatpush1.msra.mxu0 0.0
      %1528 = vmatprep.subr.mxu0 0.0
      %1529 = vmatpush1.msra.mxu0 0.0
      %1530 = vmatprep.subr.mxu0 0.0
      %1531 = vmatpush1.msra.mxu0 0.0
      %1532 = vmatprep.subr.mxu0 0.0
      %1533 = vmatpush1.msra.mxu0 0.0
      %1534 = vmatprep.subr.mxu0 0.0
      %1535 = vmatpush1.msra.mxu0 0.0
      %1536 = vmatprep.subr.mxu0 0.0
      %1537 = vmatpush1.msra.mxu0 0.0
      %1538 = vmatprep.subr.mxu0 0.0
      %1539 = vmatpush1.msra.mxu0 0.0
      %1540 = vmatprep.subr.mxu0 0.0
      %1541 = vmatpush1.msra.mxu0 0.0
      %1542 = vmatprep.subr.mxu0 0.0
      %1543 = vmatpush1.msra.mxu0 0.0
      %1544 = vmatprep.subr.mxu0 0.0
      %1545 = vmatpush1.msra.mxu0 0.0
      %1546 = vmatprep.subr.mxu0 0.0
      %1547 = vmatpush1.msra.mxu0 0.0
      %1548 = vmatprep.subr.mxu0 0.0
      %1549 = vmatpush1.msra.mxu0 0.0
      %1550 = vmatprep.subr.mxu0 0.0
      %1551 = vmatpush1.msra.mxu0 0.0
      %1552 = vmatprep.subr.mxu0 0.0
      %1553 = vmatpush1.msra.mxu0 0.0
      %1554 = vmatprep.mubr.f32.mxu0 0.0
      %1555 = vmatmul.mubr.f32.gmra.mrb[0].mxu0 %v1488
      %v1556 = vpop.f32.mrb[0].mxu0
      %v1557 = vadd.f32 %v1485, %v1556
      %v1558 = vpop.f32.mrb[0].mxu0
      %1559 = vdwg.mxu0
      %vm1560 = vcmask 257024
      %v1561 = vsel %vm1560, %v1557, 0.0
      %1562 = vadd.xlane.f32.xlu0 %v1561
      %v1563 = vpop.xlane.xlu0 %1562
      %v1564 = vmul.f32 %v1563, %v628
      %v1565 = vsub.f32 %v1557, %v1564
      %v1566 = vmul.f32 %v1565, %v1565
      %v1567 = vsel %vm1560, %v1566, 0.0
      %1568 = vadd.xlane.f32.xlu0 %v1567
      %v1569 = vpop.xlane.xlu0 %1568
      %v1570 = vmul.f32 %v1569, %v628
      %v1571 = vadd.f32 %v1570, 1e-05
      %v1572 = vrsqrt.pop %v1571
      %v1573 = vmul.f32 %v1565, %v1572
      %v1574 = vmul.f32 %v1573, %v653
      %v1575 = vadd.f32 %v1574, %v661
      %1576 = vst.msk [vmem:[%s521 + $0x18] sm:$0xf] %vm1560, %v1575
      %p1577 = scmp.lt.s32.totalorder %s27, 1
      %s1578 = scalar_select %p1577, %s27, 1
      %s1579 = smul.addr %s1578, 4
      %s1580 = smul.addr %s1579, 8
      %s1581 = scalar_lea.vmem %s16, %s1580
      // Predicated region
      $region85: #{_lambda_.3} parent=83 // pred_check
        %p1582 = pneg %p386
      $region86: #{_lambda_.3} parent=83 // pred_check_branch
        %1584 = sbr.rel (%p1582) target = $region88
      $region87: #{_lambda_.3} parent=83 // pred_region
        _
      $region88: #{_lambda_.3} parent=83 // pred_fallthru
        _
    $region84: #{_lambda_.3} parent=5 // pred_fallthru
      _
    %p1585 = scmp.le.s32.totalorder 2, %s22
    // Predicated region
    $region89: #{_lambda_.3} parent=5 // pred_check
      %p1586 = pneg %p1585
    $region90: #{_lambda_.3} parent=5 // pred_check_branch
      %1588 = sbr.rel (%p1586) target = $region92
    $region91: #{_lambda_.3} parent=5 // pred_region
      %s1589 = ssub.s32 %s22, 2
      // Predicated region
      $region93: #{_lambda_.3} parent=91 // pred_check
        %p1590 = pneg %p392
      $region94: #{_lambda_.3} parent=91 // pred_check_branch
        %1592 = sbr.rel (%p1590) target = $region96
      $region95: #{_lambda_.3} parent=91 // pred_region
        %p1593 = scmp.lt.s32.totalorder %s28, 1
        %s1594 = scalar_select %p1593, %s28, 1
        %s1595 = smul.addr %s1594, 4
        %s1596 = smul.addr %s1595, 8
        %s1597 = scalar_lea.vmem %s16, %s1596
      $region96: #{_lambda_.3} parent=91 // pred_fallthru
        _
    $region92: #{_lambda_.3} parent=5 // pred_fallthru
      _
  $region6: #{_lambda_.3} parent=0 // loop_footer
    %s26 = sadd.s32 1, %s22
  $region7: #{_lambda_.3} parent=0 // loop_footer_branch
    %21 = sbr.rel target = $region3
  $region8: #{_lambda_.3} parent=0 // loop_exit
    _

// kernel: _lambda_.4
$region0: #{_lambda_.4}
  #allocation0 [shape = 'u32[]', space=smem, size = 0x4, offset = 0x4, fixed_abs, tag = 'smem constant byte address 0x4 - core index']
  #allocation1 [shape = 'u32[144,128]{1,0:T(1,128)}', space=vmem, size = 0x12000, scoped, tag = 'internal scratch']
  %s0 = inlined_call_operand.vmem [shape: f32[2,28,32], index: 0, kind: input, shape index: {}]
  %s1 = inlined_call_operand.vmem [shape: f32[1,28,28], index: 1, kind: input, shape index: {}]
  %s2 = inlined_call_operand.vmem [shape: f32[2,32,16], index: 2, kind: input, shape index: {}]
  %s3 = inlined_call_operand.vmem [shape: f32[2,32,32], index: 3, kind: input, shape index: {}]
  %s4 = inlined_call_operand.vmem [shape: f32[2,16,32], index: 4, kind: input, shape index: {}]
  %s5 = inlined_call_operand.vmem [shape: f32[2,1,32], index: 5, kind: input, shape index: {}]
  %s6 = inlined_call_operand.vmem [shape: f32[2,1,32], index: 6, kind: input, shape index: {}]
  %s7 = inlined_call_operand.vmem [shape: f32[2,1,32], index: 7, kind: input, shape index: {}]
  %s8 = inlined_call_operand.vmem [shape: f32[2,32,16], index: 8, kind: input, shape index: {}]
  %s9 = inlined_call_operand.vmem [shape: f32[2,1,16], index: 9, kind: input, shape index: {}]
  %s10 = inlined_call_operand.vmem [shape: f32[2,16,32], index: 10, kind: input, shape index: {}]
  %s11 = inlined_call_operand.vmem [shape: f32[2,1,32], index: 11, kind: input, shape index: {}]
  %s12 = inlined_call_operand.vmem [shape: f32[2,1,32], index: 12, kind: input, shape index: {}]
  %s13 = inlined_call_operand.vmem [shape: f32[2,1,32], index: 13, kind: input, shape index: {}]
  %s14 = inlined_call_operand.vmem [shape: f32[2,28,32], index: 14, kind: output, shape index: {}]
  %s15 = sld [smem:[#allocation0]]
  $region93: #{_lambda_.4} parent=0
    _
  %s17 = ssub.s32 1, %s15
  %s18 = scalar_select 0, %s17, %s15
  loop: start=0, step=1, limit=6
  $region2: #{_lambda_.4} parent=0 // loop_pre_header
    _
  $region3: #{_lambda_.4} parent=0 // loop_header
    %s20 = sphi 0, %s24
    %p21 = scmp.ge.s32.totalorder %s20, 6
    %s27 = sphi 0, %s39
    %s28 = sphi 0, %s35
    %s29 = sphi 0, %s27
    %s30 = sphi 0, %s28
    %s31 = sphi 0, %s29
    %s32 = sphi 0, %s30
    %s42 = sphi 0, %s44
    %s45 = sphi 0, %s42
    %s46 = sphi 0, %s45
    %s62 = sphi 0, %s46
    %s66 = sphi 0, %s66
    %s68 = sphi 0, %s66
    %s69 = sphi 0, %s68
    %s83 = sphi 0, %s69
    %s89 = sphi 0, %s91
    %s92 = sphi 0, %s89
    %s93 = sphi 0, %s92
    %s109 = sphi 0, %s93
    %s115 = sphi 0, %s117
    %s118 = sphi 0, %s115
    %s119 = sphi 0, %s118
    %s135 = sphi 0, %s119
    %s141 = sphi 0, %s143
    %s144 = sphi 0, %s141
    %s145 = sphi 0, %s144
    %s161 = sphi 0, %s145
    %s167 = sphi 0, %s169
    %s170 = sphi 0, %s167
    %s171 = sphi 0, %s170
    %s187 = sphi 0, %s171
    %s193 = sphi 0, %s195
    %s196 = sphi 0, %s193
    %s197 = sphi 0, %s196
    %s213 = sphi 0, %s197
    %s219 = sphi 0, %s221
    %s222 = sphi 0, %s219
    %s223 = sphi 0, %s222
    %s239 = sphi 0, %s223
    %s245 = sphi 0, %s247
    %s248 = sphi 0, %s245
    %s249 = sphi 0, %s248
    %s265 = sphi 0, %s249
    %s271 = sphi 0, %s273
    %s274 = sphi 0, %s271
    %s275 = sphi 0, %s274
    %s291 = sphi 0, %s275
    %s297 = sphi 0, %s299
    %s300 = sphi 0, %s297
    %s301 = sphi 0, %s300
    %s317 = sphi 0, %s301
    %s323 = sphi 0, %s325
    %s326 = sphi 0, %s323
    %s327 = sphi 0, %s326
    %s343 = sphi 0, %s327
    %s349 = sphi 0, %s351
    %s352 = sphi 0, %s349
    %s353 = sphi 0, %s352
    %s369 = sphi 0, %s353
    %s375 = sphi 0, %s377
    %s378 = sphi 0, %s375
    %s379 = sphi 0, %s378
    %s395 = sphi 0, %s379
    %s401 = sphi 0, %s403
    %s404 = sphi 0, %s401
    %s405 = sphi 0, %s404
    %s421 = sphi 0, %s405
  $region4: #{_lambda_.4} parent=0 // loop_header_branch
    %23 = sbr.rel (%p21) target = $region8
  $region5: #{_lambda_.4} parent=0 // loop_body
    %s25 = ssub.s32 %s20, 1
    %s26 = ssub.s32 %s20, 2
    %s33 = sadd.s32 1, %s28
    %p34 = scmp.ge.s32.totalorder %s33, 2
    %s35 = scalar_select %p34, 0, %s33
    %s36 = sadd.s32 1, %s27
    %s37 = scalar_select %p34, %s36, %s27
    %p38 = scmp.ge.s32.totalorder %s37, 2
    %s39 = scalar_select %p38, 0, %s37
    %s40 = ssub.s32 %s27, %s39
    %p41 = scmp.eq.s32.totalorder %s40, 0
    %s43 = sadd.s32 %s42, 1
    %s44 = scalar_select %p41, %s42, %s43
    %p47 = pneg %p41
    %p48 = scmp.eq.s32.totalorder %s20, 3
    %p49 = por %p47, %p48
    %p50 = scmp.ne.s32.totalorder %s42, %s45
    %p51 = scmp.eq.s32.totalorder %s20, 0
    %p52 = por %p50, %p51
    %p53 = scmp.ne.s32.totalorder %s42, %s45
    %p54 = scmp.eq.s32.totalorder %s25, 3
    %p55 = por %p53, %p54
    %p56 = scmp.ne.s32.totalorder %s45, %s46
    %p57 = scmp.eq.s32.totalorder %s25, 0
    %p58 = por %p56, %p57
    %p59 = scmp.ne.s32.totalorder %s45, %s46
    %p60 = scmp.eq.s32.totalorder %s26, 3
    %p61 = por %p59, %p60
    %p63 = scmp.ne.s32.totalorder %s46, %s62
    %p64 = scmp.eq.s32.totalorder %s26, 0
    %p65 = por %p63, %p64
    %s67 = sadd.s32 %s66, 1
    %p70 = scmp.eq.s32.totalorder %s20, 3
    %p71 = scmp.ne.s32.totalorder %s66, %s68
    %p72 = scmp.eq.s32.totalorder %s20, 0
    %p73 = por %p71, %p72
    %p74 = scmp.ne.s32.totalorder %s66, %s68
    %p75 = scmp.eq.s32.totalorder %s25, 3
    %p76 = por %p74, %p75
    %p77 = scmp.ne.s32.totalorder %s68, %s69
    %p78 = scmp.eq.s32.totalorder %s25, 0
    %p79 = por %p77, %p78
    %p80 = scmp.ne.s32.totalorder %s68, %s69
    %p81 = scmp.eq.s32.totalorder %s26, 3
    %p82 = por %p80, %p81
    %p84 = scmp.ne.s32.totalorder %s69, %s83
    %p85 = scmp.eq.s32.totalorder %s26, 0
    %p86 = por %p84, %p85
    %s87 = ssub.s32 %s28, %s35
    %p88 = scmp.eq.s32.totalorder %s87, 0
    %s90 = sadd.s32 %s89, 1
    %s91 = scalar_select %p88, %s89, %s90
    %p94 = pneg %p88
    %p95 = scmp.eq.s32.totalorder %s20, 3
    %p96 = por %p94, %p95
    %p97 = scmp.ne.s32.totalorder %s89, %s92
    %p98 = scmp.eq.s32.totalorder %s20, 0
    %p99 = por %p97, %p98
    %p100 = scmp.ne.s32.totalorder %s89, %s92
    %p101 = scmp.eq.s32.totalorder %s25, 3
    %p102 = por %p100, %p101
    %p103 = scmp.ne.s32.totalorder %s92, %s93
    %p104 = scmp.eq.s32.totalorder %s25, 0
    %p105 = por %p103, %p104
    %p106 = scmp.ne.s32.totalorder %s92, %s93
    %p107 = scmp.eq.s32.totalorder %s26, 3
    %p108 = por %p106, %p107
    %p110 = scmp.ne.s32.totalorder %s93, %s109
    %p111 = scmp.eq.s32.totalorder %s26, 0
    %p112 = por %p110, %p111
    %s113 = ssub.s32 %s28, %s35
    %p114 = scmp.eq.s32.totalorder %s113, 0
    %s116 = sadd.s32 %s115, 1
    %s117 = scalar_select %p114, %s115, %s116
    %p120 = pneg %p114
    %p121 = scmp.eq.s32.totalorder %s20, 3
    %p122 = por %p120, %p121
    %p123 = scmp.ne.s32.totalorder %s115, %s118
    %p124 = scmp.eq.s32.totalorder %s20, 0
    %p125 = por %p123, %p124
    %p126 = scmp.ne.s32.totalorder %s115, %s118
    %p127 = scmp.eq.s32.totalorder %s25, 3
    %p128 = por %p126, %p127
    %p129 = scmp.ne.s32.totalorder %s118, %s119
    %p130 = scmp.eq.s32.totalorder %s25, 0
    %p131 = por %p129, %p130
    %p132 = scmp.ne.s32.totalorder %s118, %s119
    %p133 = scmp.eq.s32.totalorder %s26, 3
    %p134 = por %p132, %p133
    %p136 = scmp.ne.s32.totalorder %s119, %s135
    %p137 = scmp.eq.s32.totalorder %s26, 0
    %p138 = por %p136, %p137
    %s139 = ssub.s32 %s28, %s35
    %p140 = scmp.eq.s32.totalorder %s139, 0
    %s142 = sadd.s32 %s141, 1
    %s143 = scalar_select %p140, %s141, %s142
    %p146 = pneg %p140
    %p147 = scmp.eq.s32.totalorder %s20, 3
    %p148 = por %p146, %p147
    %p149 = scmp.ne.s32.totalorder %s141, %s144
    %p150 = scmp.eq.s32.totalorder %s20, 0
    %p151 = por %p149, %p150
    %p152 = scmp.ne.s32.totalorder %s141, %s144
    %p153 = scmp.eq.s32.totalorder %s25, 3
    %p154 = por %p152, %p153
    %p155 = scmp.ne.s32.totalorder %s144, %s145
    %p156 = scmp.eq.s32.totalorder %s25, 0
    %p157 = por %p155, %p156
    %p158 = scmp.ne.s32.totalorder %s144, %s145
    %p159 = scmp.eq.s32.totalorder %s26, 3
    %p160 = por %p158, %p159
    %p162 = scmp.ne.s32.totalorder %s145, %s161
    %p163 = scmp.eq.s32.totalorder %s26, 0
    %p164 = por %p162, %p163
    %s165 = ssub.s32 %s28, %s35
    %p166 = scmp.eq.s32.totalorder %s165, 0
    %s168 = sadd.s32 %s167, 1
    %s169 = scalar_select %p166, %s167, %s168
    %p172 = pneg %p166
    %p173 = scmp.eq.s32.totalorder %s20, 3
    %p174 = por %p172, %p173
    %p175 = scmp.ne.s32.totalorder %s167, %s170
    %p176 = scmp.eq.s32.totalorder %s20, 0
    %p177 = por %p175, %p176
    %p178 = scmp.ne.s32.totalorder %s167, %s170
    %p179 = scmp.eq.s32.totalorder %s25, 3
    %p180 = por %p178, %p179
    %p181 = scmp.ne.s32.totalorder %s170, %s171
    %p182 = scmp.eq.s32.totalorder %s25, 0
    %p183 = por %p181, %p182
    %p184 = scmp.ne.s32.totalorder %s170, %s171
    %p185 = scmp.eq.s32.totalorder %s26, 3
    %p186 = por %p184, %p185
    %p188 = scmp.ne.s32.totalorder %s171, %s187
    %p189 = scmp.eq.s32.totalorder %s26, 0
    %p190 = por %p188, %p189
    %s191 = ssub.s32 %s28, %s35
    %p192 = scmp.eq.s32.totalorder %s191, 0
    %s194 = sadd.s32 %s193, 1
    %s195 = scalar_select %p192, %s193, %s194
    %p198 = pneg %p192
    %p199 = scmp.eq.s32.totalorder %s20, 3
    %p200 = por %p198, %p199
    %p201 = scmp.ne.s32.totalorder %s193, %s196
    %p202 = scmp.eq.s32.totalorder %s20, 0
    %p203 = por %p201, %p202
    %p204 = scmp.ne.s32.totalorder %s193, %s196
    %p205 = scmp.eq.s32.totalorder %s25, 3
    %p206 = por %p204, %p205
    %p207 = scmp.ne.s32.totalorder %s196, %s197
    %p208 = scmp.eq.s32.totalorder %s25, 0
    %p209 = por %p207, %p208
    %p210 = scmp.ne.s32.totalorder %s196, %s197
    %p211 = scmp.eq.s32.totalorder %s26, 3
    %p212 = por %p210, %p211
    %p214 = scmp.ne.s32.totalorder %s197, %s213
    %p215 = scmp.eq.s32.totalorder %s26, 0
    %p216 = por %p214, %p215
    %s217 = ssub.s32 %s28, %s35
    %p218 = scmp.eq.s32.totalorder %s217, 0
    %s220 = sadd.s32 %s219, 1
    %s221 = scalar_select %p218, %s219, %s220
    %p224 = pneg %p218
    %p225 = scmp.eq.s32.totalorder %s20, 3
    %p226 = por %p224, %p225
    %p227 = scmp.ne.s32.totalorder %s219, %s222
    %p228 = scmp.eq.s32.totalorder %s20, 0
    %p229 = por %p227, %p228
    %p230 = scmp.ne.s32.totalorder %s219, %s222
    %p231 = scmp.eq.s32.totalorder %s25, 3
    %p232 = por %p230, %p231
    %p233 = scmp.ne.s32.totalorder %s222, %s223
    %p234 = scmp.eq.s32.totalorder %s25, 0
    %p235 = por %p233, %p234
    %p236 = scmp.ne.s32.totalorder %s222, %s223
    %p237 = scmp.eq.s32.totalorder %s26, 3
    %p238 = por %p236, %p237
    %p240 = scmp.ne.s32.totalorder %s223, %s239
    %p241 = scmp.eq.s32.totalorder %s26, 0
    %p242 = por %p240, %p241
    %s243 = ssub.s32 %s28, %s35
    %p244 = scmp.eq.s32.totalorder %s243, 0
    %s246 = sadd.s32 %s245, 1
    %s247 = scalar_select %p244, %s245, %s246
    %p250 = pneg %p244
    %p251 = scmp.eq.s32.totalorder %s20, 3
    %p252 = por %p250, %p251
    %p253 = scmp.ne.s32.totalorder %s245, %s248
    %p254 = scmp.eq.s32.totalorder %s20, 0
    %p255 = por %p253, %p254
    %p256 = scmp.ne.s32.totalorder %s245, %s248
    %p257 = scmp.eq.s32.totalorder %s25, 3
    %p258 = por %p256, %p257
    %p259 = scmp.ne.s32.totalorder %s248, %s249
    %p260 = scmp.eq.s32.totalorder %s25, 0
    %p261 = por %p259, %p260
    %p262 = scmp.ne.s32.totalorder %s248, %s249
    %p263 = scmp.eq.s32.totalorder %s26, 3
    %p264 = por %p262, %p263
    %p266 = scmp.ne.s32.totalorder %s249, %s265
    %p267 = scmp.eq.s32.totalorder %s26, 0
    %p268 = por %p266, %p267
    %s269 = ssub.s32 %s28, %s35
    %p270 = scmp.eq.s32.totalorder %s269, 0
    %s272 = sadd.s32 %s271, 1
    %s273 = scalar_select %p270, %s271, %s272
    %p276 = pneg %p270
    %p277 = scmp.eq.s32.totalorder %s20, 3
    %p278 = por %p276, %p277
    %p279 = scmp.ne.s32.totalorder %s271, %s274
    %p280 = scmp.eq.s32.totalorder %s20, 0
    %p281 = por %p279, %p280
    %p282 = scmp.ne.s32.totalorder %s271, %s274
    %p283 = scmp.eq.s32.totalorder %s25, 3
    %p284 = por %p282, %p283
    %p285 = scmp.ne.s32.totalorder %s274, %s275
    %p286 = scmp.eq.s32.totalorder %s25, 0
    %p287 = por %p285, %p286
    %p288 = scmp.ne.s32.totalorder %s274, %s275
    %p289 = scmp.eq.s32.totalorder %s26, 3
    %p290 = por %p288, %p289
    %p292 = scmp.ne.s32.totalorder %s275, %s291
    %p293 = scmp.eq.s32.totalorder %s26, 0
    %p294 = por %p292, %p293
    %s295 = ssub.s32 %s28, %s35
    %p296 = scmp.eq.s32.totalorder %s295, 0
    %s298 = sadd.s32 %s297, 1
    %s299 = scalar_select %p296, %s297, %s298
    %p302 = pneg %p296
    %p303 = scmp.eq.s32.totalorder %s20, 3
    %p304 = por %p302, %p303
    %p305 = scmp.ne.s32.totalorder %s297, %s300
    %p306 = scmp.eq.s32.totalorder %s20, 0
    %p307 = por %p305, %p306
    %p308 = scmp.ne.s32.totalorder %s297, %s300
    %p309 = scmp.eq.s32.totalorder %s25, 3
    %p310 = por %p308, %p309
    %p311 = scmp.ne.s32.totalorder %s300, %s301
    %p312 = scmp.eq.s32.totalorder %s25, 0
    %p313 = por %p311, %p312
    %p314 = scmp.ne.s32.totalorder %s300, %s301
    %p315 = scmp.eq.s32.totalorder %s26, 3
    %p316 = por %p314, %p315
    %p318 = scmp.ne.s32.totalorder %s301, %s317
    %p319 = scmp.eq.s32.totalorder %s26, 0
    %p320 = por %p318, %p319
    %s321 = ssub.s32 %s28, %s35
    %p322 = scmp.eq.s32.totalorder %s321, 0
    %s324 = sadd.s32 %s323, 1
    %s325 = scalar_select %p322, %s323, %s324
    %p328 = pneg %p322
    %p329 = scmp.eq.s32.totalorder %s20, 3
    %p330 = por %p328, %p329
    %p331 = scmp.ne.s32.totalorder %s323, %s326
    %p332 = scmp.eq.s32.totalorder %s20, 0
    %p333 = por %p331, %p332
    %p334 = scmp.ne.s32.totalorder %s323, %s326
    %p335 = scmp.eq.s32.totalorder %s25, 3
    %p336 = por %p334, %p335
    %p337 = scmp.ne.s32.totalorder %s326, %s327
    %p338 = scmp.eq.s32.totalorder %s25, 0
    %p339 = por %p337, %p338
    %p340 = scmp.ne.s32.totalorder %s326, %s327
    %p341 = scmp.eq.s32.totalorder %s26, 3
    %p342 = por %p340, %p341
    %p344 = scmp.ne.s32.totalorder %s327, %s343
    %p345 = scmp.eq.s32.totalorder %s26, 0
    %p346 = por %p344, %p345
    %s347 = ssub.s32 %s28, %s35
    %p348 = scmp.eq.s32.totalorder %s347, 0
    %s350 = sadd.s32 %s349, 1
    %s351 = scalar_select %p348, %s349, %s350
    %p354 = pneg %p348
    %p355 = scmp.eq.s32.totalorder %s20, 3
    %p356 = por %p354, %p355
    %p357 = scmp.ne.s32.totalorder %s349, %s352
    %p358 = scmp.eq.s32.totalorder %s20, 0
    %p359 = por %p357, %p358
    %p360 = scmp.ne.s32.totalorder %s349, %s352
    %p361 = scmp.eq.s32.totalorder %s25, 3
    %p362 = por %p360, %p361
    %p363 = scmp.ne.s32.totalorder %s352, %s353
    %p364 = scmp.eq.s32.totalorder %s25, 0
    %p365 = por %p363, %p364
    %p366 = scmp.ne.s32.totalorder %s352, %s353
    %p367 = scmp.eq.s32.totalorder %s26, 3
    %p368 = por %p366, %p367
    %p370 = scmp.ne.s32.totalorder %s353, %s369
    %p371 = scmp.eq.s32.totalorder %s26, 0
    %p372 = por %p370, %p371
    %s373 = ssub.s32 %s28, %s35
    %p374 = scmp.eq.s32.totalorder %s373, 0
    %s376 = sadd.s32 %s375, 1
    %s377 = scalar_select %p374, %s375, %s376
    %p380 = pneg %p374
    %p381 = scmp.eq.s32.totalorder %s20, 3
    %p382 = por %p380, %p381
    %p383 = scmp.ne.s32.totalorder %s375, %s378
    %p384 = scmp.eq.s32.totalorder %s20, 0
    %p385 = por %p383, %p384
    %p386 = scmp.ne.s32.totalorder %s375, %s378
    %p387 = scmp.eq.s32.totalorder %s25, 3
    %p388 = por %p386, %p387
    %p389 = scmp.ne.s32.totalorder %s378, %s379
    %p390 = scmp.eq.s32.totalorder %s25, 0
    %p391 = por %p389, %p390
    %p392 = scmp.ne.s32.totalorder %s378, %s379
    %p393 = scmp.eq.s32.totalorder %s26, 3
    %p394 = por %p392, %p393
    %p396 = scmp.ne.s32.totalorder %s379, %s395
    %p397 = scmp.eq.s32.totalorder %s26, 0
    %p398 = por %p396, %p397
    %s399 = ssub.s32 %s27, %s39
    %p400 = scmp.eq.s32.totalorder %s399, 0
    %s402 = sadd.s32 %s401, 1
    %s403 = scalar_select %p400, %s401, %s402
    %p406 = pneg %p400
    %p407 = scmp.eq.s32.totalorder %s20, 3
    %p408 = por %p406, %p407
    %p409 = scmp.ne.s32.totalorder %s401, %s404
    %p410 = scmp.eq.s32.totalorder %s20, 0
    %p411 = por %p409, %p410
    %p412 = scmp.ne.s32.totalorder %s401, %s404
    %p413 = scmp.eq.s32.totalorder %s25, 3
    %p414 = por %p412, %p413
    %p415 = scmp.ne.s32.totalorder %s404, %s405
    %p416 = scmp.eq.s32.totalorder %s25, 0
    %p417 = por %p415, %p416
    %p418 = scmp.ne.s32.totalorder %s404, %s405
    %p419 = scmp.eq.s32.totalorder %s26, 3
    %p420 = por %p418, %p419
    %p422 = scmp.ne.s32.totalorder %s405, %s421
    %p423 = scmp.eq.s32.totalorder %s26, 0
    %p424 = por %p422, %p423
    %p425 = scmp.le.s32.totalorder 1, %s20
    %p426 = scmp.lt.s32.totalorder %s20, 5
    %p427 = pnand %p425, %p426
    %p428 = pneg %p427
    // Predicated region
    $region9: #{_lambda_.4} parent=5 // pred_check
      _
    $region10: #{_lambda_.4} parent=5 // pred_check_branch
      %430 = sbr.rel (%p427) target = $region12
    $region11: #{_lambda_.4} parent=5 // pred_region
      %s431 = ssub.s32 %s20, 1
      // Predicated region
      $region13: #{_lambda_.4} parent=11 // pred_check
        %p432 = pneg %p79
      $region14: #{_lambda_.4} parent=11 // pred_check_branch
        %434 = sbr.rel (%p432) target = $region16
      $region15: #{_lambda_.4} parent=11 // pred_region
        _
      $region16: #{_lambda_.4} parent=11 // pred_fallthru
        _
    $region12: #{_lambda_.4} parent=5 // pred_fallthru
      _
    %p435 = scmp.lt.s32.totalorder %s20, 4
    // Predicated region
    $region17: #{_lambda_.4} parent=5 // pred_check
      %p436 = pneg %p435
    $region18: #{_lambda_.4} parent=5 // pred_check_branch
      %438 = sbr.rel (%p436) target = $region20
    $region19: #{_lambda_.4} parent=5 // pred_region
      // Predicated region
      $region21: #{_lambda_.4} parent=19 // pred_check
        %p439 = pneg %p52
      $region22: #{_lambda_.4} parent=19 // pred_check_branch
        %441 = sbr.rel (%p439) target = $region24
      $region23: #{_lambda_.4} parent=19 // pred_region
        %p442 = scmp.lt.s32.totalorder %s27, 1
        %s443 = scalar_select %p442, %s27, 1
        %s444 = smul.addr %s443, 4
        %s445 = smul.addr %s444, 8
        %s446 = scalar_lea.vmem %s0, %s445
      $region24: #{_lambda_.4} parent=19 // pred_fallthru
        _
      // Predicated region
      $region25: #{_lambda_.4} parent=19 // pred_check
        %p447 = pneg %p99
      $region26: #{_lambda_.4} parent=19 // pred_check_branch
        %449 = sbr.rel (%p447) target = $region28
      $region27: #{_lambda_.4} parent=19 // pred_region
        %p450 = scmp.lt.s32.totalorder %s28, 1
        %s451 = scalar_select %p450, %s28, 1
        %s452 = smul.addr %s451, 4
        %s453 = smul.addr %s452, 8
        %s454 = scalar_lea.vmem %s2, %s453
      $region28: #{_lambda_.4} parent=19 // pred_fallthru
        _
      // Predicated region
      $region29: #{_lambda_.4} parent=19 // pred_check
        %p455 = pneg %p125
      $region30: #{_lambda_.4} parent=19 // pred_check_branch
        %457 = sbr.rel (%p455) target = $region32
      $region31: #{_lambda_.4} parent=19 // pred_region
        %p458 = scmp.lt.s32.totalorder %s28, 1
        %s459 = scalar_select %p458, %s28, 1
        %s460 = smul.addr %s459, 4
        %s461 = smul.addr %s460, 8
        %s462 = scalar_lea.vmem %s3, %s461
      $region32: #{_lambda_.4} parent=19 // pred_fallthru
        _
      // Predicated region
      $region33: #{_lambda_.4} parent=19 // pred_check
        %p463 = pneg %p151
      $region34: #{_lambda_.4} parent=19 // pred_check_branch
        %465 = sbr.rel (%p463) target = $region36
      $region35: #{_lambda_.4} parent=19 // pred_region
        %p466 = scmp.lt.s32.totalorder %s28, 1
        %s467 = scalar_select %p466, %s28, 1
        %s468 = smul.addr %s467, 2
        %s469 = smul.addr %s468, 8
        %s470 = scalar_lea.vmem %s4, %s469
      $region36: #{_lambda_.4} parent=19 // pred_fallthru
        _
      // Predicated region
      $region37: #{_lambda_.4} parent=19 // pred_check
        %p471 = pneg %p177
      $region38: #{_lambda_.4} parent=19 // pred_check_branch
        %473 = sbr.rel (%p471) target = $region40
      $region39: #{_lambda_.4} parent=19 // pred_region
        %p474 = scmp.lt.s32.totalorder %s28, 1
        %s475 = scalar_select %p474, %s28, 1
        %s476 = scalar_lea.vmem %s5, %s475
      $region40: #{_lambda_.4} parent=19 // pred_fallthru
        _
      // Predicated region
      $region41: #{_lambda_.4} parent=19 // pred_check
        %p477 = pneg %p203
      $region42: #{_lambda_.4} parent=19 // pred_check_branch
        %479 = sbr.rel (%p477) target = $region44
      $region43: #{_lambda_.4} parent=19 // pred_region
        %p480 = scmp.lt.s32.totalorder %s28, 1
        %s481 = scalar_select %p480, %s28, 1
        %s482 = scalar_lea.vmem %s6, %s481
      $region44: #{_lambda_.4} parent=19 // pred_fallthru
        _
      // Predicated region
      $region45: #{_lambda_.4} parent=19 // pred_check
        %p483 = pneg %p229
      $region46: #{_lambda_.4} parent=19 // pred_check_branch
        %485 = sbr.rel (%p483) target = $region48
      $region47: #{_lambda_.4} parent=19 // pred_region
        %p486 = scmp.lt.s32.totalorder %s28, 1
        %s487 = scalar_select %p486, %s28, 1
        %s488 = scalar_lea.vmem %s7, %s487
      $region48: #{_lambda_.4} parent=19 // pred_fallthru
        _
      // Predicated region
      $region49: #{_lambda_.4} parent=19 // pred_check
        %p489 = pneg %p255
      $region50: #{_lambda_.4} parent=19 // pred_check_branch
        %491 = sbr.rel (%p489) target = $region52
      $region51: #{_lambda_.4} parent=19 // pred_region
        %p492 = scmp.lt.s32.totalorder %s28, 1
        %s493 = scalar_select %p492, %s28, 1
        %s494 = smul.addr %s493, 4
        %s495 = smul.addr %s494, 8
        %s496 = scalar_lea.vmem %s8, %s495
      $region52: #{_lambda_.4} parent=19 // pred_fallthru
        _
      // Predicated region
      $region53: #{_lambda_.4} parent=19 // pred_check
        %p497 = pneg %p281
      $region54: #{_lambda_.4} parent=19 // pred_check_branch
        %499 = sbr.rel (%p497) target = $region56
      $region55: #{_lambda_.4} parent=19 // pred_region
        %p500 = scmp.lt.s32.totalorder %s28, 1
        %s501 = scalar_select %p500, %s28, 1
        %s502 = scalar_lea.vmem %s9, %s501
      $region56: #{_lambda_.4} parent=19 // pred_fallthru
        _
      // Predicated region
      $region57: #{_lambda_.4} parent=19 // pred_check
        %p503 = pneg %p307
      $region58: #{_lambda_.4} parent=19 // pred_check_branch
        %505 = sbr.rel (%p503) target = $region60
      $region59: #{_lambda_.4} parent=19 // pred_region
        %p506 = scmp.lt.s32.totalorder %s28, 1
        %s507 = scalar_select %p506, %s28, 1
        %s508 = smul.addr %s507, 2
        %s509 = smul.addr %s508, 8
        %s510 = scalar_lea.vmem %s10, %s509
      $region60: #{_lambda_.4} parent=19 // pred_fallthru
        _
      // Predicated region
      $region61: #{_lambda_.4} parent=19 // pred_check
        %p511 = pneg %p333
      $region62: #{_lambda_.4} parent=19 // pred_check_branch
        %513 = sbr.rel (%p511) target = $region64
      $region63: #{_lambda_.4} parent=19 // pred_region
        %p514 = scmp.lt.s32.totalorder %s28, 1
        %s515 = scalar_select %p514, %s28, 1
        %s516 = scalar_lea.vmem %s11, %s515
      $region64: #{_lambda_.4} parent=19 // pred_fallthru
        _
      // Predicated region
      $region65: #{_lambda_.4} parent=19 // pred_check
        %p517 = pneg %p359
      $region66: #{_lambda_.4} parent=19 // pred_check_branch
        %519 = sbr.rel (%p517) target = $region68
      $region67: #{_lambda_.4} parent=19 // pred_region
        %p520 = scmp.lt.s32.totalorder %s28, 1
        %s521 = scalar_select %p520, %s28, 1
        %s522 = scalar_lea.vmem %s12, %s521
      $region68: #{_lambda_.4} parent=19 // pred_fallthru
        _
      // Predicated region
      $region69: #{_lambda_.4} parent=19 // pred_check
        %p523 = pneg %p385
      $region70: #{_lambda_.4} parent=19 // pred_check_branch
        %525 = sbr.rel (%p523) target = $region72
      $region71: #{_lambda_.4} parent=19 // pred_region
        %p526 = scmp.lt.s32.totalorder %s28, 1
        %s527 = scalar_select %p526, %s28, 1
        %s528 = scalar_lea.vmem %s13, %s527
      $region72: #{_lambda_.4} parent=19 // pred_fallthru
        _
    $region20: #{_lambda_.4} parent=5 // pred_fallthru
      _
    %p529 = scmp.le.s32.totalorder 1, %s20
    %p530 = scmp.lt.s32.totalorder %s20, 5
    %p531 = pnand %p529, %p530
    %p532 = pneg %p531
    // Predicated region
    $region73: #{_lambda_.4} parent=5 // pred_check
      _
    $region74: #{_lambda_.4} parent=5 // pred_check_branch
      %534 = sbr.rel (%p531) target = $region76
    $region75: #{_lambda_.4} parent=5 // pred_region
      %s535 = ssub.s32 %s20, 1
      %p536 = scmp.lt.s32.totalorder %s29, 1
      %s537 = scalar_select %p536, %s29, 1
      %s538 = smul.addr %s537, 4
      %s539 = smul.addr %s538, 8
      %s540 = scalar_lea.vmem %s0, %s539
      %p541 = pneg %p58
      %p542 = pneg %p55
      %p543 = pneg %p79
      %p544 = pneg %p76
      %p545 = scmp.lt.s32.totalorder %s30, 1
      %s546 = scalar_select %p545, %s30, 1
      %s547 = smul.addr %s546, 4
      %s548 = smul.addr %s547, 8
      %s549 = scalar_lea.vmem %s2, %s548
      %p550 = pneg %p105
      %p551 = pneg %p102
      %p552 = scmp.lt.s32.totalorder %s30, 1
      %s553 = scalar_select %p552, %s30, 1
      %s554 = smul.addr %s553, 4
      %s555 = smul.addr %s554, 8
      %s556 = scalar_lea.vmem %s3, %s555
      %p557 = pneg %p131
      %p558 = pneg %p128
      %p559 = scmp.lt.s32.totalorder %s30, 1
      %s560 = scalar_select %p559, %s30, 1
      %s561 = smul.addr %s560, 2
      %s562 = smul.addr %s561, 8
      %s563 = scalar_lea.vmem %s4, %s562
      %p564 = pneg %p157
      %p565 = pneg %p154
      %p566 = scmp.lt.s32.totalorder %s30, 1
      %s567 = scalar_select %p566, %s30, 1
      %s568 = scalar_lea.vmem %s5, %s567
      %p569 = pneg %p183
      %p570 = pneg %p180
      %p571 = scmp.lt.s32.totalorder %s30, 1
      %s572 = scalar_select %p571, %s30, 1
      %s573 = scalar_lea.vmem %s6, %s572
      %p574 = pneg %p209
      %p575 = pneg %p206
      %p576 = scmp.lt.s32.totalorder %s30, 1
      %s577 = scalar_select %p576, %s30, 1
      %s578 = scalar_lea.vmem %s7, %s577
      %p579 = pneg %p235
      %p580 = pneg %p232
      %p581 = scmp.lt.s32.totalorder %s30, 1
      %s582 = scalar_select %p581, %s30, 1
      %s583 = smul.addr %s582, 4
      %s584 = smul.addr %s583, 8
      %s585 = scalar_lea.vmem %s8, %s584
      %p586 = pneg %p261
      %p587 = pneg %p258
      %p588 = scmp.lt.s32.totalorder %s30, 1
      %s589 = scalar_select %p588, %s30, 1
      %s590 = scalar_lea.vmem %s9, %s589
      %p591 = pneg %p287
      %p592 = pneg %p284
      %p593 = scmp.lt.s32.totalorder %s30, 1
      %s594 = scalar_select %p593, %s30, 1
      %s595 = smul.addr %s594, 2
      %s596 = smul.addr %s595, 8
      %s597 = scalar_lea.vmem %s10, %s596
      %p598 = pneg %p313
      %p599 = pneg %p310
      %p600 = scmp.lt.s32.totalorder %s30, 1
      %s601 = scalar_select %p600, %s30, 1
      %s602 = scalar_lea.vmem %s11, %s601
      %p603 = pneg %p339
      %p604 = pneg %p336
      %p605 = scmp.lt.s32.totalorder %s30, 1
      %s606 = scalar_select %p605, %s30, 1
      %s607 = scalar_lea.vmem %s12, %s606
      %p608 = pneg %p365
      %p609 = pneg %p362
      %p610 = scmp.lt.s32.totalorder %s30, 1
      %s611 = scalar_select %p610, %s30, 1
      %s612 = scalar_lea.vmem %s13, %s611
      %p613 = pneg %p391
      %p614 = pneg %p388
      %p615 = pneg %p417
      %p616 = pneg %p414
      %p617 = scmp.lt.s32.totalorder %s29, 1
      %s618 = scalar_select %p617, %s29, 1
      %s619 = smul.addr %s618, 4
      %s620 = smul.addr %s619, 8
      %s621 = scalar_lea.vmem %s14, %s620
      %p622 = scmp.lt.s32.totalorder %s29, 1
      %s623 = scalar_select %p622, %s29, 1
      %s624 = smul.addr %s623, 4
      %s625 = smul.addr %s624, 8
      %s626 = scalar_lea.vmem %s0, %s625
      %p627 = scmp.lt.s32.totalorder %s30, 1
      %s628 = scalar_select %p627, %s30, 1
      %s629 = smul.addr %s628, 4
      %s630 = smul.addr %s629, 8
      %s631 = scalar_lea.vmem %s2, %s630
      %p632 = scmp.lt.s32.totalorder %s30, 1
      %s633 = scalar_select %p632, %s30, 1
      %s634 = smul.addr %s633, 4
      %s635 = smul.addr %s634, 8
      %s636 = scalar_lea.vmem %s3, %s635
      %p637 = scmp.lt.s32.totalorder %s30, 1
      %s638 = scalar_select %p637, %s30, 1
      %s639 = smul.addr %s638, 2
      %s640 = smul.addr %s639, 8
      %s641 = scalar_lea.vmem %s4, %s640
      %p642 = scmp.lt.s32.totalorder %s30, 1
      %s643 = scalar_select %p642, %s30, 1
      %s644 = scalar_lea.vmem %s5, %s643
      %p645 = scmp.lt.s32.totalorder %s30, 1
      %s646 = scalar_select %p645, %s30, 1
      %s647 = scalar_lea.vmem %s6, %s646
      %p648 = scmp.lt.s32.totalorder %s30, 1
      %s649 = scalar_select %p648, %s30, 1
      %s650 = scalar_lea.vmem %s7, %s649
      %p651 = scmp.lt.s32.totalorder %s30, 1
      %s652 = scalar_select %p651, %s30, 1
      %s653 = smul.addr %s652, 4
      %s654 = smul.addr %s653, 8
      %s655 = scalar_lea.vmem %s8, %s654
      %p656 = scmp.lt.s32.totalorder %s30, 1
      %s657 = scalar_select %p656, %s30, 1
      %s658 = scalar_lea.vmem %s9, %s657
      %p659 = scmp.lt.s32.totalorder %s30, 1
      %s660 = scalar_select %p659, %s30, 1
      %s661 = smul.addr %s660, 2
      %s662 = smul.addr %s661, 8
      %s663 = scalar_lea.vmem %s10, %s662
      %p664 = scmp.lt.s32.totalorder %s30, 1
      %s665 = scalar_select %p664, %s30, 1
      %s666 = scalar_lea.vmem %s11, %s665
      %p667 = scmp.lt.s32.totalorder %s30, 1
      %s668 = scalar_select %p667, %s30, 1
      %s669 = scalar_lea.vmem %s12, %s668
      %p670 = scmp.lt.s32.totalorder %s30, 1
      %s671 = scalar_select %p670, %s30, 1
      %s672 = scalar_lea.vmem %s13, %s671
      %p673 = scmp.lt.s32.totalorder %s29, 1
      %s674 = scalar_select %p673, %s29, 1
      %s675 = smul.addr %s674, 4
      %s676 = smul.addr %s675, 8
      %s677 = scalar_lea.vmem %s14, %s676
      %p678 = scmp.eq.s32.totalorder %s30, 0
      // Predicated region
      $region77: #{_lambda_.4} parent=75 // pred_check
        %p679 = pneg %p678
      $region78: #{_lambda_.4} parent=75 // pred_check_branch
        %681 = sbr.rel (%p679) target = $region80
      $region79: #{_lambda_.4} parent=75 // pred_region
        %v682 = vld [vmem:[%s626] sm:$0xff]
        %v683 = vld [vmem:[%s626 + $0x8] sm:$0xff]
        %v684 = vld [vmem:[%s626 + $0x10] sm:$0xff]
        %v685 = vld [vmem:[%s626 + $0x18] sm:$0xf]
        %vm686 = vcmask 261120
        %687 = vst.msk [vmem:[%s677] sm:$0xff] %vm686, %v682
        %688 = vst.msk [vmem:[%s677 + $0x8] sm:$0xff] %vm686, %v683
        %689 = vst.msk [vmem:[%s677 + $0x10] sm:$0xff] %vm686, %v684
        %vm690 = vcmask 257024
        %691 = vst.msk [vmem:[%s677 + $0x18] sm:$0xf] %vm690, %v685
      $region80: #{_lambda_.4} parent=75 // pred_fallthru
        _
      %v692 = vld [vmem:[%s677] sm:$0xff]
      %v693 = vld [vmem:[%s677 + $0x8] sm:$0xff]
      %v694 = vld [vmem:[%s677 + $0x10] sm:$0xff]
      %v695 = vld [vmem:[%s677 + $0x18] sm:$0xf]
      %v696 = vld [vmem:[%s1] sm:$0xff]
      %v697 = vld [vmem:[%s1 + $0x8] sm:$0xff]
      %v698 = vld [vmem:[%s1 + $0x10] sm:$0xff]
      %v699 = vld [vmem:[%s1 + $0x18] sm:$0xf]
      %v700 = vld [vmem:[%s631] sm:$0xff]
      %v701 = vld [vmem:[%s631 + $0x8] sm:$0xff]
      %v702 = vld [vmem:[%s631 + $0x10] sm:$0xff]
      %v703 = vld [vmem:[%s631 + $0x18] sm:$0xff]
      %v704 = vld [vmem:[%s636] sm:$0xff]
      %v705 = vld [vmem:[%s636 + $0x8] sm:$0xff]
      %v706 = vld [vmem:[%s636 + $0x10] sm:$0xff]
      %v707 = vld [vmem:[%s636 + $0x18] sm:$0xff]
      %v708 = vld [vmem:[%s641] sm:$0xff]
      %v709 = vld [vmem:[%s641 + $0x8] sm:$0xff]
      %v710 = vld [vmem:[%s644] sm:$0x1]
      %vm711 = vcmask 261120
      %v713 = vsel %vm711, %v692, 0
      %v716 = vsel %vm711, %v693, 0
      %v719 = vsel %vm711, %v694, 0
      %v722 = vsel %vm711, %v695, 0
      %724 = vmatprep.subr.mxu0 0.0
      %725 = vmatpush1.msra.mxu0 %v700
      %726 = vmatprep.subr.mxu0 0.0
      %727 = vmatpush1.msra.mxu0 %v701
      %728 = vmatprep.subr.mxu0 0.0
      %729 = vmatpush1.msra.mxu0 %v702
      %730 = vmatprep.subr.mxu0 0.0
      %731 = vmatpush1.msra.mxu0 %v703
      %732 = vmatprep.subr.mxu0 0.0
      %733 = vmatpush1.msra.mxu0 0.0
      %734 = vmatprep.subr.mxu0 0.0
      %735 = vmatpush1.msra.mxu0 0.0
      %736 = vmatprep.subr.mxu0 0.0
      %737 = vmatpush1.msra.mxu0 0.0
      %738 = vmatprep.subr.mxu0 0.0
      %739 = vmatpush1.msra.mxu0 0.0
      %740 = vmatprep.subr.mxu0 0.0
      %741 = vmatpush1.msra.mxu0 0.0
      %742 = vmatprep.subr.mxu0 0.0
      %743 = vmatpush1.msra.mxu0 0.0
      %744 = vmatprep.subr.mxu0 0.0
      %745 = vmatpush1.msra.mxu0 0.0
      %746 = vmatprep.subr.mxu0 0.0
      %747 = vmatpush1.msra.mxu0 0.0
      %748 = vmatprep.subr.mxu0 0.0
      %749 = vmatpush1.msra.mxu0 0.0
      %750 = vmatprep.subr.mxu0 0.0
      %751 = vmatpush1.msra.mxu0 0.0
      %752 = vmatprep.subr.mxu0 0.0
      %753 = vmatpush1.msra.mxu0 0.0
      %754 = vmatprep.subr.mxu0 0.0
      %755 = vmatpush1.msra.mxu0 0.0
      %756 = vmatprep.subr.mxu0 0.0
      %757 = vmatpush1.msra.mxu0 0.0
      %758 = vmatprep.subr.mxu0 0.0
      %759 = vmatpush1.msra.mxu0 0.0
      %760 = vmatprep.subr.mxu0 0.0
      %761 = vmatpush1.msra.mxu0 0.0
      %762 = vmatprep.subr.mxu0 0.0
      %763 = vmatpush1.msra.mxu0 0.0
      %764 = vmatprep.subr.mxu0 0.0
      %765 = vmatpush1.msra.mxu0 0.0
      %766 = vmatprep.subr.mxu0 0.0
      %767 = vmatpush1.msra.mxu0 0.0
      %768 = vmatprep.subr.mxu0 0.0
      %769 = vmatpush1.msra.mxu0 0.0
      %770 = vmatprep.subr.mxu0 0.0
      %771 = vmatpush1.msra.mxu0 0.0
      %772 = vmatprep.subr.mxu0 0.0
      %773 = vmatpush1.msra.mxu0 0.0
      %774 = vmatprep.subr.mxu0 0.0
      %775 = vmatpush1.msra.mxu0 0.0
      %776 = vmatprep.subr.mxu0 0.0
      %777 = vmatpush1.msra.mxu0 0.0
      %778 = vmatprep.subr.mxu0 0.0
      %779 = vmatpush1.msra.mxu0 0.0
      %780 = vmatprep.subr.mxu0 0.0
      %781 = vmatpush1.msra.mxu0 0.0
      %782 = vmatprep.subr.mxu0 0.0
      %783 = vmatpush1.msra.mxu0 0.0
      %784 = vmatprep.subr.mxu0 0.0
      %785 = vmatpush1.msra.mxu0 0.0
      %786 = vmatprep.subr.mxu0 0.0
      %787 = vmatpush1.msra.mxu0 0.0
      %788 = vmatprep.mubr.f32.mxu0 0.0
      %789 = vmatmul.mubr.f32.gmra.mrb[0].mxu0 %v713
      %v790 = vpop.f32.mrb[0].mxu0
      %v791 = vadd.f32 0.0, %v790
      %v792 = vpop.f32.mrb[0].mxu0
      %793 = vmatprep.mubr.f32.mxu0 0.0
      %794 = vmatmul.mubr.f32.gmra.mrb[0].mxu0 %v716
      %v795 = vpop.f32.mrb[0].mxu0
      %v796 = vadd.f32 0.0, %v795
      %v797 = vpop.f32.mrb[0].mxu0
      %798 = vmatprep.mubr.f32.mxu0 0.0
      %799 = vmatmul.mubr.f32.gmra.mrb[0].mxu0 %v719
      %v800 = vpop.f32.mrb[0].mxu0
      %v801 = vadd.f32 0.0, %v800
      %v802 = vpop.f32.mrb[0].mxu0
      %803 = vmatprep.mubr.f32.mxu0 0.0
      %804 = vmatmul.mubr.f32.gmra.mrb[0].mxu0 %v722
      %v805 = vpop.f32.mrb[0].mxu0
      %v806 = vadd.f32 0.0, %v805
      %v807 = vpop.f32.mrb[0].mxu0
      %808 = vdwg.mxu0
      %809 = vmatprep.subr.mxu0 0.0
      %810 = vmatpush1.msra.mxu0 %v704
      %811 = vmatprep.subr.mxu0 0.0
      %812 = vmatpush1.msra.mxu0 %v705
      %813 = vmatprep.subr.mxu0 0.0
      %814 = vmatpush1.msra.mxu0 %v706
      %815 = vmatprep.subr.mxu0 0.0
      %816 = vmatpush1.msra.mxu0 %v707
      %817 = vmatprep.subr.mxu0 0.0
      %818 = vmatpush1.msra.mxu0 0.0
      %819 = vmatprep.subr.mxu0 0.0
      %820 = vmatpush1.msra.mxu0 0.0
      %821 = vmatprep.subr.mxu0 0.0
      %822 = vmatpush1.msra.mxu0 0.0
      %823 = vmatprep.subr.mxu0 0.0
      %824 = vmatpush1.msra.mxu0 0.0
      %825 = vmatprep.subr.mxu0 0.0
      %826 = vmatpush1.msra.mxu0 0.0
      %827 = vmatprep.subr.mxu0 0.0
      %828 = vmatpush1.msra.mxu0 0.0
      %829 = vmatprep.subr.mxu0 0.0
      %830 = vmatpush1.msra.mxu0 0.0
      %831 = vmatprep.subr.mxu0 0.0
      %832 = vmatpush1.msra.mxu0 0.0
      %833 = vmatprep.subr.mxu0 0.0
      %834 = vmatpush1.msra.mxu0 0.0
      %835 = vmatprep.subr.mxu0 0.0
      %836 = vmatpush1.msra.mxu0 0.0
      %837 = vmatprep.subr.mxu0 0.0
      %838 = vmatpush1.msra.mxu0 0.0
      %839 = vmatprep.subr.mxu0 0.0
      %840 = vmatpush1.msra.mxu0 0.0
      %841 = vmatprep.subr.mxu0 0.0
      %842 = vmatpush1.msra.mxu0 0.0
      %843 = vmatprep.subr.mxu0 0.0
      %844 = vmatpush1.msra.mxu0 0.0
      %845 = vmatprep.subr.mxu0 0.0
      %846 = vmatpush1.msra.mxu0 0.0
      %847 = vmatprep.subr.mxu0 0.0
      %848 = vmatpush1.msra.mxu0 0.0
      %849 = vmatprep.subr.mxu0 0.0
      %850 = vmatpush1.msra.mxu0 0.0
      %851 = vmatprep.subr.mxu0 0.0
      %852 = vmatpush1.msra.mxu0 0.0
      %853 = vmatprep.subr.mxu0 0.0
      %854 = vmatpush1.msra.mxu0 0.0
      %855 = vmatprep.subr.mxu0 0.0
      %856 = vmatpush1.msra.mxu0 0.0
      %857 = vmatprep.subr.mxu0 0.0
      %858 = vmatpush1.msra.mxu0 0.0
      %859 = vmatprep.subr.mxu0 0.0
      %860 = vmatpush1.msra.mxu0 0.0
      %861 = vmatprep.subr.mxu0 0.0
      %862 = vmatpush1.msra.mxu0 0.0
      %863 = vmatprep.subr.mxu0 0.0
      %864 = vmatpush1.msra.mxu0 0.0
      %865 = vmatprep.subr.mxu0 0.0
      %866 = vmatpush1.msra.mxu0 0.0
      %867 = vmatprep.subr.mxu0 0.0
      %868 = vmatpush1.msra.mxu0 0.0
      %869 = vmatprep.subr.mxu0 0.0
      %870 = vmatpush1.msra.mxu0 0.0
      %871 = vmatprep.subr.mxu0 0.0
      %872 = vmatpush1.msra.mxu0 0.0
      %873 = vmatprep.mubr.f32.mxu0 0.0
      %874 = vmatmul.mubr.f32.gmra.mrb[0].mxu0 %v713
      %v875 = vpop.f32.mrb[0].mxu0
      %v876 = vadd.f32 0.0, %v875
      %v877 = vpop.f32.mrb[0].mxu0
      %878 = vmatprep.mubr.f32.mxu0 0.0
      %879 = vmatmul.mubr.f32.gmra.mrb[0].mxu0 %v716
      %v880 = vpop.f32.mrb[0].mxu0
      %v881 = vadd.f32 0.0, %v880
      %v882 = vpop.f32.mrb[0].mxu0
      %883 = vmatprep.mubr.f32.mxu0 0.0
      %884 = vmatmul.mubr.f32.gmra.mrb[0].mxu0 %v719
      %v885 = vpop.f32.mrb[0].mxu0
      %v886 = vadd.f32 0.0, %v885
      %v887 = vpop.f32.mrb[0].mxu0
      %888 = vmatprep.mubr.f32.mxu0 0.0
      %889 = vmatmul.mubr.f32.gmra.mrb[0].mxu0 %v722
      %v890 = vpop.f32.mrb[0].mxu0
      %v891 = vadd.f32 0.0, %v890
      %v892 = vpop.f32.mrb[0].mxu0
      %893 = vdwg.mxu0
      %v895 = vlaneseq
      %v896 = vshrl.u32 %v895, 7
      %v897 = vsub.s32 0, %v896
      %v898 = vrot.slane %v710, %v897
      %v900 = vadd.f32 %v692, %v898
      %v901 = vadd.f32 %v693, %v898
      %v902 = vadd.f32 %v694, %v898
      %v903 = vadd.f32 %v695, %v898
      %vm904 = vcmask 64512
      %v906 = vsel %vm904, %v791, 0
      %v909 = vsel %vm904, %v796, 0
      %v912 = vsel %vm904, %v801, 0
      %v915 = vsel %vm904, %v806, 0
      %v918 = vsel %vm904, %v876, 0
      %v921 = vsel %vm904, %v881, 0
      %v924 = vsel %vm904, %v886, 0
      %v927 = vsel %vm904, %v891, 0
      %929 = vmatprep.subr.mxu0 0.0
      %930 = vmatpush1.xpose.msra.mxu0 %v918
      %931 = vmatprep.subr.mxu0 0.0
      %932 = vmatpush1.xpose.msra.mxu0 %v921
      %933 = vmatprep.subr.mxu0 0.0
      %934 = vmatpush1.xpose.msra.mxu0 %v924
      %935 = vmatprep.subr.mxu0 0.0
      %936 = vmatpush1.xpose.msra.mxu0 %v927
      %937 = vmatprep.subr.mxu0 0.0
      %938 = vmatpush1.xpose.msra.mxu0 0.0
      %939 = vmatprep.subr.mxu0 0.0
      %940 = vmatpush1.xpose.msra.mxu0 0.0
      %941 = vmatprep.subr.mxu0 0.0
      %942 = vmatpush1.xpose.msra.mxu0 0.0
      %943 = vmatprep.subr.mxu0 0.0
      %944 = vmatpush1.xpose.msra.mxu0 0.0
      %945 = vmatprep.subr.mxu0 0.0
      %946 = vmatpush1.xpose.msra.mxu0 0.0
      %947 = vmatprep.subr.mxu0 0.0
      %948 = vmatpush1.xpose.msra.mxu0 0.0
      %949 = vmatprep.subr.mxu0 0.0
      %950 = vmatpush1.xpose.msra.mxu0 0.0
      %951 = vmatprep.subr.mxu0 0.0
      %952 = vmatpush1.xpose.msra.mxu0 0.0
      %953 = vmatprep.subr.mxu0 0.0
      %954 = vmatpush1.xpose.msra.mxu0 0.0
      %955 = vmatprep.subr.mxu0 0.0
      %956 = vmatpush1.xpose.msra.mxu0 0.0
      %957 = vmatprep.subr.mxu0 0.0
      %958 = vmatpush1.xpose.msra.mxu0 0.0
      %959 = vmatprep.subr.mxu0 0.0
      %960 = vmatpush1.xpose.msra.mxu0 0.0
      %961 = vmatprep.subr.mxu0 0.0
      %962 = vmatpush1.xpose.msra.mxu0 0.0
      %963 = vmatprep.subr.mxu0 0.0
      %964 = vmatpush1.xpose.msra.mxu0 0.0
      %965 = vmatprep.subr.mxu0 0.0
      %966 = vmatpush1.xpose.msra.mxu0 0.0
      %967 = vmatprep.subr.mxu0 0.0
      %968 = vmatpush1.xpose.msra.mxu0 0.0
      %969 = vmatprep.subr.mxu0 0.0
      %970 = vmatpush1.xpose.msra.mxu0 0.0
      %971 = vmatprep.subr.mxu0 0.0
      %972 = vmatpush1.xpose.msra.mxu0 0.0
      %973 = vmatprep.subr.mxu0 0.0
      %974 = vmatpush1.xpose.msra.mxu0 0.0
      %975 = vmatprep.subr.mxu0 0.0
      %976 = vmatpush1.xpose.msra.mxu0 0.0
      %977 = vmatprep.subr.mxu0 0.0
      %978 = vmatpush1.xpose.msra.mxu0 0.0
      %979 = vmatprep.subr.mxu0 0.0
      %980 = vmatpush1.xpose.msra.mxu0 0.0
      %981 = vmatprep.subr.mxu0 0.0
      %982 = vmatpush1.xpose.msra.mxu0 0.0
      %983 = vmatprep.subr.mxu0 0.0
      %984 = vmatpush1.xpose.msra.mxu0 0.0
      %985 = vmatprep.subr.mxu0 0.0
      %986 = vmatpush1.xpose.msra.mxu0 0.0
      %987 = vmatprep.subr.mxu0 0.0
      %988 = vmatpush1.xpose.msra.mxu0 0.0
      %989 = vmatprep.subr.mxu0 0.0
      %990 = vmatpush1.xpose.msra.mxu0 0.0
      %991 = vmatprep.subr.mxu0 0.0
      %992 = vmatpush1.xpose.msra.mxu0 0.0
      %993 = vmatprep.mubr.f32.mxu0 0.0
      %994 = vmatmul.mubr.f32.gmra.mrb[0].mxu0 %v906
      %v995 = vpop.f32.mrb[0].mxu0
      %v996 = vadd.f32 %v696, %v995
      %v997 = vpop.f32.mrb[0].mxu0
      %998 = vmatprep.mubr.f32.mxu0 0.0
      %999 = vmatmul.mubr.f32.gmra.mrb[0].mxu0 %v909
      %v1000 = vpop.f32.mrb[0].mxu0
      %v1001 = vadd.f32 %v697, %v1000
      %v1002 = vpop.f32.mrb[0].mxu0
      %1003 = vmatprep.mubr.f32.mxu0 0.0
      %1004 = vmatmul.mubr.f32.gmra.mrb[0].mxu0 %v912
      %v1005 = vpop.f32.mrb[0].mxu0
      %v1006 = vadd.f32 %v698, %v1005
      %v1007 = vpop.f32.mrb[0].mxu0
      %1008 = vmatprep.mubr.f32.mxu0 0.0
      %1009 = vmatmul.mubr.f32.gmra.mrb[0].mxu0 %v915
      %v1010 = vpop.f32.mrb[0].mxu0
      %v1011 = vadd.f32 %v699, %v1010
      %v1012 = vpop.f32.mrb[0].mxu0
      %1013 = vdwg.mxu0
      %vm1014 = vcmask 228352
      %v1015 = vsel %vm1014, %v996, -inf
      %1016 = vmax.xlane.f32.xlu0 %v1015
      %v1017 = vpop.xlane.xlu0 %1016
      %v1018 = vsel %vm1014, %v1001, -inf
      %1019 = vmax.xlane.f32.xlu0 %v1018
      %v1020 = vpop.xlane.xlu0 %1019
      %v1021 = vsel %vm1014, %v1006, -inf
      %1022 = vmax.xlane.f32.xlu0 %v1021
      %v1023 = vpop.xlane.xlu0 %1022
      %vm1024 = vcmask 224256
      %v1025 = vsel %vm1024, %v1011, -inf
      %1026 = vmax.xlane.f32.xlu0 %v1025
      %v1027 = vpop.xlane.xlu0 %1026
      %v1028 = vsub.f32 %v996, %v1017
      %v1029 = vsub.f32 %v1001, %v1020
      %v1030 = vsub.f32 %v1006, %v1023
      %v1031 = vsub.f32 %v1011, %v1027
      %v1032 = vmul.f32 %v1028, 1.442695
      %v1033 = vpow.pop %v1032
      %v1034 = vmul.f32 %v1029, 1.442695
      %v1035 = vpow.pop %v1034
      %v1036 = vmul.f32 %v1030, 1.442695
      %v1037 = vpow.pop %v1036
      %v1038 = vmul.f32 %v1031, 1.442695
      %v1039 = vpow.pop %v1038
      %v1040 = vsel %vm1014, %v1033, 0.0
      %1041 = vadd.xlane.f32.xlu0 %v1040
      %v1042 = vpop.xlane.xlu0 %1041
      %v1043 = vsel %vm1014, %v1035, 0.0
      %1044 = vadd.xlane.f32.xlu0 %v1043
      %v1045 = vpop.xlane.xlu0 %1044
      %v1046 = vsel %vm1014, %v1037, 0.0
      %1047 = vadd.xlane.f32.xlu0 %v1046
      %v1048 = vpop.xlane.xlu0 %1047
      %v1049 = vsel %vm1024, %v1039, 0.0
      %1050 = vadd.xlane.f32.xlu0 %v1049
      %v1051 = vpop.xlane.xlu0 %1050
      %v1052 = vrcp.pop %v1042
      %v1053 = vmul.f32 %v1033, %v1052
      %v1054 = vrcp.pop %v1045
      %v1055 = vmul.f32 %v1035, %v1054
      %v1056 = vrcp.pop %v1048
      %v1057 = vmul.f32 %v1037, %v1056
      %v1058 = vrcp.pop %v1051
      %v1059 = vmul.f32 %v1039, %v1058
      %1060 = vrot.lane.b32.xlu0 %v876, 112
      %v1061 = vpop.permute.xlu0 %1060
      %1062 = vrot.lane.b32.xlu0 %v881, 112
      %v1063 = vpop.permute.xlu0 %1062
      %1064 = vrot.lane.b32.xlu0 %v886, 112
      %v1065 = vpop.permute.xlu0 %1064
      %1066 = vrot.lane.b32.xlu0 %v891, 112
      %v1067 = vpop.permute.xlu0 %1066
      %v1072 = vsel %vm1014, %v1053, 0
      %v1075 = vsel %vm1014, %v1055, 0
      %v1078 = vsel %vm1014, %v1057, 0
      %v1081 = vsel %vm1014, %v1059, 0
      %vm1083 = vcmask 1043456
      %v1084 = vsel %vm1083, %v1067, 0
      %1086 = vmatprep.subr.mxu0 0.0
      %1087 = vmatpush1.msra.mxu0 %v1061
      %1088 = vmatprep.subr.mxu0 0.0
      %1089 = vmatpush1.msra.mxu0 %v1063
      %1090 = vmatprep.subr.mxu0 0.0
      %1091 = vmatpush1.msra.mxu0 %v1065
      %1092 = vmatprep.subr.mxu0 0.0
      %1093 = vmatpush1.msra.mxu0 %v1084
      %1094 = vmatprep.subr.mxu0 0.0
      %1095 = vmatpush1.msra.mxu0 0.0
      %1096 = vmatprep.subr.mxu0 0.0
      %1097 = vmatpush1.msra.mxu0 0.0
      %1098 = vmatprep.subr.mxu0 0.0
      %1099 = vmatpush1.msra.mxu0 0.0
      %1100 = vmatprep.subr.mxu0 0.0
      %1101 = vmatpush1.msra.mxu0 0.0
      %1102 = vmatprep.subr.mxu0 0.0
      %1103 = vmatpush1.msra.mxu0 0.0
      %1104 = vmatprep.subr.mxu0 0.0
      %1105 = vmatpush1.msra.mxu0 0.0
      %1106 = vmatprep.subr.mxu0 0.0
      %1107 = vmatpush1.msra.mxu0 0.0
      %1108 = vmatprep.subr.mxu0 0.0
      %1109 = vmatpush1.msra.mxu0 0.0
      %1110 = vmatprep.subr.mxu0 0.0
      %1111 = vmatpush1.msra.mxu0 0.0
      %1112 = vmatprep.subr.mxu0 0.0
      %1113 = vmatpush1.msra.mxu0 0.0
      %1114 = vmatprep.subr.mxu0 0.0
      %1115 = vmatpush1.msra.mxu0 0.0
      %1116 = vmatprep.subr.mxu0 0.0
      %1117 = vmatpush1.msra.mxu0 0.0
      %1118 = vmatprep.subr.mxu0 0.0
      %1119 = vmatpush1.msra.mxu0 0.0
      %1120 = vmatprep.subr.mxu0 0.0
      %1121 = vmatpush1.msra.mxu0 0.0
      %1122 = vmatprep.subr.mxu0 0.0
      %1123 = vmatpush1.msra.mxu0 0.0
      %1124 = vmatprep.subr.mxu0 0.0
      %1125 = vmatpush1.msra.mxu0 0.0
      %1126 = vmatprep.subr.mxu0 0.0
      %1127 = vmatpush1.msra.mxu0 0.0
      %1128 = vmatprep.subr.mxu0 0.0
      %1129 = vmatpush1.msra.mxu0 0.0
      %1130 = vmatprep.subr.mxu0 0.0
      %1131 = vmatpush1.msra.mxu0 0.0
      %1132 = vmatprep.subr.mxu0 0.0
      %1133 = vmatpush1.msra.mxu0 0.0
      %1134 = vmatprep.subr.mxu0 0.0
      %1135 = vmatpush1.msra.mxu0 0.0
      %1136 = vmatprep.subr.mxu0 0.0
      %1137 = vmatpush1.msra.mxu0 0.0
      %1138 = vmatprep.subr.mxu0 0.0
      %1139 = vmatpush1.msra.mxu0 0.0
      %1140 = vmatprep.subr.mxu0 0.0
      %1141 = vmatpush1.msra.mxu0 0.0
      %1142 = vmatprep.subr.mxu0 0.0
      %1143 = vmatpush1.msra.mxu0 0.0
      %1144 = vmatprep.subr.mxu0 0.0
      %1145 = vmatpush1.msra.mxu0 0.0
      %1146 = vmatprep.subr.mxu0 0.0
      %1147 = vmatpush1.msra.mxu0 0.0
      %1148 = vmatprep.subr.mxu0 0.0
      %1149 = vmatpush1.msra.mxu0 0.0
      %1150 = vmatprep.mubr.f32.mxu0 0.0
      %1151 = vmatmul.mubr.f32.gmra.mrb[0].mxu0 %v1072
      %v1152 = vpop.f32.mrb[0].mxu0
      %v1153 = vadd.f32 0.0, %v1152
      %v1154 = vpop.f32.mrb[0].mxu0
      %1155 = vmatprep.mubr.f32.mxu0 0.0
      %1156 = vmatmul.mubr.f32.gmra.mrb[0].mxu0 %v1075
      %v1157 = vpop.f32.mrb[0].mxu0
      %v1158 = vadd.f32 0.0, %v1157
      %v1159 = vpop.f32.mrb[0].mxu0
      %1160 = vmatprep.mubr.f32.mxu0 0.0
      %1161 = vmatmul.mubr.f32.gmra.mrb[0].mxu0 %v1078
      %v1162 = vpop.f32.mrb[0].mxu0
      %v1163 = vadd.f32 0.0, %v1162
      %v1164 = vpop.f32.mrb[0].mxu0
      %1165 = vmatprep.mubr.f32.mxu0 0.0
      %1166 = vmatmul.mubr.f32.gmra.mrb[0].mxu0 %v1081
      %v1167 = vpop.f32.mrb[0].mxu0
      %v1168 = vadd.f32 0.0, %v1167
      %v1169 = vpop.f32.mrb[0].mxu0
      %1170 = vdwg.mxu0
      %v1172 = vsel %vm904, %v1153, 0
      %v1175 = vsel %vm904, %v1158, 0
      %v1178 = vsel %vm904, %v1163, 0
      %v1181 = vsel %vm904, %v1168, 0
      %1183 = vmatprep.subr.mxu0 0.0
      %1184 = vmatpush1.msra.mxu0 %v708
      %1185 = vmatprep.subr.mxu0 0.0
      %1186 = vmatpush1.msra.mxu0 0.0
      %1187 = vmatprep.subr.mxu0 0.0
      %1188 = vmatpush1.msra.mxu0 0.0
      %1189 = vmatprep.subr.mxu0 0.0
      %1190 = vmatpush1.msra.mxu0 0.0
      %1191 = vmatprep.subr.mxu0 0.0
      %1192 = vmatpush1.msra.mxu0 0.0
      %1193 = vmatprep.subr.mxu0 0.0
      %1194 = vmatpush1.msra.mxu0 0.0
      %1195 = vmatprep.subr.mxu0 0.0
      %1196 = vmatpush1.msra.mxu0 0.0
      %1197 = vmatprep.subr.mxu0 0.0
      %1198 = vmatpush1.msra.mxu0 0.0
      %1199 = vmatprep.subr.mxu0 0.0
      %1200 = vmatpush1.msra.mxu0 0.0
      %1201 = vmatprep.subr.mxu0 0.0
      %1202 = vmatpush1.msra.mxu0 0.0
      %1203 = vmatprep.subr.mxu0 0.0
      %1204 = vmatpush1.msra.mxu0 0.0
      %1205 = vmatprep.subr.mxu0 0.0
      %1206 = vmatpush1.msra.mxu0 0.0
      %1207 = vmatprep.subr.mxu0 0.0
      %1208 = vmatpush1.msra.mxu0 0.0
      %1209 = vmatprep.subr.mxu0 0.0
      %1210 = vmatpush1.msra.mxu0 0.0
      %1211 = vmatprep.subr.mxu0 0.0
      %1212 = vmatpush1.msra.mxu0 0.0
      %1213 = vmatprep.subr.mxu0 0.0
      %1214 = vmatpush1.msra.mxu0 0.0
      %1215 = vmatprep.subr.mxu0 0.0
      %1216 = vmatpush1.msra.mxu0 0.0
      %1217 = vmatprep.subr.mxu0 0.0
      %1218 = vmatpush1.msra.mxu0 0.0
      %1219 = vmatprep.subr.mxu0 0.0
      %1220 = vmatpush1.msra.mxu0 0.0
      %1221 = vmatprep.subr.mxu0 0.0
      %1222 = vmatpush1.msra.mxu0 0.0
      %1223 = vmatprep.subr.mxu0 0.0
      %1224 = vmatpush1.msra.mxu0 0.0
      %1225 = vmatprep.subr.mxu0 0.0
      %1226 = vmatpush1.msra.mxu0 0.0
      %1227 = vmatprep.subr.mxu0 0.0
      %1228 = vmatpush1.msra.mxu0 0.0
      %1229 = vmatprep.subr.mxu0 0.0
      %1230 = vmatpush1.msra.mxu0 0.0
      %1231 = vmatprep.subr.mxu0 0.0
      %1232 = vmatpush1.msra.mxu0 0.0
      %1233 = vmatprep.subr.mxu0 0.0
      %1234 = vmatpush1.msra.mxu0 0.0
      %1235 = vmatprep.subr.mxu0 0.0
      %1236 = vmatpush1.msra.mxu0 0.0
      %1237 = vmatprep.subr.mxu0 0.0
      %1238 = vmatpush1.msra.mxu0 0.0
      %1239 = vmatprep.subr.mxu0 0.0
      %1240 = vmatpush1.msra.mxu0 0.0
      %1241 = vmatprep.subr.mxu0 0.0
      %1242 = vmatpush1.msra.mxu0 0.0
      %1243 = vmatprep.subr.mxu0 0.0
      %1244 = vmatpush1.msra.mxu0 0.0
      %1245 = vmatprep.subr.mxu0 0.0
      %1246 = vmatpush1.msra.mxu0 0.0
      %1247 = vmatprep.mubr.f32.mxu0 0.0
      %1248 = vmatmul.mubr.f32.gmra.mrb[0].mxu0 %v1172
      %v1249 = vpop.f32.mrb[0].mxu0
      %v1250 = vadd.f32 0.0, %v1249
      %v1251 = vpop.f32.mrb[0].mxu0
      %1252 = vmatprep.mubr.f32.mxu0 0.0
      %1253 = vmatmul.mubr.f32.gmra.mrb[0].mxu0 %v1175
      %v1254 = vpop.f32.mrb[0].mxu0
      %v1255 = vadd.f32 0.0, %v1254
      %v1256 = vpop.f32.mrb[0].mxu0
      %1257 = vmatprep.mubr.f32.mxu0 0.0
      %1258 = vmatmul.mubr.f32.gmra.mrb[0].mxu0 %v1178
      %v1259 = vpop.f32.mrb[0].mxu0
      %v1260 = vadd.f32 0.0, %v1259
      %v1261 = vpop.f32.mrb[0].mxu0
      %1262 = vmatprep.mubr.f32.mxu0 0.0
      %1263 = vmatmul.mubr.f32.gmra.mrb[0].mxu0 %v1181
      %v1264 = vpop.f32.mrb[0].mxu0
      %v1265 = vadd.f32 0.0, %v1264
      %v1266 = vpop.f32.mrb[0].mxu0
      %1267 = vdwg.mxu0
      %v1268 = vadd.f32 %v900, %v1250
      %v1269 = vadd.f32 %v901, %v1255
      %v1270 = vadd.f32 %v902, %v1260
      %v1271 = vadd.f32 %v903, %v1265
      %1272 = vrot.lane.b32.xlu0 %v791, 120
      %v1273 = vpop.permute.xlu0 %1272
      %1274 = vrot.lane.b32.xlu0 %v796, 120
      %v1275 = vpop.permute.xlu0 %1274
      %1276 = vrot.lane.b32.xlu0 %v801, 120
      %v1277 = vpop.permute.xlu0 %1276
      %1278 = vrot.lane.b32.xlu0 %v806, 120
      %v1279 = vpop.permute.xlu0 %1278
      %1280 = vrot.lane.b32.xlu0 %v876, 120
      %v1281 = vpop.permute.xlu0 %1280
      %1282 = vrot.lane.b32.xlu0 %v881, 120
      %v1283 = vpop.permute.xlu0 %1282
      %1284 = vrot.lane.b32.xlu0 %v886, 120
      %v1285 = vpop.permute.xlu0 %1284
      %1286 = vrot.lane.b32.xlu0 %v891, 120
      %v1287 = vpop.permute.xlu0 %1286
      %v1288 = vsel %vm904, %v1273, 0
      %v1290 = vsel %vm904, %v1275, 0
      %v1292 = vsel %vm904, %v1277, 0
      %v1294 = vsel %vm904, %v1279, 0
      %v1296 = vsel %vm904, %v1281, 0
      %v1298 = vsel %vm904, %v1283, 0
      %v1300 = vsel %vm904, %v1285, 0
      %v1302 = vsel %vm904, %v1287, 0
      %1304 = vmatprep.subr.mxu0 0.0
      %1305 = vmatpush1.xpose.msra.mxu0 %v1296
      %1306 = vmatprep.subr.mxu0 0.0
      %1307 = vmatpush1.xpose.msra.mxu0 %v1298
      %1308 = vmatprep.subr.mxu0 0.0
      %1309 = vmatpush1.xpose.msra.mxu0 %v1300
      %1310 = vmatprep.subr.mxu0 0.0
      %1311 = vmatpush1.xpose.msra.mxu0 %v1302
      %1312 = vmatprep.subr.mxu0 0.0
      %1313 = vmatpush1.xpose.msra.mxu0 0.0
      %1314 = vmatprep.subr.mxu0 0.0
      %1315 = vmatpush1.xpose.msra.mxu0 0.0
      %1316 = vmatprep.subr.mxu0 0.0
      %1317 = vmatpush1.xpose.msra.mxu0 0.0
      %1318 = vmatprep.subr.mxu0 0.0
      %1319 = vmatpush1.xpose.msra.mxu0 0.0
      %1320 = vmatprep.subr.mxu0 0.0
      %1321 = vmatpush1.xpose.msra.mxu0 0.0
      %1322 = vmatprep.subr.mxu0 0.0
      %1323 = vmatpush1.xpose.msra.mxu0 0.0
      %1324 = vmatprep.subr.mxu0 0.0
      %1325 = vmatpush1.xpose.msra.mxu0 0.0
      %1326 = vmatprep.subr.mxu0 0.0
      %1327 = vmatpush1.xpose.msra.mxu0 0.0
      %1328 = vmatprep.subr.mxu0 0.0
      %1329 = vmatpush1.xpose.msra.mxu0 0.0
      %1330 = vmatprep.subr.mxu0 0.0
      %1331 = vmatpush1.xpose.msra.mxu0 0.0
      %1332 = vmatprep.subr.mxu0 0.0
      %1333 = vmatpush1.xpose.msra.mxu0 0.0
      %1334 = vmatprep.subr.mxu0 0.0
      %1335 = vmatpush1.xpose.msra.mxu0 0.0
      %1336 = vmatprep.subr.mxu0 0.0
      %1337 = vmatpush1.xpose.msra.mxu0 0.0
      %1338 = vmatprep.subr.mxu0 0.0
      %1339 = vmatpush1.xpose.msra.mxu0 0.0
      %1340 = vmatprep.subr.mxu0 0.0
      %1341 = vmatpush1.xpose.msra.mxu0 0.0
      %1342 = vmatprep.subr.mxu0 0.0
      %1343 = vmatpush1.xpose.msra.mxu0 0.0
      %1344 = vmatprep.subr.mxu0 0.0
      %1345 = vmatpush1.xpose.msra.mxu0 0.0
      %1346 = vmatprep.subr.mxu0 0.0
      %1347 = vmatpush1.xpose.msra.mxu0 0.0
      %1348 = vmatprep.subr.mxu0 0.0
      %1349 = vmatpush1.xpose.msra.mxu0 0.0
      %1350 = vmatprep.subr.mxu0 0.0
      %1351 = vmatpush1.xpose.msra.mxu0 0.0
      %1352 = vmatprep.subr.mxu0 0.0
      %1353 = vmatpush1.xpose.msra.mxu0 0.0
      %1354 = vmatprep.subr.mxu0 0.0
      %1355 = vmatpush1.xpose.msra.mxu0 0.0
      %1356 = vmatprep.subr.mxu0 0.0
      %1357 = vmatpush1.xpose.msra.mxu0 0.0
      %1358 = vmatprep.subr.mxu0 0.0
      %1359 = vmatpush1.xpose.msra.mxu0 0.0
      %1360 = vmatprep.subr.mxu0 0.0
      %1361 = vmatpush1.xpose.msra.mxu0 0.0
      %1362 = vmatprep.subr.mxu0 0.0
      %1363 = vmatpush1.xpose.msra.mxu0 0.0
      %1364 = vmatprep.subr.mxu0 0.0
      %1365 = vmatpush1.xpose.msra.mxu0 0.0
      %1366 = vmatprep.subr.mxu0 0.0
      %1367 = vmatpush1.xpose.msra.mxu0 0.0
      %1368 = vmatprep.mubr.f32.mxu0 0.0
      %1369 = vmatmul.mubr.f32.gmra.mrb[0].mxu0 %v1288
      %v1370 = vpop.f32.mrb[0].mxu0
      %v1371 = vadd.f32 %v696, %v1370
      %v1372 = vpop.f32.mrb[0].mxu0
      %1373 = vmatprep.mubr.f32.mxu0 0.0
      %1374 = vmatmul.mubr.f32.gmra.mrb[0].mxu0 %v1290
      %v1375 = vpop.f32.mrb[0].mxu0
      %v1376 = vadd.f32 %v697, %v1375
      %v1377 = vpop.f32.mrb[0].mxu0
      %1378 = vmatprep.mubr.f32.mxu0 0.0
      %1379 = vmatmul.mubr.f32.gmra.mrb[0].mxu0 %v1292
      %v1380 = vpop.f32.mrb[0].mxu0
      %v1381 = vadd.f32 %v698, %v1380
      %v1382 = vpop.f32.mrb[0].mxu0
      %1383 = vmatprep.mubr.f32.mxu0 0.0
      %1384 = vmatmul.mubr.f32.gmra.mrb[0].mxu0 %v1294
      %v1385 = vpop.f32.mrb[0].mxu0
      %v1386 = vadd.f32 %v699, %v1385
      %v1387 = vpop.f32.mrb[0].mxu0
      %1388 = vdwg.mxu0
      %v1389 = vsel %vm1014, %v1371, -inf
      %1390 = vmax.xlane.f32.xlu0 %v1389
      %v1391 = vpop.xlane.xlu0 %1390
      %v1392 = vsel %vm1014, %v1376, -inf
      %1393 = vmax.xlane.f32.xlu0 %v1392
      %v1394 = vpop.xlane.xlu0 %1393
      %v1395 = vsel %vm1014, %v1381, -inf
      %1396 = vmax.xlane.f32.xlu0 %v1395
      %v1397 = vpop.xlane.xlu0 %1396
      %v1398 = vsel %vm1024, %v1386, -inf
      %1399 = vmax.xlane.f32.xlu0 %v1398
      %v1400 = vpop.xlane.xlu0 %1399
      %v1401 = vsub.f32 %v1371, %v1391
      %v1402 = vsub.f32 %v1376, %v1394
      %v1403 = vsub.f32 %v1381, %v1397
      %v1404 = vsub.f32 %v1386, %v1400
      %v1405 = vmul.f32 %v1401, 1.442695
      %v1406 = vpow.pop %v1405
      %v1407 = vmul.f32 %v1402, 1.442695
      %v1408 = vpow.pop %v1407
      %v1409 = vmul.f32 %v1403, 1.442695
      %v1410 = vpow.pop %v1409
      %v1411 = vmul.f32 %v1404, 1.442695
      %v1412 = vpow.pop %v1411
      %v1413 = vsel %vm1014, %v1406, 0.0
      %1414 = vadd.xlane.f32.xlu0 %v1413
      %v1415 = vpop.xlane.xlu0 %1414
      %v1416 = vsel %vm1014, %v1408, 0.0
      %1417 = vadd.xlane.f32.xlu0 %v1416
      %v1418 = vpop.xlane.xlu0 %1417
      %v1419 = vsel %vm1014, %v1410, 0.0
      %1420 = vadd.xlane.f32.xlu0 %v1419
      %v1421 = vpop.xlane.xlu0 %1420
      %v1422 = vsel %vm1024, %v1412, 0.0
      %1423 = vadd.xlane.f32.xlu0 %v1422
      %v1424 = vpop.xlane.xlu0 %1423
      %v1425 = vrcp.pop %v1415
      %v1426 = vmul.f32 %v1406, %v1425
      %v1427 = vrcp.pop %v1418
      %v1428 = vmul.f32 %v1408, %v1427
      %v1429 = vrcp.pop %v1421
      %v1430 = vmul.f32 %v1410, %v1429
      %v1431 = vrcp.pop %v1424
      %v1432 = vmul.f32 %v1412, %v1431
      %1433 = vrot.lane.b32.xlu0 %v876, 104
      %v1434 = vpop.permute.xlu0 %1433
      %1435 = vrot.lane.b32.xlu0 %v881, 104
      %v1436 = vpop.permute.xlu0 %1435
      %1437 = vrot.lane.b32.xlu0 %v886, 104
      %v1438 = vpop.permute.xlu0 %1437
      %1439 = vrot.lane.b32.xlu0 %v891, 104
      %v1440 = vpop.permute.xlu0 %1439
      %v1445 = vsel %vm1014, %v1426, 0
      %v1448 = vsel %vm1014, %v1428, 0
      %v1451 = vsel %vm1014, %v1430, 0
      %v1454 = vsel %vm1014, %v1432, 0
      %v1456 = vsel %vm1083, %v1440, 0
      %1458 = vmatprep.subr.mxu0 0.0
      %1459 = vmatpush1.msra.mxu0 %v1434
      %1460 = vmatprep.subr.mxu0 0.0
      %1461 = vmatpush1.msra.mxu0 %v1436
      %1462 = vmatprep.subr.mxu0 0.0
      %1463 = vmatpush1.msra.mxu0 %v1438
      %1464 = vmatprep.subr.mxu0 0.0
      %1465 = vmatpush1.msra.mxu0 %v1456
      %1466 = vmatprep.subr.mxu0 0.0
      %1467 = vmatpush1.msra.mxu0 0.0
      %1468 = vmatprep.subr.mxu0 0.0
      %1469 = vmatpush1.msra.mxu0 0.0
      %1470 = vmatprep.subr.mxu0 0.0
      %1471 = vmatpush1.msra.mxu0 0.0
      %1472 = vmatprep.subr.mxu0 0.0
      %1473 = vmatpush1.msra.mxu0 0.0
      %1474 = vmatprep.subr.mxu0 0.0
      %1475 = vmatpush1.msra.mxu0 0.0
      %1476 = vmatprep.subr.mxu0 0.0
      %1477 = vmatpush1.msra.mxu0 0.0
      %1478 = vmatprep.subr.mxu0 0.0
      %1479 = vmatpush1.msra.mxu0 0.0
      %1480 = vmatprep.subr.mxu0 0.0
      %1481 = vmatpush1.msra.mxu0 0.0
      %1482 = vmatprep.subr.mxu0 0.0
      %1483 = vmatpush1.msra.mxu0 0.0
      %1484 = vmatprep.subr.mxu0 0.0
      %1485 = vmatpush1.msra.mxu0 0.0
      %1486 = vmatprep.subr.mxu0 0.0
      %1487 = vmatpush1.msra.mxu0 0.0
      %1488 = vmatprep.subr.mxu0 0.0
      %1489 = vmatpush1.msra.mxu0 0.0
      %1490 = vmatprep.subr.mxu0 0.0
      %1491 = vmatpush1.msra.mxu0 0.0
      %1492 = vmatprep.subr.mxu0 0.0
      %1493 = vmatpush1.msra.mxu0 0.0
      %1494 = vmatprep.subr.mxu0 0.0
      %1495 = vmatpush1.msra.mxu0 0.0
      %1496 = vmatprep.subr.mxu0 0.0
      %1497 = vmatpush1.msra.mxu0 0.0
      %1498 = vmatprep.subr.mxu0 0.0
      %1499 = vmatpush1.msra.mxu0 0.0
      %1500 = vmatprep.subr.mxu0 0.0
      %1501 = vmatpush1.msra.mxu0 0.0
      %1502 = vmatprep.subr.mxu0 0.0
      %1503 = vmatpush1.msra.mxu0 0.0
      %1504 = vmatprep.subr.mxu0 0.0
      %1505 = vmatpush1.msra.mxu0 0.0
      %1506 = vmatprep.subr.mxu0 0.0
      %1507 = vmatpush1.msra.mxu0 0.0
      %1508 = vmatprep.subr.mxu0 0.0
      %1509 = vmatpush1.msra.mxu0 0.0
      %1510 = vmatprep.subr.mxu0 0.0
      %1511 = vmatpush1.msra.mxu0 0.0
      %1512 = vmatprep.subr.mxu0 0.0
      %1513 = vmatpush1.msra.mxu0 0.0
      %1514 = vmatprep.subr.mxu0 0.0
      %1515 = vmatpush1.msra.mxu0 0.0
      %1516 = vmatprep.subr.mxu0 0.0
      %1517 = vmatpush1.msra.mxu0 0.0
      %1518 = vmatprep.subr.mxu0 0.0
      %1519 = vmatpush1.msra.mxu0 0.0
      %1520 = vmatprep.subr.mxu0 0.0
      %1521 = vmatpush1.msra.mxu0 0.0
      %1522 = vmatprep.mubr.f32.mxu0 0.0
      %1523 = vmatmul.mubr.f32.gmra.mrb[0].mxu0 %v1445
      %v1524 = vpop.f32.mrb[0].mxu0
      %v1525 = vadd.f32 0.0, %v1524
      %v1526 = vpop.f32.mrb[0].mxu0
      %1527 = vmatprep.mubr.f32.mxu0 0.0
      %1528 = vmatmul.mubr.f32.gmra.mrb[0].mxu0 %v1448
      %v1529 = vpop.f32.mrb[0].mxu0
      %v1530 = vadd.f32 0.0, %v1529
      %v1531 = vpop.f32.mrb[0].mxu0
      %1532 = vmatprep.mubr.f32.mxu0 0.0
      %1533 = vmatmul.mubr.f32.gmra.mrb[0].mxu0 %v1451
      %v1534 = vpop.f32.mrb[0].mxu0
      %v1535 = vadd.f32 0.0, %v1534
      %v1536 = vpop.f32.mrb[0].mxu0
      %1537 = vmatprep.mubr.f32.mxu0 0.0
      %1538 = vmatmul.mubr.f32.gmra.mrb[0].mxu0 %v1454
      %v1539 = vpop.f32.mrb[0].mxu0
      %v1540 = vadd.f32 0.0, %v1539
      %v1541 = vpop.f32.mrb[0].mxu0
      %1542 = vdwg.mxu0
      %v1544 = vsel %vm904, %v1525, 0
      %v1547 = vsel %vm904, %v1530, 0
      %v1550 = vsel %vm904, %v1535, 0
      %v1553 = vsel %vm904, %v1540, 0
      %1555 = vmatprep.subr.mxu0 0.0
      %1556 = vmatpush1.msra.mxu0 %v709
      %1557 = vmatprep.subr.mxu0 0.0
      %1558 = vmatpush1.msra.mxu0 0.0
      %1559 = vmatprep.subr.mxu0 0.0
      %1560 = vmatpush1.msra.mxu0 0.0
      %1561 = vmatprep.subr.mxu0 0.0
      %1562 = vmatpush1.msra.mxu0 0.0
      %1563 = vmatprep.subr.mxu0 0.0
      %1564 = vmatpush1.msra.mxu0 0.0
      %1565 = vmatprep.subr.mxu0 0.0
      %1566 = vmatpush1.msra.mxu0 0.0
      %1567 = vmatprep.subr.mxu0 0.0
      %1568 = vmatpush1.msra.mxu0 0.0
      %1569 = vmatprep.subr.mxu0 0.0
      %1570 = vmatpush1.msra.mxu0 0.0
      %1571 = vmatprep.subr.mxu0 0.0
      %1572 = vmatpush1.msra.mxu0 0.0
      %1573 = vmatprep.subr.mxu0 0.0
      %1574 = vmatpush1.msra.mxu0 0.0
      %1575 = vmatprep.subr.mxu0 0.0
      %1576 = vmatpush1.msra.mxu0 0.0
      %1577 = vmatprep.subr.mxu0 0.0
      %1578 = vmatpush1.msra.mxu0 0.0
      %1579 = vmatprep.subr.mxu0 0.0
      %1580 = vmatpush1.msra.mxu0 0.0
      %1581 = vmatprep.subr.mxu0 0.0
      %1582 = vmatpush1.msra.mxu0 0.0
      %1583 = vmatprep.subr.mxu0 0.0
      %1584 = vmatpush1.msra.mxu0 0.0
      %1585 = vmatprep.subr.mxu0 0.0
      %1586 = vmatpush1.msra.mxu0 0.0
      %1587 = vmatprep.subr.mxu0 0.0
      %1588 = vmatpush1.msra.mxu0 0.0
      %1589 = vmatprep.subr.mxu0 0.0
      %1590 = vmatpush1.msra.mxu0 0.0
      %1591 = vmatprep.subr.mxu0 0.0
      %1592 = vmatpush1.msra.mxu0 0.0
      %1593 = vmatprep.subr.mxu0 0.0
      %1594 = vmatpush1.msra.mxu0 0.0
      %1595 = vmatprep.subr.mxu0 0.0
      %1596 = vmatpush1.msra.mxu0 0.0
      %1597 = vmatprep.subr.mxu0 0.0
      %1598 = vmatpush1.msra.mxu0 0.0
      %1599 = vmatprep.subr.mxu0 0.0
      %1600 = vmatpush1.msra.mxu0 0.0
      %1601 = vmatprep.subr.mxu0 0.0
      %1602 = vmatpush1.msra.mxu0 0.0
      %1603 = vmatprep.subr.mxu0 0.0
      %1604 = vmatpush1.msra.mxu0 0.0
      %1605 = vmatprep.subr.mxu0 0.0
      %1606 = vmatpush1.msra.mxu0 0.0
      %1607 = vmatprep.subr.mxu0 0.0
      %1608 = vmatpush1.msra.mxu0 0.0
      %1609 = vmatprep.subr.mxu0 0.0
      %1610 = vmatpush1.msra.mxu0 0.0
      %1611 = vmatprep.subr.mxu0 0.0
      %1612 = vmatpush1.msra.mxu0 0.0
      %1613 = vmatprep.subr.mxu0 0.0
      %1614 = vmatpush1.msra.mxu0 0.0
      %1615 = vmatprep.subr.mxu0 0.0
      %1616 = vmatpush1.msra.mxu0 0.0
      %1617 = vmatprep.subr.mxu0 0.0
      %1618 = vmatpush1.msra.mxu0 0.0
      %1619 = vmatprep.mubr.f32.mxu0 0.0
      %1620 = vmatmul.mubr.f32.gmra.mrb[0].mxu0 %v1544
      %v1621 = vpop.f32.mrb[0].mxu0
      %v1622 = vadd.f32 0.0, %v1621
      %v1623 = vpop.f32.mrb[0].mxu0
      %1624 = vmatprep.mubr.f32.mxu0 0.0
      %1625 = vmatmul.mubr.f32.gmra.mrb[0].mxu0 %v1547
      %v1626 = vpop.f32.mrb[0].mxu0
      %v1627 = vadd.f32 0.0, %v1626
      %v1628 = vpop.f32.mrb[0].mxu0
      %1629 = vmatprep.mubr.f32.mxu0 0.0
      %1630 = vmatmul.mubr.f32.gmra.mrb[0].mxu0 %v1550
      %v1631 = vpop.f32.mrb[0].mxu0
      %v1632 = vadd.f32 0.0, %v1631
      %v1633 = vpop.f32.mrb[0].mxu0
      %1634 = vmatprep.mubr.f32.mxu0 0.0
      %1635 = vmatmul.mubr.f32.gmra.mrb[0].mxu0 %v1553
      %v1636 = vpop.f32.mrb[0].mxu0
      %v1637 = vadd.f32 0.0, %v1636
      %v1638 = vpop.f32.mrb[0].mxu0
      %1639 = vdwg.mxu0
      %v1640 = vadd.f32 %v1268, %v1622
      %v1641 = vadd.f32 %v1269, %v1627
      %v1642 = vadd.f32 %v1270, %v1632
      %v1643 = vadd.f32 %v1271, %v1637
      %v1644 = vld [vmem:[%s647] sm:$0x1]
      %v1645 = vld [vmem:[%s650] sm:$0x1]
      %v1646 = vsel %vm711, %v1640, 0.0
      %1647 = vadd.xlane.f32.xlu0 %v1646
      %v1648 = vpop.xlane.xlu0 %1647
      %v1649 = vsel %vm711, %v1641, 0.0
      %1650 = vadd.xlane.f32.xlu0 %v1649
      %v1651 = vpop.xlane.xlu0 %1650
      %v1652 = vsel %vm711, %v1642, 0.0
      %1653 = vadd.xlane.f32.xlu0 %v1652
      %v1654 = vpop.xlane.xlu0 %1653
      %vm1655 = vcmask 257024
      %v1656 = vsel %vm1655, %v1643, 0.0
      %1657 = vadd.xlane.f32.xlu0 %v1656
      %v1658 = vpop.xlane.xlu0 %1657
      %v1659 = vrcp.pop 32.0
      %v1660 = vmul.f32 %v1648, %v1659
      %v1661 = vmul.f32 %v1651, %v1659
      %v1662 = vmul.f32 %v1654, %v1659
      %v1663 = vmul.f32 %v1658, %v1659
      %v1664 = vsub.f32 %v1640, %v1660
      %v1665 = vsub.f32 %v1641, %v1661
      %v1666 = vsub.f32 %v1642, %v1662
      %v1667 = vsub.f32 %v1643, %v1663
      %v1668 = vmul.f32 %v1664, %v1664
      %v1669 = vmul.f32 %v1665, %v1665
      %v1670 = vmul.f32 %v1666, %v1666
      %v1671 = vmul.f32 %v1667, %v1667
      %v1672 = vsel %vm711, %v1668, 0.0
      %1673 = vadd.xlane.f32.xlu0 %v1672
      %v1674 = vpop.xlane.xlu0 %1673
      %v1675 = vsel %vm711, %v1669, 0.0
      %1676 = vadd.xlane.f32.xlu0 %v1675
      %v1677 = vpop.xlane.xlu0 %1676
      %v1678 = vsel %vm711, %v1670, 0.0
      %1679 = vadd.xlane.f32.xlu0 %v1678
      %v1680 = vpop.xlane.xlu0 %1679
      %v1681 = vsel %vm1655, %v1671, 0.0
      %1682 = vadd.xlane.f32.xlu0 %v1681
      %v1683 = vpop.xlane.xlu0 %1682
      %v1684 = vmul.f32 %v1674, %v1659
      %v1685 = vmul.f32 %v1677, %v1659
      %v1686 = vmul.f32 %v1680, %v1659
      %v1687 = vmul.f32 %v1683, %v1659
      %v1688 = vadd.f32 %v1684, 1e-06
      %v1689 = vadd.f32 %v1685, 1e-06
      %v1690 = vadd.f32 %v1686, 1e-06
      %v1691 = vadd.f32 %v1687, 1e-06
      %v1692 = vrsqrt.pop %v1688
      %v1693 = vrsqrt.pop %v1689
      %v1694 = vrsqrt.pop %v1690
      %v1695 = vrsqrt.pop %v1691
      %v1696 = vmul.f32 %v1664, %v1692
      %v1697 = vmul.f32 %v1665, %v1693
      %v1698 = vmul.f32 %v1666, %v1694
      %v1699 = vmul.f32 %v1667, %v1695
      %v1701 = vlaneseq
      %v1702 = vshrl.u32 %v1701, 7
      %v1703 = vsub.s32 0, %v1702
      %v1704 = vrot.slane %v1644, %v1703
      %v1706 = vmul.f32 %v1696, %v1704
      %v1707 = vmul.f32 %v1697, %v1704
      %v1708 = vmul.f32 %v1698, %v1704
      %v1709 = vmul.f32 %v1699, %v1704
      %v1711 = vlaneseq
      %v1712 = vshrl.u32 %v1711, 7
      %v1713 = vsub.s32 0, %v1712
      %v1714 = vrot.slane %v1645, %v1713
      %v1716 = vadd.f32 %v1706, %v1714
      %v1717 = vadd.f32 %v1707, %v1714
      %v1718 = vadd.f32 %v1708, %v1714
      %v1719 = vadd.f32 %v1709, %v1714
      %v1720 = vld [vmem:[%s655] sm:$0xff]
      %v1721 = vld [vmem:[%s655 + $0x8] sm:$0xff]
      %v1722 = vld [vmem:[%s655 + $0x10] sm:$0xff]
      %v1723 = vld [vmem:[%s655 + $0x18] sm:$0xff]
      %v1724 = vld [vmem:[%s658] sm:$0x1]
      %v1726 = vlaneseq
      %v1727 = vshrl.u32 %v1726, 7
      %v1728 = vsub.s32 0, %v1727
      %v1729 = vrot.slane %v1724, %v1728
      %v1732 = vsel %vm711, %v1716, 0
      %v1735 = vsel %vm711, %v1717, 0
      %v1738 = vsel %vm711, %v1718, 0
      %v1741 = vsel %vm711, %v1719, 0
      %1743 = vmatprep.subr.mxu0 0.0
      %1744 = vmatpush1.msra.mxu0 %v1720
      %1745 = vmatprep.subr.mxu0 0.0
      %1746 = vmatpush1.msra.mxu0 %v1721
      %1747 = vmatprep.subr.mxu0 0.0
      %1748 = vmatpush1.msra.mxu0 %v1722
      %1749 = vmatprep.subr.mxu0 0.0
      %1750 = vmatpush1.msra.mxu0 %v1723
      %1751 = vmatprep.subr.mxu0 0.0
      %1752 = vmatpush1.msra.mxu0 0.0
      %1753 = vmatprep.subr.mxu0 0.0
      %1754 = vmatpush1.msra.mxu0 0.0
      %1755 = vmatprep.subr.mxu0 0.0
      %1756 = vmatpush1.msra.mxu0 0.0
      %1757 = vmatprep.subr.mxu0 0.0
      %1758 = vmatpush1.msra.mxu0 0.0
      %1759 = vmatprep.subr.mxu0 0.0
      %1760 = vmatpush1.msra.mxu0 0.0
      %1761 = vmatprep.subr.mxu0 0.0
      %1762 = vmatpush1.msra.mxu0 0.0
      %1763 = vmatprep.subr.mxu0 0.0
      %1764 = vmatpush1.msra.mxu0 0.0
      %1765 = vmatprep.subr.mxu0 0.0
      %1766 = vmatpush1.msra.mxu0 0.0
      %1767 = vmatprep.subr.mxu0 0.0
      %1768 = vmatpush1.msra.mxu0 0.0
      %1769 = vmatprep.subr.mxu0 0.0
      %1770 = vmatpush1.msra.mxu0 0.0
      %1771 = vmatprep.subr.mxu0 0.0
      %1772 = vmatpush1.msra.mxu0 0.0
      %1773 = vmatprep.subr.mxu0 0.0
      %1774 = vmatpush1.msra.mxu0 0.0
      %1775 = vmatprep.subr.mxu0 0.0
      %1776 = vmatpush1.msra.mxu0 0.0
      %1777 = vmatprep.subr.mxu0 0.0
      %1778 = vmatpush1.msra.mxu0 0.0
      %1779 = vmatprep.subr.mxu0 0.0
      %1780 = vmatpush1.msra.mxu0 0.0
      %1781 = vmatprep.subr.mxu0 0.0
      %1782 = vmatpush1.msra.mxu0 0.0
      %1783 = vmatprep.subr.mxu0 0.0
      %1784 = vmatpush1.msra.mxu0 0.0
      %1785 = vmatprep.subr.mxu0 0.0
      %1786 = vmatpush1.msra.mxu0 0.0
      %1787 = vmatprep.subr.mxu0 0.0
      %1788 = vmatpush1.msra.mxu0 0.0
      %1789 = vmatprep.subr.mxu0 0.0
      %1790 = vmatpush1.msra.mxu0 0.0
      %1791 = vmatprep.subr.mxu0 0.0
      %1792 = vmatpush1.msra.mxu0 0.0
      %1793 = vmatprep.subr.mxu0 0.0
      %1794 = vmatpush1.msra.mxu0 0.0
      %1795 = vmatprep.subr.mxu0 0.0
      %1796 = vmatpush1.msra.mxu0 0.0
      %1797 = vmatprep.subr.mxu0 0.0
      %1798 = vmatpush1.msra.mxu0 0.0
      %1799 = vmatprep.subr.mxu0 0.0
      %1800 = vmatpush1.msra.mxu0 0.0
      %1801 = vmatprep.subr.mxu0 0.0
      %1802 = vmatpush1.msra.mxu0 0.0
      %1803 = vmatprep.subr.mxu0 0.0
      %1804 = vmatpush1.msra.mxu0 0.0
      %1805 = vmatprep.subr.mxu0 0.0
      %1806 = vmatpush1.msra.mxu0 0.0
      %1807 = vmatprep.mubr.f32.mxu0 0.0
      %1808 = vmatmul.mubr.f32.gmra.mrb[0].mxu0 %v1732
      %v1809 = vpop.f32.mrb[0].mxu0
      %v1810 = vadd.f32 %v1729, %v1809
      %v1811 = vpop.f32.mrb[0].mxu0
      %1812 = vmatprep.mubr.f32.mxu0 0.0
      %1813 = vmatmul.mubr.f32.gmra.mrb[0].mxu0 %v1735
      %v1814 = vpop.f32.mrb[0].mxu0
      %v1815 = vadd.f32 %v1729, %v1814
      %v1816 = vpop.f32.mrb[0].mxu0
      %1817 = vmatprep.mubr.f32.mxu0 0.0
      %1818 = vmatmul.mubr.f32.gmra.mrb[0].mxu0 %v1738
      %v1819 = vpop.f32.mrb[0].mxu0
      %v1820 = vadd.f32 %v1729, %v1819
      %v1821 = vpop.f32.mrb[0].mxu0
      %1822 = vmatprep.mubr.f32.mxu0 0.0
      %1823 = vmatmul.mubr.f32.gmra.mrb[0].mxu0 %v1741
      %v1824 = vpop.f32.mrb[0].mxu0
      %v1825 = vadd.f32 %v1729, %v1824
      %v1826 = vpop.f32.mrb[0].mxu0
      %1827 = vdwg.mxu0
      %v1828 = vmul.f32 %v1810, 0.5
      %v1829 = vmul.f32 %v1815, 0.5
      %v1830 = vmul.f32 %v1820, 0.5
      %v1831 = vmul.f32 %v1825, 0.5
      %v1832 = vmul.f32 %v1810, 0.044715
      %v1833 = vmul.f32 %v1815, 0.044715
      %v1834 = vmul.f32 %v1820, 0.044715
      %v1835 = vmul.f32 %v1825, 0.044715
      %v1836 = vmul.f32 %v1832, %v1810
      %v1837 = vmul.f32 %v1833, %v1815
      %v1838 = vmul.f32 %v1834, %v1820
      %v1839 = vmul.f32 %v1835, %v1825
      %v1840 = vmul.f32 %v1836, %v1810
      %v1841 = vmul.f32 %v1837, %v1815
      %v1842 = vmul.f32 %v1838, %v1820
      %v1843 = vmul.f32 %v1839, %v1825
      %v1844 = vadd.f32 %v1810, %v1840
      %v1845 = vadd.f32 %v1815, %v1841
      %v1846 = vadd.f32 %v1820, %v1842
      %v1847 = vadd.f32 %v1825, %v1843
      %v1848 = vmul.f32 %v1844, 0.7978846
      %v1849 = vmul.f32 %v1845, 0.7978846
      %v1850 = vmul.f32 %v1846, 0.7978846
      %v1851 = vmul.f32 %v1847, 0.7978846
      %v1852 = vtanh.pop %v1848
      %v1853 = vtanh.pop %v1849
      %v1854 = vtanh.pop %v1850
      %v1855 = vtanh.pop %v1851
      %v1856 = vadd.f32 %v1852, 1.0
      %v1857 = vadd.f32 %v1853, 1.0
      %v1858 = vadd.f32 %v1854, 1.0
      %v1859 = vadd.f32 %v1855, 1.0
      %v1860 = vmul.f32 %v1828, %v1856
      %v1861 = vmul.f32 %v1829, %v1857
      %v1862 = vmul.f32 %v1830, %v1858
      %v1863 = vmul.f32 %v1831, %v1859
      %v1864 = vld [vmem:[%s663] sm:$0xff]
      %v1865 = vld [vmem:[%s663 + $0x8] sm:$0xff]
      %v1866 = vld [vmem:[%s666] sm:$0x1]
      %v1868 = vlaneseq
      %v1869 = vshrl.u32 %v1868, 7
      %v1870 = vsub.s32 0, %v1869
      %v1871 = vrot.slane %v1866, %v1870
      %vm1873 = vcmask 130048
      %v1875 = vsel %vm1873, %v1860, 0
      %v1878 = vsel %vm1873, %v1861, 0
      %v1881 = vsel %vm1873, %v1862, 0
      %v1884 = vsel %vm1873, %v1863, 0
      %1886 = vmatprep.subr.mxu0 0.0
      %1887 = vmatpush1.msra.mxu0 %v1864
      %1888 = vmatprep.subr.mxu0 0.0
      %1889 = vmatpush1.msra.mxu0 %v1865
      %1890 = vmatprep.subr.mxu0 0.0
      %1891 = vmatpush1.msra.mxu0 0.0
      %1892 = vmatprep.subr.mxu0 0.0
      %1893 = vmatpush1.msra.mxu0 0.0
      %1894 = vmatprep.subr.mxu0 0.0
      %1895 = vmatpush1.msra.mxu0 0.0
      %1896 = vmatprep.subr.mxu0 0.0
      %1897 = vmatpush1.msra.mxu0 0.0
      %1898 = vmatprep.subr.mxu0 0.0
      %1899 = vmatpush1.msra.mxu0 0.0
      %1900 = vmatprep.subr.mxu0 0.0
      %1901 = vmatpush1.msra.mxu0 0.0
      %1902 = vmatprep.subr.mxu0 0.0
      %1903 = vmatpush1.msra.mxu0 0.0
      %1904 = vmatprep.subr.mxu0 0.0
      %1905 = vmatpush1.msra.mxu0 0.0
      %1906 = vmatprep.subr.mxu0 0.0
      %1907 = vmatpush1.msra.mxu0 0.0
      %1908 = vmatprep.subr.mxu0 0.0
      %1909 = vmatpush1.msra.mxu0 0.0
      %1910 = vmatprep.subr.mxu0 0.0
      %1911 = vmatpush1.msra.mxu0 0.0
      %1912 = vmatprep.subr.mxu0 0.0
      %1913 = vmatpush1.msra.mxu0 0.0
      %1914 = vmatprep.subr.mxu0 0.0
      %1915 = vmatpush1.msra.mxu0 0.0
      %1916 = vmatprep.subr.mxu0 0.0
      %1917 = vmatpush1.msra.mxu0 0.0
      %1918 = vmatprep.subr.mxu0 0.0
      %1919 = vmatpush1.msra.mxu0 0.0
      %1920 = vmatprep.subr.mxu0 0.0
      %1921 = vmatpush1.msra.mxu0 0.0
      %1922 = vmatprep.subr.mxu0 0.0
      %1923 = vmatpush1.msra.mxu0 0.0
      %1924 = vmatprep.subr.mxu0 0.0
      %1925 = vmatpush1.msra.mxu0 0.0
      %1926 = vmatprep.subr.mxu0 0.0
      %1927 = vmatpush1.msra.mxu0 0.0
      %1928 = vmatprep.subr.mxu0 0.0
      %1929 = vmatpush1.msra.mxu0 0.0
      %1930 = vmatprep.subr.mxu0 0.0
      %1931 = vmatpush1.msra.mxu0 0.0
      %1932 = vmatprep.subr.mxu0 0.0
      %1933 = vmatpush1.msra.mxu0 0.0
      %1934 = vmatprep.subr.mxu0 0.0
      %1935 = vmatpush1.msra.mxu0 0.0
      %1936 = vmatprep.subr.mxu0 0.0
      %1937 = vmatpush1.msra.mxu0 0.0
      %1938 = vmatprep.subr.mxu0 0.0
      %1939 = vmatpush1.msra.mxu0 0.0
      %1940 = vmatprep.subr.mxu0 0.0
      %1941 = vmatpush1.msra.mxu0 0.0
      %1942 = vmatprep.subr.mxu0 0.0
      %1943 = vmatpush1.msra.mxu0 0.0
      %1944 = vmatprep.subr.mxu0 0.0
      %1945 = vmatpush1.msra.mxu0 0.0
      %1946 = vmatprep.subr.mxu0 0.0
      %1947 = vmatpush1.msra.mxu0 0.0
      %1948 = vmatprep.subr.mxu0 0.0
      %1949 = vmatpush1.msra.mxu0 0.0
      %1950 = vmatprep.mubr.f32.mxu0 0.0
      %1951 = vmatmul.mubr.f32.gmra.mrb[0].mxu0 %v1875
      %v1952 = vpop.f32.mrb[0].mxu0
      %v1953 = vadd.f32 %v1871, %v1952
      %v1954 = vpop.f32.mrb[0].mxu0
      %1955 = vmatprep.mubr.f32.mxu0 0.0
      %1956 = vmatmul.mubr.f32.gmra.mrb[0].mxu0 %v1878
      %v1957 = vpop.f32.mrb[0].mxu0
      %v1958 = vadd.f32 %v1871, %v1957
      %v1959 = vpop.f32.mrb[0].mxu0
      %1960 = vmatprep.mubr.f32.mxu0 0.0
      %1961 = vmatmul.mubr.f32.gmra.mrb[0].mxu0 %v1881
      %v1962 = vpop.f32.mrb[0].mxu0
      %v1963 = vadd.f32 %v1871, %v1962
      %v1964 = vpop.f32.mrb[0].mxu0
      %1965 = vmatprep.mubr.f32.mxu0 0.0
      %1966 = vmatmul.mubr.f32.gmra.mrb[0].mxu0 %v1884
      %v1967 = vpop.f32.mrb[0].mxu0
      %v1968 = vadd.f32 %v1871, %v1967
      %v1969 = vpop.f32.mrb[0].mxu0
      %1970 = vdwg.mxu0
      %v1971 = vadd.f32 %v1953, %v1716
      %v1972 = vadd.f32 %v1958, %v1717
      %v1973 = vadd.f32 %v1963, %v1718
      %v1974 = vadd.f32 %v1968, %v1719
      %v1975 = vld [vmem:[%s669] sm:$0x1]
      %v1976 = vld [vmem:[%s672] sm:$0x1]
      %v1977 = vsel %vm711, %v1971, 0.0
      %1978 = vadd.xlane.f32.xlu0 %v1977
      %v1979 = vpop.xlane.xlu0 %1978
      %v1980 = vsel %vm711, %v1972, 0.0
      %1981 = vadd.xlane.f32.xlu0 %v1980
      %v1982 = vpop.xlane.xlu0 %1981
      %v1983 = vsel %vm711, %v1973, 0.0
      %1984 = vadd.xlane.f32.xlu0 %v1983
      %v1985 = vpop.xlane.xlu0 %1984
      %v1986 = vsel %vm1655, %v1974, 0.0
      %1987 = vadd.xlane.f32.xlu0 %v1986
      %v1988 = vpop.xlane.xlu0 %1987
      %v1989 = vmul.f32 %v1979, %v1659
      %v1990 = vmul.f32 %v1982, %v1659
      %v1991 = vmul.f32 %v1985, %v1659
      %v1992 = vmul.f32 %v1988, %v1659
      %v1993 = vsub.f32 %v1971, %v1989
      %v1994 = vsub.f32 %v1972, %v1990
      %v1995 = vsub.f32 %v1973, %v1991
      %v1996 = vsub.f32 %v1974, %v1992
      %v1997 = vmul.f32 %v1993, %v1993
      %v1998 = vmul.f32 %v1994, %v1994
      %v1999 = vmul.f32 %v1995, %v1995
      %v2000 = vmul.f32 %v1996, %v1996
      %v2001 = vsel %vm711, %v1997, 0.0
      %2002 = vadd.xlane.f32.xlu0 %v2001
      %v2003 = vpop.xlane.xlu0 %2002
      %v2004 = vsel %vm711, %v1998, 0.0
      %2005 = vadd.xlane.f32.xlu0 %v2004
      %v2006 = vpop.xlane.xlu0 %2005
      %v2007 = vsel %vm711, %v1999, 0.0
      %2008 = vadd.xlane.f32.xlu0 %v2007
      %v2009 = vpop.xlane.xlu0 %2008
      %v2010 = vsel %vm1655, %v2000, 0.0
      %2011 = vadd.xlane.f32.xlu0 %v2010
      %v2012 = vpop.xlane.xlu0 %2011
      %v2013 = vmul.f32 %v2003, %v1659
      %v2014 = vmul.f32 %v2006, %v1659
      %v2015 = vmul.f32 %v2009, %v1659
      %v2016 = vmul.f32 %v2012, %v1659
      %v2017 = vadd.f32 %v2013, 1e-06
      %v2018 = vadd.f32 %v2014, 1e-06
      %v2019 = vadd.f32 %v2015, 1e-06
      %v2020 = vadd.f32 %v2016, 1e-06
      %v2021 = vrsqrt.pop %v2017
      %v2022 = vrsqrt.pop %v2018
      %v2023 = vrsqrt.pop %v2019
      %v2024 = vrsqrt.pop %v2020
      %v2025 = vmul.f32 %v1993, %v2021
      %v2026 = vmul.f32 %v1994, %v2022
      %v2027 = vmul.f32 %v1995, %v2023
      %v2028 = vmul.f32 %v1996, %v2024
      %v2030 = vlaneseq
      %v2031 = vshrl.u32 %v2030, 7
      %v2032 = vsub.s32 0, %v2031
      %v2033 = vrot.slane %v1975, %v2032
      %v2035 = vmul.f32 %v2025, %v2033
      %v2036 = vmul.f32 %v2026, %v2033
      %v2037 = vmul.f32 %v2027, %v2033
      %v2038 = vmul.f32 %v2028, %v2033
      %v2040 = vlaneseq
      %v2041 = vshrl.u32 %v2040, 7
      %v2042 = vsub.s32 0, %v2041
      %v2043 = vrot.slane %v1976, %v2042
      %v2045 = vadd.f32 %v2035, %v2043
      %v2046 = vadd.f32 %v2036, %v2043
      %v2047 = vadd.f32 %v2037, %v2043
      %v2048 = vadd.f32 %v2038, %v2043
      %2049 = vst.msk [vmem:[%s677] sm:$0xff] %vm711, %v2045
      %2050 = vst.msk [vmem:[%s677 + $0x8] sm:$0xff] %vm711, %v2046
      %2051 = vst.msk [vmem:[%s677 + $0x10] sm:$0xff] %vm711, %v2047
      %2052 = vst.msk [vmem:[%s677 + $0x18] sm:$0xf] %vm1655, %v2048
      %p2053 = scmp.lt.s32.totalorder %s29, 1
      %s2054 = scalar_select %p2053, %s29, 1
      %s2055 = smul.addr %s2054, 4
      %s2056 = smul.addr %s2055, 8
      %s2057 = scalar_lea.vmem %s14, %s2056
      // Predicated region
      $region81: #{_lambda_.4} parent=75 // pred_check
        %p2058 = pneg %p414
      $region82: #{_lambda_.4} parent=75 // pred_check_branch
        %2060 = sbr.rel (%p2058) target = $region84
      $region83: #{_lambda_.4} parent=75 // pred_region
        _
      $region84: #{_lambda_.4} parent=75 // pred_fallthru
        _
    $region76: #{_lambda_.4} parent=5 // pred_fallthru
      _
    %p2061 = scmp.le.s32.totalorder 2, %s20
    // Predicated region
    $region85: #{_lambda_.4} parent=5 // pred_check
      %p2062 = pneg %p2061
    $region86: #{_lambda_.4} parent=5 // pred_check_branch
      %2064 = sbr.rel (%p2062) target = $region88
    $region87: #{_lambda_.4} parent=5 // pred_region
      %s2065 = ssub.s32 %s20, 2
      // Predicated region
      $region89: #{_lambda_.4} parent=87 // pred_check
        %p2066 = pneg %p420
      $region90: #{_lambda_.4} parent=87 // pred_check_branch
        %2068 = sbr.rel (%p2066) target = $region92
      $region91: #{_lambda_.4} parent=87 // pred_region
        %p2069 = scmp.lt.s32.totalorder %s31, 1
        %s2070 = scalar_select %p2069, %s31, 1
        %s2071 = smul.addr %s2070, 4
        %s2072 = smul.addr %s2071, 8
        %s2073 = scalar_lea.vmem %s14, %s2072
      $region92: #{_lambda_.4} parent=87 // pred_fallthru
        _
    $region88: #{_lambda_.4} parent=5 // pred_fallthru
      _
  $region6: #{_lambda_.4} parent=0 // loop_footer
    %s24 = sadd.s32 1, %s20
  $region7: #{_lambda_.4} parent=0 // loop_footer_branch
    %19 = sbr.rel target = $region3
  $region8: #{_lambda_.4} parent=0 // loop_exit
    _

// kernel: _lambda_.5
$region0: #{_lambda_.5}
  #allocation0 [shape = 'u32[]', space=smem, size = 0x4, offset = 0x4, fixed_abs, tag = 'smem constant byte address 0x4 - core index']
  #allocation1 [shape = 'u32[144,128]{1,0:T(1,128)}', space=vmem, size = 0x12000, scoped, tag = 'internal scratch']
  #allocation2 [shape = 'f32[32,32]{1,0:T(8,128)}', space=vmem, size = 0x4000, scoped, tag = 'scratch operand']
  %s0 = inlined_call_operand.smem [shape: u32[32], index: -1, kind: input, shape index: {}]
  %s1 = sld [smem:[%s0]]
  %s2 = scalar_lea.smem %s0, 1
  %s3 = sld [smem:[%s2]]
  %s4 = scalar_lea.smem %s0, 2
  %s5 = sld [smem:[%s4]]
  %s6 = scalar_lea.smem %s0, 3
  %s7 = sld [smem:[%s6]]
  %s8 = scalar_lea.smem %s0, 4
  %s9 = sld [smem:[%s8]]
  %s10 = scalar_lea.smem %s0, 5
  %s11 = sld [smem:[%s10]]
  %s12 = scalar_lea.smem %s0, 6
  %s13 = sld [smem:[%s12]]
  %s14 = scalar_lea.smem %s0, 7
  %s15 = sld [smem:[%s14]]
  %s16 = scalar_lea.smem %s0, 8
  %s17 = sld [smem:[%s16]]
  %s18 = scalar_lea.smem %s0, 9
  %s19 = sld [smem:[%s18]]
  %s20 = scalar_lea.smem %s0, 10
  %s21 = sld [smem:[%s20]]
  %s22 = scalar_lea.smem %s0, 11
  %s23 = sld [smem:[%s22]]
  %s24 = scalar_lea.smem %s0, 12
  %s25 = sld [smem:[%s24]]
  %s26 = scalar_lea.smem %s0, 13
  %s27 = sld [smem:[%s26]]
  %s28 = scalar_lea.smem %s0, 14
  %s29 = sld [smem:[%s28]]
  %s30 = scalar_lea.smem %s0, 15
  %s31 = sld [smem:[%s30]]
  %s32 = scalar_lea.smem %s0, 16
  %s33 = sld [smem:[%s32]]
  %s34 = scalar_lea.smem %s0, 17
  %s35 = sld [smem:[%s34]]
  %s36 = scalar_lea.smem %s0, 18
  %s37 = sld [smem:[%s36]]
  %s38 = scalar_lea.smem %s0, 19
  %s39 = sld [smem:[%s38]]
  %s40 = scalar_lea.smem %s0, 20
  %s41 = sld [smem:[%s40]]
  %s42 = scalar_lea.smem %s0, 21
  %s43 = sld [smem:[%s42]]
  %s44 = scalar_lea.smem %s0, 22
  %s45 = sld [smem:[%s44]]
  %s46 = scalar_lea.smem %s0, 23
  %s47 = sld [smem:[%s46]]
  %s48 = scalar_lea.smem %s0, 24
  %s49 = sld [smem:[%s48]]
  %s50 = scalar_lea.smem %s0, 25
  %s51 = sld [smem:[%s50]]
  %s52 = scalar_lea.smem %s0, 26
  %s53 = sld [smem:[%s52]]
  %s54 = scalar_lea.smem %s0, 27
  %s55 = sld [smem:[%s54]]
  %s56 = scalar_lea.smem %s0, 28
  %s57 = sld [smem:[%s56]]
  %s58 = scalar_lea.smem %s0, 29
  %s59 = sld [smem:[%s58]]
  %s60 = scalar_lea.smem %s0, 30
  %s61 = sld [smem:[%s60]]
  %s62 = scalar_lea.smem %s0, 31
  %s63 = sld [smem:[%s62]]
  %s64 = sld [smem:[#allocation0]]
  $region157: #{_lambda_.5} parent=0
    _
  %s66 = ssub.s32 1, %s64
  %s67 = scalar_select 0, %s66, %s64
  $region1: #{_lambda_.5} parent=0
    #allocation3 [shape = 'u8[4096]{0}', space=vmem, size = 0x1000, scoped, tag = 'output window, operand 0']
    #allocation4 [shape = 's32[2]{0}', space=sflag, size = 0x8, scoped, tag = 'scoped memory for _lambda_.5']
    %68 = vsyncpa [#allocation4], 0
    %s69 = scalar_lea.sflag [#allocation4], 1
    %70 = vsyncpa %s69, 0
    loop: start=0, step=1, limit=4
    $region2: #{_lambda_.5} parent=1 // loop_pre_header
      _
    $region3: #{_lambda_.5} parent=1 // loop_header
      %s72 = sphi 0, %s76
      %p73 = scmp.ge.s32.totalorder %s72, 4
      %s82 = sphi 0, %s84
      %s85 = sphi 0, %s82
      %s86 = sphi 0, %s85
      %s102 = sphi 0, %s86
      %s106 = sphi 0, %s106
      %s108 = sphi 0, %s106
      %s109 = sphi 0, %s108
      %s123 = sphi 0, %s109
      %s127 = sphi 0, %s127
      %s129 = sphi 0, %s127
      %s130 = sphi 0, %s129
      %s144 = sphi 0, %s130
      %s148 = sphi 0, %s148
      %s150 = sphi 0, %s148
      %s151 = sphi 0, %s150
      %s165 = sphi 0, %s151
      %s171 = sphi 0, %s173
      %s174 = sphi 0, %s171
      %s175 = sphi 0, %s174
      %s191 = sphi 0, %s175
      %s195 = sphi 0, %s195
      %s197 = sphi 0, %s195
      %s198 = sphi 0, %s197
      %s212 = sphi 0, %s198
      %s216 = sphi 0, %s216
      %s218 = sphi 0, %s216
      %s219 = sphi 0, %s218
      %s233 = sphi 0, %s219
      %s237 = sphi 0, %s237
      %s239 = sphi 0, %s237
      %s240 = sphi 0, %s239
      %s254 = sphi 0, %s240
      %s258 = sphi 0, %s258
      %s260 = sphi 0, %s258
      %s261 = sphi 0, %s260
      %s275 = sphi 0, %s261
      %s279 = sphi 0, %s279
      %s281 = sphi 0, %s279
      %s282 = sphi 0, %s281
      %s296 = sphi 0, %s282
      %s300 = sphi 0, %s300
      %s302 = sphi 0, %s300
      %s303 = sphi 0, %s302
      %s317 = sphi 0, %s303
      %s321 = sphi 0, %s321
      %s323 = sphi 0, %s321
      %s324 = sphi 0, %s323
      %s338 = sphi 0, %s324
      %s342 = sphi 0, %s342
      %s344 = sphi 0, %s342
      %s345 = sphi 0, %s344
      %s359 = sphi 0, %s345
      %s363 = sphi 0, %s363
      %s365 = sphi 0, %s363
      %s366 = sphi 0, %s365
      %s380 = sphi 0, %s366
      %s384 = sphi 0, %s384
      %s386 = sphi 0, %s384
      %s387 = sphi 0, %s386
      %s401 = sphi 0, %s387
      %s405 = sphi 0, %s405
      %s407 = sphi 0, %s405
      %s408 = sphi 0, %s407
      %s422 = sphi 0, %s408
      %s426 = sphi 0, %s426
      %s428 = sphi 0, %s426
      %s429 = sphi 0, %s428
      %s443 = sphi 0, %s429
      %s447 = sphi 0, %s447
      %s449 = sphi 0, %s447
      %s450 = sphi 0, %s449
      %s464 = sphi 0, %s450
      %s468 = sphi 0, %s468
      %s470 = sphi 0, %s468
      %s471 = sphi 0, %s470
      %s485 = sphi 0, %s471
      %s489 = sphi 0, %s489
      %s491 = sphi 0, %s489
      %s492 = sphi 0, %s491
      %s506 = sphi 0, %s492
      %s510 = sphi 0, %s510
      %s512 = sphi 0, %s510
      %s513 = sphi 0, %s512
      %s527 = sphi 0, %s513
      %s531 = sphi 0, %s531
      %s533 = sphi 0, %s531
      %s534 = sphi 0, %s533
      %s548 = sphi 0, %s534
      %s552 = sphi 0, %s552
      %s554 = sphi 0, %s552
      %s555 = sphi 0, %s554
      %s569 = sphi 0, %s555
      %s573 = sphi 0, %s573
      %s575 = sphi 0, %s573
      %s576 = sphi 0, %s575
      %s590 = sphi 0, %s576
      %s594 = sphi 0, %s594
      %s596 = sphi 0, %s594
      %s597 = sphi 0, %s596
      %s611 = sphi 0, %s597
      %s615 = sphi 0, %s615
      %s617 = sphi 0, %s615
      %s618 = sphi 0, %s617
      %s632 = sphi 0, %s618
      %s636 = sphi 0, %s636
      %s638 = sphi 0, %s636
      %s639 = sphi 0, %s638
      %s653 = sphi 0, %s639
      %s657 = sphi 0, %s657
      %s659 = sphi 0, %s657
      %s660 = sphi 0, %s659
      %s674 = sphi 0, %s660
      %s678 = sphi 0, %s678
      %s680 = sphi 0, %s678
      %s681 = sphi 0, %s680
      %s695 = sphi 0, %s681
      %s699 = sphi 0, %s699
      %s701 = sphi 0, %s699
      %s702 = sphi 0, %s701
      %s716 = sphi 0, %s702
      %s720 = sphi 0, %s720
      %s722 = sphi 0, %s720
      %s723 = sphi 0, %s722
      %s737 = sphi 0, %s723
      %s743 = sphi 0, %s745
      %s746 = sphi 0, %s743
      %s747 = sphi 0, %s746
      %s763 = sphi 0, %s747
    $region4: #{_lambda_.5} parent=1 // loop_header_branch
      %75 = sbr.rel (%p73) target = $region8
    $region5: #{_lambda_.5} parent=1 // loop_body
      %s77 = ssub.s32 %s72, 1
      %s78 = ssub.s32 %s72, 2
      %s79 = sadd.s32 %s72, 1
      %s80 = ssub.s32 %s72, %s79
      %p81 = scmp.eq.s32.totalorder %s80, 0
      %s83 = sadd.s32 %s82, 1
      %s84 = scalar_select %p81, %s82, %s83
      %p87 = pneg %p81
      %p88 = scmp.eq.s32.totalorder %s72, 1
      %p89 = por %p87, %p88
      %p90 = scmp.ne.s32.totalorder %s82, %s85
      %p91 = scmp.eq.s32.totalorder %s72, 0
      %p92 = por %p90, %p91
      %p93 = scmp.ne.s32.totalorder %s82, %s85
      %p94 = scmp.eq.s32.totalorder %s77, 1
      %p95 = por %p93, %p94
      %p96 = scmp.ne.s32.totalorder %s85, %s86
      %p97 = scmp.eq.s32.totalorder %s77, 0
      %p98 = por %p96, %p97
      %p99 = scmp.ne.s32.totalorder %s85, %s86
      %p100 = scmp.eq.s32.totalorder %s78, 1
      %p101 = por %p99, %p100
      %p103 = scmp.ne.s32.totalorder %s86, %s102
      %p104 = scmp.eq.s32.totalorder %s78, 0
      %p105 = por %p103, %p104
      %s107 = sadd.s32 %s106, 1
      %p110 = scmp.eq.s32.totalorder %s72, 1
      %p111 = scmp.ne.s32.totalorder %s106, %s108
      %p112 = scmp.eq.s32.totalorder %s72, 0
      %p113 = por %p111, %p112
      %p114 = scmp.ne.s32.totalorder %s106, %s108
      %p115 = scmp.eq.s32.totalorder %s77, 1
      %p116 = por %p114, %p115
      %p117 = scmp.ne.s32.totalorder %s108, %s109
      %p118 = scmp.eq.s32.totalorder %s77, 0
      %p119 = por %p117, %p118
      %p120 = scmp.ne.s32.totalorder %s108, %s109
      %p121 = scmp.eq.s32.totalorder %s78, 1
      %p122 = por %p120, %p121
      %p124 = scmp.ne.s32.totalorder %s109, %s123
      %p125 = scmp.eq.s32.totalorder %s78, 0
      %p126 = por %p124, %p125
      %s128 = sadd.s32 %s127, 1
      %p131 = scmp.eq.s32.totalorder %s72, 1
      %p132 = scmp.ne.s32.totalorder %s127, %s129
      %p133 = scmp.eq.s32.totalorder %s72, 0
      %p134 = por %p132, %p133
      %p135 = scmp.ne.s32.totalorder %s127, %s129
      %p136 = scmp.eq.s32.totalorder %s77, 1
      %p137 = por %p135, %p136
      %p138 = scmp.ne.s32.totalorder %s129, %s130
      %p139 = scmp.eq.s32.totalorder %s77, 0
      %p140 = por %p138, %p139
      %p141 = scmp.ne.s32.totalorder %s129, %s130
      %p142 = scmp.eq.s32.totalorder %s78, 1
      %p143 = por %p141, %p142
      %p145 = scmp.ne.s32.totalorder %s130, %s144
      %p146 = scmp.eq.s32.totalorder %s78, 0
      %p147 = por %p145, %p146
      %s149 = sadd.s32 %s148, 1
      %p152 = scmp.eq.s32.totalorder %s72, 1
      %p153 = scmp.ne.s32.totalorder %s148, %s150
      %p154 = scmp.eq.s32.totalorder %s72, 0
      %p155 = por %p153, %p154
      %p156 = scmp.ne.s32.totalorder %s148, %s150
      %p157 = scmp.eq.s32.totalorder %s77, 1
      %p158 = por %p156, %p157
      %p159 = scmp.ne.s32.totalorder %s150, %s151
      %p160 = scmp.eq.s32.totalorder %s77, 0
      %p161 = por %p159, %p160
      %p162 = scmp.ne.s32.totalorder %s150, %s151
      %p163 = scmp.eq.s32.totalorder %s78, 1
      %p164 = por %p162, %p163
      %p166 = scmp.ne.s32.totalorder %s151, %s165
      %p167 = scmp.eq.s32.totalorder %s78, 0
      %p168 = por %p166, %p167
      %s169 = ssub.s32 %s72, %s79
      %p170 = scmp.eq.s32.totalorder %s169, 0
      %s172 = sadd.s32 %s171, 1
      %s173 = scalar_select %p170, %s171, %s172
      %p176 = pneg %p170
      %p177 = scmp.eq.s32.totalorder %s72, 1
      %p178 = por %p176, %p177
      %p179 = scmp.ne.s32.totalorder %s171, %s174
      %p180 = scmp.eq.s32.totalorder %s72, 0
      %p181 = por %p179, %p180
      %p182 = scmp.ne.s32.totalorder %s171, %s174
      %p183 = scmp.eq.s32.totalorder %s77, 1
      %p184 = por %p182, %p183
      %p185 = scmp.ne.s32.totalorder %s174, %s175
      %p186 = scmp.eq.s32.totalorder %s77, 0
      %p187 = por %p185, %p186
      %p188 = scmp.ne.s32.totalorder %s174, %s175
      %p189 = scmp.eq.s32.totalorder %s78, 1
      %p190 = por %p188, %p189
      %p192 = scmp.ne.s32.totalorder %s175, %s191
      %p193 = scmp.eq.s32.totalorder %s78, 0
      %p194 = por %p192, %p193
      %s196 = sadd.s32 %s195, 1
      %p199 = scmp.eq.s32.totalorder %s72, 1
      %p200 = scmp.ne.s32.totalorder %s195, %s197
      %p201 = scmp.eq.s32.totalorder %s72, 0
      %p202 = por %p200, %p201
      %p203 = scmp.ne.s32.totalorder %s195, %s197
      %p204 = scmp.eq.s32.totalorder %s77, 1
      %p205 = por %p203, %p204
      %p206 = scmp.ne.s32.totalorder %s197, %s198
      %p207 = scmp.eq.s32.totalorder %s77, 0
      %p208 = por %p206, %p207
      %p209 = scmp.ne.s32.totalorder %s197, %s198
      %p210 = scmp.eq.s32.totalorder %s78, 1
      %p211 = por %p209, %p210
      %p213 = scmp.ne.s32.totalorder %s198, %s212
      %p214 = scmp.eq.s32.totalorder %s78, 0
      %p215 = por %p213, %p214
      %s217 = sadd.s32 %s216, 1
      %p220 = scmp.eq.s32.totalorder %s72, 1
      %p221 = scmp.ne.s32.totalorder %s216, %s218
      %p222 = scmp.eq.s32.totalorder %s72, 0
      %p223 = por %p221, %p222
      %p224 = scmp.ne.s32.totalorder %s216, %s218
      %p225 = scmp.eq.s32.totalorder %s77, 1
      %p226 = por %p224, %p225
      %p227 = scmp.ne.s32.totalorder %s218, %s219
      %p228 = scmp.eq.s32.totalorder %s77, 0
      %p229 = por %p227, %p228
      %p230 = scmp.ne.s32.totalorder %s218, %s219
      %p231 = scmp.eq.s32.totalorder %s78, 1
      %p232 = por %p230, %p231
      %p234 = scmp.ne.s32.totalorder %s219, %s233
      %p235 = scmp.eq.s32.totalorder %s78, 0
      %p236 = por %p234, %p235
      %s238 = sadd.s32 %s237, 1
      %p241 = scmp.eq.s32.totalorder %s72, 1
      %p242 = scmp.ne.s32.totalorder %s237, %s239
      %p243 = scmp.eq.s32.totalorder %s72, 0
      %p244 = por %p242, %p243
      %p245 = scmp.ne.s32.totalorder %s237, %s239
      %p246 = scmp.eq.s32.totalorder %s77, 1
      %p247 = por %p245, %p246
      %p248 = scmp.ne.s32.totalorder %s239, %s240
      %p249 = scmp.eq.s32.totalorder %s77, 0
      %p250 = por %p248, %p249
      %p251 = scmp.ne.s32.totalorder %s239, %s240
      %p252 = scmp.eq.s32.totalorder %s78, 1
      %p253 = por %p251, %p252
      %p255 = scmp.ne.s32.totalorder %s240, %s254
      %p256 = scmp.eq.s32.totalorder %s78, 0
      %p257 = por %p255, %p256
      %s259 = sadd.s32 %s258, 1
      %p262 = scmp.eq.s32.totalorder %s72, 1
      %p263 = scmp.ne.s32.totalorder %s258, %s260
      %p264 = scmp.eq.s32.totalorder %s72, 0
      %p265 = por %p263, %p264
      %p266 = scmp.ne.s32.totalorder %s258, %s260
      %p267 = scmp.eq.s32.totalorder %s77, 1
      %p268 = por %p266, %p267
      %p269 = scmp.ne.s32.totalorder %s260, %s261
      %p270 = scmp.eq.s32.totalorder %s77, 0
      %p271 = por %p269, %p270
      %p272 = scmp.ne.s32.totalorder %s260, %s261
      %p273 = scmp.eq.s32.totalorder %s78, 1
      %p274 = por %p272, %p273
      %p276 = scmp.ne.s32.totalorder %s261, %s275
      %p277 = scmp.eq.s32.totalorder %s78, 0
      %p278 = por %p276, %p277
      %s280 = sadd.s32 %s279, 1
      %p283 = scmp.eq.s32.totalorder %s72, 1
      %p284 = scmp.ne.s32.totalorder %s279, %s281
      %p285 = scmp.eq.s32.totalorder %s72, 0
      %p286 = por %p284, %p285
      %p287 = scmp.ne.s32.totalorder %s279, %s281
      %p288 = scmp.eq.s32.totalorder %s77, 1
      %p289 = por %p287, %p288
      %p290 = scmp.ne.s32.totalorder %s281, %s282
      %p291 = scmp.eq.s32.totalorder %s77, 0
      %p292 = por %p290, %p291
      %p293 = scmp.ne.s32.totalorder %s281, %s282
      %p294 = scmp.eq.s32.totalorder %s78, 1
      %p295 = por %p293, %p294
      %p297 = scmp.ne.s32.totalorder %s282, %s296
      %p298 = scmp.eq.s32.totalorder %s78, 0
      %p299 = por %p297, %p298
      %s301 = sadd.s32 %s300, 1
      %p304 = scmp.eq.s32.totalorder %s72, 1
      %p305 = scmp.ne.s32.totalorder %s300, %s302
      %p306 = scmp.eq.s32.totalorder %s72, 0
      %p307 = por %p305, %p306
      %p308 = scmp.ne.s32.totalorder %s300, %s302
      %p309 = scmp.eq.s32.totalorder %s77, 1
      %p310 = por %p308, %p309
      %p311 = scmp.ne.s32.totalorder %s302, %s303
      %p312 = scmp.eq.s32.totalorder %s77, 0
      %p313 = por %p311, %p312
      %p314 = scmp.ne.s32.totalorder %s302, %s303
      %p315 = scmp.eq.s32.totalorder %s78, 1
      %p316 = por %p314, %p315
      %p318 = scmp.ne.s32.totalorder %s303, %s317
      %p319 = scmp.eq.s32.totalorder %s78, 0
      %p320 = por %p318, %p319
      %s322 = sadd.s32 %s321, 1
      %p325 = scmp.eq.s32.totalorder %s72, 1
      %p326 = scmp.ne.s32.totalorder %s321, %s323
      %p327 = scmp.eq.s32.totalorder %s72, 0
      %p328 = por %p326, %p327
      %p329 = scmp.ne.s32.totalorder %s321, %s323
      %p330 = scmp.eq.s32.totalorder %s77, 1
      %p331 = por %p329, %p330
      %p332 = scmp.ne.s32.totalorder %s323, %s324
      %p333 = scmp.eq.s32.totalorder %s77, 0
      %p334 = por %p332, %p333
      %p335 = scmp.ne.s32.totalorder %s323, %s324
      %p336 = scmp.eq.s32.totalorder %s78, 1
      %p337 = por %p335, %p336
      %p339 = scmp.ne.s32.totalorder %s324, %s338
      %p340 = scmp.eq.s32.totalorder %s78, 0
      %p341 = por %p339, %p340
      %s343 = sadd.s32 %s342, 1
      %p346 = scmp.eq.s32.totalorder %s72, 1
      %p347 = scmp.ne.s32.totalorder %s342, %s344
      %p348 = scmp.eq.s32.totalorder %s72, 0
      %p349 = por %p347, %p348
      %p350 = scmp.ne.s32.totalorder %s342, %s344
      %p351 = scmp.eq.s32.totalorder %s77, 1
      %p352 = por %p350, %p351
      %p353 = scmp.ne.s32.totalorder %s344, %s345
      %p354 = scmp.eq.s32.totalorder %s77, 0
      %p355 = por %p353, %p354
      %p356 = scmp.ne.s32.totalorder %s344, %s345
      %p357 = scmp.eq.s32.totalorder %s78, 1
      %p358 = por %p356, %p357
      %p360 = scmp.ne.s32.totalorder %s345, %s359
      %p361 = scmp.eq.s32.totalorder %s78, 0
      %p362 = por %p360, %p361
      %s364 = sadd.s32 %s363, 1
      %p367 = scmp.eq.s32.totalorder %s72, 1
      %p368 = scmp.ne.s32.totalorder %s363, %s365
      %p369 = scmp.eq.s32.totalorder %s72, 0
      %p370 = por %p368, %p369
      %p371 = scmp.ne.s32.totalorder %s363, %s365
      %p372 = scmp.eq.s32.totalorder %s77, 1
      %p373 = por %p371, %p372
      %p374 = scmp.ne.s32.totalorder %s365, %s366
      %p375 = scmp.eq.s32.totalorder %s77, 0
      %p376 = por %p374, %p375
      %p377 = scmp.ne.s32.totalorder %s365, %s366
      %p378 = scmp.eq.s32.totalorder %s78, 1
      %p379 = por %p377, %p378
      %p381 = scmp.ne.s32.totalorder %s366, %s380
      %p382 = scmp.eq.s32.totalorder %s78, 0
      %p383 = por %p381, %p382
      %s385 = sadd.s32 %s384, 1
      %p388 = scmp.eq.s32.totalorder %s72, 1
      %p389 = scmp.ne.s32.totalorder %s384, %s386
      %p390 = scmp.eq.s32.totalorder %s72, 0
      %p391 = por %p389, %p390
      %p392 = scmp.ne.s32.totalorder %s384, %s386
      %p393 = scmp.eq.s32.totalorder %s77, 1
      %p394 = por %p392, %p393
      %p395 = scmp.ne.s32.totalorder %s386, %s387
      %p396 = scmp.eq.s32.totalorder %s77, 0
      %p397 = por %p395, %p396
      %p398 = scmp.ne.s32.totalorder %s386, %s387
      %p399 = scmp.eq.s32.totalorder %s78, 1
      %p400 = por %p398, %p399
      %p402 = scmp.ne.s32.totalorder %s387, %s401
      %p403 = scmp.eq.s32.totalorder %s78, 0
      %p404 = por %p402, %p403
      %s406 = sadd.s32 %s405, 1
      %p409 = scmp.eq.s32.totalorder %s72, 1
      %p410 = scmp.ne.s32.totalorder %s405, %s407
      %p411 = scmp.eq.s32.totalorder %s72, 0
      %p412 = por %p410, %p411
      %p413 = scmp.ne.s32.totalorder %s405, %s407
      %p414 = scmp.eq.s32.totalorder %s77, 1
      %p415 = por %p413, %p414
      %p416 = scmp.ne.s32.totalorder %s407, %s408
      %p417 = scmp.eq.s32.totalorder %s77, 0
      %p418 = por %p416, %p417
      %p419 = scmp.ne.s32.totalorder %s407, %s408
      %p420 = scmp.eq.s32.totalorder %s78, 1
      %p421 = por %p419, %p420
      %p423 = scmp.ne.s32.totalorder %s408, %s422
      %p424 = scmp.eq.s32.totalorder %s78, 0
      %p425 = por %p423, %p424
      %s427 = sadd.s32 %s426, 1
      %p430 = scmp.eq.s32.totalorder %s72, 1
      %p431 = scmp.ne.s32.totalorder %s426, %s428
      %p432 = scmp.eq.s32.totalorder %s72, 0
      %p433 = por %p431, %p432
      %p434 = scmp.ne.s32.totalorder %s426, %s428
      %p435 = scmp.eq.s32.totalorder %s77, 1
      %p436 = por %p434, %p435
      %p437 = scmp.ne.s32.totalorder %s428, %s429
      %p438 = scmp.eq.s32.totalorder %s77, 0
      %p439 = por %p437, %p438
      %p440 = scmp.ne.s32.totalorder %s428, %s429
      %p441 = scmp.eq.s32.totalorder %s78, 1
      %p442 = por %p440, %p441
      %p444 = scmp.ne.s32.totalorder %s429, %s443
      %p445 = scmp.eq.s32.totalorder %s78, 0
      %p446 = por %p444, %p445
      %s448 = sadd.s32 %s447, 1
      %p451 = scmp.eq.s32.totalorder %s72, 1
      %p452 = scmp.ne.s32.totalorder %s447, %s449
      %p453 = scmp.eq.s32.totalorder %s72, 0
      %p454 = por %p452, %p453
      %p455 = scmp.ne.s32.totalorder %s447, %s449
      %p456 = scmp.eq.s32.totalorder %s77, 1
      %p457 = por %p455, %p456
      %p458 = scmp.ne.s32.totalorder %s449, %s450
      %p459 = scmp.eq.s32.totalorder %s77, 0
      %p460 = por %p458, %p459
      %p461 = scmp.ne.s32.totalorder %s449, %s450
      %p462 = scmp.eq.s32.totalorder %s78, 1
      %p463 = por %p461, %p462
      %p465 = scmp.ne.s32.totalorder %s450, %s464
      %p466 = scmp.eq.s32.totalorder %s78, 0
      %p467 = por %p465, %p466
      %s469 = sadd.s32 %s468, 1
      %p472 = scmp.eq.s32.totalorder %s72, 1
      %p473 = scmp.ne.s32.totalorder %s468, %s470
      %p474 = scmp.eq.s32.totalorder %s72, 0
      %p475 = por %p473, %p474
      %p476 = scmp.ne.s32.totalorder %s468, %s470
      %p477 = scmp.eq.s32.totalorder %s77, 1
      %p478 = por %p476, %p477
      %p479 = scmp.ne.s32.totalorder %s470, %s471
      %p480 = scmp.eq.s32.totalorder %s77, 0
      %p481 = por %p479, %p480
      %p482 = scmp.ne.s32.totalorder %s470, %s471
      %p483 = scmp.eq.s32.totalorder %s78, 1
      %p484 = por %p482, %p483
      %p486 = scmp.ne.s32.totalorder %s471, %s485
      %p487 = scmp.eq.s32.totalorder %s78, 0
      %p488 = por %p486, %p487
      %s490 = sadd.s32 %s489, 1
      %p493 = scmp.eq.s32.totalorder %s72, 1
      %p494 = scmp.ne.s32.totalorder %s489, %s491
      %p495 = scmp.eq.s32.totalorder %s72, 0
      %p496 = por %p494, %p495
      %p497 = scmp.ne.s32.totalorder %s489, %s491
      %p498 = scmp.eq.s32.totalorder %s77, 1
      %p499 = por %p497, %p498
      %p500 = scmp.ne.s32.totalorder %s491, %s492
      %p501 = scmp.eq.s32.totalorder %s77, 0
      %p502 = por %p500, %p501
      %p503 = scmp.ne.s32.totalorder %s491, %s492
      %p504 = scmp.eq.s32.totalorder %s78, 1
      %p505 = por %p503, %p504
      %p507 = scmp.ne.s32.totalorder %s492, %s506
      %p508 = scmp.eq.s32.totalorder %s78, 0
      %p509 = por %p507, %p508
      %s511 = sadd.s32 %s510, 1
      %p514 = scmp.eq.s32.totalorder %s72, 1
      %p515 = scmp.ne.s32.totalorder %s510, %s512
      %p516 = scmp.eq.s32.totalorder %s72, 0
      %p517 = por %p515, %p516
      %p518 = scmp.ne.s32.totalorder %s510, %s512
      %p519 = scmp.eq.s32.totalorder %s77, 1
      %p520 = por %p518, %p519
      %p521 = scmp.ne.s32.totalorder %s512, %s513
      %p522 = scmp.eq.s32.totalorder %s77, 0
      %p523 = por %p521, %p522
      %p524 = scmp.ne.s32.totalorder %s512, %s513
      %p525 = scmp.eq.s32.totalorder %s78, 1
      %p526 = por %p524, %p525
      %p528 = scmp.ne.s32.totalorder %s513, %s527
      %p529 = scmp.eq.s32.totalorder %s78, 0
      %p530 = por %p528, %p529
      %s532 = sadd.s32 %s531, 1
      %p535 = scmp.eq.s32.totalorder %s72, 1
      %p536 = scmp.ne.s32.totalorder %s531, %s533
      %p537 = scmp.eq.s32.totalorder %s72, 0
      %p538 = por %p536, %p537
      %p539 = scmp.ne.s32.totalorder %s531, %s533
      %p540 = scmp.eq.s32.totalorder %s77, 1
      %p541 = por %p539, %p540
      %p542 = scmp.ne.s32.totalorder %s533, %s534
      %p543 = scmp.eq.s32.totalorder %s77, 0
      %p544 = por %p542, %p543
      %p545 = scmp.ne.s32.totalorder %s533, %s534
      %p546 = scmp.eq.s32.totalorder %s78, 1
      %p547 = por %p545, %p546
      %p549 = scmp.ne.s32.totalorder %s534, %s548
      %p550 = scmp.eq.s32.totalorder %s78, 0
      %p551 = por %p549, %p550
      %s553 = sadd.s32 %s552, 1
      %p556 = scmp.eq.s32.totalorder %s72, 1
      %p557 = scmp.ne.s32.totalorder %s552, %s554
      %p558 = scmp.eq.s32.totalorder %s72, 0
      %p559 = por %p557, %p558
      %p560 = scmp.ne.s32.totalorder %s552, %s554
      %p561 = scmp.eq.s32.totalorder %s77, 1
      %p562 = por %p560, %p561
      %p563 = scmp.ne.s32.totalorder %s554, %s555
      %p564 = scmp.eq.s32.totalorder %s77, 0
      %p565 = por %p563, %p564
      %p566 = scmp.ne.s32.totalorder %s554, %s555
      %p567 = scmp.eq.s32.totalorder %s78, 1
      %p568 = por %p566, %p567
      %p570 = scmp.ne.s32.totalorder %s555, %s569
      %p571 = scmp.eq.s32.totalorder %s78, 0
      %p572 = por %p570, %p571
      %s574 = sadd.s32 %s573, 1
      %p577 = scmp.eq.s32.totalorder %s72, 1
      %p578 = scmp.ne.s32.totalorder %s573, %s575
      %p579 = scmp.eq.s32.totalorder %s72, 0
      %p580 = por %p578, %p579
      %p581 = scmp.ne.s32.totalorder %s573, %s575
      %p582 = scmp.eq.s32.totalorder %s77, 1
      %p583 = por %p581, %p582
      %p584 = scmp.ne.s32.totalorder %s575, %s576
      %p585 = scmp.eq.s32.totalorder %s77, 0
      %p586 = por %p584, %p585
      %p587 = scmp.ne.s32.totalorder %s575, %s576
      %p588 = scmp.eq.s32.totalorder %s78, 1
      %p589 = por %p587, %p588
      %p591 = scmp.ne.s32.totalorder %s576, %s590
      %p592 = scmp.eq.s32.totalorder %s78, 0
      %p593 = por %p591, %p592
      %s595 = sadd.s32 %s594, 1
      %p598 = scmp.eq.s32.totalorder %s72, 1
      %p599 = scmp.ne.s32.totalorder %s594, %s596
      %p600 = scmp.eq.s32.totalorder %s72, 0
      %p601 = por %p599, %p600
      %p602 = scmp.ne.s32.totalorder %s594, %s596
      %p603 = scmp.eq.s32.totalorder %s77, 1
      %p604 = por %p602, %p603
      %p605 = scmp.ne.s32.totalorder %s596, %s597
      %p606 = scmp.eq.s32.totalorder %s77, 0
      %p607 = por %p605, %p606
      %p608 = scmp.ne.s32.totalorder %s596, %s597
      %p609 = scmp.eq.s32.totalorder %s78, 1
      %p610 = por %p608, %p609
      %p612 = scmp.ne.s32.totalorder %s597, %s611
      %p613 = scmp.eq.s32.totalorder %s78, 0
      %p614 = por %p612, %p613
      %s616 = sadd.s32 %s615, 1
      %p619 = scmp.eq.s32.totalorder %s72, 1
      %p620 = scmp.ne.s32.totalorder %s615, %s617
      %p621 = scmp.eq.s32.totalorder %s72, 0
      %p622 = por %p620, %p621
      %p623 = scmp.ne.s32.totalorder %s615, %s617
      %p624 = scmp.eq.s32.totalorder %s77, 1
      %p625 = por %p623, %p624
      %p626 = scmp.ne.s32.totalorder %s617, %s618
      %p627 = scmp.eq.s32.totalorder %s77, 0
      %p628 = por %p626, %p627
      %p629 = scmp.ne.s32.totalorder %s617, %s618
      %p630 = scmp.eq.s32.totalorder %s78, 1
      %p631 = por %p629, %p630
      %p633 = scmp.ne.s32.totalorder %s618, %s632
      %p634 = scmp.eq.s32.totalorder %s78, 0
      %p635 = por %p633, %p634
      %s637 = sadd.s32 %s636, 1
      %p640 = scmp.eq.s32.totalorder %s72, 1
      %p641 = scmp.ne.s32.totalorder %s636, %s638
      %p642 = scmp.eq.s32.totalorder %s72, 0
      %p643 = por %p641, %p642
      %p644 = scmp.ne.s32.totalorder %s636, %s638
      %p645 = scmp.eq.s32.totalorder %s77, 1
      %p646 = por %p644, %p645
      %p647 = scmp.ne.s32.totalorder %s638, %s639
      %p648 = scmp.eq.s32.totalorder %s77, 0
      %p649 = por %p647, %p648
      %p650 = scmp.ne.s32.totalorder %s638, %s639
      %p651 = scmp.eq.s32.totalorder %s78, 1
      %p652 = por %p650, %p651
      %p654 = scmp.ne.s32.totalorder %s639, %s653
      %p655 = scmp.eq.s32.totalorder %s78, 0
      %p656 = por %p654, %p655
      %s658 = sadd.s32 %s657, 1
      %p661 = scmp.eq.s32.totalorder %s72, 1
      %p662 = scmp.ne.s32.totalorder %s657, %s659
      %p663 = scmp.eq.s32.totalorder %s72, 0
      %p664 = por %p662, %p663
      %p665 = scmp.ne.s32.totalorder %s657, %s659
      %p666 = scmp.eq.s32.totalorder %s77, 1
      %p667 = por %p665, %p666
      %p668 = scmp.ne.s32.totalorder %s659, %s660
      %p669 = scmp.eq.s32.totalorder %s77, 0
      %p670 = por %p668, %p669
      %p671 = scmp.ne.s32.totalorder %s659, %s660
      %p672 = scmp.eq.s32.totalorder %s78, 1
      %p673 = por %p671, %p672
      %p675 = scmp.ne.s32.totalorder %s660, %s674
      %p676 = scmp.eq.s32.totalorder %s78, 0
      %p677 = por %p675, %p676
      %s679 = sadd.s32 %s678, 1
      %p682 = scmp.eq.s32.totalorder %s72, 1
      %p683 = scmp.ne.s32.totalorder %s678, %s680
      %p684 = scmp.eq.s32.totalorder %s72, 0
      %p685 = por %p683, %p684
      %p686 = scmp.ne.s32.totalorder %s678, %s680
      %p687 = scmp.eq.s32.totalorder %s77, 1
      %p688 = por %p686, %p687
      %p689 = scmp.ne.s32.totalorder %s680, %s681
      %p690 = scmp.eq.s32.totalorder %s77, 0
      %p691 = por %p689, %p690
      %p692 = scmp.ne.s32.totalorder %s680, %s681
      %p693 = scmp.eq.s32.totalorder %s78, 1
      %p694 = por %p692, %p693
      %p696 = scmp.ne.s32.totalorder %s681, %s695
      %p697 = scmp.eq.s32.totalorder %s78, 0
      %p698 = por %p696, %p697
      %s700 = sadd.s32 %s699, 1
      %p703 = scmp.eq.s32.totalorder %s72, 1
      %p704 = scmp.ne.s32.totalorder %s699, %s701
      %p705 = scmp.eq.s32.totalorder %s72, 0
      %p706 = por %p704, %p705
      %p707 = scmp.ne.s32.totalorder %s699, %s701
      %p708 = scmp.eq.s32.totalorder %s77, 1
      %p709 = por %p707, %p708
      %p710 = scmp.ne.s32.totalorder %s701, %s702
      %p711 = scmp.eq.s32.totalorder %s77, 0
      %p712 = por %p710, %p711
      %p713 = scmp.ne.s32.totalorder %s701, %s702
      %p714 = scmp.eq.s32.totalorder %s78, 1
      %p715 = por %p713, %p714
      %p717 = scmp.ne.s32.totalorder %s702, %s716
      %p718 = scmp.eq.s32.totalorder %s78, 0
      %p719 = por %p717, %p718
      %s721 = sadd.s32 %s720, 1
      %p724 = scmp.eq.s32.totalorder %s72, 1
      %p725 = scmp.ne.s32.totalorder %s720, %s722
      %p726 = scmp.eq.s32.totalorder %s72, 0
      %p727 = por %p725, %p726
      %p728 = scmp.ne.s32.totalorder %s720, %s722
      %p729 = scmp.eq.s32.totalorder %s77, 1
      %p730 = por %p728, %p729
      %p731 = scmp.ne.s32.totalorder %s722, %s723
      %p732 = scmp.eq.s32.totalorder %s77, 0
      %p733 = por %p731, %p732
      %p734 = scmp.ne.s32.totalorder %s722, %s723
      %p735 = scmp.eq.s32.totalorder %s78, 1
      %p736 = por %p734, %p735
      %p738 = scmp.ne.s32.totalorder %s723, %s737
      %p739 = scmp.eq.s32.totalorder %s78, 0
      %p740 = por %p738, %p739
      %s741 = ssub.s32 %s72, %s79
      %p742 = scmp.eq.s32.totalorder %s741, 0
      %s744 = sadd.s32 %s743, 1
      %s745 = scalar_select %p742, %s743, %s744
      %p748 = pneg %p742
      %p749 = scmp.eq.s32.totalorder %s72, 1
      %p750 = por %p748, %p749
      %p751 = scmp.ne.s32.totalorder %s743, %s746
      %p752 = scmp.eq.s32.totalorder %s72, 0
      %p753 = por %p751, %p752
      %p754 = scmp.ne.s32.totalorder %s743, %s746
      %p755 = scmp.eq.s32.totalorder %s77, 1
      %p756 = por %p754, %p755
      %p757 = scmp.ne.s32.totalorder %s746, %s747
      %p758 = scmp.eq.s32.totalorder %s77, 0
      %p759 = por %p757, %p758
      %p760 = scmp.ne.s32.totalorder %s746, %s747
      %p761 = scmp.eq.s32.totalorder %s78, 1
      %p762 = por %p760, %p761
      %p764 = scmp.ne.s32.totalorder %s747, %s763
      %p765 = scmp.eq.s32.totalorder %s78, 0
      %p766 = por %p764, %p765
      %p767 = scmp.le.s32.totalorder 1, %s72
      %p768 = scmp.lt.s32.totalorder %s72, 3
      %p769 = pnand %p767, %p768
      %p770 = pneg %p769
      // Predicated region
      $region9: #{_lambda_.5} parent=5 // pred_check
        _
      $region10: #{_lambda_.5} parent=5 // pred_check_branch
        %772 = sbr.rel (%p769) target = $region12
      $region11: #{_lambda_.5} parent=5 // pred_region
        %s773 = ssub.s32 %s72, 1
        // Predicated region
        $region13: #{_lambda_.5} parent=11 // pred_check
          %p774 = pneg %p119
        $region14: #{_lambda_.5} parent=11 // pred_check_branch
          %776 = sbr.rel (%p774) target = $region16
        $region15: #{_lambda_.5} parent=11 // pred_region
          _
        $region16: #{_lambda_.5} parent=11 // pred_fallthru
          _
        // Predicated region
        $region17: #{_lambda_.5} parent=11 // pred_check
          %p777 = pneg %p140
        $region18: #{_lambda_.5} parent=11 // pred_check_branch
          %779 = sbr.rel (%p777) target = $region20
        $region19: #{_lambda_.5} parent=11 // pred_region
          _
        $region20: #{_lambda_.5} parent=11 // pred_fallthru
          _
        // Predicated region
        $region21: #{_lambda_.5} parent=11 // pred_check
          %p780 = pneg %p161
        $region22: #{_lambda_.5} parent=11 // pred_check_branch
          %782 = sbr.rel (%p780) target = $region24
        $region23: #{_lambda_.5} parent=11 // pred_region
          _
        $region24: #{_lambda_.5} parent=11 // pred_fallthru
          _
        // Predicated region
        $region25: #{_lambda_.5} parent=11 // pred_check
          %p783 = pneg %p208
        $region26: #{_lambda_.5} parent=11 // pred_check_branch
          %785 = sbr.rel (%p783) target = $region28
        $region27: #{_lambda_.5} parent=11 // pred_region
          _
        $region28: #{_lambda_.5} parent=11 // pred_fallthru
          _
        // Predicated region
        $region29: #{_lambda_.5} parent=11 // pred_check
          %p786 = pneg %p229
        $region30: #{_lambda_.5} parent=11 // pred_check_branch
          %788 = sbr.rel (%p786) target = $region32
        $region31: #{_lambda_.5} parent=11 // pred_region
          _
        $region32: #{_lambda_.5} parent=11 // pred_fallthru
          _
        // Predicated region
        $region33: #{_lambda_.5} parent=11 // pred_check
          %p789 = pneg %p250
        $region34: #{_lambda_.5} parent=11 // pred_check_branch
          %791 = sbr.rel (%p789) target = $region36
        $region35: #{_lambda_.5} parent=11 // pred_region
          _
        $region36: #{_lambda_.5} parent=11 // pred_fallthru
          _
        // Predicated region
        $region37: #{_lambda_.5} parent=11 // pred_check
          %p792 = pneg %p271
        $region38: #{_lambda_.5} parent=11 // pred_check_branch
          %794 = sbr.rel (%p792) target = $region40
        $region39: #{_lambda_.5} parent=11 // pred_region
          _
        $region40: #{_lambda_.5} parent=11 // pred_fallthru
          _
        // Predicated region
        $region41: #{_lambda_.5} parent=11 // pred_check
          %p795 = pneg %p292
        $region42: #{_lambda_.5} parent=11 // pred_check_branch
          %797 = sbr.rel (%p795) target = $region44
        $region43: #{_lambda_.5} parent=11 // pred_region
          _
        $region44: #{_lambda_.5} parent=11 // pred_fallthru
          _
        // Predicated region
        $region45: #{_lambda_.5} parent=11 // pred_check
          %p798 = pneg %p313
        $region46: #{_lambda_.5} parent=11 // pred_check_branch
          %800 = sbr.rel (%p798) target = $region48
        $region47: #{_lambda_.5} parent=11 // pred_region
          _
        $region48: #{_lambda_.5} parent=11 // pred_fallthru
          _
        // Predicated region
        $region49: #{_lambda_.5} parent=11 // pred_check
          %p801 = pneg %p334
        $region50: #{_lambda_.5} parent=11 // pred_check_branch
          %803 = sbr.rel (%p801) target = $region52
        $region51: #{_lambda_.5} parent=11 // pred_region
          _
        $region52: #{_lambda_.5} parent=11 // pred_fallthru
          _
        // Predicated region
        $region53: #{_lambda_.5} parent=11 // pred_check
          %p804 = pneg %p355
        $region54: #{_lambda_.5} parent=11 // pred_check_branch
          %806 = sbr.rel (%p804) target = $region56
        $region55: #{_lambda_.5} parent=11 // pred_region
          _
        $region56: #{_lambda_.5} parent=11 // pred_fallthru
          _
        // Predicated region
        $region57: #{_lambda_.5} parent=11 // pred_check
          %p807 = pneg %p376
        $region58: #{_lambda_.5} parent=11 // pred_check_branch
          %809 = sbr.rel (%p807) target = $region60
        $region59: #{_lambda_.5} parent=11 // pred_region
          _
        $region60: #{_lambda_.5} parent=11 // pred_fallthru
          _
        // Predicated region
        $region61: #{_lambda_.5} parent=11 // pred_check
          %p810 = pneg %p397
        $region62: #{_lambda_.5} parent=11 // pred_check_branch
          %812 = sbr.rel (%p810) target = $region64
        $region63: #{_lambda_.5} parent=11 // pred_region
          _
        $region64: #{_lambda_.5} parent=11 // pred_fallthru
          _
        // Predicated region
        $region65: #{_lambda_.5} parent=11 // pred_check
          %p813 = pneg %p418
        $region66: #{_lambda_.5} parent=11 // pred_check_branch
          %815 = sbr.rel (%p813) target = $region68
        $region67: #{_lambda_.5} parent=11 // pred_region
          _
        $region68: #{_lambda_.5} parent=11 // pred_fallthru
          _
        // Predicated region
        $region69: #{_lambda_.5} parent=11 // pred_check
          %p816 = pneg %p439
        $region70: #{_lambda_.5} parent=11 // pred_check_branch
          %818 = sbr.rel (%p816) target = $region72
        $region71: #{_lambda_.5} parent=11 // pred_region
          _
        $region72: #{_lambda_.5} parent=11 // pred_fallthru
          _
        // Predicated region
        $region73: #{_lambda_.5} parent=11 // pred_check
          %p819 = pneg %p460
        $region74: #{_lambda_.5} parent=11 // pred_check_branch
          %821 = sbr.rel (%p819) target = $region76
        $region75: #{_lambda_.5} parent=11 // pred_region
          _
        $region76: #{_lambda_.5} parent=11 // pred_fallthru
          _
        // Predicated region
        $region77: #{_lambda_.5} parent=11 // pred_check
          %p822 = pneg %p481
        $region78: #{_lambda_.5} parent=11 // pred_check_branch
          %824 = sbr.rel (%p822) target = $region80
        $region79: #{_lambda_.5} parent=11 // pred_region
          _
        $region80: #{_lambda_.5} parent=11 // pred_fallthru
          _
        // Predicated region
        $region81: #{_lambda_.5} parent=11 // pred_check
          %p825 = pneg %p502
        $region82: #{_lambda_.5} parent=11 // pred_check_branch
          %827 = sbr.rel (%p825) target = $region84
        $region83: #{_lambda_.5} parent=11 // pred_region
          _
        $region84: #{_lambda_.5} parent=11 // pred_fallthru
          _
        // Predicated region
        $region85: #{_lambda_.5} parent=11 // pred_check
          %p828 = pneg %p523
        $region86: #{_lambda_.5} parent=11 // pred_check_branch
          %830 = sbr.rel (%p828) target = $region88
        $region87: #{_lambda_.5} parent=11 // pred_region
          _
        $region88: #{_lambda_.5} parent=11 // pred_fallthru
          _
        // Predicated region
        $region89: #{_lambda_.5} parent=11 // pred_check
          %p831 = pneg %p544
        $region90: #{_lambda_.5} parent=11 // pred_check_branch
          %833 = sbr.rel (%p831) target = $region92
        $region91: #{_lambda_.5} parent=11 // pred_region
          _
        $region92: #{_lambda_.5} parent=11 // pred_fallthru
          _
        // Predicated region
        $region93: #{_lambda_.5} parent=11 // pred_check
          %p834 = pneg %p565
        $region94: #{_lambda_.5} parent=11 // pred_check_branch
          %836 = sbr.rel (%p834) target = $region96
        $region95: #{_lambda_.5} parent=11 // pred_region
          _
        $region96: #{_lambda_.5} parent=11 // pred_fallthru
          _
        // Predicated region
        $region97: #{_lambda_.5} parent=11 // pred_check
          %p837 = pneg %p586
        $region98: #{_lambda_.5} parent=11 // pred_check_branch
          %839 = sbr.rel (%p837) target = $region100
        $region99: #{_lambda_.5} parent=11 // pred_region
          _
        $region100: #{_lambda_.5} parent=11 // pred_fallthru
          _
        // Predicated region
        $region101: #{_lambda_.5} parent=11 // pred_check
          %p840 = pneg %p607
        $region102: #{_lambda_.5} parent=11 // pred_check_branch
          %842 = sbr.rel (%p840) target = $region104
        $region103: #{_lambda_.5} parent=11 // pred_region
          _
        $region104: #{_lambda_.5} parent=11 // pred_fallthru
          _
        // Predicated region
        $region105: #{_lambda_.5} parent=11 // pred_check
          %p843 = pneg %p628
        $region106: #{_lambda_.5} parent=11 // pred_check_branch
          %845 = sbr.rel (%p843) target = $region108
        $region107: #{_lambda_.5} parent=11 // pred_region
          _
        $region108: #{_lambda_.5} parent=11 // pred_fallthru
          _
        // Predicated region
        $region109: #{_lambda_.5} parent=11 // pred_check
          %p846 = pneg %p649
        $region110: #{_lambda_.5} parent=11 // pred_check_branch
          %848 = sbr.rel (%p846) target = $region112
        $region111: #{_lambda_.5} parent=11 // pred_region
          _
        $region112: #{_lambda_.5} parent=11 // pred_fallthru
          _
        // Predicated region
        $region113: #{_lambda_.5} parent=11 // pred_check
          %p849 = pneg %p670
        $region114: #{_lambda_.5} parent=11 // pred_check_branch
          %851 = sbr.rel (%p849) target = $region116
        $region115: #{_lambda_.5} parent=11 // pred_region
          _
        $region116: #{_lambda_.5} parent=11 // pred_fallthru
          _
        // Predicated region
        $region117: #{_lambda_.5} parent=11 // pred_check
          %p852 = pneg %p691
        $region118: #{_lambda_.5} parent=11 // pred_check_branch
          %854 = sbr.rel (%p852) target = $region120
        $region119: #{_lambda_.5} parent=11 // pred_region
          _
        $region120: #{_lambda_.5} parent=11 // pred_fallthru
          _
        // Predicated region
        $region121: #{_lambda_.5} parent=11 // pred_check
          %p855 = pneg %p712
        $region122: #{_lambda_.5} parent=11 // pred_check_branch
          %857 = sbr.rel (%p855) target = $region124
        $region123: #{_lambda_.5} parent=11 // pred_region
          _
        $region124: #{_lambda_.5} parent=11 // pred_fallthru
          _
        // Predicated region
        $region125: #{_lambda_.5} parent=11 // pred_check
          %p858 = pneg %p733
        $region126: #{_lambda_.5} parent=11 // pred_check_branch
          %860 = sbr.rel (%p858) target = $region128
        $region127: #{_lambda_.5} parent=11 // pred_region
          _
        $region128: #{_lambda_.5} parent=11 // pred_fallthru
          _
      $region12: #{_lambda_.5} parent=5 // pred_fallthru
        _
      %p861 = scmp.lt.s32.totalorder %s72, 2
      // Predicated region
      $region129: #{_lambda_.5} parent=5 // pred_check
        %p862 = pneg %p861
      $region130: #{_lambda_.5} parent=5 // pred_check_branch
        %864 = sbr.rel (%p862) target = $region132
      $region131: #{_lambda_.5} parent=5 // pred_region
        // Predicated region
        $region133: #{_lambda_.5} parent=131 // pred_check
          %p865 = pneg %p92
        $region134: #{_lambda_.5} parent=131 // pred_check_branch
          %867 = sbr.rel (%p865) target = $region136
        $region135: #{_lambda_.5} parent=131 // pred_region
          %p868 = scmp.lt.s32.totalorder %s72, 1
          %s869 = scalar_select %p868, %s72, 1
          %s870 = smul.addr %s869, 4
          %s871 = scalar_lea.vmem %s1, %s870
        $region136: #{_lambda_.5} parent=131 // pred_fallthru
          _
        // Predicated region
        $region137: #{_lambda_.5} parent=131 // pred_check
          %p872 = pneg %p181
        $region138: #{_lambda_.5} parent=131 // pred_check_branch
          %874 = sbr.rel (%p872) target = $region140
        $region139: #{_lambda_.5} parent=131 // pred_region
          %p875 = scmp.lt.s32.totalorder %s72, 1
          %s876 = scalar_select %p875, %s72, 1
          %s877 = smul.addr %s876, 4
          %s878 = smul.addr %s877, 8
          %s879 = scalar_lea.vmem %s9, %s878
        $region140: #{_lambda_.5} parent=131 // pred_fallthru
          _
      $region132: #{_lambda_.5} parent=5 // pred_fallthru
        _
      %p880 = scmp.le.s32.totalorder 1, %s72
      %p881 = scmp.lt.s32.totalorder %s72, 3
      %p882 = pnand %p880, %p881
      %p883 = pneg %p882
      // Predicated region
      $region141: #{_lambda_.5} parent=5 // pred_check
        _
      $region142: #{_lambda_.5} parent=5 // pred_check_branch
        %885 = sbr.rel (%p882) target = $region144
      $region143: #{_lambda_.5} parent=5 // pred_region
        %s886 = ssub.s32 %s72, 1
        %p887 = scmp.lt.s32.totalorder %s77, 1
        %s888 = scalar_select %p887, %s77, 1
        %s889 = smul.addr %s888, 4
        %s890 = scalar_lea.vmem %s1, %s889
        %p891 = pneg %p98
        %p892 = pneg %p95
        %p893 = pneg %p119
        %p894 = pneg %p116
        %p895 = pneg %p140
        %p896 = pneg %p137
        %p897 = pneg %p161
        %p898 = pneg %p158
        %p899 = scmp.lt.s32.totalorder %s77, 1
        %s900 = scalar_select %p899, %s77, 1
        %s901 = smul.addr %s900, 4
        %s902 = smul.addr %s901, 8
        %s903 = scalar_lea.vmem %s9, %s902
        %p904 = pneg %p187
        %p905 = pneg %p184
        %p906 = pneg %p208
        %p907 = pneg %p205
        %p908 = pneg %p229
        %p909 = pneg %p226
        %p910 = pneg %p250
        %p911 = pneg %p247
        %p912 = pneg %p271
        %p913 = pneg %p268
        %p914 = pneg %p292
        %p915 = pneg %p289
        %p916 = pneg %p313
        %p917 = pneg %p310
        %p918 = pneg %p334
        %p919 = pneg %p331
        %p920 = pneg %p355
        %p921 = pneg %p352
        %p922 = pneg %p376
        %p923 = pneg %p373
        %p924 = pneg %p397
        %p925 = pneg %p394
        %p926 = pneg %p418
        %p927 = pneg %p415
        %p928 = pneg %p439
        %p929 = pneg %p436
        %p930 = pneg %p460
        %p931 = pneg %p457
        %p932 = pneg %p481
        %p933 = pneg %p478
        %p934 = pneg %p502
        %p935 = pneg %p499
        %p936 = pneg %p523
        %p937 = pneg %p520
        %p938 = pneg %p544
        %p939 = pneg %p541
        %p940 = pneg %p565
        %p941 = pneg %p562
        %p942 = pneg %p586
        %p943 = pneg %p583
        %p944 = pneg %p607
        %p945 = pneg %p604
        %p946 = pneg %p628
        %p947 = pneg %p625
        %p948 = pneg %p649
        %p949 = pneg %p646
        %p950 = pneg %p670
        %p951 = pneg %p667
        %p952 = pneg %p691
        %p953 = pneg %p688
        %p954 = pneg %p712
        %p955 = pneg %p709
        %p956 = pneg %p733
        %p957 = pneg %p730
        %p958 = pneg %p759
        %p959 = pneg %p756
        %s960 = sand.u32 %s746, 1
        %s961 = scalar_lea.sflag [#allocation4], %s960
        %s962 = sand.u32 %s746, 1
        %s963 = smul.addr %s962, 4
        %s964 = scalar_lea.vmem [#allocation3], %s963
        %p965 = scmp.lt.s32.totalorder %s77, 1
        %s966 = scalar_select %p965, %s77, 1
        %s967 = smul.addr %s966, 4
        %s968 = scalar_lea.vmem %s1, %s967
        %p969 = scmp.lt.s32.totalorder %s77, 1
        %s970 = scalar_select %p969, %s77, 1
        %s971 = smul.addr %s970, 4
        %s972 = smul.addr %s971, 8
        %s973 = scalar_lea.vmem %s9, %s972
        %v974 = vld [vmem:[%s968] sm:$0xf]
        %v975 = vld [vmem:[%s3] sm:$0xff]
        %v976 = vld [vmem:[%s3 + $0x8] sm:$0xff]
        %v977 = vld [vmem:[%s5] sm:$0x1]
        %v979 = vlaneseq
        %v980 = vshrl.u32 %v979, 7
        %v981 = vsub.s32 0, %v980
        %v982 = vrot.slane %v977, %v981
        %vm984 = vcmask 130048
        %v986 = vsel %vm984, %v974, 0
        %988 = vmatprep.subr.mxu0 0.0
        %989 = vmatpush1.msra.mxu0 %v975
        %990 = vmatprep.subr.mxu0 0.0
        %991 = vmatpush1.msra.mxu0 %v976
        %992 = vmatprep.subr.mxu0 0.0
        %993 = vmatpush1.msra.mxu0 0.0
        %994 = vmatprep.subr.mxu0 0.0
        %995 = vmatpush1.msra.mxu0 0.0
        %996 = vmatprep.subr.mxu0 0.0
        %997 = vmatpush1.msra.mxu0 0.0
        %998 = vmatprep.subr.mxu0 0.0
        %999 = vmatpush1.msra.mxu0 0.0
        %1000 = vmatprep.subr.mxu0 0.0
        %1001 = vmatpush1.msra.mxu0 0.0
        %1002 = vmatprep.subr.mxu0 0.0
        %1003 = vmatpush1.msra.mxu0 0.0
        %1004 = vmatprep.subr.mxu0 0.0
        %1005 = vmatpush1.msra.mxu0 0.0
        %1006 = vmatprep.subr.mxu0 0.0
        %1007 = vmatpush1.msra.mxu0 0.0
        %1008 = vmatprep.subr.mxu0 0.0
        %1009 = vmatpush1.msra.mxu0 0.0
        %1010 = vmatprep.subr.mxu0 0.0
        %1011 = vmatpush1.msra.mxu0 0.0
        %1012 = vmatprep.subr.mxu0 0.0
        %1013 = vmatpush1.msra.mxu0 0.0
        %1014 = vmatprep.subr.mxu0 0.0
        %1015 = vmatpush1.msra.mxu0 0.0
        %1016 = vmatprep.subr.mxu0 0.0
        %1017 = vmatpush1.msra.mxu0 0.0
        %1018 = vmatprep.subr.mxu0 0.0
        %1019 = vmatpush1.msra.mxu0 0.0
        %1020 = vmatprep.subr.mxu0 0.0
        %1021 = vmatpush1.msra.mxu0 0.0
        %1022 = vmatprep.subr.mxu0 0.0
        %1023 = vmatpush1.msra.mxu0 0.0
        %1024 = vmatprep.subr.mxu0 0.0
        %1025 = vmatpush1.msra.mxu0 0.0
        %1026 = vmatprep.subr.mxu0 0.0
        %1027 = vmatpush1.msra.mxu0 0.0
        %1028 = vmatprep.subr.mxu0 0.0
        %1029 = vmatpush1.msra.mxu0 0.0
        %1030 = vmatprep.subr.mxu0 0.0
        %1031 = vmatpush1.msra.mxu0 0.0
        %1032 = vmatprep.subr.mxu0 0.0
        %1033 = vmatpush1.msra.mxu0 0.0
        %1034 = vmatprep.subr.mxu0 0.0
        %1035 = vmatpush1.msra.mxu0 0.0
        %1036 = vmatprep.subr.mxu0 0.0
        %1037 = vmatpush1.msra.mxu0 0.0
        %1038 = vmatprep.subr.mxu0 0.0
        %1039 = vmatpush1.msra.mxu0 0.0
        %1040 = vmatprep.subr.mxu0 0.0
        %1041 = vmatpush1.msra.mxu0 0.0
        %1042 = vmatprep.subr.mxu0 0.0
        %1043 = vmatpush1.msra.mxu0 0.0
        %1044 = vmatprep.subr.mxu0 0.0
        %1045 = vmatpush1.msra.mxu0 0.0
        %1046 = vmatprep.subr.mxu0 0.0
        %1047 = vmatpush1.msra.mxu0 0.0
        %1048 = vmatprep.subr.mxu0 0.0
        %1049 = vmatpush1.msra.mxu0 0.0
        %1050 = vmatprep.subr.mxu0 0.0
        %1051 = vmatpush1.msra.mxu0 0.0
        %1052 = vmatprep.mubr.f32.mxu0 0.0
        %1053 = vmatmul.mubr.f32.gmra.mrb[0].mxu0 %v986
        %v1054 = vpop.f32.mrb[0].mxu0
        %v1055 = vadd.f32 %v982, %v1054
        %v1056 = vpop.f32.mrb[0].mxu0
        %1057 = vdwg.mxu0
        %v1058 = vld [vmem:[%s7] sm:$0xf]
        %v1059 = vadd.f32 %v1055, %v1058
        %v1060 = vld [vmem:[%s973] sm:$0xff]
        %v1061 = vld [vmem:[%s973 + $0x8] sm:$0xff]
        %v1062 = vld [vmem:[%s973 + $0x10] sm:$0xff]
        %v1063 = vld [vmem:[%s973 + $0x18] sm:$0xf]
        %v1064 = vld [vmem:[%s13] sm:$0xff]
        %v1065 = vld [vmem:[%s13 + $0x8] sm:$0xff]
        %v1066 = vld [vmem:[%s13 + $0x10] sm:$0xff]
        %v1067 = vld [vmem:[%s13 + $0x18] sm:$0xff]
        %v1068 = vld [vmem:[%s15] sm:$0xff]
        %v1069 = vld [vmem:[%s15 + $0x8] sm:$0xff]
        %v1070 = vld [vmem:[%s15 + $0x10] sm:$0xff]
        %v1071 = vld [vmem:[%s15 + $0x18] sm:$0xff]
        %v1072 = vld [vmem:[%s17] sm:$0xff]
        %v1073 = vld [vmem:[%s17 + $0x8] sm:$0xff]
        %v1074 = vld [vmem:[%s19] sm:$0x1]
        %vm1075 = vcmask 261120
        %v1077 = vsel %vm1075, %v1059, 0
        %1079 = vmatprep.subr.mxu0 0.0
        %1080 = vmatpush1.msra.mxu0 %v1064
        %1081 = vmatprep.subr.mxu0 0.0
        %1082 = vmatpush1.msra.mxu0 %v1065
        %1083 = vmatprep.subr.mxu0 0.0
        %1084 = vmatpush1.msra.mxu0 %v1066
        %1085 = vmatprep.subr.mxu0 0.0
        %1086 = vmatpush1.msra.mxu0 %v1067
        %1087 = vmatprep.subr.mxu0 0.0
        %1088 = vmatpush1.msra.mxu0 0.0
        %1089 = vmatprep.subr.mxu0 0.0
        %1090 = vmatpush1.msra.mxu0 0.0
        %1091 = vmatprep.subr.mxu0 0.0
        %1092 = vmatpush1.msra.mxu0 0.0
        %1093 = vmatprep.subr.mxu0 0.0
        %1094 = vmatpush1.msra.mxu0 0.0
        %1095 = vmatprep.subr.mxu0 0.0
        %1096 = vmatpush1.msra.mxu0 0.0
        %1097 = vmatprep.subr.mxu0 0.0
        %1098 = vmatpush1.msra.mxu0 0.0
        %1099 = vmatprep.subr.mxu0 0.0
        %1100 = vmatpush1.msra.mxu0 0.0
        %1101 = vmatprep.subr.mxu0 0.0
        %1102 = vmatpush1.msra.mxu0 0.0
        %1103 = vmatprep.subr.mxu0 0.0
        %1104 = vmatpush1.msra.mxu0 0.0
        %1105 = vmatprep.subr.mxu0 0.0
        %1106 = vmatpush1.msra.mxu0 0.0
        %1107 = vmatprep.subr.mxu0 0.0
        %1108 = vmatpush1.msra.mxu0 0.0
        %1109 = vmatprep.subr.mxu0 0.0
        %1110 = vmatpush1.msra.mxu0 0.0
        %1111 = vmatprep.subr.mxu0 0.0
        %1112 = vmatpush1.msra.mxu0 0.0
        %1113 = vmatprep.subr.mxu0 0.0
        %1114 = vmatpush1.msra.mxu0 0.0
        %1115 = vmatprep.subr.mxu0 0.0
        %1116 = vmatpush1.msra.mxu0 0.0
        %1117 = vmatprep.subr.mxu0 0.0
        %1118 = vmatpush1.msra.mxu0 0.0
        %1119 = vmatprep.subr.mxu0 0.0
        %1120 = vmatpush1.msra.mxu0 0.0
        %1121 = vmatprep.subr.mxu0 0.0
        %1122 = vmatpush1.msra.mxu0 0.0
        %1123 = vmatprep.subr.mxu0 0.0
        %1124 = vmatpush1.msra.mxu0 0.0
        %1125 = vmatprep.subr.mxu0 0.0
        %1126 = vmatpush1.msra.mxu0 0.0
        %1127 = vmatprep.subr.mxu0 0.0
        %1128 = vmatpush1.msra.mxu0 0.0
        %1129 = vmatprep.subr.mxu0 0.0
        %1130 = vmatpush1.msra.mxu0 0.0
        %1131 = vmatprep.subr.mxu0 0.0
        %1132 = vmatpush1.msra.mxu0 0.0
        %1133 = vmatprep.subr.mxu0 0.0
        %1134 = vmatpush1.msra.mxu0 0.0
        %1135 = vmatprep.subr.mxu0 0.0
        %1136 = vmatpush1.msra.mxu0 0.0
        %1137 = vmatprep.subr.mxu0 0.0
        %1138 = vmatpush1.msra.mxu0 0.0
        %1139 = vmatprep.subr.mxu0 0.0
        %1140 = vmatpush1.msra.mxu0 0.0
        %1141 = vmatprep.subr.mxu0 0.0
        %1142 = vmatpush1.msra.mxu0 0.0
        %1143 = vmatprep.mubr.f32.mxu0 0.0
        %1144 = vmatmul.mubr.f32.gmra.mrb[0].mxu0 %v1077
        %v1145 = vpop.f32.mrb[0].mxu0
        %v1146 = vadd.f32 0.0, %v1145
        %v1147 = vpop.f32.mrb[0].mxu0
        %1148 = vdwg.mxu0
        %v1150 = vsel %vm1075, %v1060, 0
        %v1153 = vsel %vm1075, %v1061, 0
        %v1156 = vsel %vm1075, %v1062, 0
        %v1159 = vsel %vm1075, %v1063, 0
        %1161 = vmatprep.subr.mxu0 0.0
        %1162 = vmatpush1.msra.mxu0 %v1068
        %1163 = vmatprep.subr.mxu0 0.0
        %1164 = vmatpush1.msra.mxu0 %v1069
        %1165 = vmatprep.subr.mxu0 0.0
        %1166 = vmatpush1.msra.mxu0 %v1070
        %1167 = vmatprep.subr.mxu0 0.0
        %1168 = vmatpush1.msra.mxu0 %v1071
        %1169 = vmatprep.subr.mxu0 0.0
        %1170 = vmatpush1.msra.mxu0 0.0
        %1171 = vmatprep.subr.mxu0 0.0
        %1172 = vmatpush1.msra.mxu0 0.0
        %1173 = vmatprep.subr.mxu0 0.0
        %1174 = vmatpush1.msra.mxu0 0.0
        %1175 = vmatprep.subr.mxu0 0.0
        %1176 = vmatpush1.msra.mxu0 0.0
        %1177 = vmatprep.subr.mxu0 0.0
        %1178 = vmatpush1.msra.mxu0 0.0
        %1179 = vmatprep.subr.mxu0 0.0
        %1180 = vmatpush1.msra.mxu0 0.0
        %1181 = vmatprep.subr.mxu0 0.0
        %1182 = vmatpush1.msra.mxu0 0.0
        %1183 = vmatprep.subr.mxu0 0.0
        %1184 = vmatpush1.msra.mxu0 0.0
        %1185 = vmatprep.subr.mxu0 0.0
        %1186 = vmatpush1.msra.mxu0 0.0
        %1187 = vmatprep.subr.mxu0 0.0
        %1188 = vmatpush1.msra.mxu0 0.0
        %1189 = vmatprep.subr.mxu0 0.0
        %1190 = vmatpush1.msra.mxu0 0.0
        %1191 = vmatprep.subr.mxu0 0.0
        %1192 = vmatpush1.msra.mxu0 0.0
        %1193 = vmatprep.subr.mxu0 0.0
        %1194 = vmatpush1.msra.mxu0 0.0
        %1195 = vmatprep.subr.mxu0 0.0
        %1196 = vmatpush1.msra.mxu0 0.0
        %1197 = vmatprep.subr.mxu0 0.0
        %1198 = vmatpush1.msra.mxu0 0.0
        %1199 = vmatprep.subr.mxu0 0.0
        %1200 = vmatpush1.msra.mxu0 0.0
        %1201 = vmatprep.subr.mxu0 0.0
        %1202 = vmatpush1.msra.mxu0 0.0
        %1203 = vmatprep.subr.mxu0 0.0
        %1204 = vmatpush1.msra.mxu0 0.0
        %1205 = vmatprep.subr.mxu0 0.0
        %1206 = vmatpush1.msra.mxu0 0.0
        %1207 = vmatprep.subr.mxu0 0.0
        %1208 = vmatpush1.msra.mxu0 0.0
        %1209 = vmatprep.subr.mxu0 0.0
        %1210 = vmatpush1.msra.mxu0 0.0
        %1211 = vmatprep.subr.mxu0 0.0
        %1212 = vmatpush1.msra.mxu0 0.0
        %1213 = vmatprep.subr.mxu0 0.0
        %1214 = vmatpush1.msra.mxu0 0.0
        %1215 = vmatprep.subr.mxu0 0.0
        %1216 = vmatpush1.msra.mxu0 0.0
        %1217 = vmatprep.subr.mxu0 0.0
        %1218 = vmatpush1.msra.mxu0 0.0
        %1219 = vmatprep.subr.mxu0 0.0
        %1220 = vmatpush1.msra.mxu0 0.0
        %1221 = vmatprep.subr.mxu0 0.0
        %1222 = vmatpush1.msra.mxu0 0.0
        %1223 = vmatprep.subr.mxu0 0.0
        %1224 = vmatpush1.msra.mxu0 0.0
        %1225 = vmatprep.mubr.f32.mxu0 0.0
        %1226 = vmatmul.mubr.f32.gmra.mrb[0].mxu0 %v1150
        %v1227 = vpop.f32.mrb[0].mxu0
        %v1228 = vadd.f32 0.0, %v1227
        %v1229 = vpop.f32.mrb[0].mxu0
        %1230 = vmatprep.mubr.f32.mxu0 0.0
        %1231 = vmatmul.mubr.f32.gmra.mrb[0].mxu0 %v1153
        %v1232 = vpop.f32.mrb[0].mxu0
        %v1233 = vadd.f32 0.0, %v1232
        %v1234 = vpop.f32.mrb[0].mxu0
        %1235 = vmatprep.mubr.f32.mxu0 0.0
        %1236 = vmatmul.mubr.f32.gmra.mrb[0].mxu0 %v1156
        %v1237 = vpop.f32.mrb[0].mxu0
        %v1238 = vadd.f32 0.0, %v1237
        %v1239 = vpop.f32.mrb[0].mxu0
        %1240 = vmatprep.mubr.f32.mxu0 0.0
        %1241 = vmatmul.mubr.f32.gmra.mrb[0].mxu0 %v1159
        %v1242 = vpop.f32.mrb[0].mxu0
        %v1243 = vadd.f32 0.0, %v1242
        %v1244 = vpop.f32.mrb[0].mxu0
        %1245 = vdwg.mxu0
        %v1247 = vlaneseq
        %v1248 = vshrl.u32 %v1247, 7
        %v1249 = vsub.s32 0, %v1248
        %v1250 = vrot.slane %v1074, %v1249
        %v1252 = vadd.f32 %v1059, %v1250
        %vm1253 = vcmask 64512
        %v1255 = vsel %vm1253, %v1146, 0
        %v1258 = vsel %vm1253, %v1228, 0
        %v1261 = vsel %vm1253, %v1233, 0
        %v1264 = vsel %vm1253, %v1238, 0
        %v1267 = vsel %vm1253, %v1243, 0
        %1269 = vmatprep.subr.mxu0 0.0
        %1270 = vmatpush1.xpose.msra.mxu0 %v1258
        %1271 = vmatprep.subr.mxu0 0.0
        %1272 = vmatpush1.xpose.msra.mxu0 %v1261
        %1273 = vmatprep.subr.mxu0 0.0
        %1274 = vmatpush1.xpose.msra.mxu0 %v1264
        %1275 = vmatprep.subr.mxu0 0.0
        %1276 = vmatpush1.xpose.msra.mxu0 %v1267
        %1277 = vmatprep.subr.mxu0 0.0
        %1278 = vmatpush1.xpose.msra.mxu0 0.0
        %1279 = vmatprep.subr.mxu0 0.0
        %1280 = vmatpush1.xpose.msra.mxu0 0.0
        %1281 = vmatprep.subr.mxu0 0.0
        %1282 = vmatpush1.xpose.msra.mxu0 0.0
        %1283 = vmatprep.subr.mxu0 0.0
        %1284 = vmatpush1.xpose.msra.mxu0 0.0
        %1285 = vmatprep.subr.mxu0 0.0
        %1286 = vmatpush1.xpose.msra.mxu0 0.0
        %1287 = vmatprep.subr.mxu0 0.0
        %1288 = vmatpush1.xpose.msra.mxu0 0.0
        %1289 = vmatprep.subr.mxu0 0.0
        %1290 = vmatpush1.xpose.msra.mxu0 0.0
        %1291 = vmatprep.subr.mxu0 0.0
        %1292 = vmatpush1.xpose.msra.mxu0 0.0
        %1293 = vmatprep.subr.mxu0 0.0
        %1294 = vmatpush1.xpose.msra.mxu0 0.0
        %1295 = vmatprep.subr.mxu0 0.0
        %1296 = vmatpush1.xpose.msra.mxu0 0.0
        %1297 = vmatprep.subr.mxu0 0.0
        %1298 = vmatpush1.xpose.msra.mxu0 0.0
        %1299 = vmatprep.subr.mxu0 0.0
        %1300 = vmatpush1.xpose.msra.mxu0 0.0
        %1301 = vmatprep.subr.mxu0 0.0
        %1302 = vmatpush1.xpose.msra.mxu0 0.0
        %1303 = vmatprep.subr.mxu0 0.0
        %1304 = vmatpush1.xpose.msra.mxu0 0.0
        %1305 = vmatprep.subr.mxu0 0.0
        %1306 = vmatpush1.xpose.msra.mxu0 0.0
        %1307 = vmatprep.subr.mxu0 0.0
        %1308 = vmatpush1.xpose.msra.mxu0 0.0
        %1309 = vmatprep.subr.mxu0 0.0
        %1310 = vmatpush1.xpose.msra.mxu0 0.0
        %1311 = vmatprep.subr.mxu0 0.0
        %1312 = vmatpush1.xpose.msra.mxu0 0.0
        %1313 = vmatprep.subr.mxu0 0.0
        %1314 = vmatpush1.xpose.msra.mxu0 0.0
        %1315 = vmatprep.subr.mxu0 0.0
        %1316 = vmatpush1.xpose.msra.mxu0 0.0
        %1317 = vmatprep.subr.mxu0 0.0
        %1318 = vmatpush1.xpose.msra.mxu0 0.0
        %1319 = vmatprep.subr.mxu0 0.0
        %1320 = vmatpush1.xpose.msra.mxu0 0.0
        %1321 = vmatprep.subr.mxu0 0.0
        %1322 = vmatpush1.xpose.msra.mxu0 0.0
        %1323 = vmatprep.subr.mxu0 0.0
        %1324 = vmatpush1.xpose.msra.mxu0 0.0
        %1325 = vmatprep.subr.mxu0 0.0
        %1326 = vmatpush1.xpose.msra.mxu0 0.0
        %1327 = vmatprep.subr.mxu0 0.0
        %1328 = vmatpush1.xpose.msra.mxu0 0.0
        %1329 = vmatprep.subr.mxu0 0.0
        %1330 = vmatpush1.xpose.msra.mxu0 0.0
        %1331 = vmatprep.subr.mxu0 0.0
        %1332 = vmatpush1.xpose.msra.mxu0 0.0
        %1333 = vmatprep.mubr.f32.mxu0 0.0
        %1334 = vmatmul.mubr.f32.gmra.mrb[0].mxu0 %v1255
        %v1335 = vpop.f32.mrb[0].mxu0
        %v1336 = vadd.f32 0.0, %v1335
        %v1337 = vpop.f32.mrb[0].mxu0
        %1338 = vdwg.mxu0
        %vm1339 = vcmask 224256
        %v1340 = vsel %vm1339, %v1336, -inf
        %1341 = vmax.xlane.f32.xlu0 %v1340
        %v1342 = vpop.xlane.xlu0 %1341
        %v1343 = vsub.f32 %v1336, %v1342
        %v1344 = vmul.f32 %v1343, 1.442695
        %v1345 = vpow.pop %v1344
        %v1346 = vsel %vm1339, %v1345, 0.0
        %1347 = vadd.xlane.f32.xlu0 %v1346
        %v1348 = vpop.xlane.xlu0 %1347
        %v1349 = vrcp.pop %v1348
        %v1350 = vmul.f32 %v1345, %v1349
        %1351 = vrot.lane.b32.xlu0 %v1228, 112
        %v1352 = vpop.permute.xlu0 %1351
        %1353 = vrot.lane.b32.xlu0 %v1233, 112
        %v1354 = vpop.permute.xlu0 %1353
        %1355 = vrot.lane.b32.xlu0 %v1238, 112
        %v1356 = vpop.permute.xlu0 %1355
        %1357 = vrot.lane.b32.xlu0 %v1243, 112
        %v1358 = vpop.permute.xlu0 %1357
        %vm1362 = vcmask 228352
        %v1364 = vsel %vm1362, %v1350, 0
        %vm1366 = vcmask 1043456
        %v1367 = vsel %vm1366, %v1358, 0
        %1369 = vmatprep.subr.mxu0 0.0
        %1370 = vmatpush1.msra.mxu0 %v1352
        %1371 = vmatprep.subr.mxu0 0.0
        %1372 = vmatpush1.msra.mxu0 %v1354
        %1373 = vmatprep.subr.mxu0 0.0
        %1374 = vmatpush1.msra.mxu0 %v1356
        %1375 = vmatprep.subr.mxu0 0.0
        %1376 = vmatpush1.msra.mxu0 %v1367
        %1377 = vmatprep.subr.mxu0 0.0
        %1378 = vmatpush1.msra.mxu0 0.0
        %1379 = vmatprep.subr.mxu0 0.0
        %1380 = vmatpush1.msra.mxu0 0.0
        %1381 = vmatprep.subr.mxu0 0.0
        %1382 = vmatpush1.msra.mxu0 0.0
        %1383 = vmatprep.subr.mxu0 0.0
        %1384 = vmatpush1.msra.mxu0 0.0
        %1385 = vmatprep.subr.mxu0 0.0
        %1386 = vmatpush1.msra.mxu0 0.0
        %1387 = vmatprep.subr.mxu0 0.0
        %1388 = vmatpush1.msra.mxu0 0.0
        %1389 = vmatprep.subr.mxu0 0.0
        %1390 = vmatpush1.msra.mxu0 0.0
        %1391 = vmatprep.subr.mxu0 0.0
        %1392 = vmatpush1.msra.mxu0 0.0
        %1393 = vmatprep.subr.mxu0 0.0
        %1394 = vmatpush1.msra.mxu0 0.0
        %1395 = vmatprep.subr.mxu0 0.0
        %1396 = vmatpush1.msra.mxu0 0.0
        %1397 = vmatprep.subr.mxu0 0.0
        %1398 = vmatpush1.msra.mxu0 0.0
        %1399 = vmatprep.subr.mxu0 0.0
        %1400 = vmatpush1.msra.mxu0 0.0
        %1401 = vmatprep.subr.mxu0 0.0
        %1402 = vmatpush1.msra.mxu0 0.0
        %1403 = vmatprep.subr.mxu0 0.0
        %1404 = vmatpush1.msra.mxu0 0.0
        %1405 = vmatprep.subr.mxu0 0.0
        %1406 = vmatpush1.msra.mxu0 0.0
        %1407 = vmatprep.subr.mxu0 0.0
        %1408 = vmatpush1.msra.mxu0 0.0
        %1409 = vmatprep.subr.mxu0 0.0
        %1410 = vmatpush1.msra.mxu0 0.0
        %1411 = vmatprep.subr.mxu0 0.0
        %1412 = vmatpush1.msra.mxu0 0.0
        %1413 = vmatprep.subr.mxu0 0.0
        %1414 = vmatpush1.msra.mxu0 0.0
        %1415 = vmatprep.subr.mxu0 0.0
        %1416 = vmatpush1.msra.mxu0 0.0
        %1417 = vmatprep.subr.mxu0 0.0
        %1418 = vmatpush1.msra.mxu0 0.0
        %1419 = vmatprep.subr.mxu0 0.0
        %1420 = vmatpush1.msra.mxu0 0.0
        %1421 = vmatprep.subr.mxu0 0.0
        %1422 = vmatpush1.msra.mxu0 0.0
        %1423 = vmatprep.subr.mxu0 0.0
        %1424 = vmatpush1.msra.mxu0 0.0
        %1425 = vmatprep.subr.mxu0 0.0
        %1426 = vmatpush1.msra.mxu0 0.0
        %1427 = vmatprep.subr.mxu0 0.0
        %1428 = vmatpush1.msra.mxu0 0.0
        %1429 = vmatprep.subr.mxu0 0.0
        %1430 = vmatpush1.msra.mxu0 0.0
        %1431 = vmatprep.subr.mxu0 0.0
        %1432 = vmatpush1.msra.mxu0 0.0
        %1433 = vmatprep.mubr.f32.mxu0 0.0
        %1434 = vmatmul.mubr.f32.gmra.mrb[0].mxu0 %v1364
        %v1435 = vpop.f32.mrb[0].mxu0
        %v1436 = vadd.f32 0.0, %v1435
        %v1437 = vpop.f32.mrb[0].mxu0
        %1438 = vdwg.mxu0
        %v1440 = vsel %vm1253, %v1436, 0
        %1442 = vmatprep.subr.mxu0 0.0
        %1443 = vmatpush1.msra.mxu0 %v1072
        %1444 = vmatprep.subr.mxu0 0.0
        %1445 = vmatpush1.msra.mxu0 0.0
        %1446 = vmatprep.subr.mxu0 0.0
        %1447 = vmatpush1.msra.mxu0 0.0
        %1448 = vmatprep.subr.mxu0 0.0
        %1449 = vmatpush1.msra.mxu0 0.0
        %1450 = vmatprep.subr.mxu0 0.0
        %1451 = vmatpush1.msra.mxu0 0.0
        %1452 = vmatprep.subr.mxu0 0.0
        %1453 = vmatpush1.msra.mxu0 0.0
        %1454 = vmatprep.subr.mxu0 0.0
        %1455 = vmatpush1.msra.mxu0 0.0
        %1456 = vmatprep.subr.mxu0 0.0
        %1457 = vmatpush1.msra.mxu0 0.0
        %1458 = vmatprep.subr.mxu0 0.0
        %1459 = vmatpush1.msra.mxu0 0.0
        %1460 = vmatprep.subr.mxu0 0.0
        %1461 = vmatpush1.msra.mxu0 0.0
        %1462 = vmatprep.subr.mxu0 0.0
        %1463 = vmatpush1.msra.mxu0 0.0
        %1464 = vmatprep.subr.mxu0 0.0
        %1465 = vmatpush1.msra.mxu0 0.0
        %1466 = vmatprep.subr.mxu0 0.0
        %1467 = vmatpush1.msra.mxu0 0.0
        %1468 = vmatprep.subr.mxu0 0.0
        %1469 = vmatpush1.msra.mxu0 0.0
        %1470 = vmatprep.subr.mxu0 0.0
        %1471 = vmatpush1.msra.mxu0 0.0
        %1472 = vmatprep.subr.mxu0 0.0
        %1473 = vmatpush1.msra.mxu0 0.0
        %1474 = vmatprep.subr.mxu0 0.0
        %1475 = vmatpush1.msra.mxu0 0.0
        %1476 = vmatprep.subr.mxu0 0.0
        %1477 = vmatpush1.msra.mxu0 0.0
        %1478 = vmatprep.subr.mxu0 0.0
        %1479 = vmatpush1.msra.mxu0 0.0
        %1480 = vmatprep.subr.mxu0 0.0
        %1481 = vmatpush1.msra.mxu0 0.0
        %1482 = vmatprep.subr.mxu0 0.0
        %1483 = vmatpush1.msra.mxu0 0.0
        %1484 = vmatprep.subr.mxu0 0.0
        %1485 = vmatpush1.msra.mxu0 0.0
        %1486 = vmatprep.subr.mxu0 0.0
        %1487 = vmatpush1.msra.mxu0 0.0
        %1488 = vmatprep.subr.mxu0 0.0
        %1489 = vmatpush1.msra.mxu0 0.0
        %1490 = vmatprep.subr.mxu0 0.0
        %1491 = vmatpush1.msra.mxu0 0.0
        %1492 = vmatprep.subr.mxu0 0.0
        %1493 = vmatpush1.msra.mxu0 0.0
        %1494 = vmatprep.subr.mxu0 0.0
        %1495 = vmatpush1.msra.mxu0 0.0
        %1496 = vmatprep.subr.mxu0 0.0
        %1497 = vmatpush1.msra.mxu0 0.0
        %1498 = vmatprep.subr.mxu0 0.0
        %1499 = vmatpush1.msra.mxu0 0.0
        %1500 = vmatprep.subr.mxu0 0.0
        %1501 = vmatpush1.msra.mxu0 0.0
        %1502 = vmatprep.subr.mxu0 0.0
        %1503 = vmatpush1.msra.mxu0 0.0
        %1504 = vmatprep.subr.mxu0 0.0
        %1505 = vmatpush1.msra.mxu0 0.0
        %1506 = vmatprep.mubr.f32.mxu0 0.0
        %1507 = vmatmul.mubr.f32.gmra.mrb[0].mxu0 %v1440
        %v1508 = vpop.f32.mrb[0].mxu0
        %v1509 = vadd.f32 0.0, %v1508
        %v1510 = vpop.f32.mrb[0].mxu0
        %1511 = vdwg.mxu0
        %v1512 = vadd.f32 %v1252, %v1509
        %1513 = vrot.lane.b32.xlu0 %v1146, 120
        %v1514 = vpop.permute.xlu0 %1513
        %1515 = vrot.lane.b32.xlu0 %v1228, 120
        %v1516 = vpop.permute.xlu0 %1515
        %1517 = vrot.lane.b32.xlu0 %v1233, 120
        %v1518 = vpop.permute.xlu0 %1517
        %1519 = vrot.lane.b32.xlu0 %v1238, 120
        %v1520 = vpop.permute.xlu0 %1519
        %1521 = vrot.lane.b32.xlu0 %v1243, 120
        %v1522 = vpop.permute.xlu0 %1521
        %v1523 = vsel %vm1253, %v1514, 0
        %v1525 = vsel %vm1253, %v1516, 0
        %v1527 = vsel %vm1253, %v1518, 0
        %v1529 = vsel %vm1253, %v1520, 0
        %v1531 = vsel %vm1253, %v1522, 0
        %1533 = vmatprep.subr.mxu0 0.0
        %1534 = vmatpush1.xpose.msra.mxu0 %v1525
        %1535 = vmatprep.subr.mxu0 0.0
        %1536 = vmatpush1.xpose.msra.mxu0 %v1527
        %1537 = vmatprep.subr.mxu0 0.0
        %1538 = vmatpush1.xpose.msra.mxu0 %v1529
        %1539 = vmatprep.subr.mxu0 0.0
        %1540 = vmatpush1.xpose.msra.mxu0 %v1531
        %1541 = vmatprep.subr.mxu0 0.0
        %1542 = vmatpush1.xpose.msra.mxu0 0.0
        %1543 = vmatprep.subr.mxu0 0.0
        %1544 = vmatpush1.xpose.msra.mxu0 0.0
        %1545 = vmatprep.subr.mxu0 0.0
        %1546 = vmatpush1.xpose.msra.mxu0 0.0
        %1547 = vmatprep.subr.mxu0 0.0
        %1548 = vmatpush1.xpose.msra.mxu0 0.0
        %1549 = vmatprep.subr.mxu0 0.0
        %1550 = vmatpush1.xpose.msra.mxu0 0.0
        %1551 = vmatprep.subr.mxu0 0.0
        %1552 = vmatpush1.xpose.msra.mxu0 0.0
        %1553 = vmatprep.subr.mxu0 0.0
        %1554 = vmatpush1.xpose.msra.mxu0 0.0
        %1555 = vmatprep.subr.mxu0 0.0
        %1556 = vmatpush1.xpose.msra.mxu0 0.0
        %1557 = vmatprep.subr.mxu0 0.0
        %1558 = vmatpush1.xpose.msra.mxu0 0.0
        %1559 = vmatprep.subr.mxu0 0.0
        %1560 = vmatpush1.xpose.msra.mxu0 0.0
        %1561 = vmatprep.subr.mxu0 0.0
        %1562 = vmatpush1.xpose.msra.mxu0 0.0
        %1563 = vmatprep.subr.mxu0 0.0
        %1564 = vmatpush1.xpose.msra.mxu0 0.0
        %1565 = vmatprep.subr.mxu0 0.0
        %1566 = vmatpush1.xpose.msra.mxu0 0.0
        %1567 = vmatprep.subr.mxu0 0.0
        %1568 = vmatpush1.xpose.msra.mxu0 0.0
        %1569 = vmatprep.subr.mxu0 0.0
        %1570 = vmatpush1.xpose.msra.mxu0 0.0
        %1571 = vmatprep.subr.mxu0 0.0
        %1572 = vmatpush1.xpose.msra.mxu0 0.0
        %1573 = vmatprep.subr.mxu0 0.0
        %1574 = vmatpush1.xpose.msra.mxu0 0.0
        %1575 = vmatprep.subr.mxu0 0.0
        %1576 = vmatpush1.xpose.msra.mxu0 0.0
        %1577 = vmatprep.subr.mxu0 0.0
        %1578 = vmatpush1.xpose.msra.mxu0 0.0
        %1579 = vmatprep.subr.mxu0 0.0
        %1580 = vmatpush1.xpose.msra.mxu0 0.0
        %1581 = vmatprep.subr.mxu0 0.0
        %1582 = vmatpush1.xpose.msra.mxu0 0.0
        %1583 = vmatprep.subr.mxu0 0.0
        %1584 = vmatpush1.xpose.msra.mxu0 0.0
        %1585 = vmatprep.subr.mxu0 0.0
        %1586 = vmatpush1.xpose.msra.mxu0 0.0
        %1587 = vmatprep.subr.mxu0 0.0
        %1588 = vmatpush1.xpose.msra.mxu0 0.0
        %1589 = vmatprep.subr.mxu0 0.0
        %1590 = vmatpush1.xpose.msra.mxu0 0.0
        %1591 = vmatprep.subr.mxu0 0.0
        %1592 = vmatpush1.xpose.msra.mxu0 0.0
        %1593 = vmatprep.subr.mxu0 0.0
        %1594 = vmatpush1.xpose.msra.mxu0 0.0
        %1595 = vmatprep.subr.mxu0 0.0
        %1596 = vmatpush1.xpose.msra.mxu0 0.0
        %1597 = vmatprep.mubr.f32.mxu0 0.0
        %1598 = vmatmul.mubr.f32.gmra.mrb[0].mxu0 %v1523
        %v1599 = vpop.f32.mrb[0].mxu0
        %v1600 = vadd.f32 0.0, %v1599
        %v1601 = vpop.f32.mrb[0].mxu0
        %1602 = vdwg.mxu0
        %v1603 = vsel %vm1339, %v1600, -inf
        %1604 = vmax.xlane.f32.xlu0 %v1603
        %v1605 = vpop.xlane.xlu0 %1604
        %v1606 = vsub.f32 %v1600, %v1605
        %v1607 = vmul.f32 %v1606, 1.442695
        %v1608 = vpow.pop %v1607
        %v1609 = vsel %vm1339, %v1608, 0.0
        %1610 = vadd.xlane.f32.xlu0 %v1609
        %v1611 = vpop.xlane.xlu0 %1610
        %v1612 = vrcp.pop %v1611
        %v1613 = vmul.f32 %v1608, %v1612
        %1614 = vrot.lane.b32.xlu0 %v1228, 104
        %v1615 = vpop.permute.xlu0 %1614
        %1616 = vrot.lane.b32.xlu0 %v1233, 104
        %v1617 = vpop.permute.xlu0 %1616
        %1618 = vrot.lane.b32.xlu0 %v1238, 104
        %v1619 = vpop.permute.xlu0 %1618
        %1620 = vrot.lane.b32.xlu0 %v1243, 104
        %v1621 = vpop.permute.xlu0 %1620
        %v1626 = vsel %vm1362, %v1613, 0
        %v1628 = vsel %vm1366, %v1621, 0
        %1630 = vmatprep.subr.mxu0 0.0
        %1631 = vmatpush1.msra.mxu0 %v1615
        %1632 = vmatprep.subr.mxu0 0.0
        %1633 = vmatpush1.msra.mxu0 %v1617
        %1634 = vmatprep.subr.mxu0 0.0
        %1635 = vmatpush1.msra.mxu0 %v1619
        %1636 = vmatprep.subr.mxu0 0.0
        %1637 = vmatpush1.msra.mxu0 %v1628
        %1638 = vmatprep.subr.mxu0 0.0
        %1639 = vmatpush1.msra.mxu0 0.0
        %1640 = vmatprep.subr.mxu0 0.0
        %1641 = vmatpush1.msra.mxu0 0.0
        %1642 = vmatprep.subr.mxu0 0.0
        %1643 = vmatpush1.msra.mxu0 0.0
        %1644 = vmatprep.subr.mxu0 0.0
        %1645 = vmatpush1.msra.mxu0 0.0
        %1646 = vmatprep.subr.mxu0 0.0
        %1647 = vmatpush1.msra.mxu0 0.0
        %1648 = vmatprep.subr.mxu0 0.0
        %1649 = vmatpush1.msra.mxu0 0.0
        %1650 = vmatprep.subr.mxu0 0.0
        %1651 = vmatpush1.msra.mxu0 0.0
        %1652 = vmatprep.subr.mxu0 0.0
        %1653 = vmatpush1.msra.mxu0 0.0
        %1654 = vmatprep.subr.mxu0 0.0
        %1655 = vmatpush1.msra.mxu0 0.0
        %1656 = vmatprep.subr.mxu0 0.0
        %1657 = vmatpush1.msra.mxu0 0.0
        %1658 = vmatprep.subr.mxu0 0.0
        %1659 = vmatpush1.msra.mxu0 0.0
        %1660 = vmatprep.subr.mxu0 0.0
        %1661 = vmatpush1.msra.mxu0 0.0
        %1662 = vmatprep.subr.mxu0 0.0
        %1663 = vmatpush1.msra.mxu0 0.0
        %1664 = vmatprep.subr.mxu0 0.0
        %1665 = vmatpush1.msra.mxu0 0.0
        %1666 = vmatprep.subr.mxu0 0.0
        %1667 = vmatpush1.msra.mxu0 0.0
        %1668 = vmatprep.subr.mxu0 0.0
        %1669 = vmatpush1.msra.mxu0 0.0
        %1670 = vmatprep.subr.mxu0 0.0
        %1671 = vmatpush1.msra.mxu0 0.0
        %1672 = vmatprep.subr.mxu0 0.0
        %1673 = vmatpush1.msra.mxu0 0.0
        %1674 = vmatprep.subr.mxu0 0.0
        %1675 = vmatpush1.msra.mxu0 0.0
        %1676 = vmatprep.subr.mxu0 0.0
        %1677 = vmatpush1.msra.mxu0 0.0
        %1678 = vmatprep.subr.mxu0 0.0
        %1679 = vmatpush1.msra.mxu0 0.0
        %1680 = vmatprep.subr.mxu0 0.0
        %1681 = vmatpush1.msra.mxu0 0.0
        %1682 = vmatprep.subr.mxu0 0.0
        %1683 = vmatpush1.msra.mxu0 0.0
        %1684 = vmatprep.subr.mxu0 0.0
        %1685 = vmatpush1.msra.mxu0 0.0
        %1686 = vmatprep.subr.mxu0 0.0
        %1687 = vmatpush1.msra.mxu0 0.0
        %1688 = vmatprep.subr.mxu0 0.0
        %1689 = vmatpush1.msra.mxu0 0.0
        %1690 = vmatprep.subr.mxu0 0.0
        %1691 = vmatpush1.msra.mxu0 0.0
        %1692 = vmatprep.subr.mxu0 0.0
        %1693 = vmatpush1.msra.mxu0 0.0
        %1694 = vmatprep.mubr.f32.mxu0 0.0
        %1695 = vmatmul.mubr.f32.gmra.mrb[0].mxu0 %v1626
        %v1696 = vpop.f32.mrb[0].mxu0
        %v1697 = vadd.f32 0.0, %v1696
        %v1698 = vpop.f32.mrb[0].mxu0
        %1699 = vdwg.mxu0
        %v1701 = vsel %vm1253, %v1697, 0
        %1703 = vmatprep.subr.mxu0 0.0
        %1704 = vmatpush1.msra.mxu0 %v1073
        %1705 = vmatprep.subr.mxu0 0.0
        %1706 = vmatpush1.msra.mxu0 0.0
        %1707 = vmatprep.subr.mxu0 0.0
        %1708 = vmatpush1.msra.mxu0 0.0
        %1709 = vmatprep.subr.mxu0 0.0
        %1710 = vmatpush1.msra.mxu0 0.0
        %1711 = vmatprep.subr.mxu0 0.0
        %1712 = vmatpush1.msra.mxu0 0.0
        %1713 = vmatprep.subr.mxu0 0.0
        %1714 = vmatpush1.msra.mxu0 0.0
        %1715 = vmatprep.subr.mxu0 0.0
        %1716 = vmatpush1.msra.mxu0 0.0
        %1717 = vmatprep.subr.mxu0 0.0
        %1718 = vmatpush1.msra.mxu0 0.0
        %1719 = vmatprep.subr.mxu0 0.0
        %1720 = vmatpush1.msra.mxu0 0.0
        %1721 = vmatprep.subr.mxu0 0.0
        %1722 = vmatpush1.msra.mxu0 0.0
        %1723 = vmatprep.subr.mxu0 0.0
        %1724 = vmatpush1.msra.mxu0 0.0
        %1725 = vmatprep.subr.mxu0 0.0
        %1726 = vmatpush1.msra.mxu0 0.0
        %1727 = vmatprep.subr.mxu0 0.0
        %1728 = vmatpush1.msra.mxu0 0.0
        %1729 = vmatprep.subr.mxu0 0.0
        %1730 = vmatpush1.msra.mxu0 0.0
        %1731 = vmatprep.subr.mxu0 0.0
        %1732 = vmatpush1.msra.mxu0 0.0
        %1733 = vmatprep.subr.mxu0 0.0
        %1734 = vmatpush1.msra.mxu0 0.0
        %1735 = vmatprep.subr.mxu0 0.0
        %1736 = vmatpush1.msra.mxu0 0.0
        %1737 = vmatprep.subr.mxu0 0.0
        %1738 = vmatpush1.msra.mxu0 0.0
        %1739 = vmatprep.subr.mxu0 0.0
        %1740 = vmatpush1.msra.mxu0 0.0
        %1741 = vmatprep.subr.mxu0 0.0
        %1742 = vmatpush1.msra.mxu0 0.0
        %1743 = vmatprep.subr.mxu0 0.0
        %1744 = vmatpush1.msra.mxu0 0.0
        %1745 = vmatprep.subr.mxu0 0.0
        %1746 = vmatpush1.msra.mxu0 0.0
        %1747 = vmatprep.subr.mxu0 0.0
        %1748 = vmatpush1.msra.mxu0 0.0
        %1749 = vmatprep.subr.mxu0 0.0
        %1750 = vmatpush1.msra.mxu0 0.0
        %1751 = vmatprep.subr.mxu0 0.0
        %1752 = vmatpush1.msra.mxu0 0.0
        %1753 = vmatprep.subr.mxu0 0.0
        %1754 = vmatpush1.msra.mxu0 0.0
        %1755 = vmatprep.subr.mxu0 0.0
        %1756 = vmatpush1.msra.mxu0 0.0
        %1757 = vmatprep.subr.mxu0 0.0
        %1758 = vmatpush1.msra.mxu0 0.0
        %1759 = vmatprep.subr.mxu0 0.0
        %1760 = vmatpush1.msra.mxu0 0.0
        %1761 = vmatprep.subr.mxu0 0.0
        %1762 = vmatpush1.msra.mxu0 0.0
        %1763 = vmatprep.subr.mxu0 0.0
        %1764 = vmatpush1.msra.mxu0 0.0
        %1765 = vmatprep.subr.mxu0 0.0
        %1766 = vmatpush1.msra.mxu0 0.0
        %1767 = vmatprep.mubr.f32.mxu0 0.0
        %1768 = vmatmul.mubr.f32.gmra.mrb[0].mxu0 %v1701
        %v1769 = vpop.f32.mrb[0].mxu0
        %v1770 = vadd.f32 0.0, %v1769
        %v1771 = vpop.f32.mrb[0].mxu0
        %1772 = vdwg.mxu0
        %v1773 = vadd.f32 %v1512, %v1770
        %v1774 = vld [vmem:[%s21] sm:$0x1]
        %v1775 = vld [vmem:[%s23] sm:$0x1]
        %vm1776 = vcmask 257024
        %v1777 = vsel %vm1776, %v1773, 0.0
        %1778 = vadd.xlane.f32.xlu0 %v1777
        %v1779 = vpop.xlane.xlu0 %1778
        %v1780 = vrcp.pop 32.0
        %v1781 = vmul.f32 %v1779, %v1780
        %v1782 = vsub.f32 %v1773, %v1781
        %v1783 = vmul.f32 %v1782, %v1782
        %v1784 = vsel %vm1776, %v1783, 0.0
        %1785 = vadd.xlane.f32.xlu0 %v1784
        %v1786 = vpop.xlane.xlu0 %1785
        %v1787 = vmul.f32 %v1786, %v1780
        %v1788 = vadd.f32 %v1787, 1e-06
        %v1789 = vrsqrt.pop %v1788
        %v1790 = vmul.f32 %v1782, %v1789
        %v1792 = vlaneseq
        %v1793 = vshrl.u32 %v1792, 7
        %v1794 = vsub.s32 0, %v1793
        %v1795 = vrot.slane %v1774, %v1794
        %v1797 = vmul.f32 %v1790, %v1795
        %v1799 = vlaneseq
        %v1800 = vshrl.u32 %v1799, 7
        %v1801 = vsub.s32 0, %v1800
        %v1802 = vrot.slane %v1775, %v1801
        %v1804 = vadd.f32 %v1797, %v1802
        %v1805 = vld [vmem:[%s25] sm:$0xff]
        %v1806 = vld [vmem:[%s25 + $0x8] sm:$0xff]
        %v1807 = vld [vmem:[%s25 + $0x10] sm:$0xff]
        %v1808 = vld [vmem:[%s25 + $0x18] sm:$0xff]
        %v1809 = vld [vmem:[%s27] sm:$0x1]
        %v1811 = vlaneseq
        %v1812 = vshrl.u32 %v1811, 7
        %v1813 = vsub.s32 0, %v1812
        %v1814 = vrot.slane %v1809, %v1813
        %v1817 = vsel %vm1075, %v1804, 0
        %1819 = vmatprep.subr.mxu0 0.0
        %1820 = vmatpush1.msra.mxu0 %v1805
        %1821 = vmatprep.subr.mxu0 0.0
        %1822 = vmatpush1.msra.mxu0 %v1806
        %1823 = vmatprep.subr.mxu0 0.0
        %1824 = vmatpush1.msra.mxu0 %v1807
        %1825 = vmatprep.subr.mxu0 0.0
        %1826 = vmatpush1.msra.mxu0 %v1808
        %1827 = vmatprep.subr.mxu0 0.0
        %1828 = vmatpush1.msra.mxu0 0.0
        %1829 = vmatprep.subr.mxu0 0.0
        %1830 = vmatpush1.msra.mxu0 0.0
        %1831 = vmatprep.subr.mxu0 0.0
        %1832 = vmatpush1.msra.mxu0 0.0
        %1833 = vmatprep.subr.mxu0 0.0
        %1834 = vmatpush1.msra.mxu0 0.0
        %1835 = vmatprep.subr.mxu0 0.0
        %1836 = vmatpush1.msra.mxu0 0.0
        %1837 = vmatprep.subr.mxu0 0.0
        %1838 = vmatpush1.msra.mxu0 0.0
        %1839 = vmatprep.subr.mxu0 0.0
        %1840 = vmatpush1.msra.mxu0 0.0
        %1841 = vmatprep.subr.mxu0 0.0
        %1842 = vmatpush1.msra.mxu0 0.0
        %1843 = vmatprep.subr.mxu0 0.0
        %1844 = vmatpush1.msra.mxu0 0.0
        %1845 = vmatprep.subr.mxu0 0.0
        %1846 = vmatpush1.msra.mxu0 0.0
        %1847 = vmatprep.subr.mxu0 0.0
        %1848 = vmatpush1.msra.mxu0 0.0
        %1849 = vmatprep.subr.mxu0 0.0
        %1850 = vmatpush1.msra.mxu0 0.0
        %1851 = vmatprep.subr.mxu0 0.0
        %1852 = vmatpush1.msra.mxu0 0.0
        %1853 = vmatprep.subr.mxu0 0.0
        %1854 = vmatpush1.msra.mxu0 0.0
        %1855 = vmatprep.subr.mxu0 0.0
        %1856 = vmatpush1.msra.mxu0 0.0
        %1857 = vmatprep.subr.mxu0 0.0
        %1858 = vmatpush1.msra.mxu0 0.0
        %1859 = vmatprep.subr.mxu0 0.0
        %1860 = vmatpush1.msra.mxu0 0.0
        %1861 = vmatprep.subr.mxu0 0.0
        %1862 = vmatpush1.msra.mxu0 0.0
        %1863 = vmatprep.subr.mxu0 0.0
        %1864 = vmatpush1.msra.mxu0 0.0
        %1865 = vmatprep.subr.mxu0 0.0
        %1866 = vmatpush1.msra.mxu0 0.0
        %1867 = vmatprep.subr.mxu0 0.0
        %1868 = vmatpush1.msra.mxu0 0.0
        %1869 = vmatprep.subr.mxu0 0.0
        %1870 = vmatpush1.msra.mxu0 0.0
        %1871 = vmatprep.subr.mxu0 0.0
        %1872 = vmatpush1.msra.mxu0 0.0
        %1873 = vmatprep.subr.mxu0 0.0
        %1874 = vmatpush1.msra.mxu0 0.0
        %1875 = vmatprep.subr.mxu0 0.0
        %1876 = vmatpush1.msra.mxu0 0.0
        %1877 = vmatprep.subr.mxu0 0.0
        %1878 = vmatpush1.msra.mxu0 0.0
        %1879 = vmatprep.subr.mxu0 0.0
        %1880 = vmatpush1.msra.mxu0 0.0
        %1881 = vmatprep.subr.mxu0 0.0
        %1882 = vmatpush1.msra.mxu0 0.0
        %1883 = vmatprep.mubr.f32.mxu0 0.0
        %1884 = vmatmul.mubr.f32.gmra.mrb[0].mxu0 %v1817
        %v1885 = vpop.f32.mrb[0].mxu0
        %v1886 = vadd.f32 %v1814, %v1885
        %v1887 = vpop.f32.mrb[0].mxu0
        %1888 = vdwg.mxu0
        %v1889 = vmul.f32 %v1886, 0.5
        %v1890 = vmul.f32 %v1886, 0.044715
        %v1891 = vmul.f32 %v1890, %v1886
        %v1892 = vmul.f32 %v1891, %v1886
        %v1893 = vadd.f32 %v1886, %v1892
        %v1894 = vmul.f32 %v1893, 0.7978846
        %v1895 = vtanh.pop %v1894
        %v1896 = vadd.f32 %v1895, 1.0
        %v1897 = vmul.f32 %v1889, %v1896
        %v1898 = vld [vmem:[%s29] sm:$0xff]
        %v1899 = vld [vmem:[%s29 + $0x8] sm:$0xff]
        %v1900 = vld [vmem:[%s31] sm:$0x1]
        %v1902 = vlaneseq
        %v1903 = vshrl.u32 %v1902, 7
        %v1904 = vsub.s32 0, %v1903
        %v1905 = vrot.slane %v1900, %v1904
        %v1908 = vsel %vm984, %v1897, 0
        %1910 = vmatprep.subr.mxu0 0.0
        %1911 = vmatpush1.msra.mxu0 %v1898
        %1912 = vmatprep.subr.mxu0 0.0
        %1913 = vmatpush1.msra.mxu0 %v1899
        %1914 = vmatprep.subr.mxu0 0.0
        %1915 = vmatpush1.msra.mxu0 0.0
        %1916 = vmatprep.subr.mxu0 0.0
        %1917 = vmatpush1.msra.mxu0 0.0
        %1918 = vmatprep.subr.mxu0 0.0
        %1919 = vmatpush1.msra.mxu0 0.0
        %1920 = vmatprep.subr.mxu0 0.0
        %1921 = vmatpush1.msra.mxu0 0.0
        %1922 = vmatprep.subr.mxu0 0.0
        %1923 = vmatpush1.msra.mxu0 0.0
        %1924 = vmatprep.subr.mxu0 0.0
        %1925 = vmatpush1.msra.mxu0 0.0
        %1926 = vmatprep.subr.mxu0 0.0
        %1927 = vmatpush1.msra.mxu0 0.0
        %1928 = vmatprep.subr.mxu0 0.0
        %1929 = vmatpush1.msra.mxu0 0.0
        %1930 = vmatprep.subr.mxu0 0.0
        %1931 = vmatpush1.msra.mxu0 0.0
        %1932 = vmatprep.subr.mxu0 0.0
        %1933 = vmatpush1.msra.mxu0 0.0
        %1934 = vmatprep.subr.mxu0 0.0
        %1935 = vmatpush1.msra.mxu0 0.0
        %1936 = vmatprep.subr.mxu0 0.0
        %1937 = vmatpush1.msra.mxu0 0.0
        %1938 = vmatprep.subr.mxu0 0.0
        %1939 = vmatpush1.msra.mxu0 0.0
        %1940 = vmatprep.subr.mxu0 0.0
        %1941 = vmatpush1.msra.mxu0 0.0
        %1942 = vmatprep.subr.mxu0 0.0
        %1943 = vmatpush1.msra.mxu0 0.0
        %1944 = vmatprep.subr.mxu0 0.0
        %1945 = vmatpush1.msra.mxu0 0.0
        %1946 = vmatprep.subr.mxu0 0.0
        %1947 = vmatpush1.msra.mxu0 0.0
        %1948 = vmatprep.subr.mxu0 0.0
        %1949 = vmatpush1.msra.mxu0 0.0
        %1950 = vmatprep.subr.mxu0 0.0
        %1951 = vmatpush1.msra.mxu0 0.0
        %1952 = vmatprep.subr.mxu0 0.0
        %1953 = vmatpush1.msra.mxu0 0.0
        %1954 = vmatprep.subr.mxu0 0.0
        %1955 = vmatpush1.msra.mxu0 0.0
        %1956 = vmatprep.subr.mxu0 0.0
        %1957 = vmatpush1.msra.mxu0 0.0
        %1958 = vmatprep.subr.mxu0 0.0
        %1959 = vmatpush1.msra.mxu0 0.0
        %1960 = vmatprep.subr.mxu0 0.0
        %1961 = vmatpush1.msra.mxu0 0.0
        %1962 = vmatprep.subr.mxu0 0.0
        %1963 = vmatpush1.msra.mxu0 0.0
        %1964 = vmatprep.subr.mxu0 0.0
        %1965 = vmatpush1.msra.mxu0 0.0
        %1966 = vmatprep.subr.mxu0 0.0
        %1967 = vmatpush1.msra.mxu0 0.0
        %1968 = vmatprep.subr.mxu0 0.0
        %1969 = vmatpush1.msra.mxu0 0.0
        %1970 = vmatprep.subr.mxu0 0.0
        %1971 = vmatpush1.msra.mxu0 0.0
        %1972 = vmatprep.subr.mxu0 0.0
        %1973 = vmatpush1.msra.mxu0 0.0
        %1974 = vmatprep.mubr.f32.mxu0 0.0
        %1975 = vmatmul.mubr.f32.gmra.mrb[0].mxu0 %v1908
        %v1976 = vpop.f32.mrb[0].mxu0
        %v1977 = vadd.f32 %v1905, %v1976
        %v1978 = vpop.f32.mrb[0].mxu0
        %1979 = vdwg.mxu0
        %v1980 = vadd.f32 %v1977, %v1804
        %v1981 = vld [vmem:[%s33] sm:$0x1]
        %v1982 = vld [vmem:[%s35] sm:$0x1]
        %v1983 = vsel %vm1776, %v1980, 0.0
        %1984 = vadd.xlane.f32.xlu0 %v1983
        %v1985 = vpop.xlane.xlu0 %1984
        %v1986 = vmul.f32 %v1985, %v1780
        %v1987 = vsub.f32 %v1980, %v1986
        %v1988 = vmul.f32 %v1987, %v1987
        %v1989 = vsel %vm1776, %v1988, 0.0
        %1990 = vadd.xlane.f32.xlu0 %v1989
        %v1991 = vpop.xlane.xlu0 %1990
        %v1992 = vmul.f32 %v1991, %v1780
        %v1993 = vadd.f32 %v1992, 1e-06
        %v1994 = vrsqrt.pop %v1993
        %v1995 = vmul.f32 %v1987, %v1994
        %v1997 = vlaneseq
        %v1998 = vshrl.u32 %v1997, 7
        %v1999 = vsub.s32 0, %v1998
        %v2000 = vrot.slane %v1981, %v1999
        %v2002 = vmul.f32 %v1995, %v2000
        %v2004 = vlaneseq
        %v2005 = vshrl.u32 %v2004, 7
        %v2006 = vsub.s32 0, %v2005
        %v2007 = vrot.slane %v1982, %v2006
        %v2009 = vadd.f32 %v2002, %v2007
        %2010 = vst.msk [vmem:[#allocation2] sm:$0xff] %vm1075, %v1060
        %2011 = vst.msk [vmem:[#allocation2 + $0x8] sm:$0xff] %vm1075, %v1061
        %2012 = vst.msk [vmem:[#allocation2 + $0x10] sm:$0xff] %vm1075, %v1062
        %2013 = vst.msk [vmem:[#allocation2 + $0x18] sm:$0xf] %vm1776, %v1063
        %2014 = vst.msk [vmem:[#allocation2 + $0x1c] sm:$0xf] %vm1776, %v2009
        %v2015 = vld [vmem:[#allocation2] sm:$0xff]
        %v2016 = vld [vmem:[#allocation2 + $0x8] sm:$0xff]
        %v2017 = vld [vmem:[#allocation2 + $0x10] sm:$0xff]
        %v2018 = vld [vmem:[#allocation2 + $0x18] sm:$0xff]
        %v2019 = vld [vmem:[%s11] sm:$0xf]
        %v2020 = vld [vmem:[%s37] sm:$0xff]
        %v2021 = vld [vmem:[%s37 + $0x8] sm:$0xff]
        %v2022 = vld [vmem:[%s37 + $0x10] sm:$0xff]
        %v2023 = vld [vmem:[%s37 + $0x18] sm:$0xff]
        %v2024 = vld [vmem:[%s39] sm:$0xff]
        %v2025 = vld [vmem:[%s39 + $0x8] sm:$0xff]
        %v2026 = vld [vmem:[%s39 + $0x10] sm:$0xff]
        %v2027 = vld [vmem:[%s39 + $0x18] sm:$0xff]
        %v2028 = vld [vmem:[%s41] sm:$0xff]
        %v2029 = vld [vmem:[%s41 + $0x8] sm:$0xff]
        %v2030 = vld [vmem:[%s43] sm:$0x1]
        %v2032 = vsel %vm1075, %v2009, 0
        %2034 = vmatprep.subr.mxu0 0.0
        %2035 = vmatpush1.msra.mxu0 %v2020
        %2036 = vmatprep.subr.mxu0 0.0
        %2037 = vmatpush1.msra.mxu0 %v2021
        %2038 = vmatprep.subr.mxu0 0.0
        %2039 = vmatpush1.msra.mxu0 %v2022
        %2040 = vmatprep.subr.mxu0 0.0
        %2041 = vmatpush1.msra.mxu0 %v2023
        %2042 = vmatprep.subr.mxu0 0.0
        %2043 = vmatpush1.msra.mxu0 0.0
        %2044 = vmatprep.subr.mxu0 0.0
        %2045 = vmatpush1.msra.mxu0 0.0
        %2046 = vmatprep.subr.mxu0 0.0
        %2047 = vmatpush1.msra.mxu0 0.0
        %2048 = vmatprep.subr.mxu0 0.0
        %2049 = vmatpush1.msra.mxu0 0.0
        %2050 = vmatprep.subr.mxu0 0.0
        %2051 = vmatpush1.msra.mxu0 0.0
        %2052 = vmatprep.subr.mxu0 0.0
        %2053 = vmatpush1.msra.mxu0 0.0
        %2054 = vmatprep.subr.mxu0 0.0
        %2055 = vmatpush1.msra.mxu0 0.0
        %2056 = vmatprep.subr.mxu0 0.0
        %2057 = vmatpush1.msra.mxu0 0.0
        %2058 = vmatprep.subr.mxu0 0.0
        %2059 = vmatpush1.msra.mxu0 0.0
        %2060 = vmatprep.subr.mxu0 0.0
        %2061 = vmatpush1.msra.mxu0 0.0
        %2062 = vmatprep.subr.mxu0 0.0
        %2063 = vmatpush1.msra.mxu0 0.0
        %2064 = vmatprep.subr.mxu0 0.0
        %2065 = vmatpush1.msra.mxu0 0.0
        %2066 = vmatprep.subr.mxu0 0.0
        %2067 = vmatpush1.msra.mxu0 0.0
        %2068 = vmatprep.subr.mxu0 0.0
        %2069 = vmatpush1.msra.mxu0 0.0
        %2070 = vmatprep.subr.mxu0 0.0
        %2071 = vmatpush1.msra.mxu0 0.0
        %2072 = vmatprep.subr.mxu0 0.0
        %2073 = vmatpush1.msra.mxu0 0.0
        %2074 = vmatprep.subr.mxu0 0.0
        %2075 = vmatpush1.msra.mxu0 0.0
        %2076 = vmatprep.subr.mxu0 0.0
        %2077 = vmatpush1.msra.mxu0 0.0
        %2078 = vmatprep.subr.mxu0 0.0
        %2079 = vmatpush1.msra.mxu0 0.0
        %2080 = vmatprep.subr.mxu0 0.0
        %2081 = vmatpush1.msra.mxu0 0.0
        %2082 = vmatprep.subr.mxu0 0.0
        %2083 = vmatpush1.msra.mxu0 0.0
        %2084 = vmatprep.subr.mxu0 0.0
        %2085 = vmatpush1.msra.mxu0 0.0
        %2086 = vmatprep.subr.mxu0 0.0
        %2087 = vmatpush1.msra.mxu0 0.0
        %2088 = vmatprep.subr.mxu0 0.0
        %2089 = vmatpush1.msra.mxu0 0.0
        %2090 = vmatprep.subr.mxu0 0.0
        %2091 = vmatpush1.msra.mxu0 0.0
        %2092 = vmatprep.subr.mxu0 0.0
        %2093 = vmatpush1.msra.mxu0 0.0
        %2094 = vmatprep.subr.mxu0 0.0
        %2095 = vmatpush1.msra.mxu0 0.0
        %2096 = vmatprep.subr.mxu0 0.0
        %2097 = vmatpush1.msra.mxu0 0.0
        %2098 = vmatprep.mubr.f32.mxu0 0.0
        %2099 = vmatmul.mubr.f32.gmra.mrb[0].mxu0 %v2032
        %v2100 = vpop.f32.mrb[0].mxu0
        %v2101 = vadd.f32 0.0, %v2100
        %v2102 = vpop.f32.mrb[0].mxu0
        %2103 = vdwg.mxu0
        %v2105 = vsel %vm1075, %v2015, 0
        %v2108 = vsel %vm1075, %v2016, 0
        %v2111 = vsel %vm1075, %v2017, 0
        %v2114 = vsel %vm1075, %v2018, 0
        %2116 = vmatprep.subr.mxu0 0.0
        %2117 = vmatpush1.msra.mxu0 %v2024
        %2118 = vmatprep.subr.mxu0 0.0
        %2119 = vmatpush1.msra.mxu0 %v2025
        %2120 = vmatprep.subr.mxu0 0.0
        %2121 = vmatpush1.msra.mxu0 %v2026
        %2122 = vmatprep.subr.mxu0 0.0
        %2123 = vmatpush1.msra.mxu0 %v2027
        %2124 = vmatprep.subr.mxu0 0.0
        %2125 = vmatpush1.msra.mxu0 0.0
        %2126 = vmatprep.subr.mxu0 0.0
        %2127 = vmatpush1.msra.mxu0 0.0
        %2128 = vmatprep.subr.mxu0 0.0
        %2129 = vmatpush1.msra.mxu0 0.0
        %2130 = vmatprep.subr.mxu0 0.0
        %2131 = vmatpush1.msra.mxu0 0.0
        %2132 = vmatprep.subr.mxu0 0.0
        %2133 = vmatpush1.msra.mxu0 0.0
        %2134 = vmatprep.subr.mxu0 0.0
        %2135 = vmatpush1.msra.mxu0 0.0
        %2136 = vmatprep.subr.mxu0 0.0
        %2137 = vmatpush1.msra.mxu0 0.0
        %2138 = vmatprep.subr.mxu0 0.0
        %2139 = vmatpush1.msra.mxu0 0.0
        %2140 = vmatprep.subr.mxu0 0.0
        %2141 = vmatpush1.msra.mxu0 0.0
        %2142 = vmatprep.subr.mxu0 0.0
        %2143 = vmatpush1.msra.mxu0 0.0
        %2144 = vmatprep.subr.mxu0 0.0
        %2145 = vmatpush1.msra.mxu0 0.0
        %2146 = vmatprep.subr.mxu0 0.0
        %2147 = vmatpush1.msra.mxu0 0.0
        %2148 = vmatprep.subr.mxu0 0.0
        %2149 = vmatpush1.msra.mxu0 0.0
        %2150 = vmatprep.subr.mxu0 0.0
        %2151 = vmatpush1.msra.mxu0 0.0
        %2152 = vmatprep.subr.mxu0 0.0
        %2153 = vmatpush1.msra.mxu0 0.0
        %2154 = vmatprep.subr.mxu0 0.0
        %2155 = vmatpush1.msra.mxu0 0.0
        %2156 = vmatprep.subr.mxu0 0.0
        %2157 = vmatpush1.msra.mxu0 0.0
        %2158 = vmatprep.subr.mxu0 0.0
        %2159 = vmatpush1.msra.mxu0 0.0
        %2160 = vmatprep.subr.mxu0 0.0
        %2161 = vmatpush1.msra.mxu0 0.0
        %2162 = vmatprep.subr.mxu0 0.0
        %2163 = vmatpush1.msra.mxu0 0.0
        %2164 = vmatprep.subr.mxu0 0.0
        %2165 = vmatpush1.msra.mxu0 0.0
        %2166 = vmatprep.subr.mxu0 0.0
        %2167 = vmatpush1.msra.mxu0 0.0
        %2168 = vmatprep.subr.mxu0 0.0
        %2169 = vmatpush1.msra.mxu0 0.0
        %2170 = vmatprep.subr.mxu0 0.0
        %2171 = vmatpush1.msra.mxu0 0.0
        %2172 = vmatprep.subr.mxu0 0.0
        %2173 = vmatpush1.msra.mxu0 0.0
        %2174 = vmatprep.subr.mxu0 0.0
        %2175 = vmatpush1.msra.mxu0 0.0
        %2176 = vmatprep.subr.mxu0 0.0
        %2177 = vmatpush1.msra.mxu0 0.0
        %2178 = vmatprep.subr.mxu0 0.0
        %2179 = vmatpush1.msra.mxu0 0.0
        %2180 = vmatprep.mubr.f32.mxu0 0.0
        %2181 = vmatmul.mubr.f32.gmra.mrb[0].mxu0 %v2105
        %v2182 = vpop.f32.mrb[0].mxu0
        %v2183 = vadd.f32 0.0, %v2182
        %v2184 = vpop.f32.mrb[0].mxu0
        %2185 = vmatprep.mubr.f32.mxu0 0.0
        %2186 = vmatmul.mubr.f32.gmra.mrb[0].mxu0 %v2108
        %v2187 = vpop.f32.mrb[0].mxu0
        %v2188 = vadd.f32 0.0, %v2187
        %v2189 = vpop.f32.mrb[0].mxu0
        %2190 = vmatprep.mubr.f32.mxu0 0.0
        %2191 = vmatmul.mubr.f32.gmra.mrb[0].mxu0 %v2111
        %v2192 = vpop.f32.mrb[0].mxu0
        %v2193 = vadd.f32 0.0, %v2192
        %v2194 = vpop.f32.mrb[0].mxu0
        %2195 = vmatprep.mubr.f32.mxu0 0.0
        %2196 = vmatmul.mubr.f32.gmra.mrb[0].mxu0 %v2114
        %v2197 = vpop.f32.mrb[0].mxu0
        %v2198 = vadd.f32 0.0, %v2197
        %v2199 = vpop.f32.mrb[0].mxu0
        %2200 = vdwg.mxu0
        %v2202 = vlaneseq
        %v2203 = vshrl.u32 %v2202, 7
        %v2204 = vsub.s32 0, %v2203
        %v2205 = vrot.slane %v2030, %v2204
        %v2207 = vadd.f32 %v2009, %v2205
        %v2209 = vsel %vm1253, %v2101, 0
        %v2212 = vsel %vm1253, %v2183, 0
        %v2215 = vsel %vm1253, %v2188, 0
        %v2218 = vsel %vm1253, %v2193, 0
        %v2221 = vsel %vm1253, %v2198, 0
        %2223 = vmatprep.subr.mxu0 0.0
        %2224 = vmatpush1.xpose.msra.mxu0 %v2212
        %2225 = vmatprep.subr.mxu0 0.0
        %2226 = vmatpush1.xpose.msra.mxu0 %v2215
        %2227 = vmatprep.subr.mxu0 0.0
        %2228 = vmatpush1.xpose.msra.mxu0 %v2218
        %2229 = vmatprep.subr.mxu0 0.0
        %2230 = vmatpush1.xpose.msra.mxu0 %v2221
        %2231 = vmatprep.subr.mxu0 0.0
        %2232 = vmatpush1.xpose.msra.mxu0 0.0
        %2233 = vmatprep.subr.mxu0 0.0
        %2234 = vmatpush1.xpose.msra.mxu0 0.0
        %2235 = vmatprep.subr.mxu0 0.0
        %2236 = vmatpush1.xpose.msra.mxu0 0.0
        %2237 = vmatprep.subr.mxu0 0.0
        %2238 = vmatpush1.xpose.msra.mxu0 0.0
        %2239 = vmatprep.subr.mxu0 0.0
        %2240 = vmatpush1.xpose.msra.mxu0 0.0
        %2241 = vmatprep.subr.mxu0 0.0
        %2242 = vmatpush1.xpose.msra.mxu0 0.0
        %2243 = vmatprep.subr.mxu0 0.0
        %2244 = vmatpush1.xpose.msra.mxu0 0.0
        %2245 = vmatprep.subr.mxu0 0.0
        %2246 = vmatpush1.xpose.msra.mxu0 0.0
        %2247 = vmatprep.subr.mxu0 0.0
        %2248 = vmatpush1.xpose.msra.mxu0 0.0
        %2249 = vmatprep.subr.mxu0 0.0
        %2250 = vmatpush1.xpose.msra.mxu0 0.0
        %2251 = vmatprep.subr.mxu0 0.0
        %2252 = vmatpush1.xpose.msra.mxu0 0.0
        %2253 = vmatprep.subr.mxu0 0.0
        %2254 = vmatpush1.xpose.msra.mxu0 0.0
        %2255 = vmatprep.subr.mxu0 0.0
        %2256 = vmatpush1.xpose.msra.mxu0 0.0
        %2257 = vmatprep.subr.mxu0 0.0
        %2258 = vmatpush1.xpose.msra.mxu0 0.0
        %2259 = vmatprep.subr.mxu0 0.0
        %2260 = vmatpush1.xpose.msra.mxu0 0.0
        %2261 = vmatprep.subr.mxu0 0.0
        %2262 = vmatpush1.xpose.msra.mxu0 0.0
        %2263 = vmatprep.subr.mxu0 0.0
        %2264 = vmatpush1.xpose.msra.mxu0 0.0
        %2265 = vmatprep.subr.mxu0 0.0
        %2266 = vmatpush1.xpose.msra.mxu0 0.0
        %2267 = vmatprep.subr.mxu0 0.0
        %2268 = vmatpush1.xpose.msra.mxu0 0.0
        %2269 = vmatprep.subr.mxu0 0.0
        %2270 = vmatpush1.xpose.msra.mxu0 0.0
        %2271 = vmatprep.subr.mxu0 0.0
        %2272 = vmatpush1.xpose.msra.mxu0 0.0
        %2273 = vmatprep.subr.mxu0 0.0
        %2274 = vmatpush1.xpose.msra.mxu0 0.0
        %2275 = vmatprep.subr.mxu0 0.0
        %2276 = vmatpush1.xpose.msra.mxu0 0.0
        %2277 = vmatprep.subr.mxu0 0.0
        %2278 = vmatpush1.xpose.msra.mxu0 0.0
        %2279 = vmatprep.subr.mxu0 0.0
        %2280 = vmatpush1.xpose.msra.mxu0 0.0
        %2281 = vmatprep.subr.mxu0 0.0
        %2282 = vmatpush1.xpose.msra.mxu0 0.0
        %2283 = vmatprep.subr.mxu0 0.0
        %2284 = vmatpush1.xpose.msra.mxu0 0.0
        %2285 = vmatprep.subr.mxu0 0.0
        %2286 = vmatpush1.xpose.msra.mxu0 0.0
        %2287 = vmatprep.mubr.f32.mxu0 0.0
        %2288 = vmatmul.mubr.f32.gmra.mrb[0].mxu0 %v2209
        %v2289 = vpop.f32.mrb[0].mxu0
        %v2290 = vadd.f32 %v2019, %v2289
        %v2291 = vpop.f32.mrb[0].mxu0
        %2292 = vdwg.mxu0
        %v2293 = vsel %vm1776, %v2290, -inf
        %2294 = vmax.xlane.f32.xlu0 %v2293
        %v2295 = vpop.xlane.xlu0 %2294
        %v2296 = vsub.f32 %v2290, %v2295
        %v2297 = vmul.f32 %v2296, 1.442695
        %v2298 = vpow.pop %v2297
        %v2299 = vsel %vm1776, %v2298, 0.0
        %2300 = vadd.xlane.f32.xlu0 %v2299
        %v2301 = vpop.xlane.xlu0 %2300
        %v2302 = vrcp.pop %v2301
        %v2303 = vmul.f32 %v2298, %v2302
        %2304 = vrot.lane.b32.xlu0 %v2183, 112
        %v2305 = vpop.permute.xlu0 %2304
        %2306 = vrot.lane.b32.xlu0 %v2188, 112
        %v2307 = vpop.permute.xlu0 %2306
        %2308 = vrot.lane.b32.xlu0 %v2193, 112
        %v2309 = vpop.permute.xlu0 %2308
        %2310 = vrot.lane.b32.xlu0 %v2198, 112
        %v2311 = vpop.permute.xlu0 %2310
        %v2317 = vsel %vm1075, %v2303, 0
        %2319 = vmatprep.subr.mxu0 0.0
        %2320 = vmatpush1.msra.mxu0 %v2305
        %2321 = vmatprep.subr.mxu0 0.0
        %2322 = vmatpush1.msra.mxu0 %v2307
        %2323 = vmatprep.subr.mxu0 0.0
        %2324 = vmatpush1.msra.mxu0 %v2309
        %2325 = vmatprep.subr.mxu0 0.0
        %2326 = vmatpush1.msra.mxu0 %v2311
        %2327 = vmatprep.subr.mxu0 0.0
        %2328 = vmatpush1.msra.mxu0 0.0
        %2329 = vmatprep.subr.mxu0 0.0
        %2330 = vmatpush1.msra.mxu0 0.0
        %2331 = vmatprep.subr.mxu0 0.0
        %2332 = vmatpush1.msra.mxu0 0.0
        %2333 = vmatprep.subr.mxu0 0.0
        %2334 = vmatpush1.msra.mxu0 0.0
        %2335 = vmatprep.subr.mxu0 0.0
        %2336 = vmatpush1.msra.mxu0 0.0
        %2337 = vmatprep.subr.mxu0 0.0
        %2338 = vmatpush1.msra.mxu0 0.0
        %2339 = vmatprep.subr.mxu0 0.0
        %2340 = vmatpush1.msra.mxu0 0.0
        %2341 = vmatprep.subr.mxu0 0.0
        %2342 = vmatpush1.msra.mxu0 0.0
        %2343 = vmatprep.subr.mxu0 0.0
        %2344 = vmatpush1.msra.mxu0 0.0
        %2345 = vmatprep.subr.mxu0 0.0
        %2346 = vmatpush1.msra.mxu0 0.0
        %2347 = vmatprep.subr.mxu0 0.0
        %2348 = vmatpush1.msra.mxu0 0.0
        %2349 = vmatprep.subr.mxu0 0.0
        %2350 = vmatpush1.msra.mxu0 0.0
        %2351 = vmatprep.subr.mxu0 0.0
        %2352 = vmatpush1.msra.mxu0 0.0
        %2353 = vmatprep.subr.mxu0 0.0
        %2354 = vmatpush1.msra.mxu0 0.0
        %2355 = vmatprep.subr.mxu0 0.0
        %2356 = vmatpush1.msra.mxu0 0.0
        %2357 = vmatprep.subr.mxu0 0.0
        %2358 = vmatpush1.msra.mxu0 0.0
        %2359 = vmatprep.subr.mxu0 0.0
        %2360 = vmatpush1.msra.mxu0 0.0
        %2361 = vmatprep.subr.mxu0 0.0
        %2362 = vmatpush1.msra.mxu0 0.0
        %2363 = vmatprep.subr.mxu0 0.0
        %2364 = vmatpush1.msra.mxu0 0.0
        %2365 = vmatprep.subr.mxu0 0.0
        %2366 = vmatpush1.msra.mxu0 0.0
        %2367 = vmatprep.subr.mxu0 0.0
        %2368 = vmatpush1.msra.mxu0 0.0
        %2369 = vmatprep.subr.mxu0 0.0
        %2370 = vmatpush1.msra.mxu0 0.0
        %2371 = vmatprep.subr.mxu0 0.0
        %2372 = vmatpush1.msra.mxu0 0.0
        %2373 = vmatprep.subr.mxu0 0.0
        %2374 = vmatpush1.msra.mxu0 0.0
        %2375 = vmatprep.subr.mxu0 0.0
        %2376 = vmatpush1.msra.mxu0 0.0
        %2377 = vmatprep.subr.mxu0 0.0
        %2378 = vmatpush1.msra.mxu0 0.0
        %2379 = vmatprep.subr.mxu0 0.0
        %2380 = vmatpush1.msra.mxu0 0.0
        %2381 = vmatprep.subr.mxu0 0.0
        %2382 = vmatpush1.msra.mxu0 0.0
        %2383 = vmatprep.mubr.f32.mxu0 0.0
        %2384 = vmatmul.mubr.f32.gmra.mrb[0].mxu0 %v2317
        %v2385 = vpop.f32.mrb[0].mxu0
        %v2386 = vadd.f32 0.0, %v2385
        %v2387 = vpop.f32.mrb[0].mxu0
        %2388 = vdwg.mxu0
        %v2390 = vsel %vm1253, %v2386, 0
        %2392 = vmatprep.subr.mxu0 0.0
        %2393 = vmatpush1.msra.mxu0 %v2028
        %2394 = vmatprep.subr.mxu0 0.0
        %2395 = vmatpush1.msra.mxu0 0.0
        %2396 = vmatprep.subr.mxu0 0.0
        %2397 = vmatpush1.msra.mxu0 0.0
        %2398 = vmatprep.subr.mxu0 0.0
        %2399 = vmatpush1.msra.mxu0 0.0
        %2400 = vmatprep.subr.mxu0 0.0
        %2401 = vmatpush1.msra.mxu0 0.0
        %2402 = vmatprep.subr.mxu0 0.0
        %2403 = vmatpush1.msra.mxu0 0.0
        %2404 = vmatprep.subr.mxu0 0.0
        %2405 = vmatpush1.msra.mxu0 0.0
        %2406 = vmatprep.subr.mxu0 0.0
        %2407 = vmatpush1.msra.mxu0 0.0
        %2408 = vmatprep.subr.mxu0 0.0
        %2409 = vmatpush1.msra.mxu0 0.0
        %2410 = vmatprep.subr.mxu0 0.0
        %2411 = vmatpush1.msra.mxu0 0.0
        %2412 = vmatprep.subr.mxu0 0.0
        %2413 = vmatpush1.msra.mxu0 0.0
        %2414 = vmatprep.subr.mxu0 0.0
        %2415 = vmatpush1.msra.mxu0 0.0
        %2416 = vmatprep.subr.mxu0 0.0
        %2417 = vmatpush1.msra.mxu0 0.0
        %2418 = vmatprep.subr.mxu0 0.0
        %2419 = vmatpush1.msra.mxu0 0.0
        %2420 = vmatprep.subr.mxu0 0.0
        %2421 = vmatpush1.msra.mxu0 0.0
        %2422 = vmatprep.subr.mxu0 0.0
        %2423 = vmatpush1.msra.mxu0 0.0
        %2424 = vmatprep.subr.mxu0 0.0
        %2425 = vmatpush1.msra.mxu0 0.0
        %2426 = vmatprep.subr.mxu0 0.0
        %2427 = vmatpush1.msra.mxu0 0.0
        %2428 = vmatprep.subr.mxu0 0.0
        %2429 = vmatpush1.msra.mxu0 0.0
        %2430 = vmatprep.subr.mxu0 0.0
        %2431 = vmatpush1.msra.mxu0 0.0
        %2432 = vmatprep.subr.mxu0 0.0
        %2433 = vmatpush1.msra.mxu0 0.0
        %2434 = vmatprep.subr.mxu0 0.0
        %2435 = vmatpush1.msra.mxu0 0.0
        %2436 = vmatprep.subr.mxu0 0.0
        %2437 = vmatpush1.msra.mxu0 0.0
        %2438 = vmatprep.subr.mxu0 0.0
        %2439 = vmatpush1.msra.mxu0 0.0
        %2440 = vmatprep.subr.mxu0 0.0
        %2441 = vmatpush1.msra.mxu0 0.0
        %2442 = vmatprep.subr.mxu0 0.0
        %2443 = vmatpush1.msra.mxu0 0.0
        %2444 = vmatprep.subr.mxu0 0.0
        %2445 = vmatpush1.msra.mxu0 0.0
        %2446 = vmatprep.subr.mxu0 0.0
        %2447 = vmatpush1.msra.mxu0 0.0
        %2448 = vmatprep.subr.mxu0 0.0
        %2449 = vmatpush1.msra.mxu0 0.0
        %2450 = vmatprep.subr.mxu0 0.0
        %2451 = vmatpush1.msra.mxu0 0.0
        %2452 = vmatprep.subr.mxu0 0.0
        %2453 = vmatpush1.msra.mxu0 0.0
        %2454 = vmatprep.subr.mxu0 0.0
        %2455 = vmatpush1.msra.mxu0 0.0
        %2456 = vmatprep.mubr.f32.mxu0 0.0
        %2457 = vmatmul.mubr.f32.gmra.mrb[0].mxu0 %v2390
        %v2458 = vpop.f32.mrb[0].mxu0
        %v2459 = vadd.f32 0.0, %v2458
        %v2460 = vpop.f32.mrb[0].mxu0
        %2461 = vdwg.mxu0
        %v2462 = vadd.f32 %v2207, %v2459
        %2463 = vrot.lane.b32.xlu0 %v2101, 120
        %v2464 = vpop.permute.xlu0 %2463
        %2465 = vrot.lane.b32.xlu0 %v2183, 120
        %v2466 = vpop.permute.xlu0 %2465
        %2467 = vrot.lane.b32.xlu0 %v2188, 120
        %v2468 = vpop.permute.xlu0 %2467
        %2469 = vrot.lane.b32.xlu0 %v2193, 120
        %v2470 = vpop.permute.xlu0 %2469
        %2471 = vrot.lane.b32.xlu0 %v2198, 120
        %v2472 = vpop.permute.xlu0 %2471
        %v2473 = vsel %vm1253, %v2464, 0
        %v2475 = vsel %vm1253, %v2466, 0
        %v2477 = vsel %vm1253, %v2468, 0
        %v2479 = vsel %vm1253, %v2470, 0
        %v2481 = vsel %vm1253, %v2472, 0
        %2483 = vmatprep.subr.mxu0 0.0
        %2484 = vmatpush1.xpose.msra.mxu0 %v2475
        %2485 = vmatprep.subr.mxu0 0.0
        %2486 = vmatpush1.xpose.msra.mxu0 %v2477
        %2487 = vmatprep.subr.mxu0 0.0
        %2488 = vmatpush1.xpose.msra.mxu0 %v2479
        %2489 = vmatprep.subr.mxu0 0.0
        %2490 = vmatpush1.xpose.msra.mxu0 %v2481
        %2491 = vmatprep.subr.mxu0 0.0
        %2492 = vmatpush1.xpose.msra.mxu0 0.0
        %2493 = vmatprep.subr.mxu0 0.0
        %2494 = vmatpush1.xpose.msra.mxu0 0.0
        %2495 = vmatprep.subr.mxu0 0.0
        %2496 = vmatpush1.xpose.msra.mxu0 0.0
        %2497 = vmatprep.subr.mxu0 0.0
        %2498 = vmatpush1.xpose.msra.mxu0 0.0
        %2499 = vmatprep.subr.mxu0 0.0
        %2500 = vmatpush1.xpose.msra.mxu0 0.0
        %2501 = vmatprep.subr.mxu0 0.0
        %2502 = vmatpush1.xpose.msra.mxu0 0.0
        %2503 = vmatprep.subr.mxu0 0.0
        %2504 = vmatpush1.xpose.msra.mxu0 0.0
        %2505 = vmatprep.subr.mxu0 0.0
        %2506 = vmatpush1.xpose.msra.mxu0 0.0
        %2507 = vmatprep.subr.mxu0 0.0
        %2508 = vmatpush1.xpose.msra.mxu0 0.0
        %2509 = vmatprep.subr.mxu0 0.0
        %2510 = vmatpush1.xpose.msra.mxu0 0.0
        %2511 = vmatprep.subr.mxu0 0.0
        %2512 = vmatpush1.xpose.msra.mxu0 0.0
        %2513 = vmatprep.subr.mxu0 0.0
        %2514 = vmatpush1.xpose.msra.mxu0 0.0
        %2515 = vmatprep.subr.mxu0 0.0
        %2516 = vmatpush1.xpose.msra.mxu0 0.0
        %2517 = vmatprep.subr.mxu0 0.0
        %2518 = vmatpush1.xpose.msra.mxu0 0.0
        %2519 = vmatprep.subr.mxu0 0.0
        %2520 = vmatpush1.xpose.msra.mxu0 0.0
        %2521 = vmatprep.subr.mxu0 0.0
        %2522 = vmatpush1.xpose.msra.mxu0 0.0
        %2523 = vmatprep.subr.mxu0 0.0
        %2524 = vmatpush1.xpose.msra.mxu0 0.0
        %2525 = vmatprep.subr.mxu0 0.0
        %2526 = vmatpush1.xpose.msra.mxu0 0.0
        %2527 = vmatprep.subr.mxu0 0.0
        %2528 = vmatpush1.xpose.msra.mxu0 0.0
        %2529 = vmatprep.subr.mxu0 0.0
        %2530 = vmatpush1.xpose.msra.mxu0 0.0
        %2531 = vmatprep.subr.mxu0 0.0
        %2532 = vmatpush1.xpose.msra.mxu0 0.0
        %2533 = vmatprep.subr.mxu0 0.0
        %2534 = vmatpush1.xpose.msra.mxu0 0.0
        %2535 = vmatprep.subr.mxu0 0.0
        %2536 = vmatpush1.xpose.msra.mxu0 0.0
        %2537 = vmatprep.subr.mxu0 0.0
        %2538 = vmatpush1.xpose.msra.mxu0 0.0
        %2539 = vmatprep.subr.mxu0 0.0
        %2540 = vmatpush1.xpose.msra.mxu0 0.0
        %2541 = vmatprep.subr.mxu0 0.0
        %2542 = vmatpush1.xpose.msra.mxu0 0.0
        %2543 = vmatprep.subr.mxu0 0.0
        %2544 = vmatpush1.xpose.msra.mxu0 0.0
        %2545 = vmatprep.subr.mxu0 0.0
        %2546 = vmatpush1.xpose.msra.mxu0 0.0
        %2547 = vmatprep.mubr.f32.mxu0 0.0
        %2548 = vmatmul.mubr.f32.gmra.mrb[0].mxu0 %v2473
        %v2549 = vpop.f32.mrb[0].mxu0
        %v2550 = vadd.f32 %v2019, %v2549
        %v2551 = vpop.f32.mrb[0].mxu0
        %2552 = vdwg.mxu0
        %v2553 = vsel %vm1776, %v2550, -inf
        %2554 = vmax.xlane.f32.xlu0 %v2553
        %v2555 = vpop.xlane.xlu0 %2554
        %v2556 = vsub.f32 %v2550, %v2555
        %v2557 = vmul.f32 %v2556, 1.442695
        %v2558 = vpow.pop %v2557
        %v2559 = vsel %vm1776, %v2558, 0.0
        %2560 = vadd.xlane.f32.xlu0 %v2559
        %v2561 = vpop.xlane.xlu0 %2560
        %v2562 = vrcp.pop %v2561
        %v2563 = vmul.f32 %v2558, %v2562
        %2564 = vrot.lane.b32.xlu0 %v2183, 104
        %v2565 = vpop.permute.xlu0 %2564
        %2566 = vrot.lane.b32.xlu0 %v2188, 104
        %v2567 = vpop.permute.xlu0 %2566
        %2568 = vrot.lane.b32.xlu0 %v2193, 104
        %v2569 = vpop.permute.xlu0 %2568
        %2570 = vrot.lane.b32.xlu0 %v2198, 104
        %v2571 = vpop.permute.xlu0 %2570
        %v2577 = vsel %vm1075, %v2563, 0
        %2579 = vmatprep.subr.mxu0 0.0
        %2580 = vmatpush1.msra.mxu0 %v2565
        %2581 = vmatprep.subr.mxu0 0.0
        %2582 = vmatpush1.msra.mxu0 %v2567
        %2583 = vmatprep.subr.mxu0 0.0
        %2584 = vmatpush1.msra.mxu0 %v2569
        %2585 = vmatprep.subr.mxu0 0.0
        %2586 = vmatpush1.msra.mxu0 %v2571
        %2587 = vmatprep.subr.mxu0 0.0
        %2588 = vmatpush1.msra.mxu0 0.0
        %2589 = vmatprep.subr.mxu0 0.0
        %2590 = vmatpush1.msra.mxu0 0.0
        %2591 = vmatprep.subr.mxu0 0.0
        %2592 = vmatpush1.msra.mxu0 0.0
        %2593 = vmatprep.subr.mxu0 0.0
        %2594 = vmatpush1.msra.mxu0 0.0
        %2595 = vmatprep.subr.mxu0 0.0
        %2596 = vmatpush1.msra.mxu0 0.0
        %2597 = vmatprep.subr.mxu0 0.0
        %2598 = vmatpush1.msra.mxu0 0.0
        %2599 = vmatprep.subr.mxu0 0.0
        %2600 = vmatpush1.msra.mxu0 0.0
        %2601 = vmatprep.subr.mxu0 0.0
        %2602 = vmatpush1.msra.mxu0 0.0
        %2603 = vmatprep.subr.mxu0 0.0
        %2604 = vmatpush1.msra.mxu0 0.0
        %2605 = vmatprep.subr.mxu0 0.0
        %2606 = vmatpush1.msra.mxu0 0.0
        %2607 = vmatprep.subr.mxu0 0.0
        %2608 = vmatpush1.msra.mxu0 0.0
        %2609 = vmatprep.subr.mxu0 0.0
        %2610 = vmatpush1.msra.mxu0 0.0
        %2611 = vmatprep.subr.mxu0 0.0
        %2612 = vmatpush1.msra.mxu0 0.0
        %2613 = vmatprep.subr.mxu0 0.0
        %2614 = vmatpush1.msra.mxu0 0.0
        %2615 = vmatprep.subr.mxu0 0.0
        %2616 = vmatpush1.msra.mxu0 0.0
        %2617 = vmatprep.subr.mxu0 0.0
        %2618 = vmatpush1.msra.mxu0 0.0
        %2619 = vmatprep.subr.mxu0 0.0
        %2620 = vmatpush1.msra.mxu0 0.0
        %2621 = vmatprep.subr.mxu0 0.0
        %2622 = vmatpush1.msra.mxu0 0.0
        %2623 = vmatprep.subr.mxu0 0.0
        %2624 = vmatpush1.msra.mxu0 0.0
        %2625 = vmatprep.subr.mxu0 0.0
        %2626 = vmatpush1.msra.mxu0 0.0
        %2627 = vmatprep.subr.mxu0 0.0
        %2628 = vmatpush1.msra.mxu0 0.0
        %2629 = vmatprep.subr.mxu0 0.0
        %2630 = vmatpush1.msra.mxu0 0.0
        %2631 = vmatprep.subr.mxu0 0.0
        %2632 = vmatpush1.msra.mxu0 0.0
        %2633 = vmatprep.subr.mxu0 0.0
        %2634 = vmatpush1.msra.mxu0 0.0
        %2635 = vmatprep.subr.mxu0 0.0
        %2636 = vmatpush1.msra.mxu0 0.0
        %2637 = vmatprep.subr.mxu0 0.0
        %2638 = vmatpush1.msra.mxu0 0.0
        %2639 = vmatprep.subr.mxu0 0.0
        %2640 = vmatpush1.msra.mxu0 0.0
        %2641 = vmatprep.subr.mxu0 0.0
        %2642 = vmatpush1.msra.mxu0 0.0
        %2643 = vmatprep.mubr.f32.mxu0 0.0
        %2644 = vmatmul.mubr.f32.gmra.mrb[0].mxu0 %v2577
        %v2645 = vpop.f32.mrb[0].mxu0
        %v2646 = vadd.f32 0.0, %v2645
        %v2647 = vpop.f32.mrb[0].mxu0
        %2648 = vdwg.mxu0
        %v2650 = vsel %vm1253, %v2646, 0
        %2652 = vmatprep.subr.mxu0 0.0
        %2653 = vmatpush1.msra.mxu0 %v2029
        %2654 = vmatprep.subr.mxu0 0.0
        %2655 = vmatpush1.msra.mxu0 0.0
        %2656 = vmatprep.subr.mxu0 0.0
        %2657 = vmatpush1.msra.mxu0 0.0
        %2658 = vmatprep.subr.mxu0 0.0
        %2659 = vmatpush1.msra.mxu0 0.0
        %2660 = vmatprep.subr.mxu0 0.0
        %2661 = vmatpush1.msra.mxu0 0.0
        %2662 = vmatprep.subr.mxu0 0.0
        %2663 = vmatpush1.msra.mxu0 0.0
        %2664 = vmatprep.subr.mxu0 0.0
        %2665 = vmatpush1.msra.mxu0 0.0
        %2666 = vmatprep.subr.mxu0 0.0
        %2667 = vmatpush1.msra.mxu0 0.0
        %2668 = vmatprep.subr.mxu0 0.0
        %2669 = vmatpush1.msra.mxu0 0.0
        %2670 = vmatprep.subr.mxu0 0.0
        %2671 = vmatpush1.msra.mxu0 0.0
        %2672 = vmatprep.subr.mxu0 0.0
        %2673 = vmatpush1.msra.mxu0 0.0
        %2674 = vmatprep.subr.mxu0 0.0
        %2675 = vmatpush1.msra.mxu0 0.0
        %2676 = vmatprep.subr.mxu0 0.0
        %2677 = vmatpush1.msra.mxu0 0.0
        %2678 = vmatprep.subr.mxu0 0.0
        %2679 = vmatpush1.msra.mxu0 0.0
        %2680 = vmatprep.subr.mxu0 0.0
        %2681 = vmatpush1.msra.mxu0 0.0
        %2682 = vmatprep.subr.mxu0 0.0
        %2683 = vmatpush1.msra.mxu0 0.0
        %2684 = vmatprep.subr.mxu0 0.0
        %2685 = vmatpush1.msra.mxu0 0.0
        %2686 = vmatprep.subr.mxu0 0.0
        %2687 = vmatpush1.msra.mxu0 0.0
        %2688 = vmatprep.subr.mxu0 0.0
        %2689 = vmatpush1.msra.mxu0 0.0
        %2690 = vmatprep.subr.mxu0 0.0
        %2691 = vmatpush1.msra.mxu0 0.0
        %2692 = vmatprep.subr.mxu0 0.0
        %2693 = vmatpush1.msra.mxu0 0.0
        %2694 = vmatprep.subr.mxu0 0.0
        %2695 = vmatpush1.msra.mxu0 0.0
        %2696 = vmatprep.subr.mxu0 0.0
        %2697 = vmatpush1.msra.mxu0 0.0
        %2698 = vmatprep.subr.mxu0 0.0
        %2699 = vmatpush1.msra.mxu0 0.0
        %2700 = vmatprep.subr.mxu0 0.0
        %2701 = vmatpush1.msra.mxu0 0.0
        %2702 = vmatprep.subr.mxu0 0.0
        %2703 = vmatpush1.msra.mxu0 0.0
        %2704 = vmatprep.subr.mxu0 0.0
        %2705 = vmatpush1.msra.mxu0 0.0
        %2706 = vmatprep.subr.mxu0 0.0
        %2707 = vmatpush1.msra.mxu0 0.0
        %2708 = vmatprep.subr.mxu0 0.0
        %2709 = vmatpush1.msra.mxu0 0.0
        %2710 = vmatprep.subr.mxu0 0.0
        %2711 = vmatpush1.msra.mxu0 0.0
        %2712 = vmatprep.subr.mxu0 0.0
        %2713 = vmatpush1.msra.mxu0 0.0
        %2714 = vmatprep.subr.mxu0 0.0
        %2715 = vmatpush1.msra.mxu0 0.0
        %2716 = vmatprep.mubr.f32.mxu0 0.0
        %2717 = vmatmul.mubr.f32.gmra.mrb[0].mxu0 %v2650
        %v2718 = vpop.f32.mrb[0].mxu0
        %v2719 = vadd.f32 0.0, %v2718
        %v2720 = vpop.f32.mrb[0].mxu0
        %2721 = vdwg.mxu0
        %v2722 = vadd.f32 %v2462, %v2719
        %v2723 = vld [vmem:[%s45] sm:$0x1]
        %v2724 = vld [vmem:[%s47] sm:$0x1]
        %v2725 = vsel %vm1776, %v2722, 0.0
        %2726 = vadd.xlane.f32.xlu0 %v2725
        %v2727 = vpop.xlane.xlu0 %2726
        %v2728 = vmul.f32 %v2727, %v1780
        %v2729 = vsub.f32 %v2722, %v2728
        %v2730 = vmul.f32 %v2729, %v2729
        %v2731 = vsel %vm1776, %v2730, 0.0
        %2732 = vadd.xlane.f32.xlu0 %v2731
        %v2733 = vpop.xlane.xlu0 %2732
        %v2734 = vmul.f32 %v2733, %v1780
        %v2735 = vadd.f32 %v2734, 1e-06
        %v2736 = vrsqrt.pop %v2735
        %v2737 = vmul.f32 %v2729, %v2736
        %v2739 = vlaneseq
        %v2740 = vshrl.u32 %v2739, 7
        %v2741 = vsub.s32 0, %v2740
        %v2742 = vrot.slane %v2723, %v2741
        %v2744 = vmul.f32 %v2737, %v2742
        %v2746 = vlaneseq
        %v2747 = vshrl.u32 %v2746, 7
        %v2748 = vsub.s32 0, %v2747
        %v2749 = vrot.slane %v2724, %v2748
        %v2751 = vadd.f32 %v2744, %v2749
        %v2752 = vld [vmem:[%s49] sm:$0xff]
        %v2753 = vld [vmem:[%s49 + $0x8] sm:$0xff]
        %v2754 = vld [vmem:[%s49 + $0x10] sm:$0xff]
        %v2755 = vld [vmem:[%s49 + $0x18] sm:$0xff]
        %v2756 = vld [vmem:[%s51] sm:$0x1]
        %v2758 = vlaneseq
        %v2759 = vshrl.u32 %v2758, 7
        %v2760 = vsub.s32 0, %v2759
        %v2761 = vrot.slane %v2756, %v2760
        %v2764 = vsel %vm1075, %v2751, 0
        %2766 = vmatprep.subr.mxu0 0.0
        %2767 = vmatpush1.msra.mxu0 %v2752
        %2768 = vmatprep.subr.mxu0 0.0
        %2769 = vmatpush1.msra.mxu0 %v2753
        %2770 = vmatprep.subr.mxu0 0.0
        %2771 = vmatpush1.msra.mxu0 %v2754
        %2772 = vmatprep.subr.mxu0 0.0
        %2773 = vmatpush1.msra.mxu0 %v2755
        %2774 = vmatprep.subr.mxu0 0.0
        %2775 = vmatpush1.msra.mxu0 0.0
        %2776 = vmatprep.subr.mxu0 0.0
        %2777 = vmatpush1.msra.mxu0 0.0
        %2778 = vmatprep.subr.mxu0 0.0
        %2779 = vmatpush1.msra.mxu0 0.0
        %2780 = vmatprep.subr.mxu0 0.0
        %2781 = vmatpush1.msra.mxu0 0.0
        %2782 = vmatprep.subr.mxu0 0.0
        %2783 = vmatpush1.msra.mxu0 0.0
        %2784 = vmatprep.subr.mxu0 0.0
        %2785 = vmatpush1.msra.mxu0 0.0
        %2786 = vmatprep.subr.mxu0 0.0
        %2787 = vmatpush1.msra.mxu0 0.0
        %2788 = vmatprep.subr.mxu0 0.0
        %2789 = vmatpush1.msra.mxu0 0.0
        %2790 = vmatprep.subr.mxu0 0.0
        %2791 = vmatpush1.msra.mxu0 0.0
        %2792 = vmatprep.subr.mxu0 0.0
        %2793 = vmatpush1.msra.mxu0 0.0
        %2794 = vmatprep.subr.mxu0 0.0
        %2795 = vmatpush1.msra.mxu0 0.0
        %2796 = vmatprep.subr.mxu0 0.0
        %2797 = vmatpush1.msra.mxu0 0.0
        %2798 = vmatprep.subr.mxu0 0.0
        %2799 = vmatpush1.msra.mxu0 0.0
        %2800 = vmatprep.subr.mxu0 0.0
        %2801 = vmatpush1.msra.mxu0 0.0
        %2802 = vmatprep.subr.mxu0 0.0
        %2803 = vmatpush1.msra.mxu0 0.0
        %2804 = vmatprep.subr.mxu0 0.0
        %2805 = vmatpush1.msra.mxu0 0.0
        %2806 = vmatprep.subr.mxu0 0.0
        %2807 = vmatpush1.msra.mxu0 0.0
        %2808 = vmatprep.subr.mxu0 0.0
        %2809 = vmatpush1.msra.mxu0 0.0
        %2810 = vmatprep.subr.mxu0 0.0
        %2811 = vmatpush1.msra.mxu0 0.0
        %2812 = vmatprep.subr.mxu0 0.0
        %2813 = vmatpush1.msra.mxu0 0.0
        %2814 = vmatprep.subr.mxu0 0.0
        %2815 = vmatpush1.msra.mxu0 0.0
        %2816 = vmatprep.subr.mxu0 0.0
        %2817 = vmatpush1.msra.mxu0 0.0
        %2818 = vmatprep.subr.mxu0 0.0
        %2819 = vmatpush1.msra.mxu0 0.0
        %2820 = vmatprep.subr.mxu0 0.0
        %2821 = vmatpush1.msra.mxu0 0.0
        %2822 = vmatprep.subr.mxu0 0.0
        %2823 = vmatpush1.msra.mxu0 0.0
        %2824 = vmatprep.subr.mxu0 0.0
        %2825 = vmatpush1.msra.mxu0 0.0
        %2826 = vmatprep.subr.mxu0 0.0
        %2827 = vmatpush1.msra.mxu0 0.0
        %2828 = vmatprep.subr.mxu0 0.0
        %2829 = vmatpush1.msra.mxu0 0.0
        %2830 = vmatprep.mubr.f32.mxu0 0.0
        %2831 = vmatmul.mubr.f32.gmra.mrb[0].mxu0 %v2764
        %v2832 = vpop.f32.mrb[0].mxu0
        %v2833 = vadd.f32 %v2761, %v2832
        %v2834 = vpop.f32.mrb[0].mxu0
        %2835 = vdwg.mxu0
        %v2836 = vmul.f32 %v2833, 0.5
        %v2837 = vmul.f32 %v2833, 0.044715
        %v2838 = vmul.f32 %v2837, %v2833
        %v2839 = vmul.f32 %v2838, %v2833
        %v2840 = vadd.f32 %v2833, %v2839
        %v2841 = vmul.f32 %v2840, 0.7978846
        %v2842 = vtanh.pop %v2841
        %v2843 = vadd.f32 %v2842, 1.0
        %v2844 = vmul.f32 %v2836, %v2843
        %v2845 = vld [vmem:[%s53] sm:$0xff]
        %v2846 = vld [vmem:[%s53 + $0x8] sm:$0xff]
        %v2847 = vld [vmem:[%s55] sm:$0x1]
        %v2849 = vlaneseq
        %v2850 = vshrl.u32 %v2849, 7
        %v2851 = vsub.s32 0, %v2850
        %v2852 = vrot.slane %v2847, %v2851
        %v2855 = vsel %vm984, %v2844, 0
        %2857 = vmatprep.subr.mxu0 0.0
        %2858 = vmatpush1.msra.mxu0 %v2845
        %2859 = vmatprep.subr.mxu0 0.0
        %2860 = vmatpush1.msra.mxu0 %v2846
        %2861 = vmatprep.subr.mxu0 0.0
        %2862 = vmatpush1.msra.mxu0 0.0
        %2863 = vmatprep.subr.mxu0 0.0
        %2864 = vmatpush1.msra.mxu0 0.0
        %2865 = vmatprep.subr.mxu0 0.0
        %2866 = vmatpush1.msra.mxu0 0.0
        %2867 = vmatprep.subr.mxu0 0.0
        %2868 = vmatpush1.msra.mxu0 0.0
        %2869 = vmatprep.subr.mxu0 0.0
        %2870 = vmatpush1.msra.mxu0 0.0
        %2871 = vmatprep.subr.mxu0 0.0
        %2872 = vmatpush1.msra.mxu0 0.0
        %2873 = vmatprep.subr.mxu0 0.0
        %2874 = vmatpush1.msra.mxu0 0.0
        %2875 = vmatprep.subr.mxu0 0.0
        %2876 = vmatpush1.msra.mxu0 0.0
        %2877 = vmatprep.subr.mxu0 0.0
        %2878 = vmatpush1.msra.mxu0 0.0
        %2879 = vmatprep.subr.mxu0 0.0
        %2880 = vmatpush1.msra.mxu0 0.0
        %2881 = vmatprep.subr.mxu0 0.0
        %2882 = vmatpush1.msra.mxu0 0.0
        %2883 = vmatprep.subr.mxu0 0.0
        %2884 = vmatpush1.msra.mxu0 0.0
        %2885 = vmatprep.subr.mxu0 0.0
        %2886 = vmatpush1.msra.mxu0 0.0
        %2887 = vmatprep.subr.mxu0 0.0
        %2888 = vmatpush1.msra.mxu0 0.0
        %2889 = vmatprep.subr.mxu0 0.0
        %2890 = vmatpush1.msra.mxu0 0.0
        %2891 = vmatprep.subr.mxu0 0.0
        %2892 = vmatpush1.msra.mxu0 0.0
        %2893 = vmatprep.subr.mxu0 0.0
        %2894 = vmatpush1.msra.mxu0 0.0
        %2895 = vmatprep.subr.mxu0 0.0
        %2896 = vmatpush1.msra.mxu0 0.0
        %2897 = vmatprep.subr.mxu0 0.0
        %2898 = vmatpush1.msra.mxu0 0.0
        %2899 = vmatprep.subr.mxu0 0.0
        %2900 = vmatpush1.msra.mxu0 0.0
        %2901 = vmatprep.subr.mxu0 0.0
        %2902 = vmatpush1.msra.mxu0 0.0
        %2903 = vmatprep.subr.mxu0 0.0
        %2904 = vmatpush1.msra.mxu0 0.0
        %2905 = vmatprep.subr.mxu0 0.0
        %2906 = vmatpush1.msra.mxu0 0.0
        %2907 = vmatprep.subr.mxu0 0.0
        %2908 = vmatpush1.msra.mxu0 0.0
        %2909 = vmatprep.subr.mxu0 0.0
        %2910 = vmatpush1.msra.mxu0 0.0
        %2911 = vmatprep.subr.mxu0 0.0
        %2912 = vmatpush1.msra.mxu0 0.0
        %2913 = vmatprep.subr.mxu0 0.0
        %2914 = vmatpush1.msra.mxu0 0.0
        %2915 = vmatprep.subr.mxu0 0.0
        %2916 = vmatpush1.msra.mxu0 0.0
        %2917 = vmatprep.subr.mxu0 0.0
        %2918 = vmatpush1.msra.mxu0 0.0
        %2919 = vmatprep.subr.mxu0 0.0
        %2920 = vmatpush1.msra.mxu0 0.0
        %2921 = vmatprep.mubr.f32.mxu0 0.0
        %2922 = vmatmul.mubr.f32.gmra.mrb[0].mxu0 %v2855
        %v2923 = vpop.f32.mrb[0].mxu0
        %v2924 = vadd.f32 %v2852, %v2923
        %v2925 = vpop.f32.mrb[0].mxu0
        %2926 = vdwg.mxu0
        %v2927 = vadd.f32 %v2924, %v2751
        %v2928 = vld [vmem:[%s57] sm:$0x1]
        %v2929 = vld [vmem:[%s59] sm:$0x1]
        %v2930 = vsel %vm1776, %v2927, 0.0
        %2931 = vadd.xlane.f32.xlu0 %v2930
        %v2932 = vpop.xlane.xlu0 %2931
        %v2933 = vmul.f32 %v2932, %v1780
        %v2934 = vsub.f32 %v2927, %v2933
        %v2935 = vmul.f32 %v2934, %v2934
        %v2936 = vsel %vm1776, %v2935, 0.0
        %2937 = vadd.xlane.f32.xlu0 %v2936
        %v2938 = vpop.xlane.xlu0 %2937
        %v2939 = vmul.f32 %v2938, %v1780
        %v2940 = vadd.f32 %v2939, 1e-06
        %v2941 = vrsqrt.pop %v2940
        %v2942 = vmul.f32 %v2934, %v2941
        %v2944 = vlaneseq
        %v2945 = vshrl.u32 %v2944, 7
        %v2946 = vsub.s32 0, %v2945
        %v2947 = vrot.slane %v2928, %v2946
        %v2949 = vmul.f32 %v2942, %v2947
        %v2951 = vlaneseq
        %v2952 = vshrl.u32 %v2951, 7
        %v2953 = vsub.s32 0, %v2952
        %v2954 = vrot.slane %v2929, %v2953
        %v2956 = vadd.f32 %v2949, %v2954
        %v2957 = vld [vmem:[%s61] sm:$0xff]
        %v2958 = vld [vmem:[%s61 + $0x8] sm:$0xff]
        %v2959 = vld [vmem:[%s61 + $0x10] sm:$0xff]
        %v2960 = vld [vmem:[%s61 + $0x18] sm:$0xff]
        %v2962 = vsel %vm1075, %v2956, 0
        %2964 = vmatprep.subr.mxu0 0.0
        %2965 = vmatpush1.msra.mxu0 %v2957
        %2966 = vmatprep.subr.mxu0 0.0
        %2967 = vmatpush1.msra.mxu0 %v2958
        %2968 = vmatprep.subr.mxu0 0.0
        %2969 = vmatpush1.msra.mxu0 %v2959
        %2970 = vmatprep.subr.mxu0 0.0
        %2971 = vmatpush1.msra.mxu0 %v2960
        %2972 = vmatprep.subr.mxu0 0.0
        %2973 = vmatpush1.msra.mxu0 0.0
        %2974 = vmatprep.subr.mxu0 0.0
        %2975 = vmatpush1.msra.mxu0 0.0
        %2976 = vmatprep.subr.mxu0 0.0
        %2977 = vmatpush1.msra.mxu0 0.0
        %2978 = vmatprep.subr.mxu0 0.0
        %2979 = vmatpush1.msra.mxu0 0.0
        %2980 = vmatprep.subr.mxu0 0.0
        %2981 = vmatpush1.msra.mxu0 0.0
        %2982 = vmatprep.subr.mxu0 0.0
        %2983 = vmatpush1.msra.mxu0 0.0
        %2984 = vmatprep.subr.mxu0 0.0
        %2985 = vmatpush1.msra.mxu0 0.0
        %2986 = vmatprep.subr.mxu0 0.0
        %2987 = vmatpush1.msra.mxu0 0.0
        %2988 = vmatprep.subr.mxu0 0.0
        %2989 = vmatpush1.msra.mxu0 0.0
        %2990 = vmatprep.subr.mxu0 0.0
        %2991 = vmatpush1.msra.mxu0 0.0
        %2992 = vmatprep.subr.mxu0 0.0
        %2993 = vmatpush1.msra.mxu0 0.0
        %2994 = vmatprep.subr.mxu0 0.0
        %2995 = vmatpush1.msra.mxu0 0.0
        %2996 = vmatprep.subr.mxu0 0.0
        %2997 = vmatpush1.msra.mxu0 0.0
        %2998 = vmatprep.subr.mxu0 0.0
        %2999 = vmatpush1.msra.mxu0 0.0
        %3000 = vmatprep.subr.mxu0 0.0
        %3001 = vmatpush1.msra.mxu0 0.0
        %3002 = vmatprep.subr.mxu0 0.0
        %3003 = vmatpush1.msra.mxu0 0.0
        %3004 = vmatprep.subr.mxu0 0.0
        %3005 = vmatpush1.msra.mxu0 0.0
        %3006 = vmatprep.subr.mxu0 0.0
        %3007 = vmatpush1.msra.mxu0 0.0
        %3008 = vmatprep.subr.mxu0 0.0
        %3009 = vmatpush1.msra.mxu0 0.0
        %3010 = vmatprep.subr.mxu0 0.0
        %3011 = vmatpush1.msra.mxu0 0.0
        %3012 = vmatprep.subr.mxu0 0.0
        %3013 = vmatpush1.msra.mxu0 0.0
        %3014 = vmatprep.subr.mxu0 0.0
        %3015 = vmatpush1.msra.mxu0 0.0
        %3016 = vmatprep.subr.mxu0 0.0
        %3017 = vmatpush1.msra.mxu0 0.0
        %3018 = vmatprep.subr.mxu0 0.0
        %3019 = vmatpush1.msra.mxu0 0.0
        %3020 = vmatprep.subr.mxu0 0.0
        %3021 = vmatpush1.msra.mxu0 0.0
        %3022 = vmatprep.subr.mxu0 0.0
        %3023 = vmatpush1.msra.mxu0 0.0
        %3024 = vmatprep.subr.mxu0 0.0
        %3025 = vmatpush1.msra.mxu0 0.0
        %3026 = vmatprep.subr.mxu0 0.0
        %3027 = vmatpush1.msra.mxu0 0.0
        %3028 = vmatprep.mubr.f32.mxu0 0.0
        %3029 = vmatmul.mubr.f32.gmra.mrb[0].mxu0 %v2962
        %v3030 = vpop.f32.mrb[0].mxu0
        %v3031 = vadd.f32 0.0, %v3030
        %v3032 = vpop.f32.mrb[0].mxu0
        %3033 = vdwg.mxu0
        %vm3034 = vcmask 27648
        %3035 = vst.msk [vmem:[%s964] sm:$0xf] %vm3034, %v3031
        %s3036 = sand.u32 %s746, 1
        %s3037 = scalar_lea.sflag [#allocation4], %s3036
        %s3038 = sand.u32 %s746, 1
        %s3039 = smul.addr %s3038, 4
        %s3040 = scalar_lea.vmem [#allocation3], %s3039
        // Predicated region
        $region145: #{_lambda_.5} parent=143 // pred_check
          %p3041 = pneg %p756
        $region146: #{_lambda_.5} parent=143 // pred_check_branch
          %3043 = sbr.rel (%p3041) target = $region148
        $region147: #{_lambda_.5} parent=143 // pred_region
          %s3045 = ssub.s32 64, 64
          %3046 = vsyncadd %s3037, %s3045
          %s3047 = smul.addr %s77, 64
          %s3048 = scalar_lea.hbm %s63, %s3047
          %s3050 = sshll.u32 %s3040, 4
          %s3051 = int_to_ptr.vmem [resolvable:$true] %s3050
          %3053 = dma.vmem_to_hbm [thread:$0]  %s3051, 64, %s3048, %s3037
        $region148: #{_lambda_.5} parent=143 // pred_fallthru
          _
      $region144: #{_lambda_.5} parent=5 // pred_fallthru
        _
      %p3054 = scmp.le.s32.totalorder 2, %s72
      // Predicated region
      $region149: #{_lambda_.5} parent=5 // pred_check
        %p3055 = pneg %p3054
      $region150: #{_lambda_.5} parent=5 // pred_check_branch
        %3057 = sbr.rel (%p3055) target = $region152
      $region151: #{_lambda_.5} parent=5 // pred_region
        %s3058 = ssub.s32 %s72, 2
        // Predicated region
        $region153: #{_lambda_.5} parent=151 // pred_check
          %p3059 = pneg %p762
        $region154: #{_lambda_.5} parent=151 // pred_check_branch
          %3061 = sbr.rel (%p3059) target = $region156
        $region155: #{_lambda_.5} parent=151 // pred_region
          %s3062 = sand.u32 %s747, 1
          %s3063 = scalar_lea.sflag [#allocation4], %s3062
          %s3064 = sand.u32 %s747, 1
          %s3065 = smul.addr %s3064, 4
          %s3066 = scalar_lea.vmem [#allocation3], %s3065
          %3067 = dma.done %s3063, 64
        $region156: #{_lambda_.5} parent=151 // pred_fallthru
          _
      $region152: #{_lambda_.5} parent=5 // pred_fallthru
        _
    $region6: #{_lambda_.5} parent=1 // loop_footer
      %s76 = sadd.s32 1, %s72
    $region7: #{_lambda_.5} parent=1 // loop_footer_branch
      %71 = sbr.rel target = $region3
    $region8: #{_lambda_.5} parent=1 // loop_exit
      _
    %3068 = vsyncpa [#allocation4], 1
    %s3069 = scalar_lea.sflag [#allocation4], 1
    %3070 = vsyncpa %s3069, 1

</llo_original>
